<compile_context>
chip_gen: v5e
topology: v5e:2x2
jax: 0.10.0
libtpu: 0.0.40
codegen_flags: <defaults>
</compile_context>

<pallas_src>
import functools

import jax
import jax.numpy as jnp
from jax.experimental import pallas as pl
from jax.experimental.pallas import tpu as pltpu

NC = 3
NDF = 64
K = 4
BN_EPS = 1e-5
LANE = 128


def _conv_act_kernel(p_ref, w_ref, o_ref, acc_ref, *, act):
    # [tm, tk] @ [tk, OC] on the MXU per grid step; fp32 accumulation in VMEM
    # scratch across the K grid axis, activation applied once on the last step.
    @pl.when(pl.program_id(1) == 0)
    def _():
        acc_ref[...] = jnp.zeros_like(acc_ref)

    acc_ref[...] += jnp.dot(p_ref[...], w_ref[...],
                            preferred_element_type=jnp.float32)

    @pl.when(pl.program_id(1) == pl.num_programs(1) - 1)
    def _():
        y = acc_ref[...]
        if act == "leaky":
            y = jnp.where(y > 0, y, 0.2 * y)
        elif act == "sigmoid":
            y = jax.nn.sigmoid(y)
        o_ref[...] = y.astype(o_ref.dtype)


def _conv_bn_act_kernel(p_ref, w_ref, g_ref, b_ref, o_ref, acc_ref):
    # One 128-wide slab of output channels per outer grid step, full M rows
    # resident so train-mode BatchNorm2d batch statistics are exact; K is the
    # inner (pipelined) reduction axis accumulating into fp32 scratch.
    @pl.when(pl.program_id(1) == 0)
    def _():
        acc_ref[...] = jnp.zeros_like(acc_ref)

    acc_ref[...] += jnp.dot(p_ref[...], w_ref[...],
                            preferred_element_type=jnp.float32)

    @pl.when(pl.program_id(1) == pl.num_programs(1) - 1)
    def _():
        y = acc_ref[...]
        mean = jnp.mean(y, axis=0, keepdims=True)
        var = jnp.mean(jnp.square(y - mean), axis=0, keepdims=True)
        y = (y - mean) * jax.lax.rsqrt(var + BN_EPS)
        y = y * g_ref[...] + b_ref[...]
        y = jnp.where(y > 0, y, 0.2 * y)
        o_ref[...] = y.astype(o_ref.dtype)


def _im2col_nhwc(x, k, stride, pad):
    # x: [N, H, W, C] -> patches [N*OH*OW, k*k*C], columns ordered (kh, kw, c).
    # k*k strided slices: cheap contiguous copies, lane-dense in C, no gather.
    n, h, w, c = x.shape
    if pad:
        x = jnp.pad(x, ((0, 0), (pad, pad), (pad, pad), (0, 0)))
    hp, wp = h + 2 * pad, w + 2 * pad
    oh = (hp - k) // stride + 1
    ow = (wp - k) // stride + 1
    cols = []
    for kh in range(k):
        for kw in range(k):
            sl = jax.lax.slice(
                x,
                (0, kh, kw, 0),
                (n, kh + (oh - 1) * stride + 1, kw + (ow - 1) * stride + 1, c),
                (1, stride, stride, 1))
            cols.append(sl.reshape(n * oh * ow, c))
    return jnp.concatenate(cols, axis=-1), (n, oh, ow)


def conv_act(x, w2d, *, stride, pad, act, block_m=512, block_k=512):
    # Conv (no BN) + activation, gridded over (M parallel, K arbitrary).
    patches, (n, oh, ow) = _im2col_nhwc(x, K, stride, pad)
    kdim, oc = w2d.shape
    if patches.shape[1] != kdim:
        # zero-pad K (e.g. layer 1: 48 -> 128) so the MXU pass is full.
        patches = jnp.pad(patches, ((0, 0), (0, kdim - patches.shape[1])))
    patches = patches.astype(jnp.bfloat16)
    m = patches.shape[0]
    tm = m if m <= block_m else block_m
    tk = kdim if kdim <= block_k else block_k
    assert m % tm == 0 and kdim % tk == 0
    out_dtype = jnp.float32 if act == "sigmoid" else jnp.bfloat16
    out = pl.pallas_call(
        functools.partial(_conv_act_kernel, act=act),
        out_shape=jax.ShapeDtypeStruct((m, oc), out_dtype),
        grid=(m // tm, kdim // tk),
        in_specs=[
            pl.BlockSpec((tm, tk), lambda i, k: (i, k)),
            pl.BlockSpec((tk, oc), lambda i, k: (k, 0)),
        ],
        out_specs=pl.BlockSpec((tm, oc), lambda i, k: (i, 0)),
        scratch_shapes=[pltpu.VMEM((tm, oc), jnp.float32)],
        compiler_params=pltpu.CompilerParams(
            dimension_semantics=("parallel", "arbitrary")),
    )(patches, w2d)
    return out.reshape(n, oh, ow, oc)


def conv_bn_leaky(x, w2d, gamma, beta, *, stride, pad,
                  block_n=LANE, block_k=512):
    # Conv + BatchNorm2d (train-mode batch stats) + LeakyReLU(0.2), gridded
    # over (OC slabs parallel, K arbitrary): exact BN, lane-dense stores,
    # pipelined K-slab DMA against the MXU.
    patches, (n, oh, ow) = _im2col_nhwc(x, K, stride, pad)
    patches = patches.astype(jnp.bfloat16)
    m, kdim = patches.shape
    oc = w2d.shape[1]
    tn = oc if oc <= block_n else block_n
    tk = kdim if kdim <= block_k else block_k
    assert oc % tn == 0 and kdim % tk == 0
    out = pl.pallas_call(
        _conv_bn_act_kernel,
        out_shape=jax.ShapeDtypeStruct((m, oc), jnp.bfloat16),
        grid=(oc // tn, kdim // tk),
        in_specs=[
            pl.BlockSpec((m, tk), lambda j, k: (0, k)),
            pl.BlockSpec((tk, tn), lambda j, k: (k, j)),
            pl.BlockSpec((1, tn), lambda j, k: (0, j)),
            pl.BlockSpec((1, tn), lambda j, k: (0, j)),
        ],
        out_specs=pl.BlockSpec((m, tn), lambda j, k: (0, j)),
        scratch_shapes=[pltpu.VMEM((m, tn), jnp.float32)],
        compiler_params=pltpu.CompilerParams(
            dimension_semantics=("parallel", "arbitrary")),
    )(patches, w2d, gamma, beta)
    return out.reshape(n, oh, ow, oc)


def init_params(key):
    # Deterministic DCGAN-style init in PyTorch layout:
    # conv ~ N(0, 0.02), gamma ~ N(1, 0.02), beta = 0, bias=False.
    shapes = [
        (NDF, NC, K, K),
        (NDF * 2, NDF, K, K),
        (NDF * 4, NDF * 2, K, K),
        (NDF * 8, NDF * 4, K, K),
        (1, NDF * 8, K, K),
    ]
    params = {"conv": [], "gamma": [], "beta": []}
    keys = jax.random.split(key, 2 * len(shapes))
    for i, s in enumerate(shapes):
        oc = s[0]
        params["conv"].append(0.02 * jax.random.normal(keys[2 * i], s, jnp.float32))
        params["gamma"].append(
            1.0 + 0.02 * jax.random.normal(keys[2 * i + 1], (1, oc), jnp.float32))
        params["beta"].append(jnp.zeros((1, oc), jnp.float32))
    return params


def prepare_params(params):
    # One-time layout/precision conversion:
    #   PyTorch [OC, C, KH, KW] -> matmul [KH*KW*C, OC], cast to bf16,
    #   zero-pad K of layer 1 to 128, zero-pad OC of layer 5 to 128.
    n_layers = len(params["conv"])
    w2ds = []
    for idx, w in enumerate(params["conv"]):
        oc, c, kh, kw = w.shape
        w2d = jnp.transpose(w, (2, 3, 1, 0)).reshape(kh * kw * c, oc)
        kpad = (-w2d.shape[0]) % LANE
        if kpad:
            w2d = jnp.pad(w2d, ((0, kpad), (0, 0)))
        if idx == n_layers - 1:  # final 1-channel conv -> lane-dense output
            w2d = jnp.pad(w2d, ((0, 0), (0, LANE - oc)))
        w2ds.append(w2d.astype(jnp.bfloat16))
    return {"w2d": w2ds, "gamma": params["gamma"], "beta": params["beta"]}


@jax.jit
def discriminator_forward(x_nchw, prepared):
    n = x_nchw.shape[0]
    x = jnp.transpose(x_nchw, (0, 2, 3, 1))  # -> NHWC, lane-dense in C
    # layer 1: Conv(3->64, k4, s2, p1) + LeakyReLU(0.2)        (no BN)
    h = conv_act(x, prepared["w2d"][0], stride=2, pad=1, act="leaky")
    # layers 2-4: Conv + BatchNorm2d (batch stats) + LeakyReLU(0.2)
    for i in (1, 2, 3):
        h = conv_bn_leaky(h, prepared["w2d"][i], prepared["gamma"][i],
                          prepared["beta"][i], stride=2, pad=1)
    # layer 5: Conv(512->1, k4, s1, p0) + Sigmoid (OC padded to 128 for
    # lane-dense stores; the real channel is column 0)
    h = conv_act(h, prepared["w2d"][4], stride=1, pad=0, act="sigmoid")
    return h[:, :, :, :1].reshape(n, 1, 1, 1)  # [N, 1, 1, 1]


if __name__ == "__main__":
    key = jax.random.PRNGKey(0)
    pkey, xkey = jax.random.split(key)
    params = init_params(pkey)
    prepared = prepare_params(params)
    # DCGAN discriminator needs 64x64 input so the last 4x4 conv yields 1x1.
    x = jax.random.normal(xkey, (2, NC, 64, 64), jnp.float32)
    out = discriminator_forward(x, prepared)
    jax.block_until_ready(out)
    assert out.shape == (2, 1, 1, 1)
    assert bool(jnp.all((out >= 0.0) & (out <= 1.0)))
    print("KERNEL_OK")
</pallas_src>

<mosaic_0001>
module attributes {stable_mosaic.version = 11 : i64} {
  func.func @_conv_act_kernel(%arg0: i32, %arg1: i32, %arg2: memref<512x128xbf16, #tpu.memory_space<vmem>>, %arg3: memref<128x64xbf16, #tpu.memory_space<vmem>>, %arg4: memref<512x64xbf16, #tpu.memory_space<vmem>>, %arg5: memref<512x64xf32, #tpu.memory_space<vmem>>) attributes {dimension_semantics = [#tpu.dimension_semantics<parallel>, #tpu.dimension_semantics<arbitrary>], iteration_bounds = array<i64: 4, 1>, scalar_prefetch = 0 : i64, scratch_operands = 1 : i64, tpu.core_type = #tpu.core_type<tc>, window_params = [{transform_indices = @transform_0, window_bounds = array<i64: 512, 128>}, {transform_indices = @transform_1, window_bounds = array<i64: 128, 64>}, {transform_indices = @transform_2, window_bounds = array<i64: 512, 64>}]} {
    %c0_i32 = arith.constant 0 : i32
    %0 = arith.cmpi eq, %arg1, %c0_i32 : i32
    %1 = arith.extui %0 : i1 to i32
    %c0_i32_0 = arith.constant 0 : i32
    %2 = arith.cmpi ne, %1, %c0_i32_0 : i32
    scf.if %2 {
      %cst_10 = arith.constant 0.000000e+00 : f32
      %12 = vector.broadcast %cst_10 : f32 to vector<512x64xf32>
      %c0_11 = arith.constant 0 : index
      %c0_12 = arith.constant 0 : index
      %13 = vector.load %arg5[%c0_11, %c0_12] : memref<512x64xf32, #tpu.memory_space<vmem>>, vector<512x64xf32>
      tpu.vector_store %arg5[%c0_11, %c0_12], %12 {strides = array<i32>} : memref<512x64xf32, #tpu.memory_space<vmem>>, vector<512x64xf32>,
    } else {
    }
    %c0 = arith.constant 0 : index
    %c0_1 = arith.constant 0 : index
    %3 = vector.load %arg5[%c0, %c0_1] : memref<512x64xf32, #tpu.memory_space<vmem>>, vector<512x64xf32>
    %c0_2 = arith.constant 0 : index
    %c0_3 = arith.constant 0 : index
    %4 = vector.load %arg2[%c0_2, %c0_3] : memref<512x128xbf16, #tpu.memory_space<vmem>>, vector<512x128xbf16>
    %c0_4 = arith.constant 0 : index
    %c0_5 = arith.constant 0 : index
    %5 = vector.load %arg3[%c0_4, %c0_5] : memref<128x64xbf16, #tpu.memory_space<vmem>>, vector<128x64xbf16>
    %cst = arith.constant dense<0.000000e+00> : vector<512x64xf32>
    %6 = tpu.matmul %4, %5, %cst {dimension_numbers = #tpu.dot_dimension_numbers<[1], [0], [0], [1], [0, 0, 1, 1], [], []>} : vector<512x128xbf16>, vector<128x64xbf16>, vector<512x64xf32> -> vector<512x64xf32>
    %7 = arith.addf %3, %6 : vector<512x64xf32>
    %c0_6 = arith.constant 0 : index
    %c0_7 = arith.constant 0 : index
    %8 = vector.load %arg5[%c0_6, %c0_7] : memref<512x64xf32, #tpu.memory_space<vmem>>, vector<512x64xf32>
    tpu.vector_store %arg5[%c0_6, %c0_7], %7 {strides = array<i32>} : memref<512x64xf32, #tpu.memory_space<vmem>>, vector<512x64xf32>,
    %c0_i32_8 = arith.constant 0 : i32
    %9 = arith.cmpi eq, %arg1, %c0_i32_8 : i32
    %10 = arith.extui %9 : i1 to i32
    %c0_i32_9 = arith.constant 0 : i32
    %11 = arith.cmpi ne, %10, %c0_i32_9 : i32
    scf.if %11 {
      %c0_10 = arith.constant 0 : index
      %c0_11 = arith.constant 0 : index
      %12 = vector.load %arg5[%c0_10, %c0_11] : memref<512x64xf32, #tpu.memory_space<vmem>>, vector<512x64xf32>
      %cst_12 = arith.constant 0.000000e+00 : f32
      %13 = vector.broadcast %cst_12 : f32 to vector<512x64xf32>
      %14 = arith.cmpf ogt, %12, %13 : vector<512x64xf32>
      %cst_13 = arith.constant 2.000000e-01 : f32
      %15 = vector.broadcast %cst_13 : f32 to vector<512x64xf32>
      %16 = arith.mulf %15, %12 : vector<512x64xf32>
      %17 = arith.select %14, %12, %16 : vector<512x64xi1>, vector<512x64xf32>
      %18 = arith.truncf %17 : vector<512x64xf32> to vector<512x64xbf16>
      %c0_14 = arith.constant 0 : index
      %c0_15 = arith.constant 0 : index
      %19 = vector.load %arg4[%c0_14, %c0_15] : memref<512x64xbf16, #tpu.memory_space<vmem>>, vector<512x64xbf16>
      tpu.vector_store %arg4[%c0_14, %c0_15], %18 {strides = array<i32>} : memref<512x64xbf16, #tpu.memory_space<vmem>>, vector<512x64xbf16>,
    } else {
    }
    return
  }
  func.func @transform_0(%arg0: i32, %arg1: i32) -> (i32, i32) {
    %c0_i32 = arith.constant 0 : i32
    return %arg0, %arg1 : i32, i32
  }
  func.func @transform_1(%arg0: i32, %arg1: i32) -> (i32, i32) {
    %c0_i32 = arith.constant 0 : i32
    %c0_i32_0 = arith.constant 0 : i32
    return %arg1, %c0_i32 : i32, i32
  }
  func.func @transform_2(%arg0: i32, %arg1: i32) -> (i32, i32) {
    %c0_i32 = arith.constant 0 : i32
    %c0_i32_0 = arith.constant 0 : i32
    return %arg0, %c0_i32 : i32, i32
  }
}

module attributes {stable_mosaic.version = 11 : i64} {
  func.func @_conv_bn_act_kernel(%arg0: i32, %arg1: i32, %arg2: memref<512x512xbf16, #tpu.memory_space<vmem>>, %arg3: memref<512x128xbf16, #tpu.memory_space<vmem>>, %arg4: memref<1x128xf32, #tpu.memory_space<vmem>>, %arg5: memref<1x128xf32, #tpu.memory_space<vmem>>, %arg6: memref<512x128xbf16, #tpu.memory_space<vmem>>, %arg7: memref<512x128xf32, #tpu.memory_space<vmem>>) attributes {dimension_semantics = [#tpu.dimension_semantics<parallel>, #tpu.dimension_semantics<arbitrary>], iteration_bounds = array<i64: 1, 2>, scalar_prefetch = 0 : i64, scratch_operands = 1 : i64, tpu.core_type = #tpu.core_type<tc>, window_params = [{transform_indices = @transform_0, window_bounds = array<i64: 512, 512>}, {transform_indices = @transform_1, window_bounds = array<i64: 512, 128>}, {transform_indices = @transform_2, window_bounds = array<i64: 1, 128>}, {transform_indices = @transform_3, window_bounds = array<i64: 1, 128>}, {transform_indices = @transform_4, window_bounds = array<i64: 512, 128>}]} {
    %c0_i32 = arith.constant 0 : i32
    %0 = arith.cmpi eq, %arg1, %c0_i32 : i32
    %1 = arith.extui %0 : i1 to i32
    %c0_i32_0 = arith.constant 0 : i32
    %2 = arith.cmpi ne, %1, %c0_i32_0 : i32
    scf.if %2 {
      %cst_9 = arith.constant 0.000000e+00 : f32
      %12 = vector.broadcast %cst_9 : f32 to vector<512x128xf32>
      %c0_10 = arith.constant 0 : index
      %c0_11 = arith.constant 0 : index
      %13 = vector.load %arg7[%c0_10, %c0_11] : memref<512x128xf32, #tpu.memory_space<vmem>>, vector<512x128xf32>
      tpu.vector_store %arg7[%c0_10, %c0_11], %12 {strides = array<i32>} : memref<512x128xf32, #tpu.memory_space<vmem>>, vector<512x128xf32>,
    } else {
    }
    %c0 = arith.constant 0 : index
    %c0_1 = arith.constant 0 : index
    %3 = vector.load %arg7[%c0, %c0_1] : memref<512x128xf32, #tpu.memory_space<vmem>>, vector<512x128xf32>
    %c0_2 = arith.constant 0 : index
    %c0_3 = arith.constant 0 : index
    %4 = vector.load %arg2[%c0_2, %c0_3] : memref<512x512xbf16, #tpu.memory_space<vmem>>, vector<512x512xbf16>
    %c0_4 = arith.constant 0 : index
    %c0_5 = arith.constant 0 : index
    %5 = vector.load %arg3[%c0_4, %c0_5] : memref<512x128xbf16, #tpu.memory_space<vmem>>, vector<512x128xbf16>
    %cst = arith.constant dense<0.000000e+00> : vector<512x128xf32>
    %6 = tpu.matmul %4, %5, %cst {dimension_numbers = #tpu.dot_dimension_numbers<[1], [0], [0], [1], [0, 0, 1, 1], [], []>} : vector<512x512xbf16>, vector<512x128xbf16>, vector<512x128xf32> -> vector<512x128xf32>
    %7 = arith.addf %3, %6 : vector<512x128xf32>
    %c0_6 = arith.constant 0 : index
    %c0_7 = arith.constant 0 : index
    %8 = vector.load %arg7[%c0_6, %c0_7] : memref<512x128xf32, #tpu.memory_space<vmem>>, vector<512x128xf32>
    tpu.vector_store %arg7[%c0_6, %c0_7], %7 {strides = array<i32>} : memref<512x128xf32, #tpu.memory_space<vmem>>, vector<512x128xf32>,
    %c1_i32 = arith.constant 1 : i32
    %9 = arith.cmpi eq, %arg1, %c1_i32 : i32
    %10 = arith.extui %9 : i1 to i32
    %c0_i32_8 = arith.constant 0 : i32
    %11 = arith.cmpi ne, %10, %c0_i32_8 : i32
    scf.if %11 {
      %c0_9 = arith.constant 0 : index
      %c0_10 = arith.constant 0 : index
      %12 = vector.load %arg7[%c0_9, %c0_10] : memref<512x128xf32, #tpu.memory_space<vmem>>, vector<512x128xf32>
      %cst_11 = arith.constant dense<0.000000e+00> : vector<128xf32>
      %13 = vector.multi_reduction <add>, %12, %cst_11 [0] : vector<512x128xf32> to vector<128xf32>
      %14 = vector.shape_cast %13 : vector<128xf32> to vector<1x128xf32>
      %cst_12 = arith.constant 5.120000e+02 : f32
      %15 = vector.broadcast %cst_12 : f32 to vector<1x128xf32>
      %16 = arith.divf %14, %15 : vector<1x128xf32>
      %17 = vector.broadcast %16 : vector<1x128xf32> to vector<512x128xf32>
      %18 = arith.subf %12, %17 : vector<512x128xf32>
      %19 = arith.mulf %18, %18 : vector<512x128xf32>
      %cst_13 = arith.constant dense<0.000000e+00> : vector<128xf32>
      %20 = vector.multi_reduction <add>, %19, %cst_13 [0] : vector<512x128xf32> to vector<128xf32>
      %21 = vector.shape_cast %20 : vector<128xf32> to vector<1x128xf32>
      %cst_14 = arith.constant 5.120000e+02 : f32
      %22 = vector.broadcast %cst_14 : f32 to vector<1x128xf32>
      %23 = arith.divf %21, %22 : vector<1x128xf32>
      %24 = vector.broadcast %16 : vector<1x128xf32> to vector<512x128xf32>
      %25 = arith.subf %12, %24 : vector<512x128xf32>
      %cst_15 = arith.constant 9.99999974E-6 : f32
      %26 = vector.broadcast %cst_15 : f32 to vector<1x128xf32>
      %27 = arith.addf %23, %26 : vector<1x128xf32>
      %28 = math.rsqrt %27 : vector<1x128xf32>
      %29 = vector.broadcast %28 : vector<1x128xf32> to vector<512x128xf32>
      %30 = arith.mulf %25, %29 : vector<512x128xf32>
      %c0_16 = arith.constant 0 : index
      %c0_17 = arith.constant 0 : index
      %31 = vector.load %arg4[%c0_16, %c0_17] : memref<1x128xf32, #tpu.memory_space<vmem>>, vector<1x128xf32>
      %32 = vector.broadcast %31 : vector<1x128xf32> to vector<512x128xf32>
      %33 = arith.mulf %30, %32 : vector<512x128xf32>
      %c0_18 = arith.constant 0 : index
      %c0_19 = arith.constant 0 : index
      %34 = vector.load %arg5[%c0_18, %c0_19] : memref<1x128xf32, #tpu.memory_space<vmem>>, vector<1x128xf32>
      %35 = vector.broadcast %34 : vector<1x128xf32> to vector<512x128xf32>
      %36 = arith.addf %33, %35 : vector<512x128xf32>
      %cst_20 = arith.constant 0.000000e+00 : f32
      %37 = vector.broadcast %cst_20 : f32 to vector<512x128xf32>
      %38 = arith.cmpf ogt, %36, %37 : vector<512x128xf32>
      %cst_21 = arith.constant 2.000000e-01 : f32
      %39 = vector.broadcast %cst_21 : f32 to vector<512x128xf32>
      %40 = arith.mulf %39, %36 : vector<512x128xf32>
      %41 = arith.select %38, %36, %40 : vector<512x128xi1>, vector<512x128xf32>
      %42 = arith.truncf %41 : vector<512x128xf32> to vector<512x128xbf16>
      %c0_22 = arith.constant 0 : index
      %c0_23 = arith.constant 0 : index
      %43 = vector.load %arg6[%c0_22, %c0_23] : memref<512x128xbf16, #tpu.memory_space<vmem>>, vector<512x128xbf16>
      tpu.vector_store %arg6[%c0_22, %c0_23], %42 {strides = array<i32>} : memref<512x128xbf16, #tpu.memory_space<vmem>>, vector<512x128xbf16>,
    } else {
    }
    return
  }
  func.func @transform_0(%arg0: i32, %arg1: i32) -> (i32, i32) {
    %c0_i32 = arith.constant 0 : i32
    %c0_i32_0 = arith.constant 0 : i32
    return %c0_i32, %arg1 : i32, i32
  }
  func.func @transform_1(%arg0: i32, %arg1: i32) -> (i32, i32) {
    %c0_i32 = arith.constant 0 : i32
    return %arg1, %arg0 : i32, i32
  }
  func.func @transform_2(%arg0: i32, %arg1: i32) -> (i32, i32) {
    %c0_i32 = arith.constant 0 : i32
    %c0_i32_0 = arith.constant 0 : i32
    return %c0_i32, %arg0 : i32, i32
  }
  func.func @transform_3(%arg0: i32, %arg1: i32) -> (i32, i32) {
    %c0_i32 = arith.constant 0 : i32
    %c0_i32_0 = arith.constant 0 : i32
    return %c0_i32, %arg0 : i32, i32
  }
  func.func @transform_4(%arg0: i32, %arg1: i32) -> (i32, i32) {
    %c0_i32 = arith.constant 0 : i32
    %c0_i32_0 = arith.constant 0 : i32
    return %c0_i32, %arg0 : i32, i32
  }
}

module attributes {stable_mosaic.version = 11 : i64} {
  func.func @_conv_bn_act_kernel(%arg0: i32, %arg1: i32, %arg2: memref<128x512xbf16, #tpu.memory_space<vmem>>, %arg3: memref<512x128xbf16, #tpu.memory_space<vmem>>, %arg4: memref<1x128xf32, #tpu.memory_space<vmem>>, %arg5: memref<1x128xf32, #tpu.memory_space<vmem>>, %arg6: memref<128x128xbf16, #tpu.memory_space<vmem>>, %arg7: memref<128x128xf32, #tpu.memory_space<vmem>>) attributes {dimension_semantics = [#tpu.dimension_semantics<parallel>, #tpu.dimension_semantics<arbitrary>], iteration_bounds = array<i64: 2, 4>, scalar_prefetch = 0 : i64, scratch_operands = 1 : i64, tpu.core_type = #tpu.core_type<tc>, window_params = [{transform_indices = @transform_0, window_bounds = array<i64: 128, 512>}, {transform_indices = @transform_1, window_bounds = array<i64: 512, 128>}, {transform_indices = @transform_2, window_bounds = array<i64: 1, 128>}, {transform_indices = @transform_3, window_bounds = array<i64: 1, 128>}, {transform_indices = @transform_4, window_bounds = array<i64: 128, 128>}]} {
    %c0_i32 = arith.constant 0 : i32
    %0 = arith.cmpi eq, %arg1, %c0_i32 : i32
    %1 = arith.extui %0 : i1 to i32
    %c0_i32_0 = arith.constant 0 : i32
    %2 = arith.cmpi ne, %1, %c0_i32_0 : i32
    scf.if %2 {
      %cst_9 = arith.constant 0.000000e+00 : f32
      %12 = vector.broadcast %cst_9 : f32 to vector<128x128xf32>
      %c0_10 = arith.constant 0 : index
      %c0_11 = arith.constant 0 : index
      %13 = vector.load %arg7[%c0_10, %c0_11] : memref<128x128xf32, #tpu.memory_space<vmem>>, vector<128x128xf32>
      tpu.vector_store %arg7[%c0_10, %c0_11], %12 {strides = array<i32>} : memref<128x128xf32, #tpu.memory_space<vmem>>, vector<128x128xf32>,
    } else {
    }
    %c0 = arith.constant 0 : index
    %c0_1 = arith.constant 0 : index
    %3 = vector.load %arg7[%c0, %c0_1] : memref<128x128xf32, #tpu.memory_space<vmem>>, vector<128x128xf32>
    %c0_2 = arith.constant 0 : index
    %c0_3 = arith.constant 0 : index
    %4 = vector.load %arg2[%c0_2, %c0_3] : memref<128x512xbf16, #tpu.memory_space<vmem>>, vector<128x512xbf16>
    %c0_4 = arith.constant 0 : index
    %c0_5 = arith.constant 0 : index
    %5 = vector.load %arg3[%c0_4, %c0_5] : memref<512x128xbf16, #tpu.memory_space<vmem>>, vector<512x128xbf16>
    %cst = arith.constant dense<0.000000e+00> : vector<128x128xf32>
    %6 = tpu.matmul %4, %5, %cst {dimension_numbers = #tpu.dot_dimension_numbers<[1], [0], [0], [1], [0, 0, 1, 1], [], []>} : vector<128x512xbf16>, vector<512x128xbf16>, vector<128x128xf32> -> vector<128x128xf32>
    %7 = arith.addf %3, %6 : vector<128x128xf32>
    %c0_6 = arith.constant 0 : index
    %c0_7 = arith.constant 0 : index
    %8 = vector.load %arg7[%c0_6, %c0_7] : memref<128x128xf32, #tpu.memory_space<vmem>>, vector<128x128xf32>
    tpu.vector_store %arg7[%c0_6, %c0_7], %7 {strides = array<i32>} : memref<128x128xf32, #tpu.memory_space<vmem>>, vector<128x128xf32>,
    %c3_i32 = arith.constant 3 : i32
    %9 = arith.cmpi eq, %arg1, %c3_i32 : i32
    %10 = arith.extui %9 : i1 to i32
    %c0_i32_8 = arith.constant 0 : i32
    %11 = arith.cmpi ne, %10, %c0_i32_8 : i32
    scf.if %11 {
      %c0_9 = arith.constant 0 : index
      %c0_10 = arith.constant 0 : index
      %12 = vector.load %arg7[%c0_9, %c0_10] : memref<128x128xf32, #tpu.memory_space<vmem>>, vector<128x128xf32>
      %cst_11 = arith.constant dense<0.000000e+00> : vector<128xf32>
      %13 = vector.multi_reduction <add>, %12, %cst_11 [0] : vector<128x128xf32> to vector<128xf32>
      %14 = vector.shape_cast %13 : vector<128xf32> to vector<1x128xf32>
      %cst_12 = arith.constant 1.280000e+02 : f32
      %15 = vector.broadcast %cst_12 : f32 to vector<1x128xf32>
      %16 = arith.divf %14, %15 : vector<1x128xf32>
      %17 = vector.broadcast %16 : vector<1x128xf32> to vector<128x128xf32>
      %18 = arith.subf %12, %17 : vector<128x128xf32>
      %19 = arith.mulf %18, %18 : vector<128x128xf32>
      %cst_13 = arith.constant dense<0.000000e+00> : vector<128xf32>
      %20 = vector.multi_reduction <add>, %19, %cst_13 [0] : vector<128x128xf32> to vector<128xf32>
      %21 = vector.shape_cast %20 : vector<128xf32> to vector<1x128xf32>
      %cst_14 = arith.constant 1.280000e+02 : f32
      %22 = vector.broadcast %cst_14 : f32 to vector<1x128xf32>
      %23 = arith.divf %21, %22 : vector<1x128xf32>
      %24 = vector.broadcast %16 : vector<1x128xf32> to vector<128x128xf32>
      %25 = arith.subf %12, %24 : vector<128x128xf32>
      %cst_15 = arith.constant 9.99999974E-6 : f32
      %26 = vector.broadcast %cst_15 : f32 to vector<1x128xf32>
      %27 = arith.addf %23, %26 : vector<1x128xf32>
      %28 = math.rsqrt %27 : vector<1x128xf32>
      %29 = vector.broadcast %28 : vector<1x128xf32> to vector<128x128xf32>
      %30 = arith.mulf %25, %29 : vector<128x128xf32>
      %c0_16 = arith.constant 0 : index
      %c0_17 = arith.constant 0 : index
      %31 = vector.load %arg4[%c0_16, %c0_17] : memref<1x128xf32, #tpu.memory_space<vmem>>, vector<1x128xf32>
      %32 = vector.broadcast %31 : vector<1x128xf32> to vector<128x128xf32>
      %33 = arith.mulf %30, %32 : vector<128x128xf32>
      %c0_18 = arith.constant 0 : index
      %c0_19 = arith.constant 0 : index
      %34 = vector.load %arg5[%c0_18, %c0_19] : memref<1x128xf32, #tpu.memory_space<vmem>>, vector<1x128xf32>
      %35 = vector.broadcast %34 : vector<1x128xf32> to vector<128x128xf32>
      %36 = arith.addf %33, %35 : vector<128x128xf32>
      %cst_20 = arith.constant 0.000000e+00 : f32
      %37 = vector.broadcast %cst_20 : f32 to vector<128x128xf32>
      %38 = arith.cmpf ogt, %36, %37 : vector<128x128xf32>
      %cst_21 = arith.constant 2.000000e-01 : f32
      %39 = vector.broadcast %cst_21 : f32 to vector<128x128xf32>
      %40 = arith.mulf %39, %36 : vector<128x128xf32>
      %41 = arith.select %38, %36, %40 : vector<128x128xi1>, vector<128x128xf32>
      %42 = arith.truncf %41 : vector<128x128xf32> to vector<128x128xbf16>
      %c0_22 = arith.constant 0 : index
      %c0_23 = arith.constant 0 : index
      %43 = vector.load %arg6[%c0_22, %c0_23] : memref<128x128xbf16, #tpu.memory_space<vmem>>, vector<128x128xbf16>
      tpu.vector_store %arg6[%c0_22, %c0_23], %42 {strides = array<i32>} : memref<128x128xbf16, #tpu.memory_space<vmem>>, vector<128x128xbf16>,
    } else {
    }
    return
  }
  func.func @transform_0(%arg0: i32, %arg1: i32) -> (i32, i32) {
    %c0_i32 = arith.constant 0 : i32
    %c0_i32_0 = arith.constant 0 : i32
    return %c0_i32, %arg1 : i32, i32
  }
  func.func @transform_1(%arg0: i32, %arg1: i32) -> (i32, i32) {
    %c0_i32 = arith.constant 0 : i32
    return %arg1, %arg0 : i32, i32
  }
  func.func @transform_2(%arg0: i32, %arg1: i32) -> (i32, i32) {
    %c0_i32 = arith.constant 0 : i32
    %c0_i32_0 = arith.constant 0 : i32
    return %c0_i32, %arg0 : i32, i32
  }
  func.func @transform_3(%arg0: i32, %arg1: i32) -> (i32, i32) {
    %c0_i32 = arith.constant 0 : i32
    %c0_i32_0 = arith.constant 0 : i32
    return %c0_i32, %arg0 : i32, i32
  }
  func.func @transform_4(%arg0: i32, %arg1: i32) -> (i32, i32) {
    %c0_i32 = arith.constant 0 : i32
    %c0_i32_0 = arith.constant 0 : i32
    return %c0_i32, %arg0 : i32, i32
  }
}

module attributes {stable_mosaic.version = 11 : i64} {
  func.func @_conv_bn_act_kernel(%arg0: i32, %arg1: i32, %arg2: memref<32x512xbf16, #tpu.memory_space<vmem>>, %arg3: memref<512x128xbf16, #tpu.memory_space<vmem>>, %arg4: memref<1x128xf32, #tpu.memory_space<vmem>>, %arg5: memref<1x128xf32, #tpu.memory_space<vmem>>, %arg6: memref<32x128xbf16, #tpu.memory_space<vmem>>, %arg7: memref<32x128xf32, #tpu.memory_space<vmem>>) attributes {dimension_semantics = [#tpu.dimension_semantics<parallel>, #tpu.dimension_semantics<arbitrary>], iteration_bounds = array<i64: 4, 8>, scalar_prefetch = 0 : i64, scratch_operands = 1 : i64, tpu.core_type = #tpu.core_type<tc>, window_params = [{transform_indices = @transform_0, window_bounds = array<i64: 32, 512>}, {transform_indices = @transform_1, window_bounds = array<i64: 512, 128>}, {transform_indices = @transform_2, window_bounds = array<i64: 1, 128>}, {transform_indices = @transform_3, window_bounds = array<i64: 1, 128>}, {transform_indices = @transform_4, window_bounds = array<i64: 32, 128>}]} {
    %c0_i32 = arith.constant 0 : i32
    %0 = arith.cmpi eq, %arg1, %c0_i32 : i32
    %1 = arith.extui %0 : i1 to i32
    %c0_i32_0 = arith.constant 0 : i32
    %2 = arith.cmpi ne, %1, %c0_i32_0 : i32
    scf.if %2 {
      %cst_9 = arith.constant 0.000000e+00 : f32
      %12 = vector.broadcast %cst_9 : f32 to vector<32x128xf32>
      %c0_10 = arith.constant 0 : index
      %c0_11 = arith.constant 0 : index
      %13 = vector.load %arg7[%c0_10, %c0_11] : memref<32x128xf32, #tpu.memory_space<vmem>>, vector<32x128xf32>
      tpu.vector_store %arg7[%c0_10, %c0_11], %12 {strides = array<i32>} : memref<32x128xf32, #tpu.memory_space<vmem>>, vector<32x128xf32>,
    } else {
    }
    %c0 = arith.constant 0 : index
    %c0_1 = arith.constant 0 : index
    %3 = vector.load %arg7[%c0, %c0_1] : memref<32x128xf32, #tpu.memory_space<vmem>>, vector<32x128xf32>
    %c0_2 = arith.constant 0 : index
    %c0_3 = arith.constant 0 : index
    %4 = vector.load %arg2[%c0_2, %c0_3] : memref<32x512xbf16, #tpu.memory_space<vmem>>, vector<32x512xbf16>
    %c0_4 = arith.constant 0 : index
    %c0_5 = arith.constant 0 : index
    %5 = vector.load %arg3[%c0_4, %c0_5] : memref<512x128xbf16, #tpu.memory_space<vmem>>, vector<512x128xbf16>
    %cst = arith.constant dense<0.000000e+00> : vector<32x128xf32>
    %6 = tpu.matmul %4, %5, %cst {dimension_numbers = #tpu.dot_dimension_numbers<[1], [0], [0], [1], [0, 0, 1, 1], [], []>} : vector<32x512xbf16>, vector<512x128xbf16>, vector<32x128xf32> -> vector<32x128xf32>
    %7 = arith.addf %3, %6 : vector<32x128xf32>
    %c0_6 = arith.constant 0 : index
    %c0_7 = arith.constant 0 : index
    %8 = vector.load %arg7[%c0_6, %c0_7] : memref<32x128xf32, #tpu.memory_space<vmem>>, vector<32x128xf32>
    tpu.vector_store %arg7[%c0_6, %c0_7], %7 {strides = array<i32>} : memref<32x128xf32, #tpu.memory_space<vmem>>, vector<32x128xf32>,
    %c7_i32 = arith.constant 7 : i32
    %9 = arith.cmpi eq, %arg1, %c7_i32 : i32
    %10 = arith.extui %9 : i1 to i32
    %c0_i32_8 = arith.constant 0 : i32
    %11 = arith.cmpi ne, %10, %c0_i32_8 : i32
    scf.if %11 {
      %c0_9 = arith.constant 0 : index
      %c0_10 = arith.constant 0 : index
      %12 = vector.load %arg7[%c0_9, %c0_10] : memref<32x128xf32, #tpu.memory_space<vmem>>, vector<32x128xf32>
      %cst_11 = arith.constant dense<0.000000e+00> : vector<128xf32>
      %13 = vector.multi_reduction <add>, %12, %cst_11 [0] : vector<32x128xf32> to vector<128xf32>
      %14 = vector.shape_cast %13 : vector<128xf32> to vector<1x128xf32>
      %cst_12 = arith.constant 3.200000e+01 : f32
      %15 = vector.broadcast %cst_12 : f32 to vector<1x128xf32>
      %16 = arith.divf %14, %15 : vector<1x128xf32>
      %17 = vector.broadcast %16 : vector<1x128xf32> to vector<32x128xf32>
      %18 = arith.subf %12, %17 : vector<32x128xf32>
      %19 = arith.mulf %18, %18 : vector<32x128xf32>
      %cst_13 = arith.constant dense<0.000000e+00> : vector<128xf32>
      %20 = vector.multi_reduction <add>, %19, %cst_13 [0] : vector<32x128xf32> to vector<128xf32>
      %21 = vector.shape_cast %20 : vector<128xf32> to vector<1x128xf32>
      %cst_14 = arith.constant 3.200000e+01 : f32
      %22 = vector.broadcast %cst_14 : f32 to vector<1x128xf32>
      %23 = arith.divf %21, %22 : vector<1x128xf32>
      %24 = vector.broadcast %16 : vector<1x128xf32> to vector<32x128xf32>
      %25 = arith.subf %12, %24 : vector<32x128xf32>
      %cst_15 = arith.constant 9.99999974E-6 : f32
      %26 = vector.broadcast %cst_15 : f32 to vector<1x128xf32>
      %27 = arith.addf %23, %26 : vector<1x128xf32>
      %28 = math.rsqrt %27 : vector<1x128xf32>
      %29 = vector.broadcast %28 : vector<1x128xf32> to vector<32x128xf32>
      %30 = arith.mulf %25, %29 : vector<32x128xf32>
      %c0_16 = arith.constant 0 : index
      %c0_17 = arith.constant 0 : index
      %31 = vector.load %arg4[%c0_16, %c0_17] : memref<1x128xf32, #tpu.memory_space<vmem>>, vector<1x128xf32>
      %32 = vector.broadcast %31 : vector<1x128xf32> to vector<32x128xf32>
      %33 = arith.mulf %30, %32 : vector<32x128xf32>
      %c0_18 = arith.constant 0 : index
      %c0_19 = arith.constant 0 : index
      %34 = vector.load %arg5[%c0_18, %c0_19] : memref<1x128xf32, #tpu.memory_space<vmem>>, vector<1x128xf32>
      %35 = vector.broadcast %34 : vector<1x128xf32> to vector<32x128xf32>
      %36 = arith.addf %33, %35 : vector<32x128xf32>
      %cst_20 = arith.constant 0.000000e+00 : f32
      %37 = vector.broadcast %cst_20 : f32 to vector<32x128xf32>
      %38 = arith.cmpf ogt, %36, %37 : vector<32x128xf32>
      %cst_21 = arith.constant 2.000000e-01 : f32
      %39 = vector.broadcast %cst_21 : f32 to vector<32x128xf32>
      %40 = arith.mulf %39, %36 : vector<32x128xf32>
      %41 = arith.select %38, %36, %40 : vector<32x128xi1>, vector<32x128xf32>
      %42 = arith.truncf %41 : vector<32x128xf32> to vector<32x128xbf16>
      %c0_22 = arith.constant 0 : index
      %c0_23 = arith.constant 0 : index
      %43 = vector.load %arg6[%c0_22, %c0_23] : memref<32x128xbf16, #tpu.memory_space<vmem>>, vector<32x128xbf16>
      tpu.vector_store %arg6[%c0_22, %c0_23], %42 {strides = array<i32>} : memref<32x128xbf16, #tpu.memory_space<vmem>>, vector<32x128xbf16>,
    } else {
    }
    return
  }
  func.func @transform_0(%arg0: i32, %arg1: i32) -> (i32, i32) {
    %c0_i32 = arith.constant 0 : i32
    %c0_i32_0 = arith.constant 0 : i32
    return %c0_i32, %arg1 : i32, i32
  }
  func.func @transform_1(%arg0: i32, %arg1: i32) -> (i32, i32) {
    %c0_i32 = arith.constant 0 : i32
    return %arg1, %arg0 : i32, i32
  }
  func.func @transform_2(%arg0: i32, %arg1: i32) -> (i32, i32) {
    %c0_i32 = arith.constant 0 : i32
    %c0_i32_0 = arith.constant 0 : i32
    return %c0_i32, %arg0 : i32, i32
  }
  func.func @transform_3(%arg0: i32, %arg1: i32) -> (i32, i32) {
    %c0_i32 = arith.constant 0 : i32
    %c0_i32_0 = arith.constant 0 : i32
    return %c0_i32, %arg0 : i32, i32
  }
  func.func @transform_4(%arg0: i32, %arg1: i32) -> (i32, i32) {
    %c0_i32 = arith.constant 0 : i32
    %c0_i32_0 = arith.constant 0 : i32
    return %c0_i32, %arg0 : i32, i32
  }
}

module attributes {stable_mosaic.version = 11 : i64} {
  func.func @_conv_act_kernel(%arg0: i32, %arg1: i32, %arg2: memref<2x512xbf16, #tpu.memory_space<vmem>>, %arg3: memref<512x128xbf16, #tpu.memory_space<vmem>>, %arg4: memref<2x128xf32, #tpu.memory_space<vmem>>, %arg5: memref<2x128xf32, #tpu.memory_space<vmem>>) attributes {dimension_semantics = [#tpu.dimension_semantics<parallel>, #tpu.dimension_semantics<arbitrary>], iteration_bounds = array<i64: 1, 16>, scalar_prefetch = 0 : i64, scratch_operands = 1 : i64, tpu.core_type = #tpu.core_type<tc>, window_params = [{transform_indices = @transform_0, window_bounds = array<i64: 2, 512>}, {transform_indices = @transform_1, window_bounds = array<i64: 512, 128>}, {transform_indices = @transform_2, window_bounds = array<i64: 2, 128>}]} {
    %c0_i32 = arith.constant 0 : i32
    %0 = arith.cmpi eq, %arg1, %c0_i32 : i32
    %1 = arith.extui %0 : i1 to i32
    %c0_i32_0 = arith.constant 0 : i32
    %2 = arith.cmpi ne, %1, %c0_i32_0 : i32
    scf.if %2 {
      %cst_9 = arith.constant 0.000000e+00 : f32
      %12 = vector.broadcast %cst_9 : f32 to vector<2x128xf32>
      %c0_10 = arith.constant 0 : index
      %c0_11 = arith.constant 0 : index
      %13 = vector.load %arg5[%c0_10, %c0_11] : memref<2x128xf32, #tpu.memory_space<vmem>>, vector<2x128xf32>
      tpu.vector_store %arg5[%c0_10, %c0_11], %12 {strides = array<i32>} : memref<2x128xf32, #tpu.memory_space<vmem>>, vector<2x128xf32>,
    } else {
    }
    %c0 = arith.constant 0 : index
    %c0_1 = arith.constant 0 : index
    %3 = vector.load %arg5[%c0, %c0_1] : memref<2x128xf32, #tpu.memory_space<vmem>>, vector<2x128xf32>
    %c0_2 = arith.constant 0 : index
    %c0_3 = arith.constant 0 : index
    %4 = vector.load %arg2[%c0_2, %c0_3] : memref<2x512xbf16, #tpu.memory_space<vmem>>, vector<2x512xbf16>
    %c0_4 = arith.constant 0 : index
    %c0_5 = arith.constant 0 : index
    %5 = vector.load %arg3[%c0_4, %c0_5] : memref<512x128xbf16, #tpu.memory_space<vmem>>, vector<512x128xbf16>
    %cst = arith.constant dense<0.000000e+00> : vector<2x128xf32>
    %6 = tpu.matmul %4, %5, %cst {dimension_numbers = #tpu.dot_dimension_numbers<[1], [0], [0], [1], [0, 0, 1, 1], [], []>} : vector<2x512xbf16>, vector<512x128xbf16>, vector<2x128xf32> -> vector<2x128xf32>
    %7 = arith.addf %3, %6 : vector<2x128xf32>
    %c0_6 = arith.constant 0 : index
    %c0_7 = arith.constant 0 : index
    %8 = vector.load %arg5[%c0_6, %c0_7] : memref<2x128xf32, #tpu.memory_space<vmem>>, vector<2x128xf32>
    tpu.vector_store %arg5[%c0_6, %c0_7], %7 {strides = array<i32>} : memref<2x128xf32, #tpu.memory_space<vmem>>, vector<2x128xf32>,
    %c15_i32 = arith.constant 15 : i32
    %9 = arith.cmpi eq, %arg1, %c15_i32 : i32
    %10 = arith.extui %9 : i1 to i32
    %c0_i32_8 = arith.constant 0 : i32
    %11 = arith.cmpi ne, %10, %c0_i32_8 : i32
    scf.if %11 {
      %c0_9 = arith.constant 0 : index
      %c0_10 = arith.constant 0 : index
      %12 = vector.load %arg5[%c0_9, %c0_10] : memref<2x128xf32, #tpu.memory_space<vmem>>, vector<2x128xf32>
      %13 = arith.negf %12 : vector<2x128xf32>
      %14 = math.exp %13 : vector<2x128xf32>
      %cst_11 = arith.constant 1.000000e+00 : f32
      %15 = vector.broadcast %cst_11 : f32 to vector<2x128xf32>
      %16 = arith.addf %15, %14 : vector<2x128xf32>
      %17 = arith.divf %15, %16 : vector<2x128xf32>
      %c0_12 = arith.constant 0 : index
      %c0_13 = arith.constant 0 : index
      %18 = vector.load %arg4[%c0_12, %c0_13] : memref<2x128xf32, #tpu.memory_space<vmem>>, vector<2x128xf32>
      tpu.vector_store %arg4[%c0_12, %c0_13], %17 {strides = array<i32>} : memref<2x128xf32, #tpu.memory_space<vmem>>, vector<2x128xf32>,
    } else {
    }
    return
  }
  func.func @transform_0(%arg0: i32, %arg1: i32) -> (i32, i32) {
    %c0_i32 = arith.constant 0 : i32
    return %arg0, %arg1 : i32, i32
  }
  func.func @transform_1(%arg0: i32, %arg1: i32) -> (i32, i32) {
    %c0_i32 = arith.constant 0 : i32
    %c0_i32_0 = arith.constant 0 : i32
    return %arg1, %c0_i32 : i32, i32
  }
  func.func @transform_2(%arg0: i32, %arg1: i32) -> (i32, i32) {
    %c0_i32 = arith.constant 0 : i32
    %c0_i32_0 = arith.constant 0 : i32
    return %arg0, %c0_i32 : i32, i32
  }
}

</mosaic_0001>

<llo_original>
// kernel: discriminator_forward.5
$region0: #{discriminator_forward.5}
  #allocation0 [shape = 'u32[]', space=smem, size = 0x4, offset = 0x4, fixed_abs, tag = 'smem constant byte address 0x4 - core index']
  #allocation1 [shape = 'u32[72,128]{1,0:T(1,128)}', space=vmem, size = 0x9000, scoped, tag = 'internal scratch']
  #allocation2 [shape = 'f32[512,64]{1,0:T(8,128)}', space=vmem, size = 0x40000, scoped, tag = 'scratch operand']
  %s0 = inlined_call_operand.vmem [shape: bf16[2048,128], index: 0, kind: input, shape index: {}]
  %s1 = inlined_call_operand.vmem [shape: bf16[128,64], index: 1, kind: input, shape index: {}]
  %s2 = inlined_call_operand.vmem [shape: bf16[2048,64], index: 2, kind: output, shape index: {}]
  %s3 = sld [smem:[#allocation0]]
  $region49: #{discriminator_forward.5} parent=0
    _
  %s5 = ssub.s32 1, %s3
  %s6 = scalar_select 0, %s5, %s3
  loop: start=0, step=1, limit=6
  $region2: #{discriminator_forward.5} parent=0 // loop_pre_header
    _
  $region3: #{discriminator_forward.5} parent=0 // loop_header
    %s8 = sphi 0, %s12
    %p9 = scmp.ge.s32.totalorder %s8, 6
    %s15 = sphi 0, %s27
    %s16 = sphi 0, %s23
    %s17 = sphi 0, %s15
    %s18 = sphi 0, %s16
    %s19 = sphi 0, %s17
    %s20 = sphi 0, %s18
    %s32 = sphi 0, %s34
    %s35 = sphi 0, %s32
    %s36 = sphi 0, %s35
    %s52 = sphi 0, %s36
    %s58 = sphi 0, %s60
    %s61 = sphi 0, %s58
    %s62 = sphi 0, %s61
    %s78 = sphi 0, %s62
    %s84 = sphi 0, %s86
    %s87 = sphi 0, %s84
    %s88 = sphi 0, %s87
    %s104 = sphi 0, %s88
  $region4: #{discriminator_forward.5} parent=0 // loop_header_branch
    %11 = sbr.rel (%p9) target = $region8
  $region5: #{discriminator_forward.5} parent=0 // loop_body
    %s13 = ssub.s32 %s8, 1
    %s14 = ssub.s32 %s8, 2
    %s21 = sadd.s32 1, %s16
    %p22 = scmp.ge.s32.totalorder %s21, 1
    %s23 = scalar_select %p22, 0, %s21
    %s24 = sadd.s32 1, %s15
    %s25 = scalar_select %p22, %s24, %s15
    %p26 = scmp.ge.s32.totalorder %s25, 4
    %s27 = scalar_select %p26, 0, %s25
    %s28 = ssub.s32 %s15, %s27
    %s29 = ssub.s32 %s16, %s23
    %s30 = sor.u32 %s28, %s29
    %p31 = scmp.eq.s32.totalorder %s30, 0
    %s33 = sadd.s32 %s32, 1
    %s34 = scalar_select %p31, %s32, %s33
    %p37 = pneg %p31
    %p38 = scmp.eq.s32.totalorder %s8, 3
    %p39 = por %p37, %p38
    %p40 = scmp.ne.s32.totalorder %s32, %s35
    %p41 = scmp.eq.s32.totalorder %s8, 0
    %p42 = por %p40, %p41
    %p43 = scmp.ne.s32.totalorder %s32, %s35
    %p44 = scmp.eq.s32.totalorder %s13, 3
    %p45 = por %p43, %p44
    %p46 = scmp.ne.s32.totalorder %s35, %s36
    %p47 = scmp.eq.s32.totalorder %s13, 0
    %p48 = por %p46, %p47
    %p49 = scmp.ne.s32.totalorder %s35, %s36
    %p50 = scmp.eq.s32.totalorder %s14, 3
    %p51 = por %p49, %p50
    %p53 = scmp.ne.s32.totalorder %s36, %s52
    %p54 = scmp.eq.s32.totalorder %s14, 0
    %p55 = por %p53, %p54
    %s56 = ssub.s32 %s16, %s23
    %p57 = scmp.eq.s32.totalorder %s56, 0
    %s59 = sadd.s32 %s58, 1
    %s60 = scalar_select %p57, %s58, %s59
    %p63 = pneg %p57
    %p64 = scmp.eq.s32.totalorder %s8, 3
    %p65 = por %p63, %p64
    %p66 = scmp.ne.s32.totalorder %s58, %s61
    %p67 = scmp.eq.s32.totalorder %s8, 0
    %p68 = por %p66, %p67
    %p69 = scmp.ne.s32.totalorder %s58, %s61
    %p70 = scmp.eq.s32.totalorder %s13, 3
    %p71 = por %p69, %p70
    %p72 = scmp.ne.s32.totalorder %s61, %s62
    %p73 = scmp.eq.s32.totalorder %s13, 0
    %p74 = por %p72, %p73
    %p75 = scmp.ne.s32.totalorder %s61, %s62
    %p76 = scmp.eq.s32.totalorder %s14, 3
    %p77 = por %p75, %p76
    %p79 = scmp.ne.s32.totalorder %s62, %s78
    %p80 = scmp.eq.s32.totalorder %s14, 0
    %p81 = por %p79, %p80
    %s82 = ssub.s32 %s15, %s27
    %p83 = scmp.eq.s32.totalorder %s82, 0
    %s85 = sadd.s32 %s84, 1
    %s86 = scalar_select %p83, %s84, %s85
    %p89 = pneg %p83
    %p90 = scmp.eq.s32.totalorder %s8, 3
    %p91 = por %p89, %p90
    %p92 = scmp.ne.s32.totalorder %s84, %s87
    %p93 = scmp.eq.s32.totalorder %s8, 0
    %p94 = por %p92, %p93
    %p95 = scmp.ne.s32.totalorder %s84, %s87
    %p96 = scmp.eq.s32.totalorder %s13, 3
    %p97 = por %p95, %p96
    %p98 = scmp.ne.s32.totalorder %s87, %s88
    %p99 = scmp.eq.s32.totalorder %s13, 0
    %p100 = por %p98, %p99
    %p101 = scmp.ne.s32.totalorder %s87, %s88
    %p102 = scmp.eq.s32.totalorder %s14, 3
    %p103 = por %p101, %p102
    %p105 = scmp.ne.s32.totalorder %s88, %s104
    %p106 = scmp.eq.s32.totalorder %s14, 0
    %p107 = por %p105, %p106
    %p108 = scmp.le.s32.totalorder 1, %s8
    %p109 = scmp.lt.s32.totalorder %s8, 5
    %p110 = pnand %p108, %p109
    %p111 = pneg %p110
    // Predicated region
    $region9: #{discriminator_forward.5} parent=5 // pred_check
      _
    $region10: #{discriminator_forward.5} parent=5 // pred_check_branch
      %113 = sbr.rel (%p110) target = $region12
    $region11: #{discriminator_forward.5} parent=5 // pred_region
      %s114 = ssub.s32 %s8, 1
      // Predicated region
      $region13: #{discriminator_forward.5} parent=11 // pred_check
        %p115 = pneg %p74
      $region14: #{discriminator_forward.5} parent=11 // pred_check_branch
        %117 = sbr.rel (%p115) target = $region16
      $region15: #{discriminator_forward.5} parent=11 // pred_region
        %s118 = smul.u32 16, %s18
        %p119 = scmp.lt.s32.totalorder %s118, 15
        %s120 = scalar_select %p119, %s118, 15
        %s121 = smul.addr %s120, 4
        %s122 = scalar_lea.vmem %s1, %s121
        %s123 = smul.u32 16, %s18
      $region16: #{discriminator_forward.5} parent=11 // pred_fallthru
        _
    $region12: #{discriminator_forward.5} parent=5 // pred_fallthru
      _
    %p124 = scmp.lt.s32.totalorder %s8, 4
    // Predicated region
    $region17: #{discriminator_forward.5} parent=5 // pred_check
      %p125 = pneg %p124
    $region18: #{discriminator_forward.5} parent=5 // pred_check_branch
      %127 = sbr.rel (%p125) target = $region20
    $region19: #{discriminator_forward.5} parent=5 // pred_region
      // Predicated region
      $region21: #{discriminator_forward.5} parent=19 // pred_check
        %p128 = pneg %p42
      $region22: #{discriminator_forward.5} parent=19 // pred_check_branch
        %130 = sbr.rel (%p128) target = $region24
      $region23: #{discriminator_forward.5} parent=19 // pred_region
        %s131 = smul.u32 64, %s15
        %p132 = scmp.lt.s32.totalorder %s131, 255
        %s133 = scalar_select %p132, %s131, 255
        %p134 = scmp.lt.s32.totalorder %s16, 0
        %s135 = scalar_select %p134, %s16, 0
        %s136 = sadd.s32 %s135, %s133
        %s137 = smul.addr %s136, 4
        %s138 = scalar_lea.vmem %s0, %s137
        %s139 = smul.u32 64, %s15
      $region24: #{discriminator_forward.5} parent=19 // pred_fallthru
        _
    $region20: #{discriminator_forward.5} parent=5 // pred_fallthru
      _
    %p140 = scmp.le.s32.totalorder 1, %s8
    %p141 = scmp.lt.s32.totalorder %s8, 5
    %p142 = pnand %p140, %p141
    %p143 = pneg %p142
    // Predicated region
    $region25: #{discriminator_forward.5} parent=5 // pred_check
      _
    $region26: #{discriminator_forward.5} parent=5 // pred_check_branch
      %145 = sbr.rel (%p142) target = $region28
    $region27: #{discriminator_forward.5} parent=5 // pred_region
      %s146 = ssub.s32 %s8, 1
      %s147 = smul.u32 64, %s17
      %p148 = scmp.lt.s32.totalorder %s147, 255
      %s149 = scalar_select %p148, %s147, 255
      %p150 = scmp.lt.s32.totalorder %s18, 0
      %s151 = scalar_select %p150, %s18, 0
      %s152 = sadd.s32 %s151, %s149
      %s153 = smul.addr %s152, 4
      %s154 = scalar_lea.vmem %s0, %s153
      %p155 = pneg %p48
      %p156 = pneg %p45
      %s157 = smul.u32 16, %s18
      %p158 = scmp.lt.s32.totalorder %s157, 15
      %s159 = scalar_select %p158, %s157, 15
      %s160 = smul.addr %s159, 4
      %s161 = scalar_lea.vmem %s1, %s160
      %p162 = pneg %p74
      %p163 = pneg %p71
      %p164 = pneg %p100
      %p165 = pneg %p97
      %s166 = smul.u32 64, %s17
      %p167 = scmp.lt.s32.totalorder %s166, 255
      %s168 = scalar_select %p167, %s166, 255
      %s169 = smul.addr %s168, 4
      %s170 = scalar_lea.vmem %s2, %s169
      %s171 = smul.u32 64, %s17
      %p172 = scmp.lt.s32.totalorder %s171, 255
      %s173 = scalar_select %p172, %s171, 255
      %p174 = scmp.lt.s32.totalorder %s18, 0
      %s175 = scalar_select %p174, %s18, 0
      %s176 = sadd.s32 %s175, %s173
      %s177 = smul.addr %s176, 4
      %s178 = scalar_lea.vmem %s0, %s177
      %s179 = smul.u32 64, %s17
      %s180 = smul.u32 16, %s18
      %p181 = scmp.lt.s32.totalorder %s180, 15
      %s182 = scalar_select %p181, %s180, 15
      %s183 = smul.addr %s182, 4
      %s184 = scalar_lea.vmem %s1, %s183
      %s185 = smul.u32 16, %s18
      %s186 = smul.u32 64, %s17
      %p187 = scmp.lt.s32.totalorder %s186, 255
      %s188 = scalar_select %p187, %s186, 255
      %s189 = smul.addr %s188, 4
      %s190 = scalar_lea.vmem %s2, %s189
      %s191 = smul.u32 64, %s17
      %p192 = scmp.eq.s32.totalorder %s18, 0
      // Predicated region
      $region29: #{discriminator_forward.5} parent=27 // pred_check
        %p193 = pneg %p192
      $region30: #{discriminator_forward.5} parent=27 // pred_check_branch
        %195 = sbr.rel (%p193) target = $region32
      $region31: #{discriminator_forward.5} parent=27 // pred_region
        %vm196 = vcmask 523264
        %197 = vst.msk [vmem:[#allocation2] sm:$0xff] %vm196, 0.0
        %198 = vst.msk [vmem:[#allocation2 + $0x8] sm:$0xff] %vm196, 0.0
        %199 = vst.msk [vmem:[#allocation2 + $0x10] sm:$0xff] %vm196, 0.0
        %200 = vst.msk [vmem:[#allocation2 + $0x18] sm:$0xff] %vm196, 0.0
        %201 = vst.msk [vmem:[#allocation2 + $0x20] sm:$0xff] %vm196, 0.0
        %202 = vst.msk [vmem:[#allocation2 + $0x28] sm:$0xff] %vm196, 0.0
        %203 = vst.msk [vmem:[#allocation2 + $0x30] sm:$0xff] %vm196, 0.0
        %204 = vst.msk [vmem:[#allocation2 + $0x38] sm:$0xff] %vm196, 0.0
        %205 = vst.msk [vmem:[#allocation2 + $0x40] sm:$0xff] %vm196, 0.0
        %206 = vst.msk [vmem:[#allocation2 + $0x48] sm:$0xff] %vm196, 0.0
        %207 = vst.msk [vmem:[#allocation2 + $0x50] sm:$0xff] %vm196, 0.0
        %208 = vst.msk [vmem:[#allocation2 + $0x58] sm:$0xff] %vm196, 0.0
        %209 = vst.msk [vmem:[#allocation2 + $0x60] sm:$0xff] %vm196, 0.0
        %210 = vst.msk [vmem:[#allocation2 + $0x68] sm:$0xff] %vm196, 0.0
        %211 = vst.msk [vmem:[#allocation2 + $0x70] sm:$0xff] %vm196, 0.0
        %212 = vst.msk [vmem:[#allocation2 + $0x78] sm:$0xff] %vm196, 0.0
        %213 = vst.msk [vmem:[#allocation2 + $0x80] sm:$0xff] %vm196, 0.0
        %214 = vst.msk [vmem:[#allocation2 + $0x88] sm:$0xff] %vm196, 0.0
        %215 = vst.msk [vmem:[#allocation2 + $0x90] sm:$0xff] %vm196, 0.0
        %216 = vst.msk [vmem:[#allocation2 + $0x98] sm:$0xff] %vm196, 0.0
        %217 = vst.msk [vmem:[#allocation2 + $0xa0] sm:$0xff] %vm196, 0.0
        %218 = vst.msk [vmem:[#allocation2 + $0xa8] sm:$0xff] %vm196, 0.0
        %219 = vst.msk [vmem:[#allocation2 + $0xb0] sm:$0xff] %vm196, 0.0
        %220 = vst.msk [vmem:[#allocation2 + $0xb8] sm:$0xff] %vm196, 0.0
        %221 = vst.msk [vmem:[#allocation2 + $0xc0] sm:$0xff] %vm196, 0.0
        %222 = vst.msk [vmem:[#allocation2 + $0xc8] sm:$0xff] %vm196, 0.0
        %223 = vst.msk [vmem:[#allocation2 + $0xd0] sm:$0xff] %vm196, 0.0
        %224 = vst.msk [vmem:[#allocation2 + $0xd8] sm:$0xff] %vm196, 0.0
        %225 = vst.msk [vmem:[#allocation2 + $0xe0] sm:$0xff] %vm196, 0.0
        %226 = vst.msk [vmem:[#allocation2 + $0xe8] sm:$0xff] %vm196, 0.0
        %227 = vst.msk [vmem:[#allocation2 + $0xf0] sm:$0xff] %vm196, 0.0
        %228 = vst.msk [vmem:[#allocation2 + $0xf8] sm:$0xff] %vm196, 0.0
        %229 = vst.msk [vmem:[#allocation2 + $0x100] sm:$0xff] %vm196, 0.0
        %230 = vst.msk [vmem:[#allocation2 + $0x108] sm:$0xff] %vm196, 0.0
        %231 = vst.msk [vmem:[#allocation2 + $0x110] sm:$0xff] %vm196, 0.0
        %232 = vst.msk [vmem:[#allocation2 + $0x118] sm:$0xff] %vm196, 0.0
        %233 = vst.msk [vmem:[#allocation2 + $0x120] sm:$0xff] %vm196, 0.0
        %234 = vst.msk [vmem:[#allocation2 + $0x128] sm:$0xff] %vm196, 0.0
        %235 = vst.msk [vmem:[#allocation2 + $0x130] sm:$0xff] %vm196, 0.0
        %236 = vst.msk [vmem:[#allocation2 + $0x138] sm:$0xff] %vm196, 0.0
        %237 = vst.msk [vmem:[#allocation2 + $0x140] sm:$0xff] %vm196, 0.0
        %238 = vst.msk [vmem:[#allocation2 + $0x148] sm:$0xff] %vm196, 0.0
        %239 = vst.msk [vmem:[#allocation2 + $0x150] sm:$0xff] %vm196, 0.0
        %240 = vst.msk [vmem:[#allocation2 + $0x158] sm:$0xff] %vm196, 0.0
        %241 = vst.msk [vmem:[#allocation2 + $0x160] sm:$0xff] %vm196, 0.0
        %242 = vst.msk [vmem:[#allocation2 + $0x168] sm:$0xff] %vm196, 0.0
        %243 = vst.msk [vmem:[#allocation2 + $0x170] sm:$0xff] %vm196, 0.0
        %244 = vst.msk [vmem:[#allocation2 + $0x178] sm:$0xff] %vm196, 0.0
        %245 = vst.msk [vmem:[#allocation2 + $0x180] sm:$0xff] %vm196, 0.0
        %246 = vst.msk [vmem:[#allocation2 + $0x188] sm:$0xff] %vm196, 0.0
        %247 = vst.msk [vmem:[#allocation2 + $0x190] sm:$0xff] %vm196, 0.0
        %248 = vst.msk [vmem:[#allocation2 + $0x198] sm:$0xff] %vm196, 0.0
        %249 = vst.msk [vmem:[#allocation2 + $0x1a0] sm:$0xff] %vm196, 0.0
        %250 = vst.msk [vmem:[#allocation2 + $0x1a8] sm:$0xff] %vm196, 0.0
        %251 = vst.msk [vmem:[#allocation2 + $0x1b0] sm:$0xff] %vm196, 0.0
        %252 = vst.msk [vmem:[#allocation2 + $0x1b8] sm:$0xff] %vm196, 0.0
        %253 = vst.msk [vmem:[#allocation2 + $0x1c0] sm:$0xff] %vm196, 0.0
        %254 = vst.msk [vmem:[#allocation2 + $0x1c8] sm:$0xff] %vm196, 0.0
        %255 = vst.msk [vmem:[#allocation2 + $0x1d0] sm:$0xff] %vm196, 0.0
        %256 = vst.msk [vmem:[#allocation2 + $0x1d8] sm:$0xff] %vm196, 0.0
        %257 = vst.msk [vmem:[#allocation2 + $0x1e0] sm:$0xff] %vm196, 0.0
        %258 = vst.msk [vmem:[#allocation2 + $0x1e8] sm:$0xff] %vm196, 0.0
        %259 = vst.msk [vmem:[#allocation2 + $0x1f0] sm:$0xff] %vm196, 0.0
        %260 = vst.msk [vmem:[#allocation2 + $0x1f8] sm:$0xff] %vm196, 0.0
      $region32: #{discriminator_forward.5} parent=27 // pred_fallthru
        _
      %v261 = vld [vmem:[#allocation2] sm:$0xff]
      %v262 = vld [vmem:[#allocation2 + $0x8] sm:$0xff]
      %v263 = vld [vmem:[#allocation2 + $0x10] sm:$0xff]
      %v264 = vld [vmem:[#allocation2 + $0x18] sm:$0xff]
      %v265 = vld [vmem:[#allocation2 + $0x20] sm:$0xff]
      %v266 = vld [vmem:[#allocation2 + $0x28] sm:$0xff]
      %v267 = vld [vmem:[#allocation2 + $0x30] sm:$0xff]
      %v268 = vld [vmem:[#allocation2 + $0x38] sm:$0xff]
      %v269 = vld [vmem:[#allocation2 + $0x40] sm:$0xff]
      %v270 = vld [vmem:[#allocation2 + $0x48] sm:$0xff]
      %v271 = vld [vmem:[#allocation2 + $0x50] sm:$0xff]
      %v272 = vld [vmem:[#allocation2 + $0x58] sm:$0xff]
      %v273 = vld [vmem:[#allocation2 + $0x60] sm:$0xff]
      %v274 = vld [vmem:[#allocation2 + $0x68] sm:$0xff]
      %v275 = vld [vmem:[#allocation2 + $0x70] sm:$0xff]
      %v276 = vld [vmem:[#allocation2 + $0x78] sm:$0xff]
      %v277 = vld [vmem:[#allocation2 + $0x80] sm:$0xff]
      %v278 = vld [vmem:[#allocation2 + $0x88] sm:$0xff]
      %v279 = vld [vmem:[#allocation2 + $0x90] sm:$0xff]
      %v280 = vld [vmem:[#allocation2 + $0x98] sm:$0xff]
      %v281 = vld [vmem:[#allocation2 + $0xa0] sm:$0xff]
      %v282 = vld [vmem:[#allocation2 + $0xa8] sm:$0xff]
      %v283 = vld [vmem:[#allocation2 + $0xb0] sm:$0xff]
      %v284 = vld [vmem:[#allocation2 + $0xb8] sm:$0xff]
      %v285 = vld [vmem:[#allocation2 + $0xc0] sm:$0xff]
      %v286 = vld [vmem:[#allocation2 + $0xc8] sm:$0xff]
      %v287 = vld [vmem:[#allocation2 + $0xd0] sm:$0xff]
      %v288 = vld [vmem:[#allocation2 + $0xd8] sm:$0xff]
      %v289 = vld [vmem:[#allocation2 + $0xe0] sm:$0xff]
      %v290 = vld [vmem:[#allocation2 + $0xe8] sm:$0xff]
      %v291 = vld [vmem:[#allocation2 + $0xf0] sm:$0xff]
      %v292 = vld [vmem:[#allocation2 + $0xf8] sm:$0xff]
      %v293 = vld [vmem:[#allocation2 + $0x100] sm:$0xff]
      %v294 = vld [vmem:[#allocation2 + $0x108] sm:$0xff]
      %v295 = vld [vmem:[#allocation2 + $0x110] sm:$0xff]
      %v296 = vld [vmem:[#allocation2 + $0x118] sm:$0xff]
      %v297 = vld [vmem:[#allocation2 + $0x120] sm:$0xff]
      %v298 = vld [vmem:[#allocation2 + $0x128] sm:$0xff]
      %v299 = vld [vmem:[#allocation2 + $0x130] sm:$0xff]
      %v300 = vld [vmem:[#allocation2 + $0x138] sm:$0xff]
      %v301 = vld [vmem:[#allocation2 + $0x140] sm:$0xff]
      %v302 = vld [vmem:[#allocation2 + $0x148] sm:$0xff]
      %v303 = vld [vmem:[#allocation2 + $0x150] sm:$0xff]
      %v304 = vld [vmem:[#allocation2 + $0x158] sm:$0xff]
      %v305 = vld [vmem:[#allocation2 + $0x160] sm:$0xff]
      %v306 = vld [vmem:[#allocation2 + $0x168] sm:$0xff]
      %v307 = vld [vmem:[#allocation2 + $0x170] sm:$0xff]
      %v308 = vld [vmem:[#allocation2 + $0x178] sm:$0xff]
      %v309 = vld [vmem:[#allocation2 + $0x180] sm:$0xff]
      %v310 = vld [vmem:[#allocation2 + $0x188] sm:$0xff]
      %v311 = vld [vmem:[#allocation2 + $0x190] sm:$0xff]
      %v312 = vld [vmem:[#allocation2 + $0x198] sm:$0xff]
      %v313 = vld [vmem:[#allocation2 + $0x1a0] sm:$0xff]
      %v314 = vld [vmem:[#allocation2 + $0x1a8] sm:$0xff]
      %v315 = vld [vmem:[#allocation2 + $0x1b0] sm:$0xff]
      %v316 = vld [vmem:[#allocation2 + $0x1b8] sm:$0xff]
      %v317 = vld [vmem:[#allocation2 + $0x1c0] sm:$0xff]
      %v318 = vld [vmem:[#allocation2 + $0x1c8] sm:$0xff]
      %v319 = vld [vmem:[#allocation2 + $0x1d0] sm:$0xff]
      %v320 = vld [vmem:[#allocation2 + $0x1d8] sm:$0xff]
      %v321 = vld [vmem:[#allocation2 + $0x1e0] sm:$0xff]
      %v322 = vld [vmem:[#allocation2 + $0x1e8] sm:$0xff]
      %v323 = vld [vmem:[#allocation2 + $0x1f0] sm:$0xff]
      %v324 = vld [vmem:[#allocation2 + $0x1f8] sm:$0xff]
      %v325 = vld [vmem:[%s178] sm:$0xf]
      %v326 = vld [vmem:[%s178 + $0x4] sm:$0xf]
      %v327 = vld [vmem:[%s178 + $0x8] sm:$0xf]
      %v328 = vld [vmem:[%s178 + $0xc] sm:$0xf]
      %v329 = vld [vmem:[%s178 + $0x10] sm:$0xf]
      %v330 = vld [vmem:[%s178 + $0x14] sm:$0xf]
      %v331 = vld [vmem:[%s178 + $0x18] sm:$0xf]
      %v332 = vld [vmem:[%s178 + $0x1c] sm:$0xf]
      %v333 = vld [vmem:[%s178 + $0x20] sm:$0xf]
      %v334 = vld [vmem:[%s178 + $0x24] sm:$0xf]
      %v335 = vld [vmem:[%s178 + $0x28] sm:$0xf]
      %v336 = vld [vmem:[%s178 + $0x2c] sm:$0xf]
      %v337 = vld [vmem:[%s178 + $0x30] sm:$0xf]
      %v338 = vld [vmem:[%s178 + $0x34] sm:$0xf]
      %v339 = vld [vmem:[%s178 + $0x38] sm:$0xf]
      %v340 = vld [vmem:[%s178 + $0x3c] sm:$0xf]
      %v341 = vld [vmem:[%s178 + $0x40] sm:$0xf]
      %v342 = vld [vmem:[%s178 + $0x44] sm:$0xf]
      %v343 = vld [vmem:[%s178 + $0x48] sm:$0xf]
      %v344 = vld [vmem:[%s178 + $0x4c] sm:$0xf]
      %v345 = vld [vmem:[%s178 + $0x50] sm:$0xf]
      %v346 = vld [vmem:[%s178 + $0x54] sm:$0xf]
      %v347 = vld [vmem:[%s178 + $0x58] sm:$0xf]
      %v348 = vld [vmem:[%s178 + $0x5c] sm:$0xf]
      %v349 = vld [vmem:[%s178 + $0x60] sm:$0xf]
      %v350 = vld [vmem:[%s178 + $0x64] sm:$0xf]
      %v351 = vld [vmem:[%s178 + $0x68] sm:$0xf]
      %v352 = vld [vmem:[%s178 + $0x6c] sm:$0xf]
      %v353 = vld [vmem:[%s178 + $0x70] sm:$0xf]
      %v354 = vld [vmem:[%s178 + $0x74] sm:$0xf]
      %v355 = vld [vmem:[%s178 + $0x78] sm:$0xf]
      %v356 = vld [vmem:[%s178 + $0x7c] sm:$0xf]
      %v357 = vld [vmem:[%s178 + $0x80] sm:$0xf]
      %v358 = vld [vmem:[%s178 + $0x84] sm:$0xf]
      %v359 = vld [vmem:[%s178 + $0x88] sm:$0xf]
      %v360 = vld [vmem:[%s178 + $0x8c] sm:$0xf]
      %v361 = vld [vmem:[%s178 + $0x90] sm:$0xf]
      %v362 = vld [vmem:[%s178 + $0x94] sm:$0xf]
      %v363 = vld [vmem:[%s178 + $0x98] sm:$0xf]
      %v364 = vld [vmem:[%s178 + $0x9c] sm:$0xf]
      %v365 = vld [vmem:[%s178 + $0xa0] sm:$0xf]
      %v366 = vld [vmem:[%s178 + $0xa4] sm:$0xf]
      %v367 = vld [vmem:[%s178 + $0xa8] sm:$0xf]
      %v368 = vld [vmem:[%s178 + $0xac] sm:$0xf]
      %v369 = vld [vmem:[%s178 + $0xb0] sm:$0xf]
      %v370 = vld [vmem:[%s178 + $0xb4] sm:$0xf]
      %v371 = vld [vmem:[%s178 + $0xb8] sm:$0xf]
      %v372 = vld [vmem:[%s178 + $0xbc] sm:$0xf]
      %v373 = vld [vmem:[%s178 + $0xc0] sm:$0xf]
      %v374 = vld [vmem:[%s178 + $0xc4] sm:$0xf]
      %v375 = vld [vmem:[%s178 + $0xc8] sm:$0xf]
      %v376 = vld [vmem:[%s178 + $0xcc] sm:$0xf]
      %v377 = vld [vmem:[%s178 + $0xd0] sm:$0xf]
      %v378 = vld [vmem:[%s178 + $0xd4] sm:$0xf]
      %v379 = vld [vmem:[%s178 + $0xd8] sm:$0xf]
      %v380 = vld [vmem:[%s178 + $0xdc] sm:$0xf]
      %v381 = vld [vmem:[%s178 + $0xe0] sm:$0xf]
      %v382 = vld [vmem:[%s178 + $0xe4] sm:$0xf]
      %v383 = vld [vmem:[%s178 + $0xe8] sm:$0xf]
      %v384 = vld [vmem:[%s178 + $0xec] sm:$0xf]
      %v385 = vld [vmem:[%s178 + $0xf0] sm:$0xf]
      %v386 = vld [vmem:[%s178 + $0xf4] sm:$0xf]
      %v387 = vld [vmem:[%s178 + $0xf8] sm:$0xf]
      %v388 = vld [vmem:[%s178 + $0xfc] sm:$0xf]
      %v389 = vld [vmem:[%s184] sm:$0xf]
      %v390 = vld [vmem:[%s184 + $0x4] sm:$0xf]
      %v391 = vld [vmem:[%s184 + $0x8] sm:$0xf]
      %v392 = vld [vmem:[%s184 + $0xc] sm:$0xf]
      %v393 = vld [vmem:[%s184 + $0x10] sm:$0xf]
      %v394 = vld [vmem:[%s184 + $0x14] sm:$0xf]
      %v395 = vld [vmem:[%s184 + $0x18] sm:$0xf]
      %v396 = vld [vmem:[%s184 + $0x1c] sm:$0xf]
      %v397 = vld [vmem:[%s184 + $0x20] sm:$0xf]
      %v398 = vld [vmem:[%s184 + $0x24] sm:$0xf]
      %v399 = vld [vmem:[%s184 + $0x28] sm:$0xf]
      %v400 = vld [vmem:[%s184 + $0x2c] sm:$0xf]
      %v401 = vld [vmem:[%s184 + $0x30] sm:$0xf]
      %v402 = vld [vmem:[%s184 + $0x34] sm:$0xf]
      %v403 = vld [vmem:[%s184 + $0x38] sm:$0xf]
      %v404 = vld [vmem:[%s184 + $0x3c] sm:$0xf]
      %v469 = vunpack.c.l.b16 %v325
      %v470 = vunpack.c.l.b16 %v326
      %v471 = vunpack.c.l.b16 %v327
      %v472 = vunpack.c.l.b16 %v328
      %v473 = vunpack.c.l.b16 %v329
      %v474 = vunpack.c.l.b16 %v330
      %v475 = vunpack.c.l.b16 %v331
      %v476 = vunpack.c.l.b16 %v332
      %v477 = vunpack.c.l.b16 %v333
      %v478 = vunpack.c.l.b16 %v334
      %v479 = vunpack.c.l.b16 %v335
      %v480 = vunpack.c.l.b16 %v336
      %v481 = vunpack.c.l.b16 %v337
      %v482 = vunpack.c.l.b16 %v338
      %v483 = vunpack.c.l.b16 %v339
      %v484 = vunpack.c.l.b16 %v340
      %v485 = vunpack.c.l.b16 %v341
      %v486 = vunpack.c.l.b16 %v342
      %v487 = vunpack.c.l.b16 %v343
      %v488 = vunpack.c.l.b16 %v344
      %v489 = vunpack.c.l.b16 %v345
      %v490 = vunpack.c.l.b16 %v346
      %v491 = vunpack.c.l.b16 %v347
      %v492 = vunpack.c.l.b16 %v348
      %v493 = vunpack.c.l.b16 %v349
      %v494 = vunpack.c.l.b16 %v350
      %v495 = vunpack.c.l.b16 %v351
      %v496 = vunpack.c.l.b16 %v352
      %v497 = vunpack.c.l.b16 %v353
      %v498 = vunpack.c.l.b16 %v354
      %v499 = vunpack.c.l.b16 %v355
      %v500 = vunpack.c.l.b16 %v356
      %v501 = vunpack.c.l.b16 %v357
      %v502 = vunpack.c.l.b16 %v358
      %v503 = vunpack.c.l.b16 %v359
      %v504 = vunpack.c.l.b16 %v360
      %v505 = vunpack.c.l.b16 %v361
      %v506 = vunpack.c.l.b16 %v362
      %v507 = vunpack.c.l.b16 %v363
      %v508 = vunpack.c.l.b16 %v364
      %v509 = vunpack.c.l.b16 %v365
      %v510 = vunpack.c.l.b16 %v366
      %v511 = vunpack.c.l.b16 %v367
      %v512 = vunpack.c.l.b16 %v368
      %v513 = vunpack.c.l.b16 %v369
      %v514 = vunpack.c.l.b16 %v370
      %v515 = vunpack.c.l.b16 %v371
      %v516 = vunpack.c.l.b16 %v372
      %v517 = vunpack.c.l.b16 %v373
      %v518 = vunpack.c.l.b16 %v374
      %v519 = vunpack.c.l.b16 %v375
      %v520 = vunpack.c.l.b16 %v376
      %v521 = vunpack.c.l.b16 %v377
      %v522 = vunpack.c.l.b16 %v378
      %v523 = vunpack.c.l.b16 %v379
      %v524 = vunpack.c.l.b16 %v380
      %v525 = vunpack.c.l.b16 %v381
      %v526 = vunpack.c.l.b16 %v382
      %v527 = vunpack.c.l.b16 %v383
      %v528 = vunpack.c.l.b16 %v384
      %v529 = vunpack.c.l.b16 %v385
      %v530 = vunpack.c.l.b16 %v386
      %v531 = vunpack.c.l.b16 %v387
      %v532 = vunpack.c.l.b16 %v388
      %v533 = vpack.c.b16 %v470, %v469
      %v534 = vpack.c.b16 %v472, %v471
      %v535 = vpack.c.b16 %v474, %v473
      %v536 = vpack.c.b16 %v476, %v475
      %v537 = vpack.c.b16 %v478, %v477
      %v538 = vpack.c.b16 %v480, %v479
      %v539 = vpack.c.b16 %v482, %v481
      %v540 = vpack.c.b16 %v484, %v483
      %v541 = vpack.c.b16 %v486, %v485
      %v542 = vpack.c.b16 %v488, %v487
      %v543 = vpack.c.b16 %v490, %v489
      %v544 = vpack.c.b16 %v492, %v491
      %v545 = vpack.c.b16 %v494, %v493
      %v546 = vpack.c.b16 %v496, %v495
      %v547 = vpack.c.b16 %v498, %v497
      %v548 = vpack.c.b16 %v500, %v499
      %v549 = vpack.c.b16 %v502, %v501
      %v550 = vpack.c.b16 %v504, %v503
      %v551 = vpack.c.b16 %v506, %v505
      %v552 = vpack.c.b16 %v508, %v507
      %v553 = vpack.c.b16 %v510, %v509
      %v554 = vpack.c.b16 %v512, %v511
      %v555 = vpack.c.b16 %v514, %v513
      %v556 = vpack.c.b16 %v516, %v515
      %v557 = vpack.c.b16 %v518, %v517
      %v558 = vpack.c.b16 %v520, %v519
      %v559 = vpack.c.b16 %v522, %v521
      %v560 = vpack.c.b16 %v524, %v523
      %v561 = vpack.c.b16 %v526, %v525
      %v562 = vpack.c.b16 %v528, %v527
      %v563 = vpack.c.b16 %v530, %v529
      %v564 = vpack.c.b16 %v532, %v531
      %v613 = vunpack.c.l.b16 %v389
      %v614 = vunpack.c.l.b16 %v390
      %v615 = vunpack.c.l.b16 %v391
      %v616 = vunpack.c.l.b16 %v392
      %v617 = vunpack.c.l.b16 %v393
      %v618 = vunpack.c.l.b16 %v394
      %v619 = vunpack.c.l.b16 %v395
      %v620 = vunpack.c.l.b16 %v396
      %v621 = vunpack.c.l.b16 %v397
      %v622 = vunpack.c.l.b16 %v398
      %v623 = vunpack.c.l.b16 %v399
      %v624 = vunpack.c.l.b16 %v400
      %v625 = vunpack.c.l.b16 %v401
      %v626 = vunpack.c.l.b16 %v402
      %v627 = vunpack.c.l.b16 %v403
      %v628 = vunpack.c.l.b16 %v404
      %v629 = vpack.c.b16 %v614, %v613
      %v630 = vpack.c.b16 %v616, %v615
      %v631 = vpack.c.b16 %v618, %v617
      %v632 = vpack.c.b16 %v620, %v619
      %v633 = vpack.c.b16 %v622, %v621
      %v634 = vpack.c.b16 %v624, %v623
      %v635 = vpack.c.b16 %v626, %v625
      %v636 = vpack.c.b16 %v628, %v627
      %645 = vmatpush.bf16.msra.mxu0 %v636
      %646 = vmatpush.bf16.msra.mxu0 %v635
      %647 = vmatpush.bf16.msra.mxu0 %v634
      %648 = vmatpush.bf16.msra.mxu0 %v633
      %649 = vmatpush.bf16.msra.mxu0 %v632
      %650 = vmatpush.bf16.msra.mxu0 %v631
      %651 = vmatpush.bf16.msra.mxu0 %v630
      %652 = vmatpush.bf16.msra.mxu0 %v629
      %653 = vmatmul.bf16.gmra.mxu0 %v533
      %v654 = vpop.f32.mrf.mxu0
      %v655 = vadd.f32 0.0, %v654
      %v656 = vpop.f32.mrf.mxu0
      %v657 = vadd.f32 0.0, %v656
      %658 = vmatmul.bf16.gmra.mxu0 %v534
      %v659 = vpop.f32.mrf.mxu0
      %v660 = vadd.f32 0.0, %v659
      %v661 = vpop.f32.mrf.mxu0
      %v662 = vadd.f32 0.0, %v661
      %663 = vmatmul.bf16.gmra.mxu0 %v535
      %v664 = vpop.f32.mrf.mxu0
      %v665 = vadd.f32 0.0, %v664
      %v666 = vpop.f32.mrf.mxu0
      %v667 = vadd.f32 0.0, %v666
      %668 = vmatmul.bf16.gmra.mxu0 %v536
      %v669 = vpop.f32.mrf.mxu0
      %v670 = vadd.f32 0.0, %v669
      %v671 = vpop.f32.mrf.mxu0
      %v672 = vadd.f32 0.0, %v671
      %673 = vmatmul.bf16.gmra.mxu0 %v537
      %v674 = vpop.f32.mrf.mxu0
      %v675 = vadd.f32 0.0, %v674
      %v676 = vpop.f32.mrf.mxu0
      %v677 = vadd.f32 0.0, %v676
      %678 = vmatmul.bf16.gmra.mxu0 %v538
      %v679 = vpop.f32.mrf.mxu0
      %v680 = vadd.f32 0.0, %v679
      %v681 = vpop.f32.mrf.mxu0
      %v682 = vadd.f32 0.0, %v681
      %683 = vmatmul.bf16.gmra.mxu0 %v539
      %v684 = vpop.f32.mrf.mxu0
      %v685 = vadd.f32 0.0, %v684
      %v686 = vpop.f32.mrf.mxu0
      %v687 = vadd.f32 0.0, %v686
      %688 = vmatmul.bf16.gmra.mxu0 %v540
      %v689 = vpop.f32.mrf.mxu0
      %v690 = vadd.f32 0.0, %v689
      %v691 = vpop.f32.mrf.mxu0
      %v692 = vadd.f32 0.0, %v691
      %693 = vmatmul.bf16.gmra.mxu0 %v541
      %v694 = vpop.f32.mrf.mxu0
      %v695 = vadd.f32 0.0, %v694
      %v696 = vpop.f32.mrf.mxu0
      %v697 = vadd.f32 0.0, %v696
      %698 = vmatmul.bf16.gmra.mxu0 %v542
      %v699 = vpop.f32.mrf.mxu0
      %v700 = vadd.f32 0.0, %v699
      %v701 = vpop.f32.mrf.mxu0
      %v702 = vadd.f32 0.0, %v701
      %703 = vmatmul.bf16.gmra.mxu0 %v543
      %v704 = vpop.f32.mrf.mxu0
      %v705 = vadd.f32 0.0, %v704
      %v706 = vpop.f32.mrf.mxu0
      %v707 = vadd.f32 0.0, %v706
      %708 = vmatmul.bf16.gmra.mxu0 %v544
      %v709 = vpop.f32.mrf.mxu0
      %v710 = vadd.f32 0.0, %v709
      %v711 = vpop.f32.mrf.mxu0
      %v712 = vadd.f32 0.0, %v711
      %713 = vmatmul.bf16.gmra.mxu0 %v545
      %v714 = vpop.f32.mrf.mxu0
      %v715 = vadd.f32 0.0, %v714
      %v716 = vpop.f32.mrf.mxu0
      %v717 = vadd.f32 0.0, %v716
      %718 = vmatmul.bf16.gmra.mxu0 %v546
      %v719 = vpop.f32.mrf.mxu0
      %v720 = vadd.f32 0.0, %v719
      %v721 = vpop.f32.mrf.mxu0
      %v722 = vadd.f32 0.0, %v721
      %723 = vmatmul.bf16.gmra.mxu0 %v547
      %v724 = vpop.f32.mrf.mxu0
      %v725 = vadd.f32 0.0, %v724
      %v726 = vpop.f32.mrf.mxu0
      %v727 = vadd.f32 0.0, %v726
      %728 = vmatmul.bf16.gmra.mxu0 %v548
      %v729 = vpop.f32.mrf.mxu0
      %v730 = vadd.f32 0.0, %v729
      %v731 = vpop.f32.mrf.mxu0
      %v732 = vadd.f32 0.0, %v731
      %733 = vmatmul.bf16.gmra.mxu0 %v549
      %v734 = vpop.f32.mrf.mxu0
      %v735 = vadd.f32 0.0, %v734
      %v736 = vpop.f32.mrf.mxu0
      %v737 = vadd.f32 0.0, %v736
      %738 = vmatmul.bf16.gmra.mxu0 %v550
      %v739 = vpop.f32.mrf.mxu0
      %v740 = vadd.f32 0.0, %v739
      %v741 = vpop.f32.mrf.mxu0
      %v742 = vadd.f32 0.0, %v741
      %743 = vmatmul.bf16.gmra.mxu0 %v551
      %v744 = vpop.f32.mrf.mxu0
      %v745 = vadd.f32 0.0, %v744
      %v746 = vpop.f32.mrf.mxu0
      %v747 = vadd.f32 0.0, %v746
      %748 = vmatmul.bf16.gmra.mxu0 %v552
      %v749 = vpop.f32.mrf.mxu0
      %v750 = vadd.f32 0.0, %v749
      %v751 = vpop.f32.mrf.mxu0
      %v752 = vadd.f32 0.0, %v751
      %753 = vmatmul.bf16.gmra.mxu0 %v553
      %v754 = vpop.f32.mrf.mxu0
      %v755 = vadd.f32 0.0, %v754
      %v756 = vpop.f32.mrf.mxu0
      %v757 = vadd.f32 0.0, %v756
      %758 = vmatmul.bf16.gmra.mxu0 %v554
      %v759 = vpop.f32.mrf.mxu0
      %v760 = vadd.f32 0.0, %v759
      %v761 = vpop.f32.mrf.mxu0
      %v762 = vadd.f32 0.0, %v761
      %763 = vmatmul.bf16.gmra.mxu0 %v555
      %v764 = vpop.f32.mrf.mxu0
      %v765 = vadd.f32 0.0, %v764
      %v766 = vpop.f32.mrf.mxu0
      %v767 = vadd.f32 0.0, %v766
      %768 = vmatmul.bf16.gmra.mxu0 %v556
      %v769 = vpop.f32.mrf.mxu0
      %v770 = vadd.f32 0.0, %v769
      %v771 = vpop.f32.mrf.mxu0
      %v772 = vadd.f32 0.0, %v771
      %773 = vmatmul.bf16.gmra.mxu0 %v557
      %v774 = vpop.f32.mrf.mxu0
      %v775 = vadd.f32 0.0, %v774
      %v776 = vpop.f32.mrf.mxu0
      %v777 = vadd.f32 0.0, %v776
      %778 = vmatmul.bf16.gmra.mxu0 %v558
      %v779 = vpop.f32.mrf.mxu0
      %v780 = vadd.f32 0.0, %v779
      %v781 = vpop.f32.mrf.mxu0
      %v782 = vadd.f32 0.0, %v781
      %783 = vmatmul.bf16.gmra.mxu0 %v559
      %v784 = vpop.f32.mrf.mxu0
      %v785 = vadd.f32 0.0, %v784
      %v786 = vpop.f32.mrf.mxu0
      %v787 = vadd.f32 0.0, %v786
      %788 = vmatmul.bf16.gmra.mxu0 %v560
      %v789 = vpop.f32.mrf.mxu0
      %v790 = vadd.f32 0.0, %v789
      %v791 = vpop.f32.mrf.mxu0
      %v792 = vadd.f32 0.0, %v791
      %793 = vmatmul.bf16.gmra.mxu0 %v561
      %v794 = vpop.f32.mrf.mxu0
      %v795 = vadd.f32 0.0, %v794
      %v796 = vpop.f32.mrf.mxu0
      %v797 = vadd.f32 0.0, %v796
      %798 = vmatmul.bf16.gmra.mxu0 %v562
      %v799 = vpop.f32.mrf.mxu0
      %v800 = vadd.f32 0.0, %v799
      %v801 = vpop.f32.mrf.mxu0
      %v802 = vadd.f32 0.0, %v801
      %803 = vmatmul.bf16.gmra.mxu0 %v563
      %v804 = vpop.f32.mrf.mxu0
      %v805 = vadd.f32 0.0, %v804
      %v806 = vpop.f32.mrf.mxu0
      %v807 = vadd.f32 0.0, %v806
      %808 = vmatmul.bf16.gmra.mxu0 %v564
      %v809 = vpop.f32.mrf.mxu0
      %v810 = vadd.f32 0.0, %v809
      %v811 = vpop.f32.mrf.mxu0
      %v812 = vadd.f32 0.0, %v811
      %813 = vdwg.mxu0
      %v814 = vadd.f32 %v261, %v655
      %v815 = vadd.f32 %v262, %v657
      %v816 = vadd.f32 %v263, %v660
      %v817 = vadd.f32 %v264, %v662
      %v818 = vadd.f32 %v265, %v665
      %v819 = vadd.f32 %v266, %v667
      %v820 = vadd.f32 %v267, %v670
      %v821 = vadd.f32 %v268, %v672
      %v822 = vadd.f32 %v269, %v675
      %v823 = vadd.f32 %v270, %v677
      %v824 = vadd.f32 %v271, %v680
      %v825 = vadd.f32 %v272, %v682
      %v826 = vadd.f32 %v273, %v685
      %v827 = vadd.f32 %v274, %v687
      %v828 = vadd.f32 %v275, %v690
      %v829 = vadd.f32 %v276, %v692
      %v830 = vadd.f32 %v277, %v695
      %v831 = vadd.f32 %v278, %v697
      %v832 = vadd.f32 %v279, %v700
      %v833 = vadd.f32 %v280, %v702
      %v834 = vadd.f32 %v281, %v705
      %v835 = vadd.f32 %v282, %v707
      %v836 = vadd.f32 %v283, %v710
      %v837 = vadd.f32 %v284, %v712
      %v838 = vadd.f32 %v285, %v715
      %v839 = vadd.f32 %v286, %v717
      %v840 = vadd.f32 %v287, %v720
      %v841 = vadd.f32 %v288, %v722
      %v842 = vadd.f32 %v289, %v725
      %v843 = vadd.f32 %v290, %v727
      %v844 = vadd.f32 %v291, %v730
      %v845 = vadd.f32 %v292, %v732
      %v846 = vadd.f32 %v293, %v735
      %v847 = vadd.f32 %v294, %v737
      %v848 = vadd.f32 %v295, %v740
      %v849 = vadd.f32 %v296, %v742
      %v850 = vadd.f32 %v297, %v745
      %v851 = vadd.f32 %v298, %v747
      %v852 = vadd.f32 %v299, %v750
      %v853 = vadd.f32 %v300, %v752
      %v854 = vadd.f32 %v301, %v755
      %v855 = vadd.f32 %v302, %v757
      %v856 = vadd.f32 %v303, %v760
      %v857 = vadd.f32 %v304, %v762
      %v858 = vadd.f32 %v305, %v765
      %v859 = vadd.f32 %v306, %v767
      %v860 = vadd.f32 %v307, %v770
      %v861 = vadd.f32 %v308, %v772
      %v862 = vadd.f32 %v309, %v775
      %v863 = vadd.f32 %v310, %v777
      %v864 = vadd.f32 %v311, %v780
      %v865 = vadd.f32 %v312, %v782
      %v866 = vadd.f32 %v313, %v785
      %v867 = vadd.f32 %v314, %v787
      %v868 = vadd.f32 %v315, %v790
      %v869 = vadd.f32 %v316, %v792
      %v870 = vadd.f32 %v317, %v795
      %v871 = vadd.f32 %v318, %v797
      %v872 = vadd.f32 %v319, %v800
      %v873 = vadd.f32 %v320, %v802
      %v874 = vadd.f32 %v321, %v805
      %v875 = vadd.f32 %v322, %v807
      %v876 = vadd.f32 %v323, %v810
      %v877 = vadd.f32 %v324, %v812
      %vm878 = vcmask 523264
      %879 = vst.msk [vmem:[#allocation2] sm:$0xff] %vm878, %v814
      %880 = vst.msk [vmem:[#allocation2 + $0x8] sm:$0xff] %vm878, %v815
      %881 = vst.msk [vmem:[#allocation2 + $0x10] sm:$0xff] %vm878, %v816
      %882 = vst.msk [vmem:[#allocation2 + $0x18] sm:$0xff] %vm878, %v817
      %883 = vst.msk [vmem:[#allocation2 + $0x20] sm:$0xff] %vm878, %v818
      %884 = vst.msk [vmem:[#allocation2 + $0x28] sm:$0xff] %vm878, %v819
      %885 = vst.msk [vmem:[#allocation2 + $0x30] sm:$0xff] %vm878, %v820
      %886 = vst.msk [vmem:[#allocation2 + $0x38] sm:$0xff] %vm878, %v821
      %887 = vst.msk [vmem:[#allocation2 + $0x40] sm:$0xff] %vm878, %v822
      %888 = vst.msk [vmem:[#allocation2 + $0x48] sm:$0xff] %vm878, %v823
      %889 = vst.msk [vmem:[#allocation2 + $0x50] sm:$0xff] %vm878, %v824
      %890 = vst.msk [vmem:[#allocation2 + $0x58] sm:$0xff] %vm878, %v825
      %891 = vst.msk [vmem:[#allocation2 + $0x60] sm:$0xff] %vm878, %v826
      %892 = vst.msk [vmem:[#allocation2 + $0x68] sm:$0xff] %vm878, %v827
      %893 = vst.msk [vmem:[#allocation2 + $0x70] sm:$0xff] %vm878, %v828
      %894 = vst.msk [vmem:[#allocation2 + $0x78] sm:$0xff] %vm878, %v829
      %895 = vst.msk [vmem:[#allocation2 + $0x80] sm:$0xff] %vm878, %v830
      %896 = vst.msk [vmem:[#allocation2 + $0x88] sm:$0xff] %vm878, %v831
      %897 = vst.msk [vmem:[#allocation2 + $0x90] sm:$0xff] %vm878, %v832
      %898 = vst.msk [vmem:[#allocation2 + $0x98] sm:$0xff] %vm878, %v833
      %899 = vst.msk [vmem:[#allocation2 + $0xa0] sm:$0xff] %vm878, %v834
      %900 = vst.msk [vmem:[#allocation2 + $0xa8] sm:$0xff] %vm878, %v835
      %901 = vst.msk [vmem:[#allocation2 + $0xb0] sm:$0xff] %vm878, %v836
      %902 = vst.msk [vmem:[#allocation2 + $0xb8] sm:$0xff] %vm878, %v837
      %903 = vst.msk [vmem:[#allocation2 + $0xc0] sm:$0xff] %vm878, %v838
      %904 = vst.msk [vmem:[#allocation2 + $0xc8] sm:$0xff] %vm878, %v839
      %905 = vst.msk [vmem:[#allocation2 + $0xd0] sm:$0xff] %vm878, %v840
      %906 = vst.msk [vmem:[#allocation2 + $0xd8] sm:$0xff] %vm878, %v841
      %907 = vst.msk [vmem:[#allocation2 + $0xe0] sm:$0xff] %vm878, %v842
      %908 = vst.msk [vmem:[#allocation2 + $0xe8] sm:$0xff] %vm878, %v843
      %909 = vst.msk [vmem:[#allocation2 + $0xf0] sm:$0xff] %vm878, %v844
      %910 = vst.msk [vmem:[#allocation2 + $0xf8] sm:$0xff] %vm878, %v845
      %911 = vst.msk [vmem:[#allocation2 + $0x100] sm:$0xff] %vm878, %v846
      %912 = vst.msk [vmem:[#allocation2 + $0x108] sm:$0xff] %vm878, %v847
      %913 = vst.msk [vmem:[#allocation2 + $0x110] sm:$0xff] %vm878, %v848
      %914 = vst.msk [vmem:[#allocation2 + $0x118] sm:$0xff] %vm878, %v849
      %915 = vst.msk [vmem:[#allocation2 + $0x120] sm:$0xff] %vm878, %v850
      %916 = vst.msk [vmem:[#allocation2 + $0x128] sm:$0xff] %vm878, %v851
      %917 = vst.msk [vmem:[#allocation2 + $0x130] sm:$0xff] %vm878, %v852
      %918 = vst.msk [vmem:[#allocation2 + $0x138] sm:$0xff] %vm878, %v853
      %919 = vst.msk [vmem:[#allocation2 + $0x140] sm:$0xff] %vm878, %v854
      %920 = vst.msk [vmem:[#allocation2 + $0x148] sm:$0xff] %vm878, %v855
      %921 = vst.msk [vmem:[#allocation2 + $0x150] sm:$0xff] %vm878, %v856
      %922 = vst.msk [vmem:[#allocation2 + $0x158] sm:$0xff] %vm878, %v857
      %923 = vst.msk [vmem:[#allocation2 + $0x160] sm:$0xff] %vm878, %v858
      %924 = vst.msk [vmem:[#allocation2 + $0x168] sm:$0xff] %vm878, %v859
      %925 = vst.msk [vmem:[#allocation2 + $0x170] sm:$0xff] %vm878, %v860
      %926 = vst.msk [vmem:[#allocation2 + $0x178] sm:$0xff] %vm878, %v861
      %927 = vst.msk [vmem:[#allocation2 + $0x180] sm:$0xff] %vm878, %v862
      %928 = vst.msk [vmem:[#allocation2 + $0x188] sm:$0xff] %vm878, %v863
      %929 = vst.msk [vmem:[#allocation2 + $0x190] sm:$0xff] %vm878, %v864
      %930 = vst.msk [vmem:[#allocation2 + $0x198] sm:$0xff] %vm878, %v865
      %931 = vst.msk [vmem:[#allocation2 + $0x1a0] sm:$0xff] %vm878, %v866
      %932 = vst.msk [vmem:[#allocation2 + $0x1a8] sm:$0xff] %vm878, %v867
      %933 = vst.msk [vmem:[#allocation2 + $0x1b0] sm:$0xff] %vm878, %v868
      %934 = vst.msk [vmem:[#allocation2 + $0x1b8] sm:$0xff] %vm878, %v869
      %935 = vst.msk [vmem:[#allocation2 + $0x1c0] sm:$0xff] %vm878, %v870
      %936 = vst.msk [vmem:[#allocation2 + $0x1c8] sm:$0xff] %vm878, %v871
      %937 = vst.msk [vmem:[#allocation2 + $0x1d0] sm:$0xff] %vm878, %v872
      %938 = vst.msk [vmem:[#allocation2 + $0x1d8] sm:$0xff] %vm878, %v873
      %939 = vst.msk [vmem:[#allocation2 + $0x1e0] sm:$0xff] %vm878, %v874
      %940 = vst.msk [vmem:[#allocation2 + $0x1e8] sm:$0xff] %vm878, %v875
      %941 = vst.msk [vmem:[#allocation2 + $0x1f0] sm:$0xff] %vm878, %v876
      %942 = vst.msk [vmem:[#allocation2 + $0x1f8] sm:$0xff] %vm878, %v877
      // Predicated region
      $region33: #{discriminator_forward.5} parent=27 // pred_check
        %p943 = pneg %p192
      $region34: #{discriminator_forward.5} parent=27 // pred_check_branch
        %945 = sbr.rel (%p943) target = $region36
      $region35: #{discriminator_forward.5} parent=27 // pred_region
        %v946 = vld [vmem:[#allocation2] sm:$0xff]
        %v947 = vld [vmem:[#allocation2 + $0x8] sm:$0xff]
        %v948 = vld [vmem:[#allocation2 + $0x10] sm:$0xff]
        %v949 = vld [vmem:[#allocation2 + $0x18] sm:$0xff]
        %v950 = vld [vmem:[#allocation2 + $0x20] sm:$0xff]
        %v951 = vld [vmem:[#allocation2 + $0x28] sm:$0xff]
        %v952 = vld [vmem:[#allocation2 + $0x30] sm:$0xff]
        %v953 = vld [vmem:[#allocation2 + $0x38] sm:$0xff]
        %v954 = vld [vmem:[#allocation2 + $0x40] sm:$0xff]
        %v955 = vld [vmem:[#allocation2 + $0x48] sm:$0xff]
        %v956 = vld [vmem:[#allocation2 + $0x50] sm:$0xff]
        %v957 = vld [vmem:[#allocation2 + $0x58] sm:$0xff]
        %v958 = vld [vmem:[#allocation2 + $0x60] sm:$0xff]
        %v959 = vld [vmem:[#allocation2 + $0x68] sm:$0xff]
        %v960 = vld [vmem:[#allocation2 + $0x70] sm:$0xff]
        %v961 = vld [vmem:[#allocation2 + $0x78] sm:$0xff]
        %v962 = vld [vmem:[#allocation2 + $0x80] sm:$0xff]
        %v963 = vld [vmem:[#allocation2 + $0x88] sm:$0xff]
        %v964 = vld [vmem:[#allocation2 + $0x90] sm:$0xff]
        %v965 = vld [vmem:[#allocation2 + $0x98] sm:$0xff]
        %v966 = vld [vmem:[#allocation2 + $0xa0] sm:$0xff]
        %v967 = vld [vmem:[#allocation2 + $0xa8] sm:$0xff]
        %v968 = vld [vmem:[#allocation2 + $0xb0] sm:$0xff]
        %v969 = vld [vmem:[#allocation2 + $0xb8] sm:$0xff]
        %v970 = vld [vmem:[#allocation2 + $0xc0] sm:$0xff]
        %v971 = vld [vmem:[#allocation2 + $0xc8] sm:$0xff]
        %v972 = vld [vmem:[#allocation2 + $0xd0] sm:$0xff]
        %v973 = vld [vmem:[#allocation2 + $0xd8] sm:$0xff]
        %v974 = vld [vmem:[#allocation2 + $0xe0] sm:$0xff]
        %v975 = vld [vmem:[#allocation2 + $0xe8] sm:$0xff]
        %v976 = vld [vmem:[#allocation2 + $0xf0] sm:$0xff]
        %v977 = vld [vmem:[#allocation2 + $0xf8] sm:$0xff]
        %v978 = vld [vmem:[#allocation2 + $0x100] sm:$0xff]
        %v979 = vld [vmem:[#allocation2 + $0x108] sm:$0xff]
        %v980 = vld [vmem:[#allocation2 + $0x110] sm:$0xff]
        %v981 = vld [vmem:[#allocation2 + $0x118] sm:$0xff]
        %v982 = vld [vmem:[#allocation2 + $0x120] sm:$0xff]
        %v983 = vld [vmem:[#allocation2 + $0x128] sm:$0xff]
        %v984 = vld [vmem:[#allocation2 + $0x130] sm:$0xff]
        %v985 = vld [vmem:[#allocation2 + $0x138] sm:$0xff]
        %v986 = vld [vmem:[#allocation2 + $0x140] sm:$0xff]
        %v987 = vld [vmem:[#allocation2 + $0x148] sm:$0xff]
        %v988 = vld [vmem:[#allocation2 + $0x150] sm:$0xff]
        %v989 = vld [vmem:[#allocation2 + $0x158] sm:$0xff]
        %v990 = vld [vmem:[#allocation2 + $0x160] sm:$0xff]
        %v991 = vld [vmem:[#allocation2 + $0x168] sm:$0xff]
        %v992 = vld [vmem:[#allocation2 + $0x170] sm:$0xff]
        %v993 = vld [vmem:[#allocation2 + $0x178] sm:$0xff]
        %v994 = vld [vmem:[#allocation2 + $0x180] sm:$0xff]
        %v995 = vld [vmem:[#allocation2 + $0x188] sm:$0xff]
        %v996 = vld [vmem:[#allocation2 + $0x190] sm:$0xff]
        %v997 = vld [vmem:[#allocation2 + $0x198] sm:$0xff]
        %v998 = vld [vmem:[#allocation2 + $0x1a0] sm:$0xff]
        %v999 = vld [vmem:[#allocation2 + $0x1a8] sm:$0xff]
        %v1000 = vld [vmem:[#allocation2 + $0x1b0] sm:$0xff]
        %v1001 = vld [vmem:[#allocation2 + $0x1b8] sm:$0xff]
        %v1002 = vld [vmem:[#allocation2 + $0x1c0] sm:$0xff]
        %v1003 = vld [vmem:[#allocation2 + $0x1c8] sm:$0xff]
        %v1004 = vld [vmem:[#allocation2 + $0x1d0] sm:$0xff]
        %v1005 = vld [vmem:[#allocation2 + $0x1d8] sm:$0xff]
        %v1006 = vld [vmem:[#allocation2 + $0x1e0] sm:$0xff]
        %v1007 = vld [vmem:[#allocation2 + $0x1e8] sm:$0xff]
        %v1008 = vld [vmem:[#allocation2 + $0x1f0] sm:$0xff]
        %v1009 = vld [vmem:[#allocation2 + $0x1f8] sm:$0xff]
        %vm1010 = vcmp.gt.f32.partialorder %v946, 0.0
        %vm1011 = vcmp.gt.f32.partialorder %v947, 0.0
        %vm1012 = vcmp.gt.f32.partialorder %v948, 0.0
        %vm1013 = vcmp.gt.f32.partialorder %v949, 0.0
        %vm1014 = vcmp.gt.f32.partialorder %v950, 0.0
        %vm1015 = vcmp.gt.f32.partialorder %v951, 0.0
        %vm1016 = vcmp.gt.f32.partialorder %v952, 0.0
        %vm1017 = vcmp.gt.f32.partialorder %v953, 0.0
        %vm1018 = vcmp.gt.f32.partialorder %v954, 0.0
        %vm1019 = vcmp.gt.f32.partialorder %v955, 0.0
        %vm1020 = vcmp.gt.f32.partialorder %v956, 0.0
        %vm1021 = vcmp.gt.f32.partialorder %v957, 0.0
        %vm1022 = vcmp.gt.f32.partialorder %v958, 0.0
        %vm1023 = vcmp.gt.f32.partialorder %v959, 0.0
        %vm1024 = vcmp.gt.f32.partialorder %v960, 0.0
        %vm1025 = vcmp.gt.f32.partialorder %v961, 0.0
        %vm1026 = vcmp.gt.f32.partialorder %v962, 0.0
        %vm1027 = vcmp.gt.f32.partialorder %v963, 0.0
        %vm1028 = vcmp.gt.f32.partialorder %v964, 0.0
        %vm1029 = vcmp.gt.f32.partialorder %v965, 0.0
        %vm1030 = vcmp.gt.f32.partialorder %v966, 0.0
        %vm1031 = vcmp.gt.f32.partialorder %v967, 0.0
        %vm1032 = vcmp.gt.f32.partialorder %v968, 0.0
        %vm1033 = vcmp.gt.f32.partialorder %v969, 0.0
        %vm1034 = vcmp.gt.f32.partialorder %v970, 0.0
        %vm1035 = vcmp.gt.f32.partialorder %v971, 0.0
        %vm1036 = vcmp.gt.f32.partialorder %v972, 0.0
        %vm1037 = vcmp.gt.f32.partialorder %v973, 0.0
        %vm1038 = vcmp.gt.f32.partialorder %v974, 0.0
        %vm1039 = vcmp.gt.f32.partialorder %v975, 0.0
        %vm1040 = vcmp.gt.f32.partialorder %v976, 0.0
        %vm1041 = vcmp.gt.f32.partialorder %v977, 0.0
        %vm1042 = vcmp.gt.f32.partialorder %v978, 0.0
        %vm1043 = vcmp.gt.f32.partialorder %v979, 0.0
        %vm1044 = vcmp.gt.f32.partialorder %v980, 0.0
        %vm1045 = vcmp.gt.f32.partialorder %v981, 0.0
        %vm1046 = vcmp.gt.f32.partialorder %v982, 0.0
        %vm1047 = vcmp.gt.f32.partialorder %v983, 0.0
        %vm1048 = vcmp.gt.f32.partialorder %v984, 0.0
        %vm1049 = vcmp.gt.f32.partialorder %v985, 0.0
        %vm1050 = vcmp.gt.f32.partialorder %v986, 0.0
        %vm1051 = vcmp.gt.f32.partialorder %v987, 0.0
        %vm1052 = vcmp.gt.f32.partialorder %v988, 0.0
        %vm1053 = vcmp.gt.f32.partialorder %v989, 0.0
        %vm1054 = vcmp.gt.f32.partialorder %v990, 0.0
        %vm1055 = vcmp.gt.f32.partialorder %v991, 0.0
        %vm1056 = vcmp.gt.f32.partialorder %v992, 0.0
        %vm1057 = vcmp.gt.f32.partialorder %v993, 0.0
        %vm1058 = vcmp.gt.f32.partialorder %v994, 0.0
        %vm1059 = vcmp.gt.f32.partialorder %v995, 0.0
        %vm1060 = vcmp.gt.f32.partialorder %v996, 0.0
        %vm1061 = vcmp.gt.f32.partialorder %v997, 0.0
        %vm1062 = vcmp.gt.f32.partialorder %v998, 0.0
        %vm1063 = vcmp.gt.f32.partialorder %v999, 0.0
        %vm1064 = vcmp.gt.f32.partialorder %v1000, 0.0
        %vm1065 = vcmp.gt.f32.partialorder %v1001, 0.0
        %vm1066 = vcmp.gt.f32.partialorder %v1002, 0.0
        %vm1067 = vcmp.gt.f32.partialorder %v1003, 0.0
        %vm1068 = vcmp.gt.f32.partialorder %v1004, 0.0
        %vm1069 = vcmp.gt.f32.partialorder %v1005, 0.0
        %vm1070 = vcmp.gt.f32.partialorder %v1006, 0.0
        %vm1071 = vcmp.gt.f32.partialorder %v1007, 0.0
        %vm1072 = vcmp.gt.f32.partialorder %v1008, 0.0
        %vm1073 = vcmp.gt.f32.partialorder %v1009, 0.0
        %v1074 = vmul.f32 %v946, 0.2
        %v1075 = vmul.f32 %v947, 0.2
        %v1076 = vmul.f32 %v948, 0.2
        %v1077 = vmul.f32 %v949, 0.2
        %v1078 = vmul.f32 %v950, 0.2
        %v1079 = vmul.f32 %v951, 0.2
        %v1080 = vmul.f32 %v952, 0.2
        %v1081 = vmul.f32 %v953, 0.2
        %v1082 = vmul.f32 %v954, 0.2
        %v1083 = vmul.f32 %v955, 0.2
        %v1084 = vmul.f32 %v956, 0.2
        %v1085 = vmul.f32 %v957, 0.2
        %v1086 = vmul.f32 %v958, 0.2
        %v1087 = vmul.f32 %v959, 0.2
        %v1088 = vmul.f32 %v960, 0.2
        %v1089 = vmul.f32 %v961, 0.2
        %v1090 = vmul.f32 %v962, 0.2
        %v1091 = vmul.f32 %v963, 0.2
        %v1092 = vmul.f32 %v964, 0.2
        %v1093 = vmul.f32 %v965, 0.2
        %v1094 = vmul.f32 %v966, 0.2
        %v1095 = vmul.f32 %v967, 0.2
        %v1096 = vmul.f32 %v968, 0.2
        %v1097 = vmul.f32 %v969, 0.2
        %v1098 = vmul.f32 %v970, 0.2
        %v1099 = vmul.f32 %v971, 0.2
        %v1100 = vmul.f32 %v972, 0.2
        %v1101 = vmul.f32 %v973, 0.2
        %v1102 = vmul.f32 %v974, 0.2
        %v1103 = vmul.f32 %v975, 0.2
        %v1104 = vmul.f32 %v976, 0.2
        %v1105 = vmul.f32 %v977, 0.2
        %v1106 = vmul.f32 %v978, 0.2
        %v1107 = vmul.f32 %v979, 0.2
        %v1108 = vmul.f32 %v980, 0.2
        %v1109 = vmul.f32 %v981, 0.2
        %v1110 = vmul.f32 %v982, 0.2
        %v1111 = vmul.f32 %v983, 0.2
        %v1112 = vmul.f32 %v984, 0.2
        %v1113 = vmul.f32 %v985, 0.2
        %v1114 = vmul.f32 %v986, 0.2
        %v1115 = vmul.f32 %v987, 0.2
        %v1116 = vmul.f32 %v988, 0.2
        %v1117 = vmul.f32 %v989, 0.2
        %v1118 = vmul.f32 %v990, 0.2
        %v1119 = vmul.f32 %v991, 0.2
        %v1120 = vmul.f32 %v992, 0.2
        %v1121 = vmul.f32 %v993, 0.2
        %v1122 = vmul.f32 %v994, 0.2
        %v1123 = vmul.f32 %v995, 0.2
        %v1124 = vmul.f32 %v996, 0.2
        %v1125 = vmul.f32 %v997, 0.2
        %v1126 = vmul.f32 %v998, 0.2
        %v1127 = vmul.f32 %v999, 0.2
        %v1128 = vmul.f32 %v1000, 0.2
        %v1129 = vmul.f32 %v1001, 0.2
        %v1130 = vmul.f32 %v1002, 0.2
        %v1131 = vmul.f32 %v1003, 0.2
        %v1132 = vmul.f32 %v1004, 0.2
        %v1133 = vmul.f32 %v1005, 0.2
        %v1134 = vmul.f32 %v1006, 0.2
        %v1135 = vmul.f32 %v1007, 0.2
        %v1136 = vmul.f32 %v1008, 0.2
        %v1137 = vmul.f32 %v1009, 0.2
        %v1138 = vsel %vm1010, %v946, %v1074
        %v1139 = vsel %vm1011, %v947, %v1075
        %v1140 = vsel %vm1012, %v948, %v1076
        %v1141 = vsel %vm1013, %v949, %v1077
        %v1142 = vsel %vm1014, %v950, %v1078
        %v1143 = vsel %vm1015, %v951, %v1079
        %v1144 = vsel %vm1016, %v952, %v1080
        %v1145 = vsel %vm1017, %v953, %v1081
        %v1146 = vsel %vm1018, %v954, %v1082
        %v1147 = vsel %vm1019, %v955, %v1083
        %v1148 = vsel %vm1020, %v956, %v1084
        %v1149 = vsel %vm1021, %v957, %v1085
        %v1150 = vsel %vm1022, %v958, %v1086
        %v1151 = vsel %vm1023, %v959, %v1087
        %v1152 = vsel %vm1024, %v960, %v1088
        %v1153 = vsel %vm1025, %v961, %v1089
        %v1154 = vsel %vm1026, %v962, %v1090
        %v1155 = vsel %vm1027, %v963, %v1091
        %v1156 = vsel %vm1028, %v964, %v1092
        %v1157 = vsel %vm1029, %v965, %v1093
        %v1158 = vsel %vm1030, %v966, %v1094
        %v1159 = vsel %vm1031, %v967, %v1095
        %v1160 = vsel %vm1032, %v968, %v1096
        %v1161 = vsel %vm1033, %v969, %v1097
        %v1162 = vsel %vm1034, %v970, %v1098
        %v1163 = vsel %vm1035, %v971, %v1099
        %v1164 = vsel %vm1036, %v972, %v1100
        %v1165 = vsel %vm1037, %v973, %v1101
        %v1166 = vsel %vm1038, %v974, %v1102
        %v1167 = vsel %vm1039, %v975, %v1103
        %v1168 = vsel %vm1040, %v976, %v1104
        %v1169 = vsel %vm1041, %v977, %v1105
        %v1170 = vsel %vm1042, %v978, %v1106
        %v1171 = vsel %vm1043, %v979, %v1107
        %v1172 = vsel %vm1044, %v980, %v1108
        %v1173 = vsel %vm1045, %v981, %v1109
        %v1174 = vsel %vm1046, %v982, %v1110
        %v1175 = vsel %vm1047, %v983, %v1111
        %v1176 = vsel %vm1048, %v984, %v1112
        %v1177 = vsel %vm1049, %v985, %v1113
        %v1178 = vsel %vm1050, %v986, %v1114
        %v1179 = vsel %vm1051, %v987, %v1115
        %v1180 = vsel %vm1052, %v988, %v1116
        %v1181 = vsel %vm1053, %v989, %v1117
        %v1182 = vsel %vm1054, %v990, %v1118
        %v1183 = vsel %vm1055, %v991, %v1119
        %v1184 = vsel %vm1056, %v992, %v1120
        %v1185 = vsel %vm1057, %v993, %v1121
        %v1186 = vsel %vm1058, %v994, %v1122
        %v1187 = vsel %vm1059, %v995, %v1123
        %v1188 = vsel %vm1060, %v996, %v1124
        %v1189 = vsel %vm1061, %v997, %v1125
        %v1190 = vsel %vm1062, %v998, %v1126
        %v1191 = vsel %vm1063, %v999, %v1127
        %v1192 = vsel %vm1064, %v1000, %v1128
        %v1193 = vsel %vm1065, %v1001, %v1129
        %v1194 = vsel %vm1066, %v1002, %v1130
        %v1195 = vsel %vm1067, %v1003, %v1131
        %v1196 = vsel %vm1068, %v1004, %v1132
        %v1197 = vsel %vm1069, %v1005, %v1133
        %v1198 = vsel %vm1070, %v1006, %v1134
        %v1199 = vsel %vm1071, %v1007, %v1135
        %v1200 = vsel %vm1072, %v1008, %v1136
        %v1201 = vsel %vm1073, %v1009, %v1137
        %v1202 = vpack.c.bf16 %v1138, %v1138
        %v1203 = vpack.c.bf16 %v1139, %v1139
        %v1204 = vpack.c.bf16 %v1140, %v1140
        %v1205 = vpack.c.bf16 %v1141, %v1141
        %v1206 = vpack.c.bf16 %v1142, %v1142
        %v1207 = vpack.c.bf16 %v1143, %v1143
        %v1208 = vpack.c.bf16 %v1144, %v1144
        %v1209 = vpack.c.bf16 %v1145, %v1145
        %v1210 = vpack.c.bf16 %v1146, %v1146
        %v1211 = vpack.c.bf16 %v1147, %v1147
        %v1212 = vpack.c.bf16 %v1148, %v1148
        %v1213 = vpack.c.bf16 %v1149, %v1149
        %v1214 = vpack.c.bf16 %v1150, %v1150
        %v1215 = vpack.c.bf16 %v1151, %v1151
        %v1216 = vpack.c.bf16 %v1152, %v1152
        %v1217 = vpack.c.bf16 %v1153, %v1153
        %v1218 = vpack.c.bf16 %v1154, %v1154
        %v1219 = vpack.c.bf16 %v1155, %v1155
        %v1220 = vpack.c.bf16 %v1156, %v1156
        %v1221 = vpack.c.bf16 %v1157, %v1157
        %v1222 = vpack.c.bf16 %v1158, %v1158
        %v1223 = vpack.c.bf16 %v1159, %v1159
        %v1224 = vpack.c.bf16 %v1160, %v1160
        %v1225 = vpack.c.bf16 %v1161, %v1161
        %v1226 = vpack.c.bf16 %v1162, %v1162
        %v1227 = vpack.c.bf16 %v1163, %v1163
        %v1228 = vpack.c.bf16 %v1164, %v1164
        %v1229 = vpack.c.bf16 %v1165, %v1165
        %v1230 = vpack.c.bf16 %v1166, %v1166
        %v1231 = vpack.c.bf16 %v1167, %v1167
        %v1232 = vpack.c.bf16 %v1168, %v1168
        %v1233 = vpack.c.bf16 %v1169, %v1169
        %v1234 = vpack.c.bf16 %v1170, %v1170
        %v1235 = vpack.c.bf16 %v1171, %v1171
        %v1236 = vpack.c.bf16 %v1172, %v1172
        %v1237 = vpack.c.bf16 %v1173, %v1173
        %v1238 = vpack.c.bf16 %v1174, %v1174
        %v1239 = vpack.c.bf16 %v1175, %v1175
        %v1240 = vpack.c.bf16 %v1176, %v1176
        %v1241 = vpack.c.bf16 %v1177, %v1177
        %v1242 = vpack.c.bf16 %v1178, %v1178
        %v1243 = vpack.c.bf16 %v1179, %v1179
        %v1244 = vpack.c.bf16 %v1180, %v1180
        %v1245 = vpack.c.bf16 %v1181, %v1181
        %v1246 = vpack.c.bf16 %v1182, %v1182
        %v1247 = vpack.c.bf16 %v1183, %v1183
        %v1248 = vpack.c.bf16 %v1184, %v1184
        %v1249 = vpack.c.bf16 %v1185, %v1185
        %v1250 = vpack.c.bf16 %v1186, %v1186
        %v1251 = vpack.c.bf16 %v1187, %v1187
        %v1252 = vpack.c.bf16 %v1188, %v1188
        %v1253 = vpack.c.bf16 %v1189, %v1189
        %v1254 = vpack.c.bf16 %v1190, %v1190
        %v1255 = vpack.c.bf16 %v1191, %v1191
        %v1256 = vpack.c.bf16 %v1192, %v1192
        %v1257 = vpack.c.bf16 %v1193, %v1193
        %v1258 = vpack.c.bf16 %v1194, %v1194
        %v1259 = vpack.c.bf16 %v1195, %v1195
        %v1260 = vpack.c.bf16 %v1196, %v1196
        %v1261 = vpack.c.bf16 %v1197, %v1197
        %v1262 = vpack.c.bf16 %v1198, %v1198
        %v1263 = vpack.c.bf16 %v1199, %v1199
        %v1264 = vpack.c.bf16 %v1200, %v1200
        %v1265 = vpack.c.bf16 %v1201, %v1201
        %vm1266 = vcmask 519168
        %1267 = vst.msk [vmem:[%s190] sm:$0xf] %vm1266, %v1202
        %1268 = vst.msk [vmem:[%s190 + $0x4] sm:$0xf] %vm1266, %v1203
        %1269 = vst.msk [vmem:[%s190 + $0x8] sm:$0xf] %vm1266, %v1204
        %1270 = vst.msk [vmem:[%s190 + $0xc] sm:$0xf] %vm1266, %v1205
        %1271 = vst.msk [vmem:[%s190 + $0x10] sm:$0xf] %vm1266, %v1206
        %1272 = vst.msk [vmem:[%s190 + $0x14] sm:$0xf] %vm1266, %v1207
        %1273 = vst.msk [vmem:[%s190 + $0x18] sm:$0xf] %vm1266, %v1208
        %1274 = vst.msk [vmem:[%s190 + $0x1c] sm:$0xf] %vm1266, %v1209
        %1275 = vst.msk [vmem:[%s190 + $0x20] sm:$0xf] %vm1266, %v1210
        %1276 = vst.msk [vmem:[%s190 + $0x24] sm:$0xf] %vm1266, %v1211
        %1277 = vst.msk [vmem:[%s190 + $0x28] sm:$0xf] %vm1266, %v1212
        %1278 = vst.msk [vmem:[%s190 + $0x2c] sm:$0xf] %vm1266, %v1213
        %1279 = vst.msk [vmem:[%s190 + $0x30] sm:$0xf] %vm1266, %v1214
        %1280 = vst.msk [vmem:[%s190 + $0x34] sm:$0xf] %vm1266, %v1215
        %1281 = vst.msk [vmem:[%s190 + $0x38] sm:$0xf] %vm1266, %v1216
        %1282 = vst.msk [vmem:[%s190 + $0x3c] sm:$0xf] %vm1266, %v1217
        %1283 = vst.msk [vmem:[%s190 + $0x40] sm:$0xf] %vm1266, %v1218
        %1284 = vst.msk [vmem:[%s190 + $0x44] sm:$0xf] %vm1266, %v1219
        %1285 = vst.msk [vmem:[%s190 + $0x48] sm:$0xf] %vm1266, %v1220
        %1286 = vst.msk [vmem:[%s190 + $0x4c] sm:$0xf] %vm1266, %v1221
        %1287 = vst.msk [vmem:[%s190 + $0x50] sm:$0xf] %vm1266, %v1222
        %1288 = vst.msk [vmem:[%s190 + $0x54] sm:$0xf] %vm1266, %v1223
        %1289 = vst.msk [vmem:[%s190 + $0x58] sm:$0xf] %vm1266, %v1224
        %1290 = vst.msk [vmem:[%s190 + $0x5c] sm:$0xf] %vm1266, %v1225
        %1291 = vst.msk [vmem:[%s190 + $0x60] sm:$0xf] %vm1266, %v1226
        %1292 = vst.msk [vmem:[%s190 + $0x64] sm:$0xf] %vm1266, %v1227
        %1293 = vst.msk [vmem:[%s190 + $0x68] sm:$0xf] %vm1266, %v1228
        %1294 = vst.msk [vmem:[%s190 + $0x6c] sm:$0xf] %vm1266, %v1229
        %1295 = vst.msk [vmem:[%s190 + $0x70] sm:$0xf] %vm1266, %v1230
        %1296 = vst.msk [vmem:[%s190 + $0x74] sm:$0xf] %vm1266, %v1231
        %1297 = vst.msk [vmem:[%s190 + $0x78] sm:$0xf] %vm1266, %v1232
        %1298 = vst.msk [vmem:[%s190 + $0x7c] sm:$0xf] %vm1266, %v1233
        %1299 = vst.msk [vmem:[%s190 + $0x80] sm:$0xf] %vm1266, %v1234
        %1300 = vst.msk [vmem:[%s190 + $0x84] sm:$0xf] %vm1266, %v1235
        %1301 = vst.msk [vmem:[%s190 + $0x88] sm:$0xf] %vm1266, %v1236
        %1302 = vst.msk [vmem:[%s190 + $0x8c] sm:$0xf] %vm1266, %v1237
        %1303 = vst.msk [vmem:[%s190 + $0x90] sm:$0xf] %vm1266, %v1238
        %1304 = vst.msk [vmem:[%s190 + $0x94] sm:$0xf] %vm1266, %v1239
        %1305 = vst.msk [vmem:[%s190 + $0x98] sm:$0xf] %vm1266, %v1240
        %1306 = vst.msk [vmem:[%s190 + $0x9c] sm:$0xf] %vm1266, %v1241
        %1307 = vst.msk [vmem:[%s190 + $0xa0] sm:$0xf] %vm1266, %v1242
        %1308 = vst.msk [vmem:[%s190 + $0xa4] sm:$0xf] %vm1266, %v1243
        %1309 = vst.msk [vmem:[%s190 + $0xa8] sm:$0xf] %vm1266, %v1244
        %1310 = vst.msk [vmem:[%s190 + $0xac] sm:$0xf] %vm1266, %v1245
        %1311 = vst.msk [vmem:[%s190 + $0xb0] sm:$0xf] %vm1266, %v1246
        %1312 = vst.msk [vmem:[%s190 + $0xb4] sm:$0xf] %vm1266, %v1247
        %1313 = vst.msk [vmem:[%s190 + $0xb8] sm:$0xf] %vm1266, %v1248
        %1314 = vst.msk [vmem:[%s190 + $0xbc] sm:$0xf] %vm1266, %v1249
        %1315 = vst.msk [vmem:[%s190 + $0xc0] sm:$0xf] %vm1266, %v1250
        %1316 = vst.msk [vmem:[%s190 + $0xc4] sm:$0xf] %vm1266, %v1251
        %1317 = vst.msk [vmem:[%s190 + $0xc8] sm:$0xf] %vm1266, %v1252
        %1318 = vst.msk [vmem:[%s190 + $0xcc] sm:$0xf] %vm1266, %v1253
        %1319 = vst.msk [vmem:[%s190 + $0xd0] sm:$0xf] %vm1266, %v1254
        %1320 = vst.msk [vmem:[%s190 + $0xd4] sm:$0xf] %vm1266, %v1255
        %1321 = vst.msk [vmem:[%s190 + $0xd8] sm:$0xf] %vm1266, %v1256
        %1322 = vst.msk [vmem:[%s190 + $0xdc] sm:$0xf] %vm1266, %v1257
        %1323 = vst.msk [vmem:[%s190 + $0xe0] sm:$0xf] %vm1266, %v1258
        %1324 = vst.msk [vmem:[%s190 + $0xe4] sm:$0xf] %vm1266, %v1259
        %1325 = vst.msk [vmem:[%s190 + $0xe8] sm:$0xf] %vm1266, %v1260
        %1326 = vst.msk [vmem:[%s190 + $0xec] sm:$0xf] %vm1266, %v1261
        %1327 = vst.msk [vmem:[%s190 + $0xf0] sm:$0xf] %vm1266, %v1262
        %1328 = vst.msk [vmem:[%s190 + $0xf4] sm:$0xf] %vm1266, %v1263
        %1329 = vst.msk [vmem:[%s190 + $0xf8] sm:$0xf] %vm1266, %v1264
        %1330 = vst.msk [vmem:[%s190 + $0xfc] sm:$0xf] %vm1266, %v1265
      $region36: #{discriminator_forward.5} parent=27 // pred_fallthru
        _
      %s1331 = smul.u32 64, %s17
      %p1332 = scmp.lt.s32.totalorder %s1331, 255
      %s1333 = scalar_select %p1332, %s1331, 255
      %s1334 = smul.addr %s1333, 4
      %s1335 = scalar_lea.vmem %s2, %s1334
      // Predicated region
      $region37: #{discriminator_forward.5} parent=27 // pred_check
        %p1336 = pneg %p97
      $region38: #{discriminator_forward.5} parent=27 // pred_check_branch
        %1338 = sbr.rel (%p1336) target = $region40
      $region39: #{discriminator_forward.5} parent=27 // pred_region
        %s1339 = smul.u32 64, %s17
      $region40: #{discriminator_forward.5} parent=27 // pred_fallthru
        _
    $region28: #{discriminator_forward.5} parent=5 // pred_fallthru
      _
    %p1340 = scmp.le.s32.totalorder 2, %s8
    // Predicated region
    $region41: #{discriminator_forward.5} parent=5 // pred_check
      %p1341 = pneg %p1340
    $region42: #{discriminator_forward.5} parent=5 // pred_check_branch
      %1343 = sbr.rel (%p1341) target = $region44
    $region43: #{discriminator_forward.5} parent=5 // pred_region
      %s1344 = ssub.s32 %s8, 2
      // Predicated region
      $region45: #{discriminator_forward.5} parent=43 // pred_check
        %p1345 = pneg %p103
      $region46: #{discriminator_forward.5} parent=43 // pred_check_branch
        %1347 = sbr.rel (%p1345) target = $region48
      $region47: #{discriminator_forward.5} parent=43 // pred_region
        %s1348 = smul.u32 64, %s19
        %p1349 = scmp.lt.s32.totalorder %s1348, 255
        %s1350 = scalar_select %p1349, %s1348, 255
        %s1351 = smul.addr %s1350, 4
        %s1352 = scalar_lea.vmem %s2, %s1351
      $region48: #{discriminator_forward.5} parent=43 // pred_fallthru
        _
    $region44: #{discriminator_forward.5} parent=5 // pred_fallthru
      _
  $region6: #{discriminator_forward.5} parent=0 // loop_footer
    %s12 = sadd.s32 1, %s8
  $region7: #{discriminator_forward.5} parent=0 // loop_footer_branch
    %7 = sbr.rel target = $region3
  $region8: #{discriminator_forward.5} parent=0 // loop_exit
    _

// kernel: discriminator_forward.6
$region0: #{discriminator_forward.6}
  #allocation0 [shape = 'u32[]', space=smem, size = 0x4, offset = 0x4, fixed_abs, tag = 'smem constant byte address 0x4 - core index']
  #allocation1 [shape = 'u32[72,128]{1,0:T(1,128)}', space=vmem, size = 0x9000, scoped, tag = 'internal scratch']
  #allocation2 [shape = 'f32[512,128]{1,0:T(8,128)}', space=vmem, size = 0x40000, scoped, tag = 'scratch operand']
  %s0 = inlined_call_operand.vmem [shape: bf16[512,1024], index: 0, kind: input, shape index: {}]
  %s1 = inlined_call_operand.vmem [shape: bf16[1024,128], index: 1, kind: input, shape index: {}]
  %s2 = inlined_call_operand.vmem [shape: f32[1,128], index: 2, kind: input, shape index: {}]
  %s3 = inlined_call_operand.vmem [shape: f32[1,128], index: 3, kind: input, shape index: {}]
  %s4 = inlined_call_operand.vmem [shape: bf16[512,128], index: 4, kind: output, shape index: {}]
  %s5 = sld [smem:[#allocation0]]
  $region80: #{discriminator_forward.6} parent=0
    _
  %s7 = ssub.s32 1, %s5
  %s8 = scalar_select 0, %s7, %s5
  $region1: #{discriminator_forward.6} parent=0
    #allocation3 [shape = 'u8[1048576]{0}', space=vmem, size = 0x100000, scoped, tag = 'input window, operand 0']
    loop: start=0, step=1, limit=4
    $region2: #{discriminator_forward.6} parent=1 // loop_pre_header
      _
    $region3: #{discriminator_forward.6} parent=1 // loop_header
      %s10 = sphi 0, %s14
      %p11 = scmp.ge.s32.totalorder %s10, 4
      %s17 = sphi 0, %s29
      %s18 = sphi 0, %s25
      %s19 = sphi 0, %s17
      %s20 = sphi 0, %s18
      %s21 = sphi 0, %s19
      %s22 = sphi 0, %s20
      %s32 = sphi 0, %s34
      %s35 = sphi 0, %s32
      %s36 = sphi 0, %s35
      %s52 = sphi 0, %s36
      %s60 = sphi 0, %s62
      %s63 = sphi 0, %s60
      %s64 = sphi 0, %s63
      %s80 = sphi 0, %s64
      %s86 = sphi 0, %s88
      %s89 = sphi 0, %s86
      %s90 = sphi 0, %s89
      %s106 = sphi 0, %s90
      %s112 = sphi 0, %s114
      %s115 = sphi 0, %s112
      %s116 = sphi 0, %s115
      %s132 = sphi 0, %s116
      %s138 = sphi 0, %s140
      %s141 = sphi 0, %s138
      %s142 = sphi 0, %s141
      %s158 = sphi 0, %s142
    $region4: #{discriminator_forward.6} parent=1 // loop_header_branch
      %13 = sbr.rel (%p11) target = $region8
    $region5: #{discriminator_forward.6} parent=1 // loop_body
      %s15 = ssub.s32 %s10, 1
      %s16 = ssub.s32 %s10, 2
      %s23 = sadd.s32 1, %s18
      %p24 = scmp.ge.s32.totalorder %s23, 2
      %s25 = scalar_select %p24, 0, %s23
      %s26 = sadd.s32 1, %s17
      %s27 = scalar_select %p24, %s26, %s17
      %p28 = scmp.ge.s32.totalorder %s27, 1
      %s29 = scalar_select %p28, 0, %s27
      %s30 = ssub.s32 %s18, %s25
      %p31 = scmp.eq.s32.totalorder %s30, 0
      %s33 = sadd.s32 %s32, 1
      %s34 = scalar_select %p31, %s32, %s33
      %p37 = pneg %p31
      %p38 = scmp.eq.s32.totalorder %s10, 1
      %p39 = por %p37, %p38
      %p40 = scmp.ne.s32.totalorder %s32, %s35
      %p41 = scmp.eq.s32.totalorder %s10, 0
      %p42 = por %p40, %p41
      %p43 = scmp.ne.s32.totalorder %s32, %s35
      %p44 = scmp.eq.s32.totalorder %s15, 1
      %p45 = por %p43, %p44
      %p46 = scmp.ne.s32.totalorder %s35, %s36
      %p47 = scmp.eq.s32.totalorder %s15, 0
      %p48 = por %p46, %p47
      %p49 = scmp.ne.s32.totalorder %s35, %s36
      %p50 = scmp.eq.s32.totalorder %s16, 1
      %p51 = por %p49, %p50
      %p53 = scmp.ne.s32.totalorder %s36, %s52
      %p54 = scmp.eq.s32.totalorder %s16, 0
      %p55 = por %p53, %p54
      %s56 = ssub.s32 %s18, %s25
      %s57 = ssub.s32 %s17, %s29
      %s58 = sor.u32 %s56, %s57
      %p59 = scmp.eq.s32.totalorder %s58, 0
      %s61 = sadd.s32 %s60, 1
      %s62 = scalar_select %p59, %s60, %s61
      %p65 = pneg %p59
      %p66 = scmp.eq.s32.totalorder %s10, 1
      %p67 = por %p65, %p66
      %p68 = scmp.ne.s32.totalorder %s60, %s63
      %p69 = scmp.eq.s32.totalorder %s10, 0
      %p70 = por %p68, %p69
      %p71 = scmp.ne.s32.totalorder %s60, %s63
      %p72 = scmp.eq.s32.totalorder %s15, 1
      %p73 = por %p71, %p72
      %p74 = scmp.ne.s32.totalorder %s63, %s64
      %p75 = scmp.eq.s32.totalorder %s15, 0
      %p76 = por %p74, %p75
      %p77 = scmp.ne.s32.totalorder %s63, %s64
      %p78 = scmp.eq.s32.totalorder %s16, 1
      %p79 = por %p77, %p78
      %p81 = scmp.ne.s32.totalorder %s64, %s80
      %p82 = scmp.eq.s32.totalorder %s16, 0
      %p83 = por %p81, %p82
      %s84 = ssub.s32 %s17, %s29
      %p85 = scmp.eq.s32.totalorder %s84, 0
      %s87 = sadd.s32 %s86, 1
      %s88 = scalar_select %p85, %s86, %s87
      %p91 = pneg %p85
      %p92 = scmp.eq.s32.totalorder %s10, 1
      %p93 = por %p91, %p92
      %p94 = scmp.ne.s32.totalorder %s86, %s89
      %p95 = scmp.eq.s32.totalorder %s10, 0
      %p96 = por %p94, %p95
      %p97 = scmp.ne.s32.totalorder %s86, %s89
      %p98 = scmp.eq.s32.totalorder %s15, 1
      %p99 = por %p97, %p98
      %p100 = scmp.ne.s32.totalorder %s89, %s90
      %p101 = scmp.eq.s32.totalorder %s15, 0
      %p102 = por %p100, %p101
      %p103 = scmp.ne.s32.totalorder %s89, %s90
      %p104 = scmp.eq.s32.totalorder %s16, 1
      %p105 = por %p103, %p104
      %p107 = scmp.ne.s32.totalorder %s90, %s106
      %p108 = scmp.eq.s32.totalorder %s16, 0
      %p109 = por %p107, %p108
      %s110 = ssub.s32 %s17, %s29
      %p111 = scmp.eq.s32.totalorder %s110, 0
      %s113 = sadd.s32 %s112, 1
      %s114 = scalar_select %p111, %s112, %s113
      %p117 = pneg %p111
      %p118 = scmp.eq.s32.totalorder %s10, 1
      %p119 = por %p117, %p118
      %p120 = scmp.ne.s32.totalorder %s112, %s115
      %p121 = scmp.eq.s32.totalorder %s10, 0
      %p122 = por %p120, %p121
      %p123 = scmp.ne.s32.totalorder %s112, %s115
      %p124 = scmp.eq.s32.totalorder %s15, 1
      %p125 = por %p123, %p124
      %p126 = scmp.ne.s32.totalorder %s115, %s116
      %p127 = scmp.eq.s32.totalorder %s15, 0
      %p128 = por %p126, %p127
      %p129 = scmp.ne.s32.totalorder %s115, %s116
      %p130 = scmp.eq.s32.totalorder %s16, 1
      %p131 = por %p129, %p130
      %p133 = scmp.ne.s32.totalorder %s116, %s132
      %p134 = scmp.eq.s32.totalorder %s16, 0
      %p135 = por %p133, %p134
      %s136 = ssub.s32 %s17, %s29
      %p137 = scmp.eq.s32.totalorder %s136, 0
      %s139 = sadd.s32 %s138, 1
      %s140 = scalar_select %p137, %s138, %s139
      %p143 = pneg %p137
      %p144 = scmp.eq.s32.totalorder %s10, 1
      %p145 = por %p143, %p144
      %p146 = scmp.ne.s32.totalorder %s138, %s141
      %p147 = scmp.eq.s32.totalorder %s10, 0
      %p148 = por %p146, %p147
      %p149 = scmp.ne.s32.totalorder %s138, %s141
      %p150 = scmp.eq.s32.totalorder %s15, 1
      %p151 = por %p149, %p150
      %p152 = scmp.ne.s32.totalorder %s141, %s142
      %p153 = scmp.eq.s32.totalorder %s15, 0
      %p154 = por %p152, %p153
      %p155 = scmp.ne.s32.totalorder %s141, %s142
      %p156 = scmp.eq.s32.totalorder %s16, 1
      %p157 = por %p155, %p156
      %p159 = scmp.ne.s32.totalorder %s142, %s158
      %p160 = scmp.eq.s32.totalorder %s16, 0
      %p161 = por %p159, %p160
      %p162 = scmp.le.s32.totalorder 1, %s10
      %p163 = scmp.lt.s32.totalorder %s10, 3
      %p164 = pnand %p162, %p163
      %p165 = pneg %p164
      // Predicated region
      $region9: #{discriminator_forward.6} parent=5 // pred_check
        _
      $region10: #{discriminator_forward.6} parent=5 // pred_check_branch
        %167 = sbr.rel (%p164) target = $region12
      $region11: #{discriminator_forward.6} parent=5 // pred_region
        %s168 = ssub.s32 %s10, 1
        // Predicated region
        $region13: #{discriminator_forward.6} parent=11 // pred_check
          %p169 = pneg %p102
        $region14: #{discriminator_forward.6} parent=11 // pred_check_branch
          %171 = sbr.rel (%p169) target = $region16
        $region15: #{discriminator_forward.6} parent=11 // pred_region
          %p172 = scmp.lt.s32.totalorder %s19, 0
          %s173 = scalar_select %p172, %s19, 0
          %s174 = scalar_lea.vmem %s2, %s173
        $region16: #{discriminator_forward.6} parent=11 // pred_fallthru
          _
        // Predicated region
        $region17: #{discriminator_forward.6} parent=11 // pred_check
          %p175 = pneg %p128
        $region18: #{discriminator_forward.6} parent=11 // pred_check_branch
          %177 = sbr.rel (%p175) target = $region20
        $region19: #{discriminator_forward.6} parent=11 // pred_region
          %p178 = scmp.lt.s32.totalorder %s19, 0
          %s179 = scalar_select %p178, %s19, 0
          %s180 = scalar_lea.vmem %s3, %s179
        $region20: #{discriminator_forward.6} parent=11 // pred_fallthru
          _
      $region12: #{discriminator_forward.6} parent=5 // pred_fallthru
        _
      %p181 = scmp.lt.s32.totalorder %s10, 2
      // Predicated region
      $region21: #{discriminator_forward.6} parent=5 // pred_check
        %p182 = pneg %p181
      $region22: #{discriminator_forward.6} parent=5 // pred_check_branch
        %184 = sbr.rel (%p182) target = $region24
      $region23: #{discriminator_forward.6} parent=5 // pred_region
        // Predicated region
        $region25: #{discriminator_forward.6} parent=23 // pred_check
          %p185 = pneg %p42
        $region26: #{discriminator_forward.6} parent=23 // pred_check_branch
          %187 = sbr.rel (%p185) target = $region28
        $region27: #{discriminator_forward.6} parent=23 // pred_region
          %s188 = sand.u32 %s32, 1
          %s189 = sand.u32 %s32, 1
          %s190 = smul.addr %s189, 1024
          %s191 = scalar_lea.vmem [#allocation3], %s190
          %s192 = smul.u32 4, %s18
          %s193 = smul.addr %s192, 4
          %s194 = scalar_lea.vmem %s0, %s193
          // Predicated region
          $region29: #{discriminator_forward.6} parent=27 // pred_check
            _
          $region30: #{discriminator_forward.6} parent=27 // pred_check_branch
            %196 = sbr.rel (0) target = $region32
          $region31: #{discriminator_forward.6} parent=27 // pred_region
            // Predicated region
            $region33: #{discriminator_forward.6} parent=31 // pred_check
              _
            $region34: #{discriminator_forward.6} parent=31 // pred_check_branch
              %198 = sbr.rel (0) target = $region36
            $region35: #{discriminator_forward.6} parent=31 // pred_region
              loop: start=0, step=1, limit=1
              $region37: #{discriminator_forward.6} parent=35 // loop_pre_header
                _
              $region38: #{discriminator_forward.6} parent=35 // loop_header
                %s200 = sphi 0, %s204
                %p201 = scmp.ge.s32.totalorder %s200, 1
                %s205 = sphi %s194, %s194
                %s206 = sphi %s191, %s191
              $region39: #{discriminator_forward.6} parent=35 // loop_header_branch
                %203 = sbr.rel (%p201) target = $region43
              $region40: #{discriminator_forward.6} parent=35 // loop_body
                %v207 = vld [vmem:[%s205] sm:$0xff]
                %208 = vst [vmem:[%s206] sm:$0xff] %v207
                %v209 = vld [vmem:[%s205 + $0x8] sm:$0xff]
                %210 = vst [vmem:[%s206 + $0x8] sm:$0xff] %v209
                %v211 = vld [vmem:[%s205 + $0x20] sm:$0xff]
                %212 = vst [vmem:[%s206 + $0x10] sm:$0xff] %v211
                %v213 = vld [vmem:[%s205 + $0x28] sm:$0xff]
                %214 = vst [vmem:[%s206 + $0x18] sm:$0xff] %v213
                %v215 = vld [vmem:[%s205 + $0x40] sm:$0xff]
                %216 = vst [vmem:[%s206 + $0x20] sm:$0xff] %v215
                %v217 = vld [vmem:[%s205 + $0x48] sm:$0xff]
                %218 = vst [vmem:[%s206 + $0x28] sm:$0xff] %v217
                %v219 = vld [vmem:[%s205 + $0x60] sm:$0xff]
                %220 = vst [vmem:[%s206 + $0x30] sm:$0xff] %v219
                %v221 = vld [vmem:[%s205 + $0x68] sm:$0xff]
                %222 = vst [vmem:[%s206 + $0x38] sm:$0xff] %v221
                %v223 = vld [vmem:[%s205 + $0x80] sm:$0xff]
                %224 = vst [vmem:[%s206 + $0x40] sm:$0xff] %v223
                %v225 = vld [vmem:[%s205 + $0x88] sm:$0xff]
                %226 = vst [vmem:[%s206 + $0x48] sm:$0xff] %v225
                %v227 = vld [vmem:[%s205 + $0xa0] sm:$0xff]
                %228 = vst [vmem:[%s206 + $0x50] sm:$0xff] %v227
                %v229 = vld [vmem:[%s205 + $0xa8] sm:$0xff]
                %230 = vst [vmem:[%s206 + $0x58] sm:$0xff] %v229
                %v231 = vld [vmem:[%s205 + $0xc0] sm:$0xff]
                %232 = vst [vmem:[%s206 + $0x60] sm:$0xff] %v231
                %v233 = vld [vmem:[%s205 + $0xc8] sm:$0xff]
                %234 = vst [vmem:[%s206 + $0x68] sm:$0xff] %v233
                %v235 = vld [vmem:[%s205 + $0xe0] sm:$0xff]
                %236 = vst [vmem:[%s206 + $0x70] sm:$0xff] %v235
                %v237 = vld [vmem:[%s205 + $0xe8] sm:$0xff]
                %238 = vst [vmem:[%s206 + $0x78] sm:$0xff] %v237
                %v239 = vld [vmem:[%s205 + $0x100] sm:$0xff]
                %240 = vst [vmem:[%s206 + $0x80] sm:$0xff] %v239
                %v241 = vld [vmem:[%s205 + $0x108] sm:$0xff]
                %242 = vst [vmem:[%s206 + $0x88] sm:$0xff] %v241
                %v243 = vld [vmem:[%s205 + $0x120] sm:$0xff]
                %244 = vst [vmem:[%s206 + $0x90] sm:$0xff] %v243
                %v245 = vld [vmem:[%s205 + $0x128] sm:$0xff]
                %246 = vst [vmem:[%s206 + $0x98] sm:$0xff] %v245
                %v247 = vld [vmem:[%s205 + $0x140] sm:$0xff]
                %248 = vst [vmem:[%s206 + $0xa0] sm:$0xff] %v247
                %v249 = vld [vmem:[%s205 + $0x148] sm:$0xff]
                %250 = vst [vmem:[%s206 + $0xa8] sm:$0xff] %v249
                %v251 = vld [vmem:[%s205 + $0x160] sm:$0xff]
                %252 = vst [vmem:[%s206 + $0xb0] sm:$0xff] %v251
                %v253 = vld [vmem:[%s205 + $0x168] sm:$0xff]
                %254 = vst [vmem:[%s206 + $0xb8] sm:$0xff] %v253
                %v255 = vld [vmem:[%s205 + $0x180] sm:$0xff]
                %256 = vst [vmem:[%s206 + $0xc0] sm:$0xff] %v255
                %v257 = vld [vmem:[%s205 + $0x188] sm:$0xff]
                %258 = vst [vmem:[%s206 + $0xc8] sm:$0xff] %v257
                %v259 = vld [vmem:[%s205 + $0x1a0] sm:$0xff]
                %260 = vst [vmem:[%s206 + $0xd0] sm:$0xff] %v259
                %v261 = vld [vmem:[%s205 + $0x1a8] sm:$0xff]
                %262 = vst [vmem:[%s206 + $0xd8] sm:$0xff] %v261
                %v263 = vld [vmem:[%s205 + $0x1c0] sm:$0xff]
                %264 = vst [vmem:[%s206 + $0xe0] sm:$0xff] %v263
                %v265 = vld [vmem:[%s205 + $0x1c8] sm:$0xff]
                %266 = vst [vmem:[%s206 + $0xe8] sm:$0xff] %v265
                %v267 = vld [vmem:[%s205 + $0x1e0] sm:$0xff]
                %268 = vst [vmem:[%s206 + $0xf0] sm:$0xff] %v267
                %v269 = vld [vmem:[%s205 + $0x1e8] sm:$0xff]
                %270 = vst [vmem:[%s206 + $0xf8] sm:$0xff] %v269
                %v271 = vld [vmem:[%s205 + $0x200] sm:$0xff]
                %272 = vst [vmem:[%s206 + $0x100] sm:$0xff] %v271
                %v273 = vld [vmem:[%s205 + $0x208] sm:$0xff]
                %274 = vst [vmem:[%s206 + $0x108] sm:$0xff] %v273
                %v275 = vld [vmem:[%s205 + $0x220] sm:$0xff]
                %276 = vst [vmem:[%s206 + $0x110] sm:$0xff] %v275
                %v277 = vld [vmem:[%s205 + $0x228] sm:$0xff]
                %278 = vst [vmem:[%s206 + $0x118] sm:$0xff] %v277
                %v279 = vld [vmem:[%s205 + $0x240] sm:$0xff]
                %280 = vst [vmem:[%s206 + $0x120] sm:$0xff] %v279
                %v281 = vld [vmem:[%s205 + $0x248] sm:$0xff]
                %282 = vst [vmem:[%s206 + $0x128] sm:$0xff] %v281
                %v283 = vld [vmem:[%s205 + $0x260] sm:$0xff]
                %284 = vst [vmem:[%s206 + $0x130] sm:$0xff] %v283
                %v285 = vld [vmem:[%s205 + $0x268] sm:$0xff]
                %286 = vst [vmem:[%s206 + $0x138] sm:$0xff] %v285
                %v287 = vld [vmem:[%s205 + $0x280] sm:$0xff]
                %288 = vst [vmem:[%s206 + $0x140] sm:$0xff] %v287
                %v289 = vld [vmem:[%s205 + $0x288] sm:$0xff]
                %290 = vst [vmem:[%s206 + $0x148] sm:$0xff] %v289
                %v291 = vld [vmem:[%s205 + $0x2a0] sm:$0xff]
                %292 = vst [vmem:[%s206 + $0x150] sm:$0xff] %v291
                %v293 = vld [vmem:[%s205 + $0x2a8] sm:$0xff]
                %294 = vst [vmem:[%s206 + $0x158] sm:$0xff] %v293
                %v295 = vld [vmem:[%s205 + $0x2c0] sm:$0xff]
                %296 = vst [vmem:[%s206 + $0x160] sm:$0xff] %v295
                %v297 = vld [vmem:[%s205 + $0x2c8] sm:$0xff]
                %298 = vst [vmem:[%s206 + $0x168] sm:$0xff] %v297
                %v299 = vld [vmem:[%s205 + $0x2e0] sm:$0xff]
                %300 = vst [vmem:[%s206 + $0x170] sm:$0xff] %v299
                %v301 = vld [vmem:[%s205 + $0x2e8] sm:$0xff]
                %302 = vst [vmem:[%s206 + $0x178] sm:$0xff] %v301
                %v303 = vld [vmem:[%s205 + $0x300] sm:$0xff]
                %304 = vst [vmem:[%s206 + $0x180] sm:$0xff] %v303
                %v305 = vld [vmem:[%s205 + $0x308] sm:$0xff]
                %306 = vst [vmem:[%s206 + $0x188] sm:$0xff] %v305
                %v307 = vld [vmem:[%s205 + $0x320] sm:$0xff]
                %308 = vst [vmem:[%s206 + $0x190] sm:$0xff] %v307
                %v309 = vld [vmem:[%s205 + $0x328] sm:$0xff]
                %310 = vst [vmem:[%s206 + $0x198] sm:$0xff] %v309
                %v311 = vld [vmem:[%s205 + $0x340] sm:$0xff]
                %312 = vst [vmem:[%s206 + $0x1a0] sm:$0xff] %v311
                %v313 = vld [vmem:[%s205 + $0x348] sm:$0xff]
                %314 = vst [vmem:[%s206 + $0x1a8] sm:$0xff] %v313
                %v315 = vld [vmem:[%s205 + $0x360] sm:$0xff]
                %316 = vst [vmem:[%s206 + $0x1b0] sm:$0xff] %v315
                %v317 = vld [vmem:[%s205 + $0x368] sm:$0xff]
                %318 = vst [vmem:[%s206 + $0x1b8] sm:$0xff] %v317
                %v319 = vld [vmem:[%s205 + $0x380] sm:$0xff]
                %320 = vst [vmem:[%s206 + $0x1c0] sm:$0xff] %v319
                %v321 = vld [vmem:[%s205 + $0x388] sm:$0xff]
                %322 = vst [vmem:[%s206 + $0x1c8] sm:$0xff] %v321
                %v323 = vld [vmem:[%s205 + $0x3a0] sm:$0xff]
                %324 = vst [vmem:[%s206 + $0x1d0] sm:$0xff] %v323
                %v325 = vld [vmem:[%s205 + $0x3a8] sm:$0xff]
                %326 = vst [vmem:[%s206 + $0x1d8] sm:$0xff] %v325
                %v327 = vld [vmem:[%s205 + $0x3c0] sm:$0xff]
                %328 = vst [vmem:[%s206 + $0x1e0] sm:$0xff] %v327
                %v329 = vld [vmem:[%s205 + $0x3c8] sm:$0xff]
                %330 = vst [vmem:[%s206 + $0x1e8] sm:$0xff] %v329
                %v331 = vld [vmem:[%s205 + $0x3e0] sm:$0xff]
                %332 = vst [vmem:[%s206 + $0x1f0] sm:$0xff] %v331
                %v333 = vld [vmem:[%s205 + $0x3e8] sm:$0xff]
                %334 = vst [vmem:[%s206 + $0x1f8] sm:$0xff] %v333
                %v335 = vld [vmem:[%s205 + $0x400] sm:$0xff]
                %336 = vst [vmem:[%s206 + $0x200] sm:$0xff] %v335
                %v337 = vld [vmem:[%s205 + $0x408] sm:$0xff]
                %338 = vst [vmem:[%s206 + $0x208] sm:$0xff] %v337
                %v339 = vld [vmem:[%s205 + $0x420] sm:$0xff]
                %340 = vst [vmem:[%s206 + $0x210] sm:$0xff] %v339
                %v341 = vld [vmem:[%s205 + $0x428] sm:$0xff]
                %342 = vst [vmem:[%s206 + $0x218] sm:$0xff] %v341
                %v343 = vld [vmem:[%s205 + $0x440] sm:$0xff]
                %344 = vst [vmem:[%s206 + $0x220] sm:$0xff] %v343
                %v345 = vld [vmem:[%s205 + $0x448] sm:$0xff]
                %346 = vst [vmem:[%s206 + $0x228] sm:$0xff] %v345
                %v347 = vld [vmem:[%s205 + $0x460] sm:$0xff]
                %348 = vst [vmem:[%s206 + $0x230] sm:$0xff] %v347
                %v349 = vld [vmem:[%s205 + $0x468] sm:$0xff]
                %350 = vst [vmem:[%s206 + $0x238] sm:$0xff] %v349
                %v351 = vld [vmem:[%s205 + $0x480] sm:$0xff]
                %352 = vst [vmem:[%s206 + $0x240] sm:$0xff] %v351
                %v353 = vld [vmem:[%s205 + $0x488] sm:$0xff]
                %354 = vst [vmem:[%s206 + $0x248] sm:$0xff] %v353
                %v355 = vld [vmem:[%s205 + $0x4a0] sm:$0xff]
                %356 = vst [vmem:[%s206 + $0x250] sm:$0xff] %v355
                %v357 = vld [vmem:[%s205 + $0x4a8] sm:$0xff]
                %358 = vst [vmem:[%s206 + $0x258] sm:$0xff] %v357
                %v359 = vld [vmem:[%s205 + $0x4c0] sm:$0xff]
                %360 = vst [vmem:[%s206 + $0x260] sm:$0xff] %v359
                %v361 = vld [vmem:[%s205 + $0x4c8] sm:$0xff]
                %362 = vst [vmem:[%s206 + $0x268] sm:$0xff] %v361
                %v363 = vld [vmem:[%s205 + $0x4e0] sm:$0xff]
                %364 = vst [vmem:[%s206 + $0x270] sm:$0xff] %v363
                %v365 = vld [vmem:[%s205 + $0x4e8] sm:$0xff]
                %366 = vst [vmem:[%s206 + $0x278] sm:$0xff] %v365
                %v367 = vld [vmem:[%s205 + $0x500] sm:$0xff]
                %368 = vst [vmem:[%s206 + $0x280] sm:$0xff] %v367
                %v369 = vld [vmem:[%s205 + $0x508] sm:$0xff]
                %370 = vst [vmem:[%s206 + $0x288] sm:$0xff] %v369
                %v371 = vld [vmem:[%s205 + $0x520] sm:$0xff]
                %372 = vst [vmem:[%s206 + $0x290] sm:$0xff] %v371
                %v373 = vld [vmem:[%s205 + $0x528] sm:$0xff]
                %374 = vst [vmem:[%s206 + $0x298] sm:$0xff] %v373
                %v375 = vld [vmem:[%s205 + $0x540] sm:$0xff]
                %376 = vst [vmem:[%s206 + $0x2a0] sm:$0xff] %v375
                %v377 = vld [vmem:[%s205 + $0x548] sm:$0xff]
                %378 = vst [vmem:[%s206 + $0x2a8] sm:$0xff] %v377
                %v379 = vld [vmem:[%s205 + $0x560] sm:$0xff]
                %380 = vst [vmem:[%s206 + $0x2b0] sm:$0xff] %v379
                %v381 = vld [vmem:[%s205 + $0x568] sm:$0xff]
                %382 = vst [vmem:[%s206 + $0x2b8] sm:$0xff] %v381
                %v383 = vld [vmem:[%s205 + $0x580] sm:$0xff]
                %384 = vst [vmem:[%s206 + $0x2c0] sm:$0xff] %v383
                %v385 = vld [vmem:[%s205 + $0x588] sm:$0xff]
                %386 = vst [vmem:[%s206 + $0x2c8] sm:$0xff] %v385
                %v387 = vld [vmem:[%s205 + $0x5a0] sm:$0xff]
                %388 = vst [vmem:[%s206 + $0x2d0] sm:$0xff] %v387
                %v389 = vld [vmem:[%s205 + $0x5a8] sm:$0xff]
                %390 = vst [vmem:[%s206 + $0x2d8] sm:$0xff] %v389
                %v391 = vld [vmem:[%s205 + $0x5c0] sm:$0xff]
                %392 = vst [vmem:[%s206 + $0x2e0] sm:$0xff] %v391
                %v393 = vld [vmem:[%s205 + $0x5c8] sm:$0xff]
                %394 = vst [vmem:[%s206 + $0x2e8] sm:$0xff] %v393
                %v395 = vld [vmem:[%s205 + $0x5e0] sm:$0xff]
                %396 = vst [vmem:[%s206 + $0x2f0] sm:$0xff] %v395
                %v397 = vld [vmem:[%s205 + $0x5e8] sm:$0xff]
                %398 = vst [vmem:[%s206 + $0x2f8] sm:$0xff] %v397
                %v399 = vld [vmem:[%s205 + $0x600] sm:$0xff]
                %400 = vst [vmem:[%s206 + $0x300] sm:$0xff] %v399
                %v401 = vld [vmem:[%s205 + $0x608] sm:$0xff]
                %402 = vst [vmem:[%s206 + $0x308] sm:$0xff] %v401
                %v403 = vld [vmem:[%s205 + $0x620] sm:$0xff]
                %404 = vst [vmem:[%s206 + $0x310] sm:$0xff] %v403
                %v405 = vld [vmem:[%s205 + $0x628] sm:$0xff]
                %406 = vst [vmem:[%s206 + $0x318] sm:$0xff] %v405
                %v407 = vld [vmem:[%s205 + $0x640] sm:$0xff]
                %408 = vst [vmem:[%s206 + $0x320] sm:$0xff] %v407
                %v409 = vld [vmem:[%s205 + $0x648] sm:$0xff]
                %410 = vst [vmem:[%s206 + $0x328] sm:$0xff] %v409
                %v411 = vld [vmem:[%s205 + $0x660] sm:$0xff]
                %412 = vst [vmem:[%s206 + $0x330] sm:$0xff] %v411
                %v413 = vld [vmem:[%s205 + $0x668] sm:$0xff]
                %414 = vst [vmem:[%s206 + $0x338] sm:$0xff] %v413
                %v415 = vld [vmem:[%s205 + $0x680] sm:$0xff]
                %416 = vst [vmem:[%s206 + $0x340] sm:$0xff] %v415
                %v417 = vld [vmem:[%s205 + $0x688] sm:$0xff]
                %418 = vst [vmem:[%s206 + $0x348] sm:$0xff] %v417
                %v419 = vld [vmem:[%s205 + $0x6a0] sm:$0xff]
                %420 = vst [vmem:[%s206 + $0x350] sm:$0xff] %v419
                %v421 = vld [vmem:[%s205 + $0x6a8] sm:$0xff]
                %422 = vst [vmem:[%s206 + $0x358] sm:$0xff] %v421
                %v423 = vld [vmem:[%s205 + $0x6c0] sm:$0xff]
                %424 = vst [vmem:[%s206 + $0x360] sm:$0xff] %v423
                %v425 = vld [vmem:[%s205 + $0x6c8] sm:$0xff]
                %426 = vst [vmem:[%s206 + $0x368] sm:$0xff] %v425
                %v427 = vld [vmem:[%s205 + $0x6e0] sm:$0xff]
                %428 = vst [vmem:[%s206 + $0x370] sm:$0xff] %v427
                %v429 = vld [vmem:[%s205 + $0x6e8] sm:$0xff]
                %430 = vst [vmem:[%s206 + $0x378] sm:$0xff] %v429
                %v431 = vld [vmem:[%s205 + $0x700] sm:$0xff]
                %432 = vst [vmem:[%s206 + $0x380] sm:$0xff] %v431
                %v433 = vld [vmem:[%s205 + $0x708] sm:$0xff]
                %434 = vst [vmem:[%s206 + $0x388] sm:$0xff] %v433
                %v435 = vld [vmem:[%s205 + $0x720] sm:$0xff]
                %436 = vst [vmem:[%s206 + $0x390] sm:$0xff] %v435
                %v437 = vld [vmem:[%s205 + $0x728] sm:$0xff]
                %438 = vst [vmem:[%s206 + $0x398] sm:$0xff] %v437
                %v439 = vld [vmem:[%s205 + $0x740] sm:$0xff]
                %440 = vst [vmem:[%s206 + $0x3a0] sm:$0xff] %v439
                %v441 = vld [vmem:[%s205 + $0x748] sm:$0xff]
                %442 = vst [vmem:[%s206 + $0x3a8] sm:$0xff] %v441
                %v443 = vld [vmem:[%s205 + $0x760] sm:$0xff]
                %444 = vst [vmem:[%s206 + $0x3b0] sm:$0xff] %v443
                %v445 = vld [vmem:[%s205 + $0x768] sm:$0xff]
                %446 = vst [vmem:[%s206 + $0x3b8] sm:$0xff] %v445
                %v447 = vld [vmem:[%s205 + $0x780] sm:$0xff]
                %448 = vst [vmem:[%s206 + $0x3c0] sm:$0xff] %v447
                %v449 = vld [vmem:[%s205 + $0x788] sm:$0xff]
                %450 = vst [vmem:[%s206 + $0x3c8] sm:$0xff] %v449
                %v451 = vld [vmem:[%s205 + $0x7a0] sm:$0xff]
                %452 = vst [vmem:[%s206 + $0x3d0] sm:$0xff] %v451
                %v453 = vld [vmem:[%s205 + $0x7a8] sm:$0xff]
                %454 = vst [vmem:[%s206 + $0x3d8] sm:$0xff] %v453
                %v455 = vld [vmem:[%s205 + $0x7c0] sm:$0xff]
                %456 = vst [vmem:[%s206 + $0x3e0] sm:$0xff] %v455
                %v457 = vld [vmem:[%s205 + $0x7c8] sm:$0xff]
                %458 = vst [vmem:[%s206 + $0x3e8] sm:$0xff] %v457
                %v459 = vld [vmem:[%s205 + $0x7e0] sm:$0xff]
                %460 = vst [vmem:[%s206 + $0x3f0] sm:$0xff] %v459
                %v461 = vld [vmem:[%s205 + $0x7e8] sm:$0xff]
                %462 = vst [vmem:[%s206 + $0x3f8] sm:$0xff] %v461
              $region41: #{discriminator_forward.6} parent=35 // loop_footer
                %s204 = sadd.s32 1, %s200
              $region42: #{discriminator_forward.6} parent=35 // loop_footer_branch
                %199 = sbr.rel target = $region38
              $region43: #{discriminator_forward.6} parent=35 // loop_exit
                _
            $region36: #{discriminator_forward.6} parent=31 // pred_fallthru
              _
            // Predicated region
            $region44: #{discriminator_forward.6} parent=31 // pred_check
              _
            $region45: #{discriminator_forward.6} parent=31 // pred_check_branch
              %464 = sbr.rel target = $region47
            $region46: #{discriminator_forward.6} parent=31 // pred_region
              _
            $region47: #{discriminator_forward.6} parent=31 // pred_fallthru
              _
          $region32: #{discriminator_forward.6} parent=27 // pred_fallthru
            _
          %465 = vnop
        $region28: #{discriminator_forward.6} parent=23 // pred_fallthru
          _
        // Predicated region
        $region48: #{discriminator_forward.6} parent=23 // pred_check
          %p466 = pneg %p70
        $region49: #{discriminator_forward.6} parent=23 // pred_check_branch
          %468 = sbr.rel (%p466) target = $region51
        $region50: #{discriminator_forward.6} parent=23 // pred_region
          %s469 = smul.u32 64, %s18
          %p470 = scmp.lt.s32.totalorder %s469, 127
          %s471 = scalar_select %p470, %s469, 127
          %p472 = scmp.lt.s32.totalorder %s17, 0
          %s473 = scalar_select %p472, %s17, 0
          %s474 = sadd.s32 %s473, %s471
          %s475 = smul.addr %s474, 4
          %s476 = scalar_lea.vmem %s1, %s475
          %s477 = smul.u32 64, %s18
        $region51: #{discriminator_forward.6} parent=23 // pred_fallthru
          _
      $region24: #{discriminator_forward.6} parent=5 // pred_fallthru
        _
      %p478 = scmp.le.s32.totalorder 1, %s10
      %p479 = scmp.lt.s32.totalorder %s10, 3
      %p480 = pnand %p478, %p479
      %p481 = pneg %p480
      // Predicated region
      $region52: #{discriminator_forward.6} parent=5 // pred_check
        _
      $region53: #{discriminator_forward.6} parent=5 // pred_check_branch
        %483 = sbr.rel (%p480) target = $region55
      $region54: #{discriminator_forward.6} parent=5 // pred_region
        %s484 = ssub.s32 %s10, 1
        %s485 = sand.u32 %s35, 1
        %s486 = sand.u32 %s35, 1
        %s487 = smul.addr %s486, 1024
        %s488 = scalar_lea.vmem [#allocation3], %s487
        // Predicated region
        $region56: #{discriminator_forward.6} parent=54 // pred_check
          %p489 = pneg %p48
        $region57: #{discriminator_forward.6} parent=54 // pred_check_branch
          %491 = sbr.rel (%p489) target = $region59
        $region58: #{discriminator_forward.6} parent=54 // pred_region
          _
        $region59: #{discriminator_forward.6} parent=54 // pred_fallthru
          _
        %s492 = sand.u32 %s35, 1
        %s493 = sand.u32 %s35, 1
        %s494 = smul.addr %s493, 1024
        %s495 = scalar_lea.vmem [#allocation3], %s494
        %p496 = pneg %p48
        %p497 = pneg %p45
        %s498 = smul.u32 64, %s20
        %p499 = scmp.lt.s32.totalorder %s498, 127
        %s500 = scalar_select %p499, %s498, 127
        %p501 = scmp.lt.s32.totalorder %s19, 0
        %s502 = scalar_select %p501, %s19, 0
        %s503 = sadd.s32 %s502, %s500
        %s504 = smul.addr %s503, 4
        %s505 = scalar_lea.vmem %s1, %s504
        %p506 = pneg %p76
        %p507 = pneg %p73
        %p508 = scmp.lt.s32.totalorder %s19, 0
        %s509 = scalar_select %p508, %s19, 0
        %s510 = scalar_lea.vmem %s2, %s509
        %p511 = pneg %p102
        %p512 = pneg %p99
        %p513 = scmp.lt.s32.totalorder %s19, 0
        %s514 = scalar_select %p513, %s19, 0
        %s515 = scalar_lea.vmem %s3, %s514
        %p516 = pneg %p128
        %p517 = pneg %p125
        %p518 = pneg %p154
        %p519 = pneg %p151
        %p520 = scmp.lt.s32.totalorder %s19, 0
        %s521 = scalar_select %p520, %s19, 0
        %s522 = smul.addr %s521, 4
        %s523 = scalar_lea.vmem %s4, %s522
        %s524 = smul.u32 4, %s20
        %s525 = smul.u32 64, %s20
        %p526 = scmp.lt.s32.totalorder %s525, 127
        %s527 = scalar_select %p526, %s525, 127
        %p528 = scmp.lt.s32.totalorder %s19, 0
        %s529 = scalar_select %p528, %s19, 0
        %s530 = sadd.s32 %s529, %s527
        %s531 = smul.addr %s530, 4
        %s532 = scalar_lea.vmem %s1, %s531
        %s533 = smul.u32 64, %s20
        %p534 = scmp.lt.s32.totalorder %s19, 0
        %s535 = scalar_select %p534, %s19, 0
        %s536 = scalar_lea.vmem %s2, %s535
        %p537 = scmp.lt.s32.totalorder %s19, 0
        %s538 = scalar_select %p537, %s19, 0
        %s539 = scalar_lea.vmem %s3, %s538
        %p540 = scmp.lt.s32.totalorder %s19, 0
        %s541 = scalar_select %p540, %s19, 0
        %s542 = smul.addr %s541, 4
        %s543 = scalar_lea.vmem %s4, %s542
        %p544 = scmp.eq.s32.totalorder %s20, 0
        // Predicated region
        $region60: #{discriminator_forward.6} parent=54 // pred_check
          %p545 = pneg %p544
        $region61: #{discriminator_forward.6} parent=54 // pred_check_branch
          %547 = sbr.rel (%p545) target = $region63
        $region62: #{discriminator_forward.6} parent=54 // pred_region
          %548 = vst [vmem:[#allocation2] sm:$0xff] 0.0
          %549 = vst [vmem:[#allocation2 + $0x8] sm:$0xff] 0.0
          %550 = vst [vmem:[#allocation2 + $0x10] sm:$0xff] 0.0
          %551 = vst [vmem:[#allocation2 + $0x18] sm:$0xff] 0.0
          %552 = vst [vmem:[#allocation2 + $0x20] sm:$0xff] 0.0
          %553 = vst [vmem:[#allocation2 + $0x28] sm:$0xff] 0.0
          %554 = vst [vmem:[#allocation2 + $0x30] sm:$0xff] 0.0
          %555 = vst [vmem:[#allocation2 + $0x38] sm:$0xff] 0.0
          %556 = vst [vmem:[#allocation2 + $0x40] sm:$0xff] 0.0
          %557 = vst [vmem:[#allocation2 + $0x48] sm:$0xff] 0.0
          %558 = vst [vmem:[#allocation2 + $0x50] sm:$0xff] 0.0
          %559 = vst [vmem:[#allocation2 + $0x58] sm:$0xff] 0.0
          %560 = vst [vmem:[#allocation2 + $0x60] sm:$0xff] 0.0
          %561 = vst [vmem:[#allocation2 + $0x68] sm:$0xff] 0.0
          %562 = vst [vmem:[#allocation2 + $0x70] sm:$0xff] 0.0
          %563 = vst [vmem:[#allocation2 + $0x78] sm:$0xff] 0.0
          %564 = vst [vmem:[#allocation2 + $0x80] sm:$0xff] 0.0
          %565 = vst [vmem:[#allocation2 + $0x88] sm:$0xff] 0.0
          %566 = vst [vmem:[#allocation2 + $0x90] sm:$0xff] 0.0
          %567 = vst [vmem:[#allocation2 + $0x98] sm:$0xff] 0.0
          %568 = vst [vmem:[#allocation2 + $0xa0] sm:$0xff] 0.0
          %569 = vst [vmem:[#allocation2 + $0xa8] sm:$0xff] 0.0
          %570 = vst [vmem:[#allocation2 + $0xb0] sm:$0xff] 0.0
          %571 = vst [vmem:[#allocation2 + $0xb8] sm:$0xff] 0.0
          %572 = vst [vmem:[#allocation2 + $0xc0] sm:$0xff] 0.0
          %573 = vst [vmem:[#allocation2 + $0xc8] sm:$0xff] 0.0
          %574 = vst [vmem:[#allocation2 + $0xd0] sm:$0xff] 0.0
          %575 = vst [vmem:[#allocation2 + $0xd8] sm:$0xff] 0.0
          %576 = vst [vmem:[#allocation2 + $0xe0] sm:$0xff] 0.0
          %577 = vst [vmem:[#allocation2 + $0xe8] sm:$0xff] 0.0
          %578 = vst [vmem:[#allocation2 + $0xf0] sm:$0xff] 0.0
          %579 = vst [vmem:[#allocation2 + $0xf8] sm:$0xff] 0.0
          %580 = vst [vmem:[#allocation2 + $0x100] sm:$0xff] 0.0
          %581 = vst [vmem:[#allocation2 + $0x108] sm:$0xff] 0.0
          %582 = vst [vmem:[#allocation2 + $0x110] sm:$0xff] 0.0
          %583 = vst [vmem:[#allocation2 + $0x118] sm:$0xff] 0.0
          %584 = vst [vmem:[#allocation2 + $0x120] sm:$0xff] 0.0
          %585 = vst [vmem:[#allocation2 + $0x128] sm:$0xff] 0.0
          %586 = vst [vmem:[#allocation2 + $0x130] sm:$0xff] 0.0
          %587 = vst [vmem:[#allocation2 + $0x138] sm:$0xff] 0.0
          %588 = vst [vmem:[#allocation2 + $0x140] sm:$0xff] 0.0
          %589 = vst [vmem:[#allocation2 + $0x148] sm:$0xff] 0.0
          %590 = vst [vmem:[#allocation2 + $0x150] sm:$0xff] 0.0
          %591 = vst [vmem:[#allocation2 + $0x158] sm:$0xff] 0.0
          %592 = vst [vmem:[#allocation2 + $0x160] sm:$0xff] 0.0
          %593 = vst [vmem:[#allocation2 + $0x168] sm:$0xff] 0.0
          %594 = vst [vmem:[#allocation2 + $0x170] sm:$0xff] 0.0
          %595 = vst [vmem:[#allocation2 + $0x178] sm:$0xff] 0.0
          %596 = vst [vmem:[#allocation2 + $0x180] sm:$0xff] 0.0
          %597 = vst [vmem:[#allocation2 + $0x188] sm:$0xff] 0.0
          %598 = vst [vmem:[#allocation2 + $0x190] sm:$0xff] 0.0
          %599 = vst [vmem:[#allocation2 + $0x198] sm:$0xff] 0.0
          %600 = vst [vmem:[#allocation2 + $0x1a0] sm:$0xff] 0.0
          %601 = vst [vmem:[#allocation2 + $0x1a8] sm:$0xff] 0.0
          %602 = vst [vmem:[#allocation2 + $0x1b0] sm:$0xff] 0.0
          %603 = vst [vmem:[#allocation2 + $0x1b8] sm:$0xff] 0.0
          %604 = vst [vmem:[#allocation2 + $0x1c0] sm:$0xff] 0.0
          %605 = vst [vmem:[#allocation2 + $0x1c8] sm:$0xff] 0.0
          %606 = vst [vmem:[#allocation2 + $0x1d0] sm:$0xff] 0.0
          %607 = vst [vmem:[#allocation2 + $0x1d8] sm:$0xff] 0.0
          %608 = vst [vmem:[#allocation2 + $0x1e0] sm:$0xff] 0.0
          %609 = vst [vmem:[#allocation2 + $0x1e8] sm:$0xff] 0.0
          %610 = vst [vmem:[#allocation2 + $0x1f0] sm:$0xff] 0.0
          %611 = vst [vmem:[#allocation2 + $0x1f8] sm:$0xff] 0.0
        $region63: #{discriminator_forward.6} parent=54 // pred_fallthru
          _
        %v612 = vld [vmem:[#allocation2] sm:$0xff]
        %v613 = vld [vmem:[#allocation2 + $0x8] sm:$0xff]
        %v614 = vld [vmem:[#allocation2 + $0x10] sm:$0xff]
        %v615 = vld [vmem:[#allocation2 + $0x18] sm:$0xff]
        %v616 = vld [vmem:[#allocation2 + $0x20] sm:$0xff]
        %v617 = vld [vmem:[#allocation2 + $0x28] sm:$0xff]
        %v618 = vld [vmem:[#allocation2 + $0x30] sm:$0xff]
        %v619 = vld [vmem:[#allocation2 + $0x38] sm:$0xff]
        %v620 = vld [vmem:[#allocation2 + $0x40] sm:$0xff]
        %v621 = vld [vmem:[#allocation2 + $0x48] sm:$0xff]
        %v622 = vld [vmem:[#allocation2 + $0x50] sm:$0xff]
        %v623 = vld [vmem:[#allocation2 + $0x58] sm:$0xff]
        %v624 = vld [vmem:[#allocation2 + $0x60] sm:$0xff]
        %v625 = vld [vmem:[#allocation2 + $0x68] sm:$0xff]
        %v626 = vld [vmem:[#allocation2 + $0x70] sm:$0xff]
        %v627 = vld [vmem:[#allocation2 + $0x78] sm:$0xff]
        %v628 = vld [vmem:[#allocation2 + $0x80] sm:$0xff]
        %v629 = vld [vmem:[#allocation2 + $0x88] sm:$0xff]
        %v630 = vld [vmem:[#allocation2 + $0x90] sm:$0xff]
        %v631 = vld [vmem:[#allocation2 + $0x98] sm:$0xff]
        %v632 = vld [vmem:[#allocation2 + $0xa0] sm:$0xff]
        %v633 = vld [vmem:[#allocation2 + $0xa8] sm:$0xff]
        %v634 = vld [vmem:[#allocation2 + $0xb0] sm:$0xff]
        %v635 = vld [vmem:[#allocation2 + $0xb8] sm:$0xff]
        %v636 = vld [vmem:[#allocation2 + $0xc0] sm:$0xff]
        %v637 = vld [vmem:[#allocation2 + $0xc8] sm:$0xff]
        %v638 = vld [vmem:[#allocation2 + $0xd0] sm:$0xff]
        %v639 = vld [vmem:[#allocation2 + $0xd8] sm:$0xff]
        %v640 = vld [vmem:[#allocation2 + $0xe0] sm:$0xff]
        %v641 = vld [vmem:[#allocation2 + $0xe8] sm:$0xff]
        %v642 = vld [vmem:[#allocation2 + $0xf0] sm:$0xff]
        %v643 = vld [vmem:[#allocation2 + $0xf8] sm:$0xff]
        %v644 = vld [vmem:[#allocation2 + $0x100] sm:$0xff]
        %v645 = vld [vmem:[#allocation2 + $0x108] sm:$0xff]
        %v646 = vld [vmem:[#allocation2 + $0x110] sm:$0xff]
        %v647 = vld [vmem:[#allocation2 + $0x118] sm:$0xff]
        %v648 = vld [vmem:[#allocation2 + $0x120] sm:$0xff]
        %v649 = vld [vmem:[#allocation2 + $0x128] sm:$0xff]
        %v650 = vld [vmem:[#allocation2 + $0x130] sm:$0xff]
        %v651 = vld [vmem:[#allocation2 + $0x138] sm:$0xff]
        %v652 = vld [vmem:[#allocation2 + $0x140] sm:$0xff]
        %v653 = vld [vmem:[#allocation2 + $0x148] sm:$0xff]
        %v654 = vld [vmem:[#allocation2 + $0x150] sm:$0xff]
        %v655 = vld [vmem:[#allocation2 + $0x158] sm:$0xff]
        %v656 = vld [vmem:[#allocation2 + $0x160] sm:$0xff]
        %v657 = vld [vmem:[#allocation2 + $0x168] sm:$0xff]
        %v658 = vld [vmem:[#allocation2 + $0x170] sm:$0xff]
        %v659 = vld [vmem:[#allocation2 + $0x178] sm:$0xff]
        %v660 = vld [vmem:[#allocation2 + $0x180] sm:$0xff]
        %v661 = vld [vmem:[#allocation2 + $0x188] sm:$0xff]
        %v662 = vld [vmem:[#allocation2 + $0x190] sm:$0xff]
        %v663 = vld [vmem:[#allocation2 + $0x198] sm:$0xff]
        %v664 = vld [vmem:[#allocation2 + $0x1a0] sm:$0xff]
        %v665 = vld [vmem:[#allocation2 + $0x1a8] sm:$0xff]
        %v666 = vld [vmem:[#allocation2 + $0x1b0] sm:$0xff]
        %v667 = vld [vmem:[#allocation2 + $0x1b8] sm:$0xff]
        %v668 = vld [vmem:[#allocation2 + $0x1c0] sm:$0xff]
        %v669 = vld [vmem:[#allocation2 + $0x1c8] sm:$0xff]
        %v670 = vld [vmem:[#allocation2 + $0x1d0] sm:$0xff]
        %v671 = vld [vmem:[#allocation2 + $0x1d8] sm:$0xff]
        %v672 = vld [vmem:[#allocation2 + $0x1e0] sm:$0xff]
        %v673 = vld [vmem:[#allocation2 + $0x1e8] sm:$0xff]
        %v674 = vld [vmem:[#allocation2 + $0x1f0] sm:$0xff]
        %v675 = vld [vmem:[#allocation2 + $0x1f8] sm:$0xff]
        %v676 = vld [vmem:[%s488] sm:$0xff]
        %v677 = vld [vmem:[%s488 + $0x8] sm:$0xff]
        %v678 = vld [vmem:[%s488 + $0x10] sm:$0xff]
        %v679 = vld [vmem:[%s488 + $0x18] sm:$0xff]
        %v680 = vld [vmem:[%s488 + $0x20] sm:$0xff]
        %v681 = vld [vmem:[%s488 + $0x28] sm:$0xff]
        %v682 = vld [vmem:[%s488 + $0x30] sm:$0xff]
        %v683 = vld [vmem:[%s488 + $0x38] sm:$0xff]
        %v684 = vld [vmem:[%s488 + $0x40] sm:$0xff]
        %v685 = vld [vmem:[%s488 + $0x48] sm:$0xff]
        %v686 = vld [vmem:[%s488 + $0x50] sm:$0xff]
        %v687 = vld [vmem:[%s488 + $0x58] sm:$0xff]
        %v688 = vld [vmem:[%s488 + $0x60] sm:$0xff]
        %v689 = vld [vmem:[%s488 + $0x68] sm:$0xff]
        %v690 = vld [vmem:[%s488 + $0x70] sm:$0xff]
        %v691 = vld [vmem:[%s488 + $0x78] sm:$0xff]
        %v692 = vld [vmem:[%s488 + $0x80] sm:$0xff]
        %v693 = vld [vmem:[%s488 + $0x88] sm:$0xff]
        %v694 = vld [vmem:[%s488 + $0x90] sm:$0xff]
        %v695 = vld [vmem:[%s488 + $0x98] sm:$0xff]
        %v696 = vld [vmem:[%s488 + $0xa0] sm:$0xff]
        %v697 = vld [vmem:[%s488 + $0xa8] sm:$0xff]
        %v698 = vld [vmem:[%s488 + $0xb0] sm:$0xff]
        %v699 = vld [vmem:[%s488 + $0xb8] sm:$0xff]
        %v700 = vld [vmem:[%s488 + $0xc0] sm:$0xff]
        %v701 = vld [vmem:[%s488 + $0xc8] sm:$0xff]
        %v702 = vld [vmem:[%s488 + $0xd0] sm:$0xff]
        %v703 = vld [vmem:[%s488 + $0xd8] sm:$0xff]
        %v704 = vld [vmem:[%s488 + $0xe0] sm:$0xff]
        %v705 = vld [vmem:[%s488 + $0xe8] sm:$0xff]
        %v706 = vld [vmem:[%s488 + $0xf0] sm:$0xff]
        %v707 = vld [vmem:[%s488 + $0xf8] sm:$0xff]
        %v708 = vld [vmem:[%s488 + $0x100] sm:$0xff]
        %v709 = vld [vmem:[%s488 + $0x108] sm:$0xff]
        %v710 = vld [vmem:[%s488 + $0x110] sm:$0xff]
        %v711 = vld [vmem:[%s488 + $0x118] sm:$0xff]
        %v712 = vld [vmem:[%s488 + $0x120] sm:$0xff]
        %v713 = vld [vmem:[%s488 + $0x128] sm:$0xff]
        %v714 = vld [vmem:[%s488 + $0x130] sm:$0xff]
        %v715 = vld [vmem:[%s488 + $0x138] sm:$0xff]
        %v716 = vld [vmem:[%s488 + $0x140] sm:$0xff]
        %v717 = vld [vmem:[%s488 + $0x148] sm:$0xff]
        %v718 = vld [vmem:[%s488 + $0x150] sm:$0xff]
        %v719 = vld [vmem:[%s488 + $0x158] sm:$0xff]
        %v720 = vld [vmem:[%s488 + $0x160] sm:$0xff]
        %v721 = vld [vmem:[%s488 + $0x168] sm:$0xff]
        %v722 = vld [vmem:[%s488 + $0x170] sm:$0xff]
        %v723 = vld [vmem:[%s488 + $0x178] sm:$0xff]
        %v724 = vld [vmem:[%s488 + $0x180] sm:$0xff]
        %v725 = vld [vmem:[%s488 + $0x188] sm:$0xff]
        %v726 = vld [vmem:[%s488 + $0x190] sm:$0xff]
        %v727 = vld [vmem:[%s488 + $0x198] sm:$0xff]
        %v728 = vld [vmem:[%s488 + $0x1a0] sm:$0xff]
        %v729 = vld [vmem:[%s488 + $0x1a8] sm:$0xff]
        %v730 = vld [vmem:[%s488 + $0x1b0] sm:$0xff]
        %v731 = vld [vmem:[%s488 + $0x1b8] sm:$0xff]
        %v732 = vld [vmem:[%s488 + $0x1c0] sm:$0xff]
        %v733 = vld [vmem:[%s488 + $0x1c8] sm:$0xff]
        %v734 = vld [vmem:[%s488 + $0x1d0] sm:$0xff]
        %v735 = vld [vmem:[%s488 + $0x1d8] sm:$0xff]
        %v736 = vld [vmem:[%s488 + $0x1e0] sm:$0xff]
        %v737 = vld [vmem:[%s488 + $0x1e8] sm:$0xff]
        %v738 = vld [vmem:[%s488 + $0x1f0] sm:$0xff]
        %v739 = vld [vmem:[%s488 + $0x1f8] sm:$0xff]
        %v740 = vld [vmem:[%s488 + $0x200] sm:$0xff]
        %v741 = vld [vmem:[%s488 + $0x208] sm:$0xff]
        %v742 = vld [vmem:[%s488 + $0x210] sm:$0xff]
        %v743 = vld [vmem:[%s488 + $0x218] sm:$0xff]
        %v744 = vld [vmem:[%s488 + $0x220] sm:$0xff]
        %v745 = vld [vmem:[%s488 + $0x228] sm:$0xff]
        %v746 = vld [vmem:[%s488 + $0x230] sm:$0xff]
        %v747 = vld [vmem:[%s488 + $0x238] sm:$0xff]
        %v748 = vld [vmem:[%s488 + $0x240] sm:$0xff]
        %v749 = vld [vmem:[%s488 + $0x248] sm:$0xff]
        %v750 = vld [vmem:[%s488 + $0x250] sm:$0xff]
        %v751 = vld [vmem:[%s488 + $0x258] sm:$0xff]
        %v752 = vld [vmem:[%s488 + $0x260] sm:$0xff]
        %v753 = vld [vmem:[%s488 + $0x268] sm:$0xff]
        %v754 = vld [vmem:[%s488 + $0x270] sm:$0xff]
        %v755 = vld [vmem:[%s488 + $0x278] sm:$0xff]
        %v756 = vld [vmem:[%s488 + $0x280] sm:$0xff]
        %v757 = vld [vmem:[%s488 + $0x288] sm:$0xff]
        %v758 = vld [vmem:[%s488 + $0x290] sm:$0xff]
        %v759 = vld [vmem:[%s488 + $0x298] sm:$0xff]
        %v760 = vld [vmem:[%s488 + $0x2a0] sm:$0xff]
        %v761 = vld [vmem:[%s488 + $0x2a8] sm:$0xff]
        %v762 = vld [vmem:[%s488 + $0x2b0] sm:$0xff]
        %v763 = vld [vmem:[%s488 + $0x2b8] sm:$0xff]
        %v764 = vld [vmem:[%s488 + $0x2c0] sm:$0xff]
        %v765 = vld [vmem:[%s488 + $0x2c8] sm:$0xff]
        %v766 = vld [vmem:[%s488 + $0x2d0] sm:$0xff]
        %v767 = vld [vmem:[%s488 + $0x2d8] sm:$0xff]
        %v768 = vld [vmem:[%s488 + $0x2e0] sm:$0xff]
        %v769 = vld [vmem:[%s488 + $0x2e8] sm:$0xff]
        %v770 = vld [vmem:[%s488 + $0x2f0] sm:$0xff]
        %v771 = vld [vmem:[%s488 + $0x2f8] sm:$0xff]
        %v772 = vld [vmem:[%s488 + $0x300] sm:$0xff]
        %v773 = vld [vmem:[%s488 + $0x308] sm:$0xff]
        %v774 = vld [vmem:[%s488 + $0x310] sm:$0xff]
        %v775 = vld [vmem:[%s488 + $0x318] sm:$0xff]
        %v776 = vld [vmem:[%s488 + $0x320] sm:$0xff]
        %v777 = vld [vmem:[%s488 + $0x328] sm:$0xff]
        %v778 = vld [vmem:[%s488 + $0x330] sm:$0xff]
        %v779 = vld [vmem:[%s488 + $0x338] sm:$0xff]
        %v780 = vld [vmem:[%s488 + $0x340] sm:$0xff]
        %v781 = vld [vmem:[%s488 + $0x348] sm:$0xff]
        %v782 = vld [vmem:[%s488 + $0x350] sm:$0xff]
        %v783 = vld [vmem:[%s488 + $0x358] sm:$0xff]
        %v784 = vld [vmem:[%s488 + $0x360] sm:$0xff]
        %v785 = vld [vmem:[%s488 + $0x368] sm:$0xff]
        %v786 = vld [vmem:[%s488 + $0x370] sm:$0xff]
        %v787 = vld [vmem:[%s488 + $0x378] sm:$0xff]
        %v788 = vld [vmem:[%s488 + $0x380] sm:$0xff]
        %v789 = vld [vmem:[%s488 + $0x388] sm:$0xff]
        %v790 = vld [vmem:[%s488 + $0x390] sm:$0xff]
        %v791 = vld [vmem:[%s488 + $0x398] sm:$0xff]
        %v792 = vld [vmem:[%s488 + $0x3a0] sm:$0xff]
        %v793 = vld [vmem:[%s488 + $0x3a8] sm:$0xff]
        %v794 = vld [vmem:[%s488 + $0x3b0] sm:$0xff]
        %v795 = vld [vmem:[%s488 + $0x3b8] sm:$0xff]
        %v796 = vld [vmem:[%s488 + $0x3c0] sm:$0xff]
        %v797 = vld [vmem:[%s488 + $0x3c8] sm:$0xff]
        %v798 = vld [vmem:[%s488 + $0x3d0] sm:$0xff]
        %v799 = vld [vmem:[%s488 + $0x3d8] sm:$0xff]
        %v800 = vld [vmem:[%s488 + $0x3e0] sm:$0xff]
        %v801 = vld [vmem:[%s488 + $0x3e8] sm:$0xff]
        %v802 = vld [vmem:[%s488 + $0x3f0] sm:$0xff]
        %v803 = vld [vmem:[%s488 + $0x3f8] sm:$0xff]
        %v804 = vld [vmem:[%s532] sm:$0xf]
        %v805 = vld [vmem:[%s532 + $0x4] sm:$0xf]
        %v806 = vld [vmem:[%s532 + $0x8] sm:$0xf]
        %v807 = vld [vmem:[%s532 + $0xc] sm:$0xf]
        %v808 = vld [vmem:[%s532 + $0x10] sm:$0xf]
        %v809 = vld [vmem:[%s532 + $0x14] sm:$0xf]
        %v810 = vld [vmem:[%s532 + $0x18] sm:$0xf]
        %v811 = vld [vmem:[%s532 + $0x1c] sm:$0xf]
        %v812 = vld [vmem:[%s532 + $0x20] sm:$0xf]
        %v813 = vld [vmem:[%s532 + $0x24] sm:$0xf]
        %v814 = vld [vmem:[%s532 + $0x28] sm:$0xf]
        %v815 = vld [vmem:[%s532 + $0x2c] sm:$0xf]
        %v816 = vld [vmem:[%s532 + $0x30] sm:$0xf]
        %v817 = vld [vmem:[%s532 + $0x34] sm:$0xf]
        %v818 = vld [vmem:[%s532 + $0x38] sm:$0xf]
        %v819 = vld [vmem:[%s532 + $0x3c] sm:$0xf]
        %v820 = vld [vmem:[%s532 + $0x40] sm:$0xf]
        %v821 = vld [vmem:[%s532 + $0x44] sm:$0xf]
        %v822 = vld [vmem:[%s532 + $0x48] sm:$0xf]
        %v823 = vld [vmem:[%s532 + $0x4c] sm:$0xf]
        %v824 = vld [vmem:[%s532 + $0x50] sm:$0xf]
        %v825 = vld [vmem:[%s532 + $0x54] sm:$0xf]
        %v826 = vld [vmem:[%s532 + $0x58] sm:$0xf]
        %v827 = vld [vmem:[%s532 + $0x5c] sm:$0xf]
        %v828 = vld [vmem:[%s532 + $0x60] sm:$0xf]
        %v829 = vld [vmem:[%s532 + $0x64] sm:$0xf]
        %v830 = vld [vmem:[%s532 + $0x68] sm:$0xf]
        %v831 = vld [vmem:[%s532 + $0x6c] sm:$0xf]
        %v832 = vld [vmem:[%s532 + $0x70] sm:$0xf]
        %v833 = vld [vmem:[%s532 + $0x74] sm:$0xf]
        %v834 = vld [vmem:[%s532 + $0x78] sm:$0xf]
        %v835 = vld [vmem:[%s532 + $0x7c] sm:$0xf]
        %v836 = vld [vmem:[%s532 + $0x80] sm:$0xf]
        %v837 = vld [vmem:[%s532 + $0x84] sm:$0xf]
        %v838 = vld [vmem:[%s532 + $0x88] sm:$0xf]
        %v839 = vld [vmem:[%s532 + $0x8c] sm:$0xf]
        %v840 = vld [vmem:[%s532 + $0x90] sm:$0xf]
        %v841 = vld [vmem:[%s532 + $0x94] sm:$0xf]
        %v842 = vld [vmem:[%s532 + $0x98] sm:$0xf]
        %v843 = vld [vmem:[%s532 + $0x9c] sm:$0xf]
        %v844 = vld [vmem:[%s532 + $0xa0] sm:$0xf]
        %v845 = vld [vmem:[%s532 + $0xa4] sm:$0xf]
        %v846 = vld [vmem:[%s532 + $0xa8] sm:$0xf]
        %v847 = vld [vmem:[%s532 + $0xac] sm:$0xf]
        %v848 = vld [vmem:[%s532 + $0xb0] sm:$0xf]
        %v849 = vld [vmem:[%s532 + $0xb4] sm:$0xf]
        %v850 = vld [vmem:[%s532 + $0xb8] sm:$0xf]
        %v851 = vld [vmem:[%s532 + $0xbc] sm:$0xf]
        %v852 = vld [vmem:[%s532 + $0xc0] sm:$0xf]
        %v853 = vld [vmem:[%s532 + $0xc4] sm:$0xf]
        %v854 = vld [vmem:[%s532 + $0xc8] sm:$0xf]
        %v855 = vld [vmem:[%s532 + $0xcc] sm:$0xf]
        %v856 = vld [vmem:[%s532 + $0xd0] sm:$0xf]
        %v857 = vld [vmem:[%s532 + $0xd4] sm:$0xf]
        %v858 = vld [vmem:[%s532 + $0xd8] sm:$0xf]
        %v859 = vld [vmem:[%s532 + $0xdc] sm:$0xf]
        %v860 = vld [vmem:[%s532 + $0xe0] sm:$0xf]
        %v861 = vld [vmem:[%s532 + $0xe4] sm:$0xf]
        %v862 = vld [vmem:[%s532 + $0xe8] sm:$0xf]
        %v863 = vld [vmem:[%s532 + $0xec] sm:$0xf]
        %v864 = vld [vmem:[%s532 + $0xf0] sm:$0xf]
        %v865 = vld [vmem:[%s532 + $0xf4] sm:$0xf]
        %v866 = vld [vmem:[%s532 + $0xf8] sm:$0xf]
        %v867 = vld [vmem:[%s532 + $0xfc] sm:$0xf]
        %v996 = vunpack.c.l.b16 %v676
        %v997 = vunpack.c.h.b16 %v676
        %v998 = vunpack.c.l.b16 %v677
        %v999 = vunpack.c.h.b16 %v677
        %v1000 = vunpack.c.l.b16 %v678
        %v1001 = vunpack.c.h.b16 %v678
        %v1002 = vunpack.c.l.b16 %v679
        %v1003 = vunpack.c.h.b16 %v679
        %v1004 = vunpack.c.l.b16 %v680
        %v1005 = vunpack.c.h.b16 %v680
        %v1006 = vunpack.c.l.b16 %v681
        %v1007 = vunpack.c.h.b16 %v681
        %v1008 = vunpack.c.l.b16 %v682
        %v1009 = vunpack.c.h.b16 %v682
        %v1010 = vunpack.c.l.b16 %v683
        %v1011 = vunpack.c.h.b16 %v683
        %v1012 = vunpack.c.l.b16 %v684
        %v1013 = vunpack.c.h.b16 %v684
        %v1014 = vunpack.c.l.b16 %v685
        %v1015 = vunpack.c.h.b16 %v685
        %v1016 = vunpack.c.l.b16 %v686
        %v1017 = vunpack.c.h.b16 %v686
        %v1018 = vunpack.c.l.b16 %v687
        %v1019 = vunpack.c.h.b16 %v687
        %v1020 = vunpack.c.l.b16 %v688
        %v1021 = vunpack.c.h.b16 %v688
        %v1022 = vunpack.c.l.b16 %v689
        %v1023 = vunpack.c.h.b16 %v689
        %v1024 = vunpack.c.l.b16 %v690
        %v1025 = vunpack.c.h.b16 %v690
        %v1026 = vunpack.c.l.b16 %v691
        %v1027 = vunpack.c.h.b16 %v691
        %v1028 = vunpack.c.l.b16 %v692
        %v1029 = vunpack.c.h.b16 %v692
        %v1030 = vunpack.c.l.b16 %v693
        %v1031 = vunpack.c.h.b16 %v693
        %v1032 = vunpack.c.l.b16 %v694
        %v1033 = vunpack.c.h.b16 %v694
        %v1034 = vunpack.c.l.b16 %v695
        %v1035 = vunpack.c.h.b16 %v695
        %v1036 = vunpack.c.l.b16 %v696
        %v1037 = vunpack.c.h.b16 %v696
        %v1038 = vunpack.c.l.b16 %v697
        %v1039 = vunpack.c.h.b16 %v697
        %v1040 = vunpack.c.l.b16 %v698
        %v1041 = vunpack.c.h.b16 %v698
        %v1042 = vunpack.c.l.b16 %v699
        %v1043 = vunpack.c.h.b16 %v699
        %v1044 = vunpack.c.l.b16 %v700
        %v1045 = vunpack.c.h.b16 %v700
        %v1046 = vunpack.c.l.b16 %v701
        %v1047 = vunpack.c.h.b16 %v701
        %v1048 = vunpack.c.l.b16 %v702
        %v1049 = vunpack.c.h.b16 %v702
        %v1050 = vunpack.c.l.b16 %v703
        %v1051 = vunpack.c.h.b16 %v703
        %v1052 = vunpack.c.l.b16 %v704
        %v1053 = vunpack.c.h.b16 %v704
        %v1054 = vunpack.c.l.b16 %v705
        %v1055 = vunpack.c.h.b16 %v705
        %v1056 = vunpack.c.l.b16 %v706
        %v1057 = vunpack.c.h.b16 %v706
        %v1058 = vunpack.c.l.b16 %v707
        %v1059 = vunpack.c.h.b16 %v707
        %v1060 = vunpack.c.l.b16 %v708
        %v1061 = vunpack.c.h.b16 %v708
        %v1062 = vunpack.c.l.b16 %v709
        %v1063 = vunpack.c.h.b16 %v709
        %v1064 = vunpack.c.l.b16 %v710
        %v1065 = vunpack.c.h.b16 %v710
        %v1066 = vunpack.c.l.b16 %v711
        %v1067 = vunpack.c.h.b16 %v711
        %v1068 = vunpack.c.l.b16 %v712
        %v1069 = vunpack.c.h.b16 %v712
        %v1070 = vunpack.c.l.b16 %v713
        %v1071 = vunpack.c.h.b16 %v713
        %v1072 = vunpack.c.l.b16 %v714
        %v1073 = vunpack.c.h.b16 %v714
        %v1074 = vunpack.c.l.b16 %v715
        %v1075 = vunpack.c.h.b16 %v715
        %v1076 = vunpack.c.l.b16 %v716
        %v1077 = vunpack.c.h.b16 %v716
        %v1078 = vunpack.c.l.b16 %v717
        %v1079 = vunpack.c.h.b16 %v717
        %v1080 = vunpack.c.l.b16 %v718
        %v1081 = vunpack.c.h.b16 %v718
        %v1082 = vunpack.c.l.b16 %v719
        %v1083 = vunpack.c.h.b16 %v719
        %v1084 = vunpack.c.l.b16 %v720
        %v1085 = vunpack.c.h.b16 %v720
        %v1086 = vunpack.c.l.b16 %v721
        %v1087 = vunpack.c.h.b16 %v721
        %v1088 = vunpack.c.l.b16 %v722
        %v1089 = vunpack.c.h.b16 %v722
        %v1090 = vunpack.c.l.b16 %v723
        %v1091 = vunpack.c.h.b16 %v723
        %v1092 = vunpack.c.l.b16 %v724
        %v1093 = vunpack.c.h.b16 %v724
        %v1094 = vunpack.c.l.b16 %v725
        %v1095 = vunpack.c.h.b16 %v725
        %v1096 = vunpack.c.l.b16 %v726
        %v1097 = vunpack.c.h.b16 %v726
        %v1098 = vunpack.c.l.b16 %v727
        %v1099 = vunpack.c.h.b16 %v727
        %v1100 = vunpack.c.l.b16 %v728
        %v1101 = vunpack.c.h.b16 %v728
        %v1102 = vunpack.c.l.b16 %v729
        %v1103 = vunpack.c.h.b16 %v729
        %v1104 = vunpack.c.l.b16 %v730
        %v1105 = vunpack.c.h.b16 %v730
        %v1106 = vunpack.c.l.b16 %v731
        %v1107 = vunpack.c.h.b16 %v731
        %v1108 = vunpack.c.l.b16 %v732
        %v1109 = vunpack.c.h.b16 %v732
        %v1110 = vunpack.c.l.b16 %v733
        %v1111 = vunpack.c.h.b16 %v733
        %v1112 = vunpack.c.l.b16 %v734
        %v1113 = vunpack.c.h.b16 %v734
        %v1114 = vunpack.c.l.b16 %v735
        %v1115 = vunpack.c.h.b16 %v735
        %v1116 = vunpack.c.l.b16 %v736
        %v1117 = vunpack.c.h.b16 %v736
        %v1118 = vunpack.c.l.b16 %v737
        %v1119 = vunpack.c.h.b16 %v737
        %v1120 = vunpack.c.l.b16 %v738
        %v1121 = vunpack.c.h.b16 %v738
        %v1122 = vunpack.c.l.b16 %v739
        %v1123 = vunpack.c.h.b16 %v739
        %v1124 = vunpack.c.l.b16 %v740
        %v1125 = vunpack.c.h.b16 %v740
        %v1126 = vunpack.c.l.b16 %v741
        %v1127 = vunpack.c.h.b16 %v741
        %v1128 = vunpack.c.l.b16 %v742
        %v1129 = vunpack.c.h.b16 %v742
        %v1130 = vunpack.c.l.b16 %v743
        %v1131 = vunpack.c.h.b16 %v743
        %v1132 = vunpack.c.l.b16 %v744
        %v1133 = vunpack.c.h.b16 %v744
        %v1134 = vunpack.c.l.b16 %v745
        %v1135 = vunpack.c.h.b16 %v745
        %v1136 = vunpack.c.l.b16 %v746
        %v1137 = vunpack.c.h.b16 %v746
        %v1138 = vunpack.c.l.b16 %v747
        %v1139 = vunpack.c.h.b16 %v747
        %v1140 = vunpack.c.l.b16 %v748
        %v1141 = vunpack.c.h.b16 %v748
        %v1142 = vunpack.c.l.b16 %v749
        %v1143 = vunpack.c.h.b16 %v749
        %v1144 = vunpack.c.l.b16 %v750
        %v1145 = vunpack.c.h.b16 %v750
        %v1146 = vunpack.c.l.b16 %v751
        %v1147 = vunpack.c.h.b16 %v751
        %v1148 = vunpack.c.l.b16 %v752
        %v1149 = vunpack.c.h.b16 %v752
        %v1150 = vunpack.c.l.b16 %v753
        %v1151 = vunpack.c.h.b16 %v753
        %v1152 = vunpack.c.l.b16 %v754
        %v1153 = vunpack.c.h.b16 %v754
        %v1154 = vunpack.c.l.b16 %v755
        %v1155 = vunpack.c.h.b16 %v755
        %v1156 = vunpack.c.l.b16 %v756
        %v1157 = vunpack.c.h.b16 %v756
        %v1158 = vunpack.c.l.b16 %v757
        %v1159 = vunpack.c.h.b16 %v757
        %v1160 = vunpack.c.l.b16 %v758
        %v1161 = vunpack.c.h.b16 %v758
        %v1162 = vunpack.c.l.b16 %v759
        %v1163 = vunpack.c.h.b16 %v759
        %v1164 = vunpack.c.l.b16 %v760
        %v1165 = vunpack.c.h.b16 %v760
        %v1166 = vunpack.c.l.b16 %v761
        %v1167 = vunpack.c.h.b16 %v761
        %v1168 = vunpack.c.l.b16 %v762
        %v1169 = vunpack.c.h.b16 %v762
        %v1170 = vunpack.c.l.b16 %v763
        %v1171 = vunpack.c.h.b16 %v763
        %v1172 = vunpack.c.l.b16 %v764
        %v1173 = vunpack.c.h.b16 %v764
        %v1174 = vunpack.c.l.b16 %v765
        %v1175 = vunpack.c.h.b16 %v765
        %v1176 = vunpack.c.l.b16 %v766
        %v1177 = vunpack.c.h.b16 %v766
        %v1178 = vunpack.c.l.b16 %v767
        %v1179 = vunpack.c.h.b16 %v767
        %v1180 = vunpack.c.l.b16 %v768
        %v1181 = vunpack.c.h.b16 %v768
        %v1182 = vunpack.c.l.b16 %v769
        %v1183 = vunpack.c.h.b16 %v769
        %v1184 = vunpack.c.l.b16 %v770
        %v1185 = vunpack.c.h.b16 %v770
        %v1186 = vunpack.c.l.b16 %v771
        %v1187 = vunpack.c.h.b16 %v771
        %v1188 = vunpack.c.l.b16 %v772
        %v1189 = vunpack.c.h.b16 %v772
        %v1190 = vunpack.c.l.b16 %v773
        %v1191 = vunpack.c.h.b16 %v773
        %v1192 = vunpack.c.l.b16 %v774
        %v1193 = vunpack.c.h.b16 %v774
        %v1194 = vunpack.c.l.b16 %v775
        %v1195 = vunpack.c.h.b16 %v775
        %v1196 = vunpack.c.l.b16 %v776
        %v1197 = vunpack.c.h.b16 %v776
        %v1198 = vunpack.c.l.b16 %v777
        %v1199 = vunpack.c.h.b16 %v777
        %v1200 = vunpack.c.l.b16 %v778
        %v1201 = vunpack.c.h.b16 %v778
        %v1202 = vunpack.c.l.b16 %v779
        %v1203 = vunpack.c.h.b16 %v779
        %v1204 = vunpack.c.l.b16 %v780
        %v1205 = vunpack.c.h.b16 %v780
        %v1206 = vunpack.c.l.b16 %v781
        %v1207 = vunpack.c.h.b16 %v781
        %v1208 = vunpack.c.l.b16 %v782
        %v1209 = vunpack.c.h.b16 %v782
        %v1210 = vunpack.c.l.b16 %v783
        %v1211 = vunpack.c.h.b16 %v783
        %v1212 = vunpack.c.l.b16 %v784
        %v1213 = vunpack.c.h.b16 %v784
        %v1214 = vunpack.c.l.b16 %v785
        %v1215 = vunpack.c.h.b16 %v785
        %v1216 = vunpack.c.l.b16 %v786
        %v1217 = vunpack.c.h.b16 %v786
        %v1218 = vunpack.c.l.b16 %v787
        %v1219 = vunpack.c.h.b16 %v787
        %v1220 = vunpack.c.l.b16 %v788
        %v1221 = vunpack.c.h.b16 %v788
        %v1222 = vunpack.c.l.b16 %v789
        %v1223 = vunpack.c.h.b16 %v789
        %v1224 = vunpack.c.l.b16 %v790
        %v1225 = vunpack.c.h.b16 %v790
        %v1226 = vunpack.c.l.b16 %v791
        %v1227 = vunpack.c.h.b16 %v791
        %v1228 = vunpack.c.l.b16 %v792
        %v1229 = vunpack.c.h.b16 %v792
        %v1230 = vunpack.c.l.b16 %v793
        %v1231 = vunpack.c.h.b16 %v793
        %v1232 = vunpack.c.l.b16 %v794
        %v1233 = vunpack.c.h.b16 %v794
        %v1234 = vunpack.c.l.b16 %v795
        %v1235 = vunpack.c.h.b16 %v795
        %v1236 = vunpack.c.l.b16 %v796
        %v1237 = vunpack.c.h.b16 %v796
        %v1238 = vunpack.c.l.b16 %v797
        %v1239 = vunpack.c.h.b16 %v797
        %v1240 = vunpack.c.l.b16 %v798
        %v1241 = vunpack.c.h.b16 %v798
        %v1242 = vunpack.c.l.b16 %v799
        %v1243 = vunpack.c.h.b16 %v799
        %v1244 = vunpack.c.l.b16 %v800
        %v1245 = vunpack.c.h.b16 %v800
        %v1246 = vunpack.c.l.b16 %v801
        %v1247 = vunpack.c.h.b16 %v801
        %v1248 = vunpack.c.l.b16 %v802
        %v1249 = vunpack.c.h.b16 %v802
        %v1250 = vunpack.c.l.b16 %v803
        %v1251 = vunpack.c.h.b16 %v803
        %v1252 = vpack.c.b16 %v1000, %v996
        %v1253 = vpack.c.b16 %v1001, %v997
        %v1254 = vpack.c.b16 %v1002, %v998
        %v1255 = vpack.c.b16 %v1003, %v999
        %v1256 = vpack.c.b16 %v1008, %v1004
        %v1257 = vpack.c.b16 %v1009, %v1005
        %v1258 = vpack.c.b16 %v1010, %v1006
        %v1259 = vpack.c.b16 %v1011, %v1007
        %v1260 = vpack.c.b16 %v1016, %v1012
        %v1261 = vpack.c.b16 %v1017, %v1013
        %v1262 = vpack.c.b16 %v1018, %v1014
        %v1263 = vpack.c.b16 %v1019, %v1015
        %v1264 = vpack.c.b16 %v1024, %v1020
        %v1265 = vpack.c.b16 %v1025, %v1021
        %v1266 = vpack.c.b16 %v1026, %v1022
        %v1267 = vpack.c.b16 %v1027, %v1023
        %v1268 = vpack.c.b16 %v1032, %v1028
        %v1269 = vpack.c.b16 %v1033, %v1029
        %v1270 = vpack.c.b16 %v1034, %v1030
        %v1271 = vpack.c.b16 %v1035, %v1031
        %v1272 = vpack.c.b16 %v1040, %v1036
        %v1273 = vpack.c.b16 %v1041, %v1037
        %v1274 = vpack.c.b16 %v1042, %v1038
        %v1275 = vpack.c.b16 %v1043, %v1039
        %v1276 = vpack.c.b16 %v1048, %v1044
        %v1277 = vpack.c.b16 %v1049, %v1045
        %v1278 = vpack.c.b16 %v1050, %v1046
        %v1279 = vpack.c.b16 %v1051, %v1047
        %v1280 = vpack.c.b16 %v1056, %v1052
        %v1281 = vpack.c.b16 %v1057, %v1053
        %v1282 = vpack.c.b16 %v1058, %v1054
        %v1283 = vpack.c.b16 %v1059, %v1055
        %v1284 = vpack.c.b16 %v1064, %v1060
        %v1285 = vpack.c.b16 %v1065, %v1061
        %v1286 = vpack.c.b16 %v1066, %v1062
        %v1287 = vpack.c.b16 %v1067, %v1063
        %v1288 = vpack.c.b16 %v1072, %v1068
        %v1289 = vpack.c.b16 %v1073, %v1069
        %v1290 = vpack.c.b16 %v1074, %v1070
        %v1291 = vpack.c.b16 %v1075, %v1071
        %v1292 = vpack.c.b16 %v1080, %v1076
        %v1293 = vpack.c.b16 %v1081, %v1077
        %v1294 = vpack.c.b16 %v1082, %v1078
        %v1295 = vpack.c.b16 %v1083, %v1079
        %v1296 = vpack.c.b16 %v1088, %v1084
        %v1297 = vpack.c.b16 %v1089, %v1085
        %v1298 = vpack.c.b16 %v1090, %v1086
        %v1299 = vpack.c.b16 %v1091, %v1087
        %v1300 = vpack.c.b16 %v1096, %v1092
        %v1301 = vpack.c.b16 %v1097, %v1093
        %v1302 = vpack.c.b16 %v1098, %v1094
        %v1303 = vpack.c.b16 %v1099, %v1095
        %v1304 = vpack.c.b16 %v1104, %v1100
        %v1305 = vpack.c.b16 %v1105, %v1101
        %v1306 = vpack.c.b16 %v1106, %v1102
        %v1307 = vpack.c.b16 %v1107, %v1103
        %v1308 = vpack.c.b16 %v1112, %v1108
        %v1309 = vpack.c.b16 %v1113, %v1109
        %v1310 = vpack.c.b16 %v1114, %v1110
        %v1311 = vpack.c.b16 %v1115, %v1111
        %v1312 = vpack.c.b16 %v1120, %v1116
        %v1313 = vpack.c.b16 %v1121, %v1117
        %v1314 = vpack.c.b16 %v1122, %v1118
        %v1315 = vpack.c.b16 %v1123, %v1119
        %v1316 = vpack.c.b16 %v1128, %v1124
        %v1317 = vpack.c.b16 %v1129, %v1125
        %v1318 = vpack.c.b16 %v1130, %v1126
        %v1319 = vpack.c.b16 %v1131, %v1127
        %v1320 = vpack.c.b16 %v1136, %v1132
        %v1321 = vpack.c.b16 %v1137, %v1133
        %v1322 = vpack.c.b16 %v1138, %v1134
        %v1323 = vpack.c.b16 %v1139, %v1135
        %v1324 = vpack.c.b16 %v1144, %v1140
        %v1325 = vpack.c.b16 %v1145, %v1141
        %v1326 = vpack.c.b16 %v1146, %v1142
        %v1327 = vpack.c.b16 %v1147, %v1143
        %v1328 = vpack.c.b16 %v1152, %v1148
        %v1329 = vpack.c.b16 %v1153, %v1149
        %v1330 = vpack.c.b16 %v1154, %v1150
        %v1331 = vpack.c.b16 %v1155, %v1151
        %v1332 = vpack.c.b16 %v1160, %v1156
        %v1333 = vpack.c.b16 %v1161, %v1157
        %v1334 = vpack.c.b16 %v1162, %v1158
        %v1335 = vpack.c.b16 %v1163, %v1159
        %v1336 = vpack.c.b16 %v1168, %v1164
        %v1337 = vpack.c.b16 %v1169, %v1165
        %v1338 = vpack.c.b16 %v1170, %v1166
        %v1339 = vpack.c.b16 %v1171, %v1167
        %v1340 = vpack.c.b16 %v1176, %v1172
        %v1341 = vpack.c.b16 %v1177, %v1173
        %v1342 = vpack.c.b16 %v1178, %v1174
        %v1343 = vpack.c.b16 %v1179, %v1175
        %v1344 = vpack.c.b16 %v1184, %v1180
        %v1345 = vpack.c.b16 %v1185, %v1181
        %v1346 = vpack.c.b16 %v1186, %v1182
        %v1347 = vpack.c.b16 %v1187, %v1183
        %v1348 = vpack.c.b16 %v1192, %v1188
        %v1349 = vpack.c.b16 %v1193, %v1189
        %v1350 = vpack.c.b16 %v1194, %v1190
        %v1351 = vpack.c.b16 %v1195, %v1191
        %v1352 = vpack.c.b16 %v1200, %v1196
        %v1353 = vpack.c.b16 %v1201, %v1197
        %v1354 = vpack.c.b16 %v1202, %v1198
        %v1355 = vpack.c.b16 %v1203, %v1199
        %v1356 = vpack.c.b16 %v1208, %v1204
        %v1357 = vpack.c.b16 %v1209, %v1205
        %v1358 = vpack.c.b16 %v1210, %v1206
        %v1359 = vpack.c.b16 %v1211, %v1207
        %v1360 = vpack.c.b16 %v1216, %v1212
        %v1361 = vpack.c.b16 %v1217, %v1213
        %v1362 = vpack.c.b16 %v1218, %v1214
        %v1363 = vpack.c.b16 %v1219, %v1215
        %v1364 = vpack.c.b16 %v1224, %v1220
        %v1365 = vpack.c.b16 %v1225, %v1221
        %v1366 = vpack.c.b16 %v1226, %v1222
        %v1367 = vpack.c.b16 %v1227, %v1223
        %v1368 = vpack.c.b16 %v1232, %v1228
        %v1369 = vpack.c.b16 %v1233, %v1229
        %v1370 = vpack.c.b16 %v1234, %v1230
        %v1371 = vpack.c.b16 %v1235, %v1231
        %v1372 = vpack.c.b16 %v1240, %v1236
        %v1373 = vpack.c.b16 %v1241, %v1237
        %v1374 = vpack.c.b16 %v1242, %v1238
        %v1375 = vpack.c.b16 %v1243, %v1239
        %v1376 = vpack.c.b16 %v1248, %v1244
        %v1377 = vpack.c.b16 %v1249, %v1245
        %v1378 = vpack.c.b16 %v1250, %v1246
        %v1379 = vpack.c.b16 %v1251, %v1247
        %v1572 = vunpack.c.l.b16 %v804
        %v1573 = vunpack.c.l.b16 %v805
        %v1574 = vunpack.c.l.b16 %v806
        %v1575 = vunpack.c.l.b16 %v807
        %v1576 = vunpack.c.l.b16 %v808
        %v1577 = vunpack.c.l.b16 %v809
        %v1578 = vunpack.c.l.b16 %v810
        %v1579 = vunpack.c.l.b16 %v811
        %v1580 = vunpack.c.l.b16 %v812
        %v1581 = vunpack.c.l.b16 %v813
        %v1582 = vunpack.c.l.b16 %v814
        %v1583 = vunpack.c.l.b16 %v815
        %v1584 = vunpack.c.l.b16 %v816
        %v1585 = vunpack.c.l.b16 %v817
        %v1586 = vunpack.c.l.b16 %v818
        %v1587 = vunpack.c.l.b16 %v819
        %v1588 = vunpack.c.l.b16 %v820
        %v1589 = vunpack.c.l.b16 %v821
        %v1590 = vunpack.c.l.b16 %v822
        %v1591 = vunpack.c.l.b16 %v823
        %v1592 = vunpack.c.l.b16 %v824
        %v1593 = vunpack.c.l.b16 %v825
        %v1594 = vunpack.c.l.b16 %v826
        %v1595 = vunpack.c.l.b16 %v827
        %v1596 = vunpack.c.l.b16 %v828
        %v1597 = vunpack.c.l.b16 %v829
        %v1598 = vunpack.c.l.b16 %v830
        %v1599 = vunpack.c.l.b16 %v831
        %v1600 = vunpack.c.l.b16 %v832
        %v1601 = vunpack.c.l.b16 %v833
        %v1602 = vunpack.c.l.b16 %v834
        %v1603 = vunpack.c.l.b16 %v835
        %v1604 = vunpack.c.l.b16 %v836
        %v1605 = vunpack.c.l.b16 %v837
        %v1606 = vunpack.c.l.b16 %v838
        %v1607 = vunpack.c.l.b16 %v839
        %v1608 = vunpack.c.l.b16 %v840
        %v1609 = vunpack.c.l.b16 %v841
        %v1610 = vunpack.c.l.b16 %v842
        %v1611 = vunpack.c.l.b16 %v843
        %v1612 = vunpack.c.l.b16 %v844
        %v1613 = vunpack.c.l.b16 %v845
        %v1614 = vunpack.c.l.b16 %v846
        %v1615 = vunpack.c.l.b16 %v847
        %v1616 = vunpack.c.l.b16 %v848
        %v1617 = vunpack.c.l.b16 %v849
        %v1618 = vunpack.c.l.b16 %v850
        %v1619 = vunpack.c.l.b16 %v851
        %v1620 = vunpack.c.l.b16 %v852
        %v1621 = vunpack.c.l.b16 %v853
        %v1622 = vunpack.c.l.b16 %v854
        %v1623 = vunpack.c.l.b16 %v855
        %v1624 = vunpack.c.l.b16 %v856
        %v1625 = vunpack.c.l.b16 %v857
        %v1626 = vunpack.c.l.b16 %v858
        %v1627 = vunpack.c.l.b16 %v859
        %v1628 = vunpack.c.l.b16 %v860
        %v1629 = vunpack.c.l.b16 %v861
        %v1630 = vunpack.c.l.b16 %v862
        %v1631 = vunpack.c.l.b16 %v863
        %v1632 = vunpack.c.l.b16 %v864
        %v1633 = vunpack.c.l.b16 %v865
        %v1634 = vunpack.c.l.b16 %v866
        %v1635 = vunpack.c.l.b16 %v867
        %v1636 = vpack.c.b16 %v1573, %v1572
        %v1637 = vpack.c.b16 %v1575, %v1574
        %v1638 = vpack.c.b16 %v1577, %v1576
        %v1639 = vpack.c.b16 %v1579, %v1578
        %v1640 = vpack.c.b16 %v1581, %v1580
        %v1641 = vpack.c.b16 %v1583, %v1582
        %v1642 = vpack.c.b16 %v1585, %v1584
        %v1643 = vpack.c.b16 %v1587, %v1586
        %v1644 = vpack.c.b16 %v1589, %v1588
        %v1645 = vpack.c.b16 %v1591, %v1590
        %v1646 = vpack.c.b16 %v1593, %v1592
        %v1647 = vpack.c.b16 %v1595, %v1594
        %v1648 = vpack.c.b16 %v1597, %v1596
        %v1649 = vpack.c.b16 %v1599, %v1598
        %v1650 = vpack.c.b16 %v1601, %v1600
        %v1651 = vpack.c.b16 %v1603, %v1602
        %v1652 = vpack.c.b16 %v1605, %v1604
        %v1653 = vpack.c.b16 %v1607, %v1606
        %v1654 = vpack.c.b16 %v1609, %v1608
        %v1655 = vpack.c.b16 %v1611, %v1610
        %v1656 = vpack.c.b16 %v1613, %v1612
        %v1657 = vpack.c.b16 %v1615, %v1614
        %v1658 = vpack.c.b16 %v1617, %v1616
        %v1659 = vpack.c.b16 %v1619, %v1618
        %v1660 = vpack.c.b16 %v1621, %v1620
        %v1661 = vpack.c.b16 %v1623, %v1622
        %v1662 = vpack.c.b16 %v1625, %v1624
        %v1663 = vpack.c.b16 %v1627, %v1626
        %v1664 = vpack.c.b16 %v1629, %v1628
        %v1665 = vpack.c.b16 %v1631, %v1630
        %v1666 = vpack.c.b16 %v1633, %v1632
        %v1667 = vpack.c.b16 %v1635, %v1634
        %1700 = vmatpush.bf16.msra.mxu0 %v1643
        %1701 = vmatpush.bf16.msra.mxu0 %v1642
        %1702 = vmatpush.bf16.msra.mxu0 %v1641
        %1703 = vmatpush.bf16.msra.mxu0 %v1640
        %1704 = vmatpush.bf16.msra.mxu0 %v1639
        %1705 = vmatpush.bf16.msra.mxu0 %v1638
        %1706 = vmatpush.bf16.msra.mxu0 %v1637
        %1707 = vmatpush.bf16.msra.mxu0 %v1636
        %1708 = vmatmul.bf16.gmra.mxu0 %v1252
        %v1709 = vpop.f32.mrf.mxu0
        %v1710 = vadd.f32 0.0, %v1709
        %v1711 = vpop.f32.mrf.mxu0
        %v1712 = vadd.f32 0.0, %v1711
        %1713 = vmatmul.bf16.gmra.mxu0 %v1256
        %v1714 = vpop.f32.mrf.mxu0
        %v1715 = vadd.f32 0.0, %v1714
        %v1716 = vpop.f32.mrf.mxu0
        %v1717 = vadd.f32 0.0, %v1716
        %1718 = vmatmul.bf16.gmra.mxu0 %v1260
        %v1719 = vpop.f32.mrf.mxu0
        %v1720 = vadd.f32 0.0, %v1719
        %v1721 = vpop.f32.mrf.mxu0
        %v1722 = vadd.f32 0.0, %v1721
        %1723 = vmatmul.bf16.gmra.mxu0 %v1264
        %v1724 = vpop.f32.mrf.mxu0
        %v1725 = vadd.f32 0.0, %v1724
        %v1726 = vpop.f32.mrf.mxu0
        %v1727 = vadd.f32 0.0, %v1726
        %1728 = vmatmul.bf16.gmra.mxu0 %v1268
        %v1729 = vpop.f32.mrf.mxu0
        %v1730 = vadd.f32 0.0, %v1729
        %v1731 = vpop.f32.mrf.mxu0
        %v1732 = vadd.f32 0.0, %v1731
        %1733 = vmatmul.bf16.gmra.mxu0 %v1272
        %v1734 = vpop.f32.mrf.mxu0
        %v1735 = vadd.f32 0.0, %v1734
        %v1736 = vpop.f32.mrf.mxu0
        %v1737 = vadd.f32 0.0, %v1736
        %1738 = vmatmul.bf16.gmra.mxu0 %v1276
        %v1739 = vpop.f32.mrf.mxu0
        %v1740 = vadd.f32 0.0, %v1739
        %v1741 = vpop.f32.mrf.mxu0
        %v1742 = vadd.f32 0.0, %v1741
        %1743 = vmatmul.bf16.gmra.mxu0 %v1280
        %v1744 = vpop.f32.mrf.mxu0
        %v1745 = vadd.f32 0.0, %v1744
        %v1746 = vpop.f32.mrf.mxu0
        %v1747 = vadd.f32 0.0, %v1746
        %1748 = vmatmul.bf16.gmra.mxu0 %v1284
        %v1749 = vpop.f32.mrf.mxu0
        %v1750 = vadd.f32 0.0, %v1749
        %v1751 = vpop.f32.mrf.mxu0
        %v1752 = vadd.f32 0.0, %v1751
        %1753 = vmatmul.bf16.gmra.mxu0 %v1288
        %v1754 = vpop.f32.mrf.mxu0
        %v1755 = vadd.f32 0.0, %v1754
        %v1756 = vpop.f32.mrf.mxu0
        %v1757 = vadd.f32 0.0, %v1756
        %1758 = vmatmul.bf16.gmra.mxu0 %v1292
        %v1759 = vpop.f32.mrf.mxu0
        %v1760 = vadd.f32 0.0, %v1759
        %v1761 = vpop.f32.mrf.mxu0
        %v1762 = vadd.f32 0.0, %v1761
        %1763 = vmatmul.bf16.gmra.mxu0 %v1296
        %v1764 = vpop.f32.mrf.mxu0
        %v1765 = vadd.f32 0.0, %v1764
        %v1766 = vpop.f32.mrf.mxu0
        %v1767 = vadd.f32 0.0, %v1766
        %1768 = vmatmul.bf16.gmra.mxu0 %v1300
        %v1769 = vpop.f32.mrf.mxu0
        %v1770 = vadd.f32 0.0, %v1769
        %v1771 = vpop.f32.mrf.mxu0
        %v1772 = vadd.f32 0.0, %v1771
        %1773 = vmatmul.bf16.gmra.mxu0 %v1304
        %v1774 = vpop.f32.mrf.mxu0
        %v1775 = vadd.f32 0.0, %v1774
        %v1776 = vpop.f32.mrf.mxu0
        %v1777 = vadd.f32 0.0, %v1776
        %1778 = vmatmul.bf16.gmra.mxu0 %v1308
        %v1779 = vpop.f32.mrf.mxu0
        %v1780 = vadd.f32 0.0, %v1779
        %v1781 = vpop.f32.mrf.mxu0
        %v1782 = vadd.f32 0.0, %v1781
        %1783 = vmatmul.bf16.gmra.mxu0 %v1312
        %v1784 = vpop.f32.mrf.mxu0
        %v1785 = vadd.f32 0.0, %v1784
        %v1786 = vpop.f32.mrf.mxu0
        %v1787 = vadd.f32 0.0, %v1786
        %1788 = vmatmul.bf16.gmra.mxu0 %v1316
        %v1789 = vpop.f32.mrf.mxu0
        %v1790 = vadd.f32 0.0, %v1789
        %v1791 = vpop.f32.mrf.mxu0
        %v1792 = vadd.f32 0.0, %v1791
        %1793 = vmatmul.bf16.gmra.mxu0 %v1320
        %v1794 = vpop.f32.mrf.mxu0
        %v1795 = vadd.f32 0.0, %v1794
        %v1796 = vpop.f32.mrf.mxu0
        %v1797 = vadd.f32 0.0, %v1796
        %1798 = vmatmul.bf16.gmra.mxu0 %v1324
        %v1799 = vpop.f32.mrf.mxu0
        %v1800 = vadd.f32 0.0, %v1799
        %v1801 = vpop.f32.mrf.mxu0
        %v1802 = vadd.f32 0.0, %v1801
        %1803 = vmatmul.bf16.gmra.mxu0 %v1328
        %v1804 = vpop.f32.mrf.mxu0
        %v1805 = vadd.f32 0.0, %v1804
        %v1806 = vpop.f32.mrf.mxu0
        %v1807 = vadd.f32 0.0, %v1806
        %1808 = vmatmul.bf16.gmra.mxu0 %v1332
        %v1809 = vpop.f32.mrf.mxu0
        %v1810 = vadd.f32 0.0, %v1809
        %v1811 = vpop.f32.mrf.mxu0
        %v1812 = vadd.f32 0.0, %v1811
        %1813 = vmatmul.bf16.gmra.mxu0 %v1336
        %v1814 = vpop.f32.mrf.mxu0
        %v1815 = vadd.f32 0.0, %v1814
        %v1816 = vpop.f32.mrf.mxu0
        %v1817 = vadd.f32 0.0, %v1816
        %1818 = vmatmul.bf16.gmra.mxu0 %v1340
        %v1819 = vpop.f32.mrf.mxu0
        %v1820 = vadd.f32 0.0, %v1819
        %v1821 = vpop.f32.mrf.mxu0
        %v1822 = vadd.f32 0.0, %v1821
        %1823 = vmatmul.bf16.gmra.mxu0 %v1344
        %v1824 = vpop.f32.mrf.mxu0
        %v1825 = vadd.f32 0.0, %v1824
        %v1826 = vpop.f32.mrf.mxu0
        %v1827 = vadd.f32 0.0, %v1826
        %1828 = vmatmul.bf16.gmra.mxu0 %v1348
        %v1829 = vpop.f32.mrf.mxu0
        %v1830 = vadd.f32 0.0, %v1829
        %v1831 = vpop.f32.mrf.mxu0
        %v1832 = vadd.f32 0.0, %v1831
        %1833 = vmatmul.bf16.gmra.mxu0 %v1352
        %v1834 = vpop.f32.mrf.mxu0
        %v1835 = vadd.f32 0.0, %v1834
        %v1836 = vpop.f32.mrf.mxu0
        %v1837 = vadd.f32 0.0, %v1836
        %1838 = vmatmul.bf16.gmra.mxu0 %v1356
        %v1839 = vpop.f32.mrf.mxu0
        %v1840 = vadd.f32 0.0, %v1839
        %v1841 = vpop.f32.mrf.mxu0
        %v1842 = vadd.f32 0.0, %v1841
        %1843 = vmatmul.bf16.gmra.mxu0 %v1360
        %v1844 = vpop.f32.mrf.mxu0
        %v1845 = vadd.f32 0.0, %v1844
        %v1846 = vpop.f32.mrf.mxu0
        %v1847 = vadd.f32 0.0, %v1846
        %1848 = vmatmul.bf16.gmra.mxu0 %v1364
        %v1849 = vpop.f32.mrf.mxu0
        %v1850 = vadd.f32 0.0, %v1849
        %v1851 = vpop.f32.mrf.mxu0
        %v1852 = vadd.f32 0.0, %v1851
        %1853 = vmatmul.bf16.gmra.mxu0 %v1368
        %v1854 = vpop.f32.mrf.mxu0
        %v1855 = vadd.f32 0.0, %v1854
        %v1856 = vpop.f32.mrf.mxu0
        %v1857 = vadd.f32 0.0, %v1856
        %1858 = vmatmul.bf16.gmra.mxu0 %v1372
        %v1859 = vpop.f32.mrf.mxu0
        %v1860 = vadd.f32 0.0, %v1859
        %v1861 = vpop.f32.mrf.mxu0
        %v1862 = vadd.f32 0.0, %v1861
        %1863 = vmatmul.bf16.gmra.mxu0 %v1376
        %v1864 = vpop.f32.mrf.mxu0
        %v1865 = vadd.f32 0.0, %v1864
        %v1866 = vpop.f32.mrf.mxu0
        %v1867 = vadd.f32 0.0, %v1866
        %1868 = vdwg.mxu0
        %1869 = vmatpush.bf16.msra.mxu0 %v1651
        %1870 = vmatpush.bf16.msra.mxu0 %v1650
        %1871 = vmatpush.bf16.msra.mxu0 %v1649
        %1872 = vmatpush.bf16.msra.mxu0 %v1648
        %1873 = vmatpush.bf16.msra.mxu0 %v1647
        %1874 = vmatpush.bf16.msra.mxu0 %v1646
        %1875 = vmatpush.bf16.msra.mxu0 %v1645
        %1876 = vmatpush.bf16.msra.mxu0 %v1644
        %1877 = vmatmul.bf16.gmra.mxu0 %v1253
        %v1878 = vpop.f32.mrf.mxu0
        %v1879 = vadd.f32 %v1710, %v1878
        %v1880 = vpop.f32.mrf.mxu0
        %v1881 = vadd.f32 %v1712, %v1880
        %1882 = vmatmul.bf16.gmra.mxu0 %v1257
        %v1883 = vpop.f32.mrf.mxu0
        %v1884 = vadd.f32 %v1715, %v1883
        %v1885 = vpop.f32.mrf.mxu0
        %v1886 = vadd.f32 %v1717, %v1885
        %1887 = vmatmul.bf16.gmra.mxu0 %v1261
        %v1888 = vpop.f32.mrf.mxu0
        %v1889 = vadd.f32 %v1720, %v1888
        %v1890 = vpop.f32.mrf.mxu0
        %v1891 = vadd.f32 %v1722, %v1890
        %1892 = vmatmul.bf16.gmra.mxu0 %v1265
        %v1893 = vpop.f32.mrf.mxu0
        %v1894 = vadd.f32 %v1725, %v1893
        %v1895 = vpop.f32.mrf.mxu0
        %v1896 = vadd.f32 %v1727, %v1895
        %1897 = vmatmul.bf16.gmra.mxu0 %v1269
        %v1898 = vpop.f32.mrf.mxu0
        %v1899 = vadd.f32 %v1730, %v1898
        %v1900 = vpop.f32.mrf.mxu0
        %v1901 = vadd.f32 %v1732, %v1900
        %1902 = vmatmul.bf16.gmra.mxu0 %v1273
        %v1903 = vpop.f32.mrf.mxu0
        %v1904 = vadd.f32 %v1735, %v1903
        %v1905 = vpop.f32.mrf.mxu0
        %v1906 = vadd.f32 %v1737, %v1905
        %1907 = vmatmul.bf16.gmra.mxu0 %v1277
        %v1908 = vpop.f32.mrf.mxu0
        %v1909 = vadd.f32 %v1740, %v1908
        %v1910 = vpop.f32.mrf.mxu0
        %v1911 = vadd.f32 %v1742, %v1910
        %1912 = vmatmul.bf16.gmra.mxu0 %v1281
        %v1913 = vpop.f32.mrf.mxu0
        %v1914 = vadd.f32 %v1745, %v1913
        %v1915 = vpop.f32.mrf.mxu0
        %v1916 = vadd.f32 %v1747, %v1915
        %1917 = vmatmul.bf16.gmra.mxu0 %v1285
        %v1918 = vpop.f32.mrf.mxu0
        %v1919 = vadd.f32 %v1750, %v1918
        %v1920 = vpop.f32.mrf.mxu0
        %v1921 = vadd.f32 %v1752, %v1920
        %1922 = vmatmul.bf16.gmra.mxu0 %v1289
        %v1923 = vpop.f32.mrf.mxu0
        %v1924 = vadd.f32 %v1755, %v1923
        %v1925 = vpop.f32.mrf.mxu0
        %v1926 = vadd.f32 %v1757, %v1925
        %1927 = vmatmul.bf16.gmra.mxu0 %v1293
        %v1928 = vpop.f32.mrf.mxu0
        %v1929 = vadd.f32 %v1760, %v1928
        %v1930 = vpop.f32.mrf.mxu0
        %v1931 = vadd.f32 %v1762, %v1930
        %1932 = vmatmul.bf16.gmra.mxu0 %v1297
        %v1933 = vpop.f32.mrf.mxu0
        %v1934 = vadd.f32 %v1765, %v1933
        %v1935 = vpop.f32.mrf.mxu0
        %v1936 = vadd.f32 %v1767, %v1935
        %1937 = vmatmul.bf16.gmra.mxu0 %v1301
        %v1938 = vpop.f32.mrf.mxu0
        %v1939 = vadd.f32 %v1770, %v1938
        %v1940 = vpop.f32.mrf.mxu0
        %v1941 = vadd.f32 %v1772, %v1940
        %1942 = vmatmul.bf16.gmra.mxu0 %v1305
        %v1943 = vpop.f32.mrf.mxu0
        %v1944 = vadd.f32 %v1775, %v1943
        %v1945 = vpop.f32.mrf.mxu0
        %v1946 = vadd.f32 %v1777, %v1945
        %1947 = vmatmul.bf16.gmra.mxu0 %v1309
        %v1948 = vpop.f32.mrf.mxu0
        %v1949 = vadd.f32 %v1780, %v1948
        %v1950 = vpop.f32.mrf.mxu0
        %v1951 = vadd.f32 %v1782, %v1950
        %1952 = vmatmul.bf16.gmra.mxu0 %v1313
        %v1953 = vpop.f32.mrf.mxu0
        %v1954 = vadd.f32 %v1785, %v1953
        %v1955 = vpop.f32.mrf.mxu0
        %v1956 = vadd.f32 %v1787, %v1955
        %1957 = vmatmul.bf16.gmra.mxu0 %v1317
        %v1958 = vpop.f32.mrf.mxu0
        %v1959 = vadd.f32 %v1790, %v1958
        %v1960 = vpop.f32.mrf.mxu0
        %v1961 = vadd.f32 %v1792, %v1960
        %1962 = vmatmul.bf16.gmra.mxu0 %v1321
        %v1963 = vpop.f32.mrf.mxu0
        %v1964 = vadd.f32 %v1795, %v1963
        %v1965 = vpop.f32.mrf.mxu0
        %v1966 = vadd.f32 %v1797, %v1965
        %1967 = vmatmul.bf16.gmra.mxu0 %v1325
        %v1968 = vpop.f32.mrf.mxu0
        %v1969 = vadd.f32 %v1800, %v1968
        %v1970 = vpop.f32.mrf.mxu0
        %v1971 = vadd.f32 %v1802, %v1970
        %1972 = vmatmul.bf16.gmra.mxu0 %v1329
        %v1973 = vpop.f32.mrf.mxu0
        %v1974 = vadd.f32 %v1805, %v1973
        %v1975 = vpop.f32.mrf.mxu0
        %v1976 = vadd.f32 %v1807, %v1975
        %1977 = vmatmul.bf16.gmra.mxu0 %v1333
        %v1978 = vpop.f32.mrf.mxu0
        %v1979 = vadd.f32 %v1810, %v1978
        %v1980 = vpop.f32.mrf.mxu0
        %v1981 = vadd.f32 %v1812, %v1980
        %1982 = vmatmul.bf16.gmra.mxu0 %v1337
        %v1983 = vpop.f32.mrf.mxu0
        %v1984 = vadd.f32 %v1815, %v1983
        %v1985 = vpop.f32.mrf.mxu0
        %v1986 = vadd.f32 %v1817, %v1985
        %1987 = vmatmul.bf16.gmra.mxu0 %v1341
        %v1988 = vpop.f32.mrf.mxu0
        %v1989 = vadd.f32 %v1820, %v1988
        %v1990 = vpop.f32.mrf.mxu0
        %v1991 = vadd.f32 %v1822, %v1990
        %1992 = vmatmul.bf16.gmra.mxu0 %v1345
        %v1993 = vpop.f32.mrf.mxu0
        %v1994 = vadd.f32 %v1825, %v1993
        %v1995 = vpop.f32.mrf.mxu0
        %v1996 = vadd.f32 %v1827, %v1995
        %1997 = vmatmul.bf16.gmra.mxu0 %v1349
        %v1998 = vpop.f32.mrf.mxu0
        %v1999 = vadd.f32 %v1830, %v1998
        %v2000 = vpop.f32.mrf.mxu0
        %v2001 = vadd.f32 %v1832, %v2000
        %2002 = vmatmul.bf16.gmra.mxu0 %v1353
        %v2003 = vpop.f32.mrf.mxu0
        %v2004 = vadd.f32 %v1835, %v2003
        %v2005 = vpop.f32.mrf.mxu0
        %v2006 = vadd.f32 %v1837, %v2005
        %2007 = vmatmul.bf16.gmra.mxu0 %v1357
        %v2008 = vpop.f32.mrf.mxu0
        %v2009 = vadd.f32 %v1840, %v2008
        %v2010 = vpop.f32.mrf.mxu0
        %v2011 = vadd.f32 %v1842, %v2010
        %2012 = vmatmul.bf16.gmra.mxu0 %v1361
        %v2013 = vpop.f32.mrf.mxu0
        %v2014 = vadd.f32 %v1845, %v2013
        %v2015 = vpop.f32.mrf.mxu0
        %v2016 = vadd.f32 %v1847, %v2015
        %2017 = vmatmul.bf16.gmra.mxu0 %v1365
        %v2018 = vpop.f32.mrf.mxu0
        %v2019 = vadd.f32 %v1850, %v2018
        %v2020 = vpop.f32.mrf.mxu0
        %v2021 = vadd.f32 %v1852, %v2020
        %2022 = vmatmul.bf16.gmra.mxu0 %v1369
        %v2023 = vpop.f32.mrf.mxu0
        %v2024 = vadd.f32 %v1855, %v2023
        %v2025 = vpop.f32.mrf.mxu0
        %v2026 = vadd.f32 %v1857, %v2025
        %2027 = vmatmul.bf16.gmra.mxu0 %v1373
        %v2028 = vpop.f32.mrf.mxu0
        %v2029 = vadd.f32 %v1860, %v2028
        %v2030 = vpop.f32.mrf.mxu0
        %v2031 = vadd.f32 %v1862, %v2030
        %2032 = vmatmul.bf16.gmra.mxu0 %v1377
        %v2033 = vpop.f32.mrf.mxu0
        %v2034 = vadd.f32 %v1865, %v2033
        %v2035 = vpop.f32.mrf.mxu0
        %v2036 = vadd.f32 %v1867, %v2035
        %2037 = vdwg.mxu0
        %2038 = vmatpush.bf16.msra.mxu0 %v1659
        %2039 = vmatpush.bf16.msra.mxu0 %v1658
        %2040 = vmatpush.bf16.msra.mxu0 %v1657
        %2041 = vmatpush.bf16.msra.mxu0 %v1656
        %2042 = vmatpush.bf16.msra.mxu0 %v1655
        %2043 = vmatpush.bf16.msra.mxu0 %v1654
        %2044 = vmatpush.bf16.msra.mxu0 %v1653
        %2045 = vmatpush.bf16.msra.mxu0 %v1652
        %2046 = vmatmul.bf16.gmra.mxu0 %v1254
        %v2047 = vpop.f32.mrf.mxu0
        %v2048 = vadd.f32 %v1879, %v2047
        %v2049 = vpop.f32.mrf.mxu0
        %v2050 = vadd.f32 %v1881, %v2049
        %2051 = vmatmul.bf16.gmra.mxu0 %v1258
        %v2052 = vpop.f32.mrf.mxu0
        %v2053 = vadd.f32 %v1884, %v2052
        %v2054 = vpop.f32.mrf.mxu0
        %v2055 = vadd.f32 %v1886, %v2054
        %2056 = vmatmul.bf16.gmra.mxu0 %v1262
        %v2057 = vpop.f32.mrf.mxu0
        %v2058 = vadd.f32 %v1889, %v2057
        %v2059 = vpop.f32.mrf.mxu0
        %v2060 = vadd.f32 %v1891, %v2059
        %2061 = vmatmul.bf16.gmra.mxu0 %v1266
        %v2062 = vpop.f32.mrf.mxu0
        %v2063 = vadd.f32 %v1894, %v2062
        %v2064 = vpop.f32.mrf.mxu0
        %v2065 = vadd.f32 %v1896, %v2064
        %2066 = vmatmul.bf16.gmra.mxu0 %v1270
        %v2067 = vpop.f32.mrf.mxu0
        %v2068 = vadd.f32 %v1899, %v2067
        %v2069 = vpop.f32.mrf.mxu0
        %v2070 = vadd.f32 %v1901, %v2069
        %2071 = vmatmul.bf16.gmra.mxu0 %v1274
        %v2072 = vpop.f32.mrf.mxu0
        %v2073 = vadd.f32 %v1904, %v2072
        %v2074 = vpop.f32.mrf.mxu0
        %v2075 = vadd.f32 %v1906, %v2074
        %2076 = vmatmul.bf16.gmra.mxu0 %v1278
        %v2077 = vpop.f32.mrf.mxu0
        %v2078 = vadd.f32 %v1909, %v2077
        %v2079 = vpop.f32.mrf.mxu0
        %v2080 = vadd.f32 %v1911, %v2079
        %2081 = vmatmul.bf16.gmra.mxu0 %v1282
        %v2082 = vpop.f32.mrf.mxu0
        %v2083 = vadd.f32 %v1914, %v2082
        %v2084 = vpop.f32.mrf.mxu0
        %v2085 = vadd.f32 %v1916, %v2084
        %2086 = vmatmul.bf16.gmra.mxu0 %v1286
        %v2087 = vpop.f32.mrf.mxu0
        %v2088 = vadd.f32 %v1919, %v2087
        %v2089 = vpop.f32.mrf.mxu0
        %v2090 = vadd.f32 %v1921, %v2089
        %2091 = vmatmul.bf16.gmra.mxu0 %v1290
        %v2092 = vpop.f32.mrf.mxu0
        %v2093 = vadd.f32 %v1924, %v2092
        %v2094 = vpop.f32.mrf.mxu0
        %v2095 = vadd.f32 %v1926, %v2094
        %2096 = vmatmul.bf16.gmra.mxu0 %v1294
        %v2097 = vpop.f32.mrf.mxu0
        %v2098 = vadd.f32 %v1929, %v2097
        %v2099 = vpop.f32.mrf.mxu0
        %v2100 = vadd.f32 %v1931, %v2099
        %2101 = vmatmul.bf16.gmra.mxu0 %v1298
        %v2102 = vpop.f32.mrf.mxu0
        %v2103 = vadd.f32 %v1934, %v2102
        %v2104 = vpop.f32.mrf.mxu0
        %v2105 = vadd.f32 %v1936, %v2104
        %2106 = vmatmul.bf16.gmra.mxu0 %v1302
        %v2107 = vpop.f32.mrf.mxu0
        %v2108 = vadd.f32 %v1939, %v2107
        %v2109 = vpop.f32.mrf.mxu0
        %v2110 = vadd.f32 %v1941, %v2109
        %2111 = vmatmul.bf16.gmra.mxu0 %v1306
        %v2112 = vpop.f32.mrf.mxu0
        %v2113 = vadd.f32 %v1944, %v2112
        %v2114 = vpop.f32.mrf.mxu0
        %v2115 = vadd.f32 %v1946, %v2114
        %2116 = vmatmul.bf16.gmra.mxu0 %v1310
        %v2117 = vpop.f32.mrf.mxu0
        %v2118 = vadd.f32 %v1949, %v2117
        %v2119 = vpop.f32.mrf.mxu0
        %v2120 = vadd.f32 %v1951, %v2119
        %2121 = vmatmul.bf16.gmra.mxu0 %v1314
        %v2122 = vpop.f32.mrf.mxu0
        %v2123 = vadd.f32 %v1954, %v2122
        %v2124 = vpop.f32.mrf.mxu0
        %v2125 = vadd.f32 %v1956, %v2124
        %2126 = vmatmul.bf16.gmra.mxu0 %v1318
        %v2127 = vpop.f32.mrf.mxu0
        %v2128 = vadd.f32 %v1959, %v2127
        %v2129 = vpop.f32.mrf.mxu0
        %v2130 = vadd.f32 %v1961, %v2129
        %2131 = vmatmul.bf16.gmra.mxu0 %v1322
        %v2132 = vpop.f32.mrf.mxu0
        %v2133 = vadd.f32 %v1964, %v2132
        %v2134 = vpop.f32.mrf.mxu0
        %v2135 = vadd.f32 %v1966, %v2134
        %2136 = vmatmul.bf16.gmra.mxu0 %v1326
        %v2137 = vpop.f32.mrf.mxu0
        %v2138 = vadd.f32 %v1969, %v2137
        %v2139 = vpop.f32.mrf.mxu0
        %v2140 = vadd.f32 %v1971, %v2139
        %2141 = vmatmul.bf16.gmra.mxu0 %v1330
        %v2142 = vpop.f32.mrf.mxu0
        %v2143 = vadd.f32 %v1974, %v2142
        %v2144 = vpop.f32.mrf.mxu0
        %v2145 = vadd.f32 %v1976, %v2144
        %2146 = vmatmul.bf16.gmra.mxu0 %v1334
        %v2147 = vpop.f32.mrf.mxu0
        %v2148 = vadd.f32 %v1979, %v2147
        %v2149 = vpop.f32.mrf.mxu0
        %v2150 = vadd.f32 %v1981, %v2149
        %2151 = vmatmul.bf16.gmra.mxu0 %v1338
        %v2152 = vpop.f32.mrf.mxu0
        %v2153 = vadd.f32 %v1984, %v2152
        %v2154 = vpop.f32.mrf.mxu0
        %v2155 = vadd.f32 %v1986, %v2154
        %2156 = vmatmul.bf16.gmra.mxu0 %v1342
        %v2157 = vpop.f32.mrf.mxu0
        %v2158 = vadd.f32 %v1989, %v2157
        %v2159 = vpop.f32.mrf.mxu0
        %v2160 = vadd.f32 %v1991, %v2159
        %2161 = vmatmul.bf16.gmra.mxu0 %v1346
        %v2162 = vpop.f32.mrf.mxu0
        %v2163 = vadd.f32 %v1994, %v2162
        %v2164 = vpop.f32.mrf.mxu0
        %v2165 = vadd.f32 %v1996, %v2164
        %2166 = vmatmul.bf16.gmra.mxu0 %v1350
        %v2167 = vpop.f32.mrf.mxu0
        %v2168 = vadd.f32 %v1999, %v2167
        %v2169 = vpop.f32.mrf.mxu0
        %v2170 = vadd.f32 %v2001, %v2169
        %2171 = vmatmul.bf16.gmra.mxu0 %v1354
        %v2172 = vpop.f32.mrf.mxu0
        %v2173 = vadd.f32 %v2004, %v2172
        %v2174 = vpop.f32.mrf.mxu0
        %v2175 = vadd.f32 %v2006, %v2174
        %2176 = vmatmul.bf16.gmra.mxu0 %v1358
        %v2177 = vpop.f32.mrf.mxu0
        %v2178 = vadd.f32 %v2009, %v2177
        %v2179 = vpop.f32.mrf.mxu0
        %v2180 = vadd.f32 %v2011, %v2179
        %2181 = vmatmul.bf16.gmra.mxu0 %v1362
        %v2182 = vpop.f32.mrf.mxu0
        %v2183 = vadd.f32 %v2014, %v2182
        %v2184 = vpop.f32.mrf.mxu0
        %v2185 = vadd.f32 %v2016, %v2184
        %2186 = vmatmul.bf16.gmra.mxu0 %v1366
        %v2187 = vpop.f32.mrf.mxu0
        %v2188 = vadd.f32 %v2019, %v2187
        %v2189 = vpop.f32.mrf.mxu0
        %v2190 = vadd.f32 %v2021, %v2189
        %2191 = vmatmul.bf16.gmra.mxu0 %v1370
        %v2192 = vpop.f32.mrf.mxu0
        %v2193 = vadd.f32 %v2024, %v2192
        %v2194 = vpop.f32.mrf.mxu0
        %v2195 = vadd.f32 %v2026, %v2194
        %2196 = vmatmul.bf16.gmra.mxu0 %v1374
        %v2197 = vpop.f32.mrf.mxu0
        %v2198 = vadd.f32 %v2029, %v2197
        %v2199 = vpop.f32.mrf.mxu0
        %v2200 = vadd.f32 %v2031, %v2199
        %2201 = vmatmul.bf16.gmra.mxu0 %v1378
        %v2202 = vpop.f32.mrf.mxu0
        %v2203 = vadd.f32 %v2034, %v2202
        %v2204 = vpop.f32.mrf.mxu0
        %v2205 = vadd.f32 %v2036, %v2204
        %2206 = vdwg.mxu0
        %2207 = vmatpush.bf16.msra.mxu0 %v1667
        %2208 = vmatpush.bf16.msra.mxu0 %v1666
        %2209 = vmatpush.bf16.msra.mxu0 %v1665
        %2210 = vmatpush.bf16.msra.mxu0 %v1664
        %2211 = vmatpush.bf16.msra.mxu0 %v1663
        %2212 = vmatpush.bf16.msra.mxu0 %v1662
        %2213 = vmatpush.bf16.msra.mxu0 %v1661
        %2214 = vmatpush.bf16.msra.mxu0 %v1660
        %2215 = vmatmul.bf16.gmra.mxu0 %v1255
        %v2216 = vpop.f32.mrf.mxu0
        %v2217 = vadd.f32 %v2048, %v2216
        %v2218 = vpop.f32.mrf.mxu0
        %v2219 = vadd.f32 %v2050, %v2218
        %2220 = vmatmul.bf16.gmra.mxu0 %v1259
        %v2221 = vpop.f32.mrf.mxu0
        %v2222 = vadd.f32 %v2053, %v2221
        %v2223 = vpop.f32.mrf.mxu0
        %v2224 = vadd.f32 %v2055, %v2223
        %2225 = vmatmul.bf16.gmra.mxu0 %v1263
        %v2226 = vpop.f32.mrf.mxu0
        %v2227 = vadd.f32 %v2058, %v2226
        %v2228 = vpop.f32.mrf.mxu0
        %v2229 = vadd.f32 %v2060, %v2228
        %2230 = vmatmul.bf16.gmra.mxu0 %v1267
        %v2231 = vpop.f32.mrf.mxu0
        %v2232 = vadd.f32 %v2063, %v2231
        %v2233 = vpop.f32.mrf.mxu0
        %v2234 = vadd.f32 %v2065, %v2233
        %2235 = vmatmul.bf16.gmra.mxu0 %v1271
        %v2236 = vpop.f32.mrf.mxu0
        %v2237 = vadd.f32 %v2068, %v2236
        %v2238 = vpop.f32.mrf.mxu0
        %v2239 = vadd.f32 %v2070, %v2238
        %2240 = vmatmul.bf16.gmra.mxu0 %v1275
        %v2241 = vpop.f32.mrf.mxu0
        %v2242 = vadd.f32 %v2073, %v2241
        %v2243 = vpop.f32.mrf.mxu0
        %v2244 = vadd.f32 %v2075, %v2243
        %2245 = vmatmul.bf16.gmra.mxu0 %v1279
        %v2246 = vpop.f32.mrf.mxu0
        %v2247 = vadd.f32 %v2078, %v2246
        %v2248 = vpop.f32.mrf.mxu0
        %v2249 = vadd.f32 %v2080, %v2248
        %2250 = vmatmul.bf16.gmra.mxu0 %v1283
        %v2251 = vpop.f32.mrf.mxu0
        %v2252 = vadd.f32 %v2083, %v2251
        %v2253 = vpop.f32.mrf.mxu0
        %v2254 = vadd.f32 %v2085, %v2253
        %2255 = vmatmul.bf16.gmra.mxu0 %v1287
        %v2256 = vpop.f32.mrf.mxu0
        %v2257 = vadd.f32 %v2088, %v2256
        %v2258 = vpop.f32.mrf.mxu0
        %v2259 = vadd.f32 %v2090, %v2258
        %2260 = vmatmul.bf16.gmra.mxu0 %v1291
        %v2261 = vpop.f32.mrf.mxu0
        %v2262 = vadd.f32 %v2093, %v2261
        %v2263 = vpop.f32.mrf.mxu0
        %v2264 = vadd.f32 %v2095, %v2263
        %2265 = vmatmul.bf16.gmra.mxu0 %v1295
        %v2266 = vpop.f32.mrf.mxu0
        %v2267 = vadd.f32 %v2098, %v2266
        %v2268 = vpop.f32.mrf.mxu0
        %v2269 = vadd.f32 %v2100, %v2268
        %2270 = vmatmul.bf16.gmra.mxu0 %v1299
        %v2271 = vpop.f32.mrf.mxu0
        %v2272 = vadd.f32 %v2103, %v2271
        %v2273 = vpop.f32.mrf.mxu0
        %v2274 = vadd.f32 %v2105, %v2273
        %2275 = vmatmul.bf16.gmra.mxu0 %v1303
        %v2276 = vpop.f32.mrf.mxu0
        %v2277 = vadd.f32 %v2108, %v2276
        %v2278 = vpop.f32.mrf.mxu0
        %v2279 = vadd.f32 %v2110, %v2278
        %2280 = vmatmul.bf16.gmra.mxu0 %v1307
        %v2281 = vpop.f32.mrf.mxu0
        %v2282 = vadd.f32 %v2113, %v2281
        %v2283 = vpop.f32.mrf.mxu0
        %v2284 = vadd.f32 %v2115, %v2283
        %2285 = vmatmul.bf16.gmra.mxu0 %v1311
        %v2286 = vpop.f32.mrf.mxu0
        %v2287 = vadd.f32 %v2118, %v2286
        %v2288 = vpop.f32.mrf.mxu0
        %v2289 = vadd.f32 %v2120, %v2288
        %2290 = vmatmul.bf16.gmra.mxu0 %v1315
        %v2291 = vpop.f32.mrf.mxu0
        %v2292 = vadd.f32 %v2123, %v2291
        %v2293 = vpop.f32.mrf.mxu0
        %v2294 = vadd.f32 %v2125, %v2293
        %2295 = vmatmul.bf16.gmra.mxu0 %v1319
        %v2296 = vpop.f32.mrf.mxu0
        %v2297 = vadd.f32 %v2128, %v2296
        %v2298 = vpop.f32.mrf.mxu0
        %v2299 = vadd.f32 %v2130, %v2298
        %2300 = vmatmul.bf16.gmra.mxu0 %v1323
        %v2301 = vpop.f32.mrf.mxu0
        %v2302 = vadd.f32 %v2133, %v2301
        %v2303 = vpop.f32.mrf.mxu0
        %v2304 = vadd.f32 %v2135, %v2303
        %2305 = vmatmul.bf16.gmra.mxu0 %v1327
        %v2306 = vpop.f32.mrf.mxu0
        %v2307 = vadd.f32 %v2138, %v2306
        %v2308 = vpop.f32.mrf.mxu0
        %v2309 = vadd.f32 %v2140, %v2308
        %2310 = vmatmul.bf16.gmra.mxu0 %v1331
        %v2311 = vpop.f32.mrf.mxu0
        %v2312 = vadd.f32 %v2143, %v2311
        %v2313 = vpop.f32.mrf.mxu0
        %v2314 = vadd.f32 %v2145, %v2313
        %2315 = vmatmul.bf16.gmra.mxu0 %v1335
        %v2316 = vpop.f32.mrf.mxu0
        %v2317 = vadd.f32 %v2148, %v2316
        %v2318 = vpop.f32.mrf.mxu0
        %v2319 = vadd.f32 %v2150, %v2318
        %2320 = vmatmul.bf16.gmra.mxu0 %v1339
        %v2321 = vpop.f32.mrf.mxu0
        %v2322 = vadd.f32 %v2153, %v2321
        %v2323 = vpop.f32.mrf.mxu0
        %v2324 = vadd.f32 %v2155, %v2323
        %2325 = vmatmul.bf16.gmra.mxu0 %v1343
        %v2326 = vpop.f32.mrf.mxu0
        %v2327 = vadd.f32 %v2158, %v2326
        %v2328 = vpop.f32.mrf.mxu0
        %v2329 = vadd.f32 %v2160, %v2328
        %2330 = vmatmul.bf16.gmra.mxu0 %v1347
        %v2331 = vpop.f32.mrf.mxu0
        %v2332 = vadd.f32 %v2163, %v2331
        %v2333 = vpop.f32.mrf.mxu0
        %v2334 = vadd.f32 %v2165, %v2333
        %2335 = vmatmul.bf16.gmra.mxu0 %v1351
        %v2336 = vpop.f32.mrf.mxu0
        %v2337 = vadd.f32 %v2168, %v2336
        %v2338 = vpop.f32.mrf.mxu0
        %v2339 = vadd.f32 %v2170, %v2338
        %2340 = vmatmul.bf16.gmra.mxu0 %v1355
        %v2341 = vpop.f32.mrf.mxu0
        %v2342 = vadd.f32 %v2173, %v2341
        %v2343 = vpop.f32.mrf.mxu0
        %v2344 = vadd.f32 %v2175, %v2343
        %2345 = vmatmul.bf16.gmra.mxu0 %v1359
        %v2346 = vpop.f32.mrf.mxu0
        %v2347 = vadd.f32 %v2178, %v2346
        %v2348 = vpop.f32.mrf.mxu0
        %v2349 = vadd.f32 %v2180, %v2348
        %2350 = vmatmul.bf16.gmra.mxu0 %v1363
        %v2351 = vpop.f32.mrf.mxu0
        %v2352 = vadd.f32 %v2183, %v2351
        %v2353 = vpop.f32.mrf.mxu0
        %v2354 = vadd.f32 %v2185, %v2353
        %2355 = vmatmul.bf16.gmra.mxu0 %v1367
        %v2356 = vpop.f32.mrf.mxu0
        %v2357 = vadd.f32 %v2188, %v2356
        %v2358 = vpop.f32.mrf.mxu0
        %v2359 = vadd.f32 %v2190, %v2358
        %2360 = vmatmul.bf16.gmra.mxu0 %v1371
        %v2361 = vpop.f32.mrf.mxu0
        %v2362 = vadd.f32 %v2193, %v2361
        %v2363 = vpop.f32.mrf.mxu0
        %v2364 = vadd.f32 %v2195, %v2363
        %2365 = vmatmul.bf16.gmra.mxu0 %v1375
        %v2366 = vpop.f32.mrf.mxu0
        %v2367 = vadd.f32 %v2198, %v2366
        %v2368 = vpop.f32.mrf.mxu0
        %v2369 = vadd.f32 %v2200, %v2368
        %2370 = vmatmul.bf16.gmra.mxu0 %v1379
        %v2371 = vpop.f32.mrf.mxu0
        %v2372 = vadd.f32 %v2203, %v2371
        %v2373 = vpop.f32.mrf.mxu0
        %v2374 = vadd.f32 %v2205, %v2373
        %2375 = vdwg.mxu0
        %v2376 = vadd.f32 %v612, %v2217
        %v2377 = vadd.f32 %v613, %v2219
        %v2378 = vadd.f32 %v614, %v2222
        %v2379 = vadd.f32 %v615, %v2224
        %v2380 = vadd.f32 %v616, %v2227
        %v2381 = vadd.f32 %v617, %v2229
        %v2382 = vadd.f32 %v618, %v2232
        %v2383 = vadd.f32 %v619, %v2234
        %v2384 = vadd.f32 %v620, %v2237
        %v2385 = vadd.f32 %v621, %v2239
        %v2386 = vadd.f32 %v622, %v2242
        %v2387 = vadd.f32 %v623, %v2244
        %v2388 = vadd.f32 %v624, %v2247
        %v2389 = vadd.f32 %v625, %v2249
        %v2390 = vadd.f32 %v626, %v2252
        %v2391 = vadd.f32 %v627, %v2254
        %v2392 = vadd.f32 %v628, %v2257
        %v2393 = vadd.f32 %v629, %v2259
        %v2394 = vadd.f32 %v630, %v2262
        %v2395 = vadd.f32 %v631, %v2264
        %v2396 = vadd.f32 %v632, %v2267
        %v2397 = vadd.f32 %v633, %v2269
        %v2398 = vadd.f32 %v634, %v2272
        %v2399 = vadd.f32 %v635, %v2274
        %v2400 = vadd.f32 %v636, %v2277
        %v2401 = vadd.f32 %v637, %v2279
        %v2402 = vadd.f32 %v638, %v2282
        %v2403 = vadd.f32 %v639, %v2284
        %v2404 = vadd.f32 %v640, %v2287
        %v2405 = vadd.f32 %v641, %v2289
        %v2406 = vadd.f32 %v642, %v2292
        %v2407 = vadd.f32 %v643, %v2294
        %v2408 = vadd.f32 %v644, %v2297
        %v2409 = vadd.f32 %v645, %v2299
        %v2410 = vadd.f32 %v646, %v2302
        %v2411 = vadd.f32 %v647, %v2304
        %v2412 = vadd.f32 %v648, %v2307
        %v2413 = vadd.f32 %v649, %v2309
        %v2414 = vadd.f32 %v650, %v2312
        %v2415 = vadd.f32 %v651, %v2314
        %v2416 = vadd.f32 %v652, %v2317
        %v2417 = vadd.f32 %v653, %v2319
        %v2418 = vadd.f32 %v654, %v2322
        %v2419 = vadd.f32 %v655, %v2324
        %v2420 = vadd.f32 %v656, %v2327
        %v2421 = vadd.f32 %v657, %v2329
        %v2422 = vadd.f32 %v658, %v2332
        %v2423 = vadd.f32 %v659, %v2334
        %v2424 = vadd.f32 %v660, %v2337
        %v2425 = vadd.f32 %v661, %v2339
        %v2426 = vadd.f32 %v662, %v2342
        %v2427 = vadd.f32 %v663, %v2344
        %v2428 = vadd.f32 %v664, %v2347
        %v2429 = vadd.f32 %v665, %v2349
        %v2430 = vadd.f32 %v666, %v2352
        %v2431 = vadd.f32 %v667, %v2354
        %v2432 = vadd.f32 %v668, %v2357
        %v2433 = vadd.f32 %v669, %v2359
        %v2434 = vadd.f32 %v670, %v2362
        %v2435 = vadd.f32 %v671, %v2364
        %v2436 = vadd.f32 %v672, %v2367
        %v2437 = vadd.f32 %v673, %v2369
        %v2438 = vadd.f32 %v674, %v2372
        %v2439 = vadd.f32 %v675, %v2374
        %2440 = vst [vmem:[#allocation2] sm:$0xff] %v2376
        %2441 = vst [vmem:[#allocation2 + $0x8] sm:$0xff] %v2377
        %2442 = vst [vmem:[#allocation2 + $0x10] sm:$0xff] %v2378
        %2443 = vst [vmem:[#allocation2 + $0x18] sm:$0xff] %v2379
        %2444 = vst [vmem:[#allocation2 + $0x20] sm:$0xff] %v2380
        %2445 = vst [vmem:[#allocation2 + $0x28] sm:$0xff] %v2381
        %2446 = vst [vmem:[#allocation2 + $0x30] sm:$0xff] %v2382
        %2447 = vst [vmem:[#allocation2 + $0x38] sm:$0xff] %v2383
        %2448 = vst [vmem:[#allocation2 + $0x40] sm:$0xff] %v2384
        %2449 = vst [vmem:[#allocation2 + $0x48] sm:$0xff] %v2385
        %2450 = vst [vmem:[#allocation2 + $0x50] sm:$0xff] %v2386
        %2451 = vst [vmem:[#allocation2 + $0x58] sm:$0xff] %v2387
        %2452 = vst [vmem:[#allocation2 + $0x60] sm:$0xff] %v2388
        %2453 = vst [vmem:[#allocation2 + $0x68] sm:$0xff] %v2389
        %2454 = vst [vmem:[#allocation2 + $0x70] sm:$0xff] %v2390
        %2455 = vst [vmem:[#allocation2 + $0x78] sm:$0xff] %v2391
        %2456 = vst [vmem:[#allocation2 + $0x80] sm:$0xff] %v2392
        %2457 = vst [vmem:[#allocation2 + $0x88] sm:$0xff] %v2393
        %2458 = vst [vmem:[#allocation2 + $0x90] sm:$0xff] %v2394
        %2459 = vst [vmem:[#allocation2 + $0x98] sm:$0xff] %v2395
        %2460 = vst [vmem:[#allocation2 + $0xa0] sm:$0xff] %v2396
        %2461 = vst [vmem:[#allocation2 + $0xa8] sm:$0xff] %v2397
        %2462 = vst [vmem:[#allocation2 + $0xb0] sm:$0xff] %v2398
        %2463 = vst [vmem:[#allocation2 + $0xb8] sm:$0xff] %v2399
        %2464 = vst [vmem:[#allocation2 + $0xc0] sm:$0xff] %v2400
        %2465 = vst [vmem:[#allocation2 + $0xc8] sm:$0xff] %v2401
        %2466 = vst [vmem:[#allocation2 + $0xd0] sm:$0xff] %v2402
        %2467 = vst [vmem:[#allocation2 + $0xd8] sm:$0xff] %v2403
        %2468 = vst [vmem:[#allocation2 + $0xe0] sm:$0xff] %v2404
        %2469 = vst [vmem:[#allocation2 + $0xe8] sm:$0xff] %v2405
        %2470 = vst [vmem:[#allocation2 + $0xf0] sm:$0xff] %v2406
        %2471 = vst [vmem:[#allocation2 + $0xf8] sm:$0xff] %v2407
        %2472 = vst [vmem:[#allocation2 + $0x100] sm:$0xff] %v2408
        %2473 = vst [vmem:[#allocation2 + $0x108] sm:$0xff] %v2409
        %2474 = vst [vmem:[#allocation2 + $0x110] sm:$0xff] %v2410
        %2475 = vst [vmem:[#allocation2 + $0x118] sm:$0xff] %v2411
        %2476 = vst [vmem:[#allocation2 + $0x120] sm:$0xff] %v2412
        %2477 = vst [vmem:[#allocation2 + $0x128] sm:$0xff] %v2413
        %2478 = vst [vmem:[#allocation2 + $0x130] sm:$0xff] %v2414
        %2479 = vst [vmem:[#allocation2 + $0x138] sm:$0xff] %v2415
        %2480 = vst [vmem:[#allocation2 + $0x140] sm:$0xff] %v2416
        %2481 = vst [vmem:[#allocation2 + $0x148] sm:$0xff] %v2417
        %2482 = vst [vmem:[#allocation2 + $0x150] sm:$0xff] %v2418
        %2483 = vst [vmem:[#allocation2 + $0x158] sm:$0xff] %v2419
        %2484 = vst [vmem:[#allocation2 + $0x160] sm:$0xff] %v2420
        %2485 = vst [vmem:[#allocation2 + $0x168] sm:$0xff] %v2421
        %2486 = vst [vmem:[#allocation2 + $0x170] sm:$0xff] %v2422
        %2487 = vst [vmem:[#allocation2 + $0x178] sm:$0xff] %v2423
        %2488 = vst [vmem:[#allocation2 + $0x180] sm:$0xff] %v2424
        %2489 = vst [vmem:[#allocation2 + $0x188] sm:$0xff] %v2425
        %2490 = vst [vmem:[#allocation2 + $0x190] sm:$0xff] %v2426
        %2491 = vst [vmem:[#allocation2 + $0x198] sm:$0xff] %v2427
        %2492 = vst [vmem:[#allocation2 + $0x1a0] sm:$0xff] %v2428
        %2493 = vst [vmem:[#allocation2 + $0x1a8] sm:$0xff] %v2429
        %2494 = vst [vmem:[#allocation2 + $0x1b0] sm:$0xff] %v2430
        %2495 = vst [vmem:[#allocation2 + $0x1b8] sm:$0xff] %v2431
        %2496 = vst [vmem:[#allocation2 + $0x1c0] sm:$0xff] %v2432
        %2497 = vst [vmem:[#allocation2 + $0x1c8] sm:$0xff] %v2433
        %2498 = vst [vmem:[#allocation2 + $0x1d0] sm:$0xff] %v2434
        %2499 = vst [vmem:[#allocation2 + $0x1d8] sm:$0xff] %v2435
        %2500 = vst [vmem:[#allocation2 + $0x1e0] sm:$0xff] %v2436
        %2501 = vst [vmem:[#allocation2 + $0x1e8] sm:$0xff] %v2437
        %2502 = vst [vmem:[#allocation2 + $0x1f0] sm:$0xff] %v2438
        %2503 = vst [vmem:[#allocation2 + $0x1f8] sm:$0xff] %v2439
        %p2504 = scmp.eq.s32.totalorder %s20, 1
        // Predicated region
        $region64: #{discriminator_forward.6} parent=54 // pred_check
          %p2505 = pneg %p2504
        $region65: #{discriminator_forward.6} parent=54 // pred_check_branch
          %2507 = sbr.rel (%p2505) target = $region67
        $region66: #{discriminator_forward.6} parent=54 // pred_region
          %v2508 = vld [vmem:[#allocation2] sm:$0xff]
          %v2509 = vld [vmem:[#allocation2 + $0x8] sm:$0xff]
          %v2510 = vld [vmem:[#allocation2 + $0x10] sm:$0xff]
          %v2511 = vld [vmem:[#allocation2 + $0x18] sm:$0xff]
          %v2512 = vld [vmem:[#allocation2 + $0x20] sm:$0xff]
          %v2513 = vld [vmem:[#allocation2 + $0x28] sm:$0xff]
          %v2514 = vld [vmem:[#allocation2 + $0x30] sm:$0xff]
          %v2515 = vld [vmem:[#allocation2 + $0x38] sm:$0xff]
          %v2516 = vld [vmem:[#allocation2 + $0x40] sm:$0xff]
          %v2517 = vld [vmem:[#allocation2 + $0x48] sm:$0xff]
          %v2518 = vld [vmem:[#allocation2 + $0x50] sm:$0xff]
          %v2519 = vld [vmem:[#allocation2 + $0x58] sm:$0xff]
          %v2520 = vld [vmem:[#allocation2 + $0x60] sm:$0xff]
          %v2521 = vld [vmem:[#allocation2 + $0x68] sm:$0xff]
          %v2522 = vld [vmem:[#allocation2 + $0x70] sm:$0xff]
          %v2523 = vld [vmem:[#allocation2 + $0x78] sm:$0xff]
          %v2524 = vld [vmem:[#allocation2 + $0x80] sm:$0xff]
          %v2525 = vld [vmem:[#allocation2 + $0x88] sm:$0xff]
          %v2526 = vld [vmem:[#allocation2 + $0x90] sm:$0xff]
          %v2527 = vld [vmem:[#allocation2 + $0x98] sm:$0xff]
          %v2528 = vld [vmem:[#allocation2 + $0xa0] sm:$0xff]
          %v2529 = vld [vmem:[#allocation2 + $0xa8] sm:$0xff]
          %v2530 = vld [vmem:[#allocation2 + $0xb0] sm:$0xff]
          %v2531 = vld [vmem:[#allocation2 + $0xb8] sm:$0xff]
          %v2532 = vld [vmem:[#allocation2 + $0xc0] sm:$0xff]
          %v2533 = vld [vmem:[#allocation2 + $0xc8] sm:$0xff]
          %v2534 = vld [vmem:[#allocation2 + $0xd0] sm:$0xff]
          %v2535 = vld [vmem:[#allocation2 + $0xd8] sm:$0xff]
          %v2536 = vld [vmem:[#allocation2 + $0xe0] sm:$0xff]
          %v2537 = vld [vmem:[#allocation2 + $0xe8] sm:$0xff]
          %v2538 = vld [vmem:[#allocation2 + $0xf0] sm:$0xff]
          %v2539 = vld [vmem:[#allocation2 + $0xf8] sm:$0xff]
          %v2540 = vld [vmem:[#allocation2 + $0x100] sm:$0xff]
          %v2541 = vld [vmem:[#allocation2 + $0x108] sm:$0xff]
          %v2542 = vld [vmem:[#allocation2 + $0x110] sm:$0xff]
          %v2543 = vld [vmem:[#allocation2 + $0x118] sm:$0xff]
          %v2544 = vld [vmem:[#allocation2 + $0x120] sm:$0xff]
          %v2545 = vld [vmem:[#allocation2 + $0x128] sm:$0xff]
          %v2546 = vld [vmem:[#allocation2 + $0x130] sm:$0xff]
          %v2547 = vld [vmem:[#allocation2 + $0x138] sm:$0xff]
          %v2548 = vld [vmem:[#allocation2 + $0x140] sm:$0xff]
          %v2549 = vld [vmem:[#allocation2 + $0x148] sm:$0xff]
          %v2550 = vld [vmem:[#allocation2 + $0x150] sm:$0xff]
          %v2551 = vld [vmem:[#allocation2 + $0x158] sm:$0xff]
          %v2552 = vld [vmem:[#allocation2 + $0x160] sm:$0xff]
          %v2553 = vld [vmem:[#allocation2 + $0x168] sm:$0xff]
          %v2554 = vld [vmem:[#allocation2 + $0x170] sm:$0xff]
          %v2555 = vld [vmem:[#allocation2 + $0x178] sm:$0xff]
          %v2556 = vld [vmem:[#allocation2 + $0x180] sm:$0xff]
          %v2557 = vld [vmem:[#allocation2 + $0x188] sm:$0xff]
          %v2558 = vld [vmem:[#allocation2 + $0x190] sm:$0xff]
          %v2559 = vld [vmem:[#allocation2 + $0x198] sm:$0xff]
          %v2560 = vld [vmem:[#allocation2 + $0x1a0] sm:$0xff]
          %v2561 = vld [vmem:[#allocation2 + $0x1a8] sm:$0xff]
          %v2562 = vld [vmem:[#allocation2 + $0x1b0] sm:$0xff]
          %v2563 = vld [vmem:[#allocation2 + $0x1b8] sm:$0xff]
          %v2564 = vld [vmem:[#allocation2 + $0x1c0] sm:$0xff]
          %v2565 = vld [vmem:[#allocation2 + $0x1c8] sm:$0xff]
          %v2566 = vld [vmem:[#allocation2 + $0x1d0] sm:$0xff]
          %v2567 = vld [vmem:[#allocation2 + $0x1d8] sm:$0xff]
          %v2568 = vld [vmem:[#allocation2 + $0x1e0] sm:$0xff]
          %v2569 = vld [vmem:[#allocation2 + $0x1e8] sm:$0xff]
          %v2570 = vld [vmem:[#allocation2 + $0x1f0] sm:$0xff]
          %v2571 = vld [vmem:[#allocation2 + $0x1f8] sm:$0xff]
          %v2572 = vadd.f32 %v2508, %v2509
          %v2573 = vadd.f32 %v2572, %v2510
          %v2574 = vadd.f32 %v2573, %v2511
          %v2575 = vadd.f32 %v2574, %v2512
          %v2576 = vadd.f32 %v2575, %v2513
          %v2577 = vadd.f32 %v2576, %v2514
          %v2578 = vadd.f32 %v2577, %v2515
          %v2579 = vadd.f32 %v2578, %v2516
          %v2580 = vadd.f32 %v2579, %v2517
          %v2581 = vadd.f32 %v2580, %v2518
          %v2582 = vadd.f32 %v2581, %v2519
          %v2583 = vadd.f32 %v2582, %v2520
          %v2584 = vadd.f32 %v2583, %v2521
          %v2585 = vadd.f32 %v2584, %v2522
          %v2586 = vadd.f32 %v2585, %v2523
          %v2587 = vadd.f32 %v2586, %v2524
          %v2588 = vadd.f32 %v2587, %v2525
          %v2589 = vadd.f32 %v2588, %v2526
          %v2590 = vadd.f32 %v2589, %v2527
          %v2591 = vadd.f32 %v2590, %v2528
          %v2592 = vadd.f32 %v2591, %v2529
          %v2593 = vadd.f32 %v2592, %v2530
          %v2594 = vadd.f32 %v2593, %v2531
          %v2595 = vadd.f32 %v2594, %v2532
          %v2596 = vadd.f32 %v2595, %v2533
          %v2597 = vadd.f32 %v2596, %v2534
          %v2598 = vadd.f32 %v2597, %v2535
          %v2599 = vadd.f32 %v2598, %v2536
          %v2600 = vadd.f32 %v2599, %v2537
          %v2601 = vadd.f32 %v2600, %v2538
          %v2602 = vadd.f32 %v2601, %v2539
          %v2603 = vadd.f32 %v2602, %v2540
          %v2604 = vadd.f32 %v2603, %v2541
          %v2605 = vadd.f32 %v2604, %v2542
          %v2606 = vadd.f32 %v2605, %v2543
          %v2607 = vadd.f32 %v2606, %v2544
          %v2608 = vadd.f32 %v2607, %v2545
          %v2609 = vadd.f32 %v2608, %v2546
          %v2610 = vadd.f32 %v2609, %v2547
          %v2611 = vadd.f32 %v2610, %v2548
          %v2612 = vadd.f32 %v2611, %v2549
          %v2613 = vadd.f32 %v2612, %v2550
          %v2614 = vadd.f32 %v2613, %v2551
          %v2615 = vadd.f32 %v2614, %v2552
          %v2616 = vadd.f32 %v2615, %v2553
          %v2617 = vadd.f32 %v2616, %v2554
          %v2618 = vadd.f32 %v2617, %v2555
          %v2619 = vadd.f32 %v2618, %v2556
          %v2620 = vadd.f32 %v2619, %v2557
          %v2621 = vadd.f32 %v2620, %v2558
          %v2622 = vadd.f32 %v2621, %v2559
          %v2623 = vadd.f32 %v2622, %v2560
          %v2624 = vadd.f32 %v2623, %v2561
          %v2625 = vadd.f32 %v2624, %v2562
          %v2626 = vadd.f32 %v2625, %v2563
          %v2627 = vadd.f32 %v2626, %v2564
          %v2628 = vadd.f32 %v2627, %v2565
          %v2629 = vadd.f32 %v2628, %v2566
          %v2630 = vadd.f32 %v2629, %v2567
          %v2631 = vadd.f32 %v2630, %v2568
          %v2632 = vadd.f32 %v2631, %v2569
          %v2633 = vadd.f32 %v2632, %v2570
          %v2634 = vadd.f32 %v2633, %v2571
          %v2635 = vrot.slane %v2634, 4
          %v2636 = vadd.f32 %v2634, %v2635
          %v2637 = vrot.slane %v2636, 2
          %v2638 = vadd.f32 %v2636, %v2637
          %v2639 = vrot.slane %v2638, 1
          %v2640 = vadd.f32 %v2638, %v2639
          %v2641 = vrcp.pop 512.0
          %v2642 = vmul.f32 512.0, %v2641
          %v2643 = vsub.f32 1.0, %v2642
          %v2644 = vmul.f32 %v2641, %v2643
          %v2645 = vadd.f32 %v2641, %v2644
          %vm2646 = vweird.f32 %v2641
          %v2647 = vsel %vm2646, %v2641, %v2645
          %v2648 = vmul.f32 %v2640, %v2647
          %v2649 = vsub.f32 %v2508, %v2648
          %v2650 = vsub.f32 %v2509, %v2648
          %v2651 = vsub.f32 %v2510, %v2648
          %v2652 = vsub.f32 %v2511, %v2648
          %v2653 = vsub.f32 %v2512, %v2648
          %v2654 = vsub.f32 %v2513, %v2648
          %v2655 = vsub.f32 %v2514, %v2648
          %v2656 = vsub.f32 %v2515, %v2648
          %v2657 = vsub.f32 %v2516, %v2648
          %v2658 = vsub.f32 %v2517, %v2648
          %v2659 = vsub.f32 %v2518, %v2648
          %v2660 = vsub.f32 %v2519, %v2648
          %v2661 = vsub.f32 %v2520, %v2648
          %v2662 = vsub.f32 %v2521, %v2648
          %v2663 = vsub.f32 %v2522, %v2648
          %v2664 = vsub.f32 %v2523, %v2648
          %v2665 = vsub.f32 %v2524, %v2648
          %v2666 = vsub.f32 %v2525, %v2648
          %v2667 = vsub.f32 %v2526, %v2648
          %v2668 = vsub.f32 %v2527, %v2648
          %v2669 = vsub.f32 %v2528, %v2648
          %v2670 = vsub.f32 %v2529, %v2648
          %v2671 = vsub.f32 %v2530, %v2648
          %v2672 = vsub.f32 %v2531, %v2648
          %v2673 = vsub.f32 %v2532, %v2648
          %v2674 = vsub.f32 %v2533, %v2648
          %v2675 = vsub.f32 %v2534, %v2648
          %v2676 = vsub.f32 %v2535, %v2648
          %v2677 = vsub.f32 %v2536, %v2648
          %v2678 = vsub.f32 %v2537, %v2648
          %v2679 = vsub.f32 %v2538, %v2648
          %v2680 = vsub.f32 %v2539, %v2648
          %v2681 = vsub.f32 %v2540, %v2648
          %v2682 = vsub.f32 %v2541, %v2648
          %v2683 = vsub.f32 %v2542, %v2648
          %v2684 = vsub.f32 %v2543, %v2648
          %v2685 = vsub.f32 %v2544, %v2648
          %v2686 = vsub.f32 %v2545, %v2648
          %v2687 = vsub.f32 %v2546, %v2648
          %v2688 = vsub.f32 %v2547, %v2648
          %v2689 = vsub.f32 %v2548, %v2648
          %v2690 = vsub.f32 %v2549, %v2648
          %v2691 = vsub.f32 %v2550, %v2648
          %v2692 = vsub.f32 %v2551, %v2648
          %v2693 = vsub.f32 %v2552, %v2648
          %v2694 = vsub.f32 %v2553, %v2648
          %v2695 = vsub.f32 %v2554, %v2648
          %v2696 = vsub.f32 %v2555, %v2648
          %v2697 = vsub.f32 %v2556, %v2648
          %v2698 = vsub.f32 %v2557, %v2648
          %v2699 = vsub.f32 %v2558, %v2648
          %v2700 = vsub.f32 %v2559, %v2648
          %v2701 = vsub.f32 %v2560, %v2648
          %v2702 = vsub.f32 %v2561, %v2648
          %v2703 = vsub.f32 %v2562, %v2648
          %v2704 = vsub.f32 %v2563, %v2648
          %v2705 = vsub.f32 %v2564, %v2648
          %v2706 = vsub.f32 %v2565, %v2648
          %v2707 = vsub.f32 %v2566, %v2648
          %v2708 = vsub.f32 %v2567, %v2648
          %v2709 = vsub.f32 %v2568, %v2648
          %v2710 = vsub.f32 %v2569, %v2648
          %v2711 = vsub.f32 %v2570, %v2648
          %v2712 = vsub.f32 %v2571, %v2648
          %v2713 = vmul.f32 %v2649, %v2649
          %v2714 = vmul.f32 %v2650, %v2650
          %v2715 = vmul.f32 %v2651, %v2651
          %v2716 = vmul.f32 %v2652, %v2652
          %v2717 = vmul.f32 %v2653, %v2653
          %v2718 = vmul.f32 %v2654, %v2654
          %v2719 = vmul.f32 %v2655, %v2655
          %v2720 = vmul.f32 %v2656, %v2656
          %v2721 = vmul.f32 %v2657, %v2657
          %v2722 = vmul.f32 %v2658, %v2658
          %v2723 = vmul.f32 %v2659, %v2659
          %v2724 = vmul.f32 %v2660, %v2660
          %v2725 = vmul.f32 %v2661, %v2661
          %v2726 = vmul.f32 %v2662, %v2662
          %v2727 = vmul.f32 %v2663, %v2663
          %v2728 = vmul.f32 %v2664, %v2664
          %v2729 = vmul.f32 %v2665, %v2665
          %v2730 = vmul.f32 %v2666, %v2666
          %v2731 = vmul.f32 %v2667, %v2667
          %v2732 = vmul.f32 %v2668, %v2668
          %v2733 = vmul.f32 %v2669, %v2669
          %v2734 = vmul.f32 %v2670, %v2670
          %v2735 = vmul.f32 %v2671, %v2671
          %v2736 = vmul.f32 %v2672, %v2672
          %v2737 = vmul.f32 %v2673, %v2673
          %v2738 = vmul.f32 %v2674, %v2674
          %v2739 = vmul.f32 %v2675, %v2675
          %v2740 = vmul.f32 %v2676, %v2676
          %v2741 = vmul.f32 %v2677, %v2677
          %v2742 = vmul.f32 %v2678, %v2678
          %v2743 = vmul.f32 %v2679, %v2679
          %v2744 = vmul.f32 %v2680, %v2680
          %v2745 = vmul.f32 %v2681, %v2681
          %v2746 = vmul.f32 %v2682, %v2682
          %v2747 = vmul.f32 %v2683, %v2683
          %v2748 = vmul.f32 %v2684, %v2684
          %v2749 = vmul.f32 %v2685, %v2685
          %v2750 = vmul.f32 %v2686, %v2686
          %v2751 = vmul.f32 %v2687, %v2687
          %v2752 = vmul.f32 %v2688, %v2688
          %v2753 = vmul.f32 %v2689, %v2689
          %v2754 = vmul.f32 %v2690, %v2690
          %v2755 = vmul.f32 %v2691, %v2691
          %v2756 = vmul.f32 %v2692, %v2692
          %v2757 = vmul.f32 %v2693, %v2693
          %v2758 = vmul.f32 %v2694, %v2694
          %v2759 = vmul.f32 %v2695, %v2695
          %v2760 = vmul.f32 %v2696, %v2696
          %v2761 = vmul.f32 %v2697, %v2697
          %v2762 = vmul.f32 %v2698, %v2698
          %v2763 = vmul.f32 %v2699, %v2699
          %v2764 = vmul.f32 %v2700, %v2700
          %v2765 = vmul.f32 %v2701, %v2701
          %v2766 = vmul.f32 %v2702, %v2702
          %v2767 = vmul.f32 %v2703, %v2703
          %v2768 = vmul.f32 %v2704, %v2704
          %v2769 = vmul.f32 %v2705, %v2705
          %v2770 = vmul.f32 %v2706, %v2706
          %v2771 = vmul.f32 %v2707, %v2707
          %v2772 = vmul.f32 %v2708, %v2708
          %v2773 = vmul.f32 %v2709, %v2709
          %v2774 = vmul.f32 %v2710, %v2710
          %v2775 = vmul.f32 %v2711, %v2711
          %v2776 = vmul.f32 %v2712, %v2712
          %v2777 = vadd.f32 %v2713, %v2714
          %v2778 = vadd.f32 %v2777, %v2715
          %v2779 = vadd.f32 %v2778, %v2716
          %v2780 = vadd.f32 %v2779, %v2717
          %v2781 = vadd.f32 %v2780, %v2718
          %v2782 = vadd.f32 %v2781, %v2719
          %v2783 = vadd.f32 %v2782, %v2720
          %v2784 = vadd.f32 %v2783, %v2721
          %v2785 = vadd.f32 %v2784, %v2722
          %v2786 = vadd.f32 %v2785, %v2723
          %v2787 = vadd.f32 %v2786, %v2724
          %v2788 = vadd.f32 %v2787, %v2725
          %v2789 = vadd.f32 %v2788, %v2726
          %v2790 = vadd.f32 %v2789, %v2727
          %v2791 = vadd.f32 %v2790, %v2728
          %v2792 = vadd.f32 %v2791, %v2729
          %v2793 = vadd.f32 %v2792, %v2730
          %v2794 = vadd.f32 %v2793, %v2731
          %v2795 = vadd.f32 %v2794, %v2732
          %v2796 = vadd.f32 %v2795, %v2733
          %v2797 = vadd.f32 %v2796, %v2734
          %v2798 = vadd.f32 %v2797, %v2735
          %v2799 = vadd.f32 %v2798, %v2736
          %v2800 = vadd.f32 %v2799, %v2737
          %v2801 = vadd.f32 %v2800, %v2738
          %v2802 = vadd.f32 %v2801, %v2739
          %v2803 = vadd.f32 %v2802, %v2740
          %v2804 = vadd.f32 %v2803, %v2741
          %v2805 = vadd.f32 %v2804, %v2742
          %v2806 = vadd.f32 %v2805, %v2743
          %v2807 = vadd.f32 %v2806, %v2744
          %v2808 = vadd.f32 %v2807, %v2745
          %v2809 = vadd.f32 %v2808, %v2746
          %v2810 = vadd.f32 %v2809, %v2747
          %v2811 = vadd.f32 %v2810, %v2748
          %v2812 = vadd.f32 %v2811, %v2749
          %v2813 = vadd.f32 %v2812, %v2750
          %v2814 = vadd.f32 %v2813, %v2751
          %v2815 = vadd.f32 %v2814, %v2752
          %v2816 = vadd.f32 %v2815, %v2753
          %v2817 = vadd.f32 %v2816, %v2754
          %v2818 = vadd.f32 %v2817, %v2755
          %v2819 = vadd.f32 %v2818, %v2756
          %v2820 = vadd.f32 %v2819, %v2757
          %v2821 = vadd.f32 %v2820, %v2758
          %v2822 = vadd.f32 %v2821, %v2759
          %v2823 = vadd.f32 %v2822, %v2760
          %v2824 = vadd.f32 %v2823, %v2761
          %v2825 = vadd.f32 %v2824, %v2762
          %v2826 = vadd.f32 %v2825, %v2763
          %v2827 = vadd.f32 %v2826, %v2764
          %v2828 = vadd.f32 %v2827, %v2765
          %v2829 = vadd.f32 %v2828, %v2766
          %v2830 = vadd.f32 %v2829, %v2767
          %v2831 = vadd.f32 %v2830, %v2768
          %v2832 = vadd.f32 %v2831, %v2769
          %v2833 = vadd.f32 %v2832, %v2770
          %v2834 = vadd.f32 %v2833, %v2771
          %v2835 = vadd.f32 %v2834, %v2772
          %v2836 = vadd.f32 %v2835, %v2773
          %v2837 = vadd.f32 %v2836, %v2774
          %v2838 = vadd.f32 %v2837, %v2775
          %v2839 = vadd.f32 %v2838, %v2776
          %v2840 = vrot.slane %v2839, 4
          %v2841 = vadd.f32 %v2839, %v2840
          %v2842 = vrot.slane %v2841, 2
          %v2843 = vadd.f32 %v2841, %v2842
          %v2844 = vrot.slane %v2843, 1
          %v2845 = vadd.f32 %v2843, %v2844
          %v2846 = vmul.f32 %v2845, %v2647
          %v2847 = vadd.f32 %v2846, 1e-05
          %v2848 = vrsqrt.pop %v2847
          %v2849 = vmul.f32 %v2848, %v2847
          %v2850 = vmul.f32 %v2849, %v2848
          %v2851 = vmul.f32 0.5, %v2850
          %v2852 = vsub.f32 1.5, %v2851
          %v2853 = vmul.f32 %v2848, %v2852
          %vm2854 = vweird.f32 %v2847
          %vm2855 = vweird.f32 %v2848
          %vm2856 = vmor %vm2854, %vm2855
          %v2857 = vsel %vm2856, %v2848, %v2853
          %v2858 = vmul.f32 %v2649, %v2857
          %v2859 = vmul.f32 %v2650, %v2857
          %v2860 = vmul.f32 %v2651, %v2857
          %v2861 = vmul.f32 %v2652, %v2857
          %v2862 = vmul.f32 %v2653, %v2857
          %v2863 = vmul.f32 %v2654, %v2857
          %v2864 = vmul.f32 %v2655, %v2857
          %v2865 = vmul.f32 %v2656, %v2857
          %v2866 = vmul.f32 %v2657, %v2857
          %v2867 = vmul.f32 %v2658, %v2857
          %v2868 = vmul.f32 %v2659, %v2857
          %v2869 = vmul.f32 %v2660, %v2857
          %v2870 = vmul.f32 %v2661, %v2857
          %v2871 = vmul.f32 %v2662, %v2857
          %v2872 = vmul.f32 %v2663, %v2857
          %v2873 = vmul.f32 %v2664, %v2857
          %v2874 = vmul.f32 %v2665, %v2857
          %v2875 = vmul.f32 %v2666, %v2857
          %v2876 = vmul.f32 %v2667, %v2857
          %v2877 = vmul.f32 %v2668, %v2857
          %v2878 = vmul.f32 %v2669, %v2857
          %v2879 = vmul.f32 %v2670, %v2857
          %v2880 = vmul.f32 %v2671, %v2857
          %v2881 = vmul.f32 %v2672, %v2857
          %v2882 = vmul.f32 %v2673, %v2857
          %v2883 = vmul.f32 %v2674, %v2857
          %v2884 = vmul.f32 %v2675, %v2857
          %v2885 = vmul.f32 %v2676, %v2857
          %v2886 = vmul.f32 %v2677, %v2857
          %v2887 = vmul.f32 %v2678, %v2857
          %v2888 = vmul.f32 %v2679, %v2857
          %v2889 = vmul.f32 %v2680, %v2857
          %v2890 = vmul.f32 %v2681, %v2857
          %v2891 = vmul.f32 %v2682, %v2857
          %v2892 = vmul.f32 %v2683, %v2857
          %v2893 = vmul.f32 %v2684, %v2857
          %v2894 = vmul.f32 %v2685, %v2857
          %v2895 = vmul.f32 %v2686, %v2857
          %v2896 = vmul.f32 %v2687, %v2857
          %v2897 = vmul.f32 %v2688, %v2857
          %v2898 = vmul.f32 %v2689, %v2857
          %v2899 = vmul.f32 %v2690, %v2857
          %v2900 = vmul.f32 %v2691, %v2857
          %v2901 = vmul.f32 %v2692, %v2857
          %v2902 = vmul.f32 %v2693, %v2857
          %v2903 = vmul.f32 %v2694, %v2857
          %v2904 = vmul.f32 %v2695, %v2857
          %v2905 = vmul.f32 %v2696, %v2857
          %v2906 = vmul.f32 %v2697, %v2857
          %v2907 = vmul.f32 %v2698, %v2857
          %v2908 = vmul.f32 %v2699, %v2857
          %v2909 = vmul.f32 %v2700, %v2857
          %v2910 = vmul.f32 %v2701, %v2857
          %v2911 = vmul.f32 %v2702, %v2857
          %v2912 = vmul.f32 %v2703, %v2857
          %v2913 = vmul.f32 %v2704, %v2857
          %v2914 = vmul.f32 %v2705, %v2857
          %v2915 = vmul.f32 %v2706, %v2857
          %v2916 = vmul.f32 %v2707, %v2857
          %v2917 = vmul.f32 %v2708, %v2857
          %v2918 = vmul.f32 %v2709, %v2857
          %v2919 = vmul.f32 %v2710, %v2857
          %v2920 = vmul.f32 %v2711, %v2857
          %v2921 = vmul.f32 %v2712, %v2857
          %v2922 = vld [vmem:[%s536] sm:$0x1]
          %v2924 = vperm.slane %v2922, 0
          %v2926 = vmul.f32 %v2858, %v2924
          %v2927 = vmul.f32 %v2859, %v2924
          %v2928 = vmul.f32 %v2860, %v2924
          %v2929 = vmul.f32 %v2861, %v2924
          %v2930 = vmul.f32 %v2862, %v2924
          %v2931 = vmul.f32 %v2863, %v2924
          %v2932 = vmul.f32 %v2864, %v2924
          %v2933 = vmul.f32 %v2865, %v2924
          %v2934 = vmul.f32 %v2866, %v2924
          %v2935 = vmul.f32 %v2867, %v2924
          %v2936 = vmul.f32 %v2868, %v2924
          %v2937 = vmul.f32 %v2869, %v2924
          %v2938 = vmul.f32 %v2870, %v2924
          %v2939 = vmul.f32 %v2871, %v2924
          %v2940 = vmul.f32 %v2872, %v2924
          %v2941 = vmul.f32 %v2873, %v2924
          %v2942 = vmul.f32 %v2874, %v2924
          %v2943 = vmul.f32 %v2875, %v2924
          %v2944 = vmul.f32 %v2876, %v2924
          %v2945 = vmul.f32 %v2877, %v2924
          %v2946 = vmul.f32 %v2878, %v2924
          %v2947 = vmul.f32 %v2879, %v2924
          %v2948 = vmul.f32 %v2880, %v2924
          %v2949 = vmul.f32 %v2881, %v2924
          %v2950 = vmul.f32 %v2882, %v2924
          %v2951 = vmul.f32 %v2883, %v2924
          %v2952 = vmul.f32 %v2884, %v2924
          %v2953 = vmul.f32 %v2885, %v2924
          %v2954 = vmul.f32 %v2886, %v2924
          %v2955 = vmul.f32 %v2887, %v2924
          %v2956 = vmul.f32 %v2888, %v2924
          %v2957 = vmul.f32 %v2889, %v2924
          %v2958 = vmul.f32 %v2890, %v2924
          %v2959 = vmul.f32 %v2891, %v2924
          %v2960 = vmul.f32 %v2892, %v2924
          %v2961 = vmul.f32 %v2893, %v2924
          %v2962 = vmul.f32 %v2894, %v2924
          %v2963 = vmul.f32 %v2895, %v2924
          %v2964 = vmul.f32 %v2896, %v2924
          %v2965 = vmul.f32 %v2897, %v2924
          %v2966 = vmul.f32 %v2898, %v2924
          %v2967 = vmul.f32 %v2899, %v2924
          %v2968 = vmul.f32 %v2900, %v2924
          %v2969 = vmul.f32 %v2901, %v2924
          %v2970 = vmul.f32 %v2902, %v2924
          %v2971 = vmul.f32 %v2903, %v2924
          %v2972 = vmul.f32 %v2904, %v2924
          %v2973 = vmul.f32 %v2905, %v2924
          %v2974 = vmul.f32 %v2906, %v2924
          %v2975 = vmul.f32 %v2907, %v2924
          %v2976 = vmul.f32 %v2908, %v2924
          %v2977 = vmul.f32 %v2909, %v2924
          %v2978 = vmul.f32 %v2910, %v2924
          %v2979 = vmul.f32 %v2911, %v2924
          %v2980 = vmul.f32 %v2912, %v2924
          %v2981 = vmul.f32 %v2913, %v2924
          %v2982 = vmul.f32 %v2914, %v2924
          %v2983 = vmul.f32 %v2915, %v2924
          %v2984 = vmul.f32 %v2916, %v2924
          %v2985 = vmul.f32 %v2917, %v2924
          %v2986 = vmul.f32 %v2918, %v2924
          %v2987 = vmul.f32 %v2919, %v2924
          %v2988 = vmul.f32 %v2920, %v2924
          %v2989 = vmul.f32 %v2921, %v2924
          %v2990 = vld [vmem:[%s539] sm:$0x1]
          %v2992 = vperm.slane %v2990, 0
          %v2994 = vadd.f32 %v2926, %v2992
          %v2995 = vadd.f32 %v2927, %v2992
          %v2996 = vadd.f32 %v2928, %v2992
          %v2997 = vadd.f32 %v2929, %v2992
          %v2998 = vadd.f32 %v2930, %v2992
          %v2999 = vadd.f32 %v2931, %v2992
          %v3000 = vadd.f32 %v2932, %v2992
          %v3001 = vadd.f32 %v2933, %v2992
          %v3002 = vadd.f32 %v2934, %v2992
          %v3003 = vadd.f32 %v2935, %v2992
          %v3004 = vadd.f32 %v2936, %v2992
          %v3005 = vadd.f32 %v2937, %v2992
          %v3006 = vadd.f32 %v2938, %v2992
          %v3007 = vadd.f32 %v2939, %v2992
          %v3008 = vadd.f32 %v2940, %v2992
          %v3009 = vadd.f32 %v2941, %v2992
          %v3010 = vadd.f32 %v2942, %v2992
          %v3011 = vadd.f32 %v2943, %v2992
          %v3012 = vadd.f32 %v2944, %v2992
          %v3013 = vadd.f32 %v2945, %v2992
          %v3014 = vadd.f32 %v2946, %v2992
          %v3015 = vadd.f32 %v2947, %v2992
          %v3016 = vadd.f32 %v2948, %v2992
          %v3017 = vadd.f32 %v2949, %v2992
          %v3018 = vadd.f32 %v2950, %v2992
          %v3019 = vadd.f32 %v2951, %v2992
          %v3020 = vadd.f32 %v2952, %v2992
          %v3021 = vadd.f32 %v2953, %v2992
          %v3022 = vadd.f32 %v2954, %v2992
          %v3023 = vadd.f32 %v2955, %v2992
          %v3024 = vadd.f32 %v2956, %v2992
          %v3025 = vadd.f32 %v2957, %v2992
          %v3026 = vadd.f32 %v2958, %v2992
          %v3027 = vadd.f32 %v2959, %v2992
          %v3028 = vadd.f32 %v2960, %v2992
          %v3029 = vadd.f32 %v2961, %v2992
          %v3030 = vadd.f32 %v2962, %v2992
          %v3031 = vadd.f32 %v2963, %v2992
          %v3032 = vadd.f32 %v2964, %v2992
          %v3033 = vadd.f32 %v2965, %v2992
          %v3034 = vadd.f32 %v2966, %v2992
          %v3035 = vadd.f32 %v2967, %v2992
          %v3036 = vadd.f32 %v2968, %v2992
          %v3037 = vadd.f32 %v2969, %v2992
          %v3038 = vadd.f32 %v2970, %v2992
          %v3039 = vadd.f32 %v2971, %v2992
          %v3040 = vadd.f32 %v2972, %v2992
          %v3041 = vadd.f32 %v2973, %v2992
          %v3042 = vadd.f32 %v2974, %v2992
          %v3043 = vadd.f32 %v2975, %v2992
          %v3044 = vadd.f32 %v2976, %v2992
          %v3045 = vadd.f32 %v2977, %v2992
          %v3046 = vadd.f32 %v2978, %v2992
          %v3047 = vadd.f32 %v2979, %v2992
          %v3048 = vadd.f32 %v2980, %v2992
          %v3049 = vadd.f32 %v2981, %v2992
          %v3050 = vadd.f32 %v2982, %v2992
          %v3051 = vadd.f32 %v2983, %v2992
          %v3052 = vadd.f32 %v2984, %v2992
          %v3053 = vadd.f32 %v2985, %v2992
          %v3054 = vadd.f32 %v2986, %v2992
          %v3055 = vadd.f32 %v2987, %v2992
          %v3056 = vadd.f32 %v2988, %v2992
          %v3057 = vadd.f32 %v2989, %v2992
          %vm3058 = vcmp.gt.f32.partialorder %v2994, 0.0
          %vm3059 = vcmp.gt.f32.partialorder %v2995, 0.0
          %vm3060 = vcmp.gt.f32.partialorder %v2996, 0.0
          %vm3061 = vcmp.gt.f32.partialorder %v2997, 0.0
          %vm3062 = vcmp.gt.f32.partialorder %v2998, 0.0
          %vm3063 = vcmp.gt.f32.partialorder %v2999, 0.0
          %vm3064 = vcmp.gt.f32.partialorder %v3000, 0.0
          %vm3065 = vcmp.gt.f32.partialorder %v3001, 0.0
          %vm3066 = vcmp.gt.f32.partialorder %v3002, 0.0
          %vm3067 = vcmp.gt.f32.partialorder %v3003, 0.0
          %vm3068 = vcmp.gt.f32.partialorder %v3004, 0.0
          %vm3069 = vcmp.gt.f32.partialorder %v3005, 0.0
          %vm3070 = vcmp.gt.f32.partialorder %v3006, 0.0
          %vm3071 = vcmp.gt.f32.partialorder %v3007, 0.0
          %vm3072 = vcmp.gt.f32.partialorder %v3008, 0.0
          %vm3073 = vcmp.gt.f32.partialorder %v3009, 0.0
          %vm3074 = vcmp.gt.f32.partialorder %v3010, 0.0
          %vm3075 = vcmp.gt.f32.partialorder %v3011, 0.0
          %vm3076 = vcmp.gt.f32.partialorder %v3012, 0.0
          %vm3077 = vcmp.gt.f32.partialorder %v3013, 0.0
          %vm3078 = vcmp.gt.f32.partialorder %v3014, 0.0
          %vm3079 = vcmp.gt.f32.partialorder %v3015, 0.0
          %vm3080 = vcmp.gt.f32.partialorder %v3016, 0.0
          %vm3081 = vcmp.gt.f32.partialorder %v3017, 0.0
          %vm3082 = vcmp.gt.f32.partialorder %v3018, 0.0
          %vm3083 = vcmp.gt.f32.partialorder %v3019, 0.0
          %vm3084 = vcmp.gt.f32.partialorder %v3020, 0.0
          %vm3085 = vcmp.gt.f32.partialorder %v3021, 0.0
          %vm3086 = vcmp.gt.f32.partialorder %v3022, 0.0
          %vm3087 = vcmp.gt.f32.partialorder %v3023, 0.0
          %vm3088 = vcmp.gt.f32.partialorder %v3024, 0.0
          %vm3089 = vcmp.gt.f32.partialorder %v3025, 0.0
          %vm3090 = vcmp.gt.f32.partialorder %v3026, 0.0
          %vm3091 = vcmp.gt.f32.partialorder %v3027, 0.0
          %vm3092 = vcmp.gt.f32.partialorder %v3028, 0.0
          %vm3093 = vcmp.gt.f32.partialorder %v3029, 0.0
          %vm3094 = vcmp.gt.f32.partialorder %v3030, 0.0
          %vm3095 = vcmp.gt.f32.partialorder %v3031, 0.0
          %vm3096 = vcmp.gt.f32.partialorder %v3032, 0.0
          %vm3097 = vcmp.gt.f32.partialorder %v3033, 0.0
          %vm3098 = vcmp.gt.f32.partialorder %v3034, 0.0
          %vm3099 = vcmp.gt.f32.partialorder %v3035, 0.0
          %vm3100 = vcmp.gt.f32.partialorder %v3036, 0.0
          %vm3101 = vcmp.gt.f32.partialorder %v3037, 0.0
          %vm3102 = vcmp.gt.f32.partialorder %v3038, 0.0
          %vm3103 = vcmp.gt.f32.partialorder %v3039, 0.0
          %vm3104 = vcmp.gt.f32.partialorder %v3040, 0.0
          %vm3105 = vcmp.gt.f32.partialorder %v3041, 0.0
          %vm3106 = vcmp.gt.f32.partialorder %v3042, 0.0
          %vm3107 = vcmp.gt.f32.partialorder %v3043, 0.0
          %vm3108 = vcmp.gt.f32.partialorder %v3044, 0.0
          %vm3109 = vcmp.gt.f32.partialorder %v3045, 0.0
          %vm3110 = vcmp.gt.f32.partialorder %v3046, 0.0
          %vm3111 = vcmp.gt.f32.partialorder %v3047, 0.0
          %vm3112 = vcmp.gt.f32.partialorder %v3048, 0.0
          %vm3113 = vcmp.gt.f32.partialorder %v3049, 0.0
          %vm3114 = vcmp.gt.f32.partialorder %v3050, 0.0
          %vm3115 = vcmp.gt.f32.partialorder %v3051, 0.0
          %vm3116 = vcmp.gt.f32.partialorder %v3052, 0.0
          %vm3117 = vcmp.gt.f32.partialorder %v3053, 0.0
          %vm3118 = vcmp.gt.f32.partialorder %v3054, 0.0
          %vm3119 = vcmp.gt.f32.partialorder %v3055, 0.0
          %vm3120 = vcmp.gt.f32.partialorder %v3056, 0.0
          %vm3121 = vcmp.gt.f32.partialorder %v3057, 0.0
          %v3122 = vmul.f32 %v2994, 0.2
          %v3123 = vmul.f32 %v2995, 0.2
          %v3124 = vmul.f32 %v2996, 0.2
          %v3125 = vmul.f32 %v2997, 0.2
          %v3126 = vmul.f32 %v2998, 0.2
          %v3127 = vmul.f32 %v2999, 0.2
          %v3128 = vmul.f32 %v3000, 0.2
          %v3129 = vmul.f32 %v3001, 0.2
          %v3130 = vmul.f32 %v3002, 0.2
          %v3131 = vmul.f32 %v3003, 0.2
          %v3132 = vmul.f32 %v3004, 0.2
          %v3133 = vmul.f32 %v3005, 0.2
          %v3134 = vmul.f32 %v3006, 0.2
          %v3135 = vmul.f32 %v3007, 0.2
          %v3136 = vmul.f32 %v3008, 0.2
          %v3137 = vmul.f32 %v3009, 0.2
          %v3138 = vmul.f32 %v3010, 0.2
          %v3139 = vmul.f32 %v3011, 0.2
          %v3140 = vmul.f32 %v3012, 0.2
          %v3141 = vmul.f32 %v3013, 0.2
          %v3142 = vmul.f32 %v3014, 0.2
          %v3143 = vmul.f32 %v3015, 0.2
          %v3144 = vmul.f32 %v3016, 0.2
          %v3145 = vmul.f32 %v3017, 0.2
          %v3146 = vmul.f32 %v3018, 0.2
          %v3147 = vmul.f32 %v3019, 0.2
          %v3148 = vmul.f32 %v3020, 0.2
          %v3149 = vmul.f32 %v3021, 0.2
          %v3150 = vmul.f32 %v3022, 0.2
          %v3151 = vmul.f32 %v3023, 0.2
          %v3152 = vmul.f32 %v3024, 0.2
          %v3153 = vmul.f32 %v3025, 0.2
          %v3154 = vmul.f32 %v3026, 0.2
          %v3155 = vmul.f32 %v3027, 0.2
          %v3156 = vmul.f32 %v3028, 0.2
          %v3157 = vmul.f32 %v3029, 0.2
          %v3158 = vmul.f32 %v3030, 0.2
          %v3159 = vmul.f32 %v3031, 0.2
          %v3160 = vmul.f32 %v3032, 0.2
          %v3161 = vmul.f32 %v3033, 0.2
          %v3162 = vmul.f32 %v3034, 0.2
          %v3163 = vmul.f32 %v3035, 0.2
          %v3164 = vmul.f32 %v3036, 0.2
          %v3165 = vmul.f32 %v3037, 0.2
          %v3166 = vmul.f32 %v3038, 0.2
          %v3167 = vmul.f32 %v3039, 0.2
          %v3168 = vmul.f32 %v3040, 0.2
          %v3169 = vmul.f32 %v3041, 0.2
          %v3170 = vmul.f32 %v3042, 0.2
          %v3171 = vmul.f32 %v3043, 0.2
          %v3172 = vmul.f32 %v3044, 0.2
          %v3173 = vmul.f32 %v3045, 0.2
          %v3174 = vmul.f32 %v3046, 0.2
          %v3175 = vmul.f32 %v3047, 0.2
          %v3176 = vmul.f32 %v3048, 0.2
          %v3177 = vmul.f32 %v3049, 0.2
          %v3178 = vmul.f32 %v3050, 0.2
          %v3179 = vmul.f32 %v3051, 0.2
          %v3180 = vmul.f32 %v3052, 0.2
          %v3181 = vmul.f32 %v3053, 0.2
          %v3182 = vmul.f32 %v3054, 0.2
          %v3183 = vmul.f32 %v3055, 0.2
          %v3184 = vmul.f32 %v3056, 0.2
          %v3185 = vmul.f32 %v3057, 0.2
          %v3186 = vsel %vm3058, %v2994, %v3122
          %v3187 = vsel %vm3059, %v2995, %v3123
          %v3188 = vsel %vm3060, %v2996, %v3124
          %v3189 = vsel %vm3061, %v2997, %v3125
          %v3190 = vsel %vm3062, %v2998, %v3126
          %v3191 = vsel %vm3063, %v2999, %v3127
          %v3192 = vsel %vm3064, %v3000, %v3128
          %v3193 = vsel %vm3065, %v3001, %v3129
          %v3194 = vsel %vm3066, %v3002, %v3130
          %v3195 = vsel %vm3067, %v3003, %v3131
          %v3196 = vsel %vm3068, %v3004, %v3132
          %v3197 = vsel %vm3069, %v3005, %v3133
          %v3198 = vsel %vm3070, %v3006, %v3134
          %v3199 = vsel %vm3071, %v3007, %v3135
          %v3200 = vsel %vm3072, %v3008, %v3136
          %v3201 = vsel %vm3073, %v3009, %v3137
          %v3202 = vsel %vm3074, %v3010, %v3138
          %v3203 = vsel %vm3075, %v3011, %v3139
          %v3204 = vsel %vm3076, %v3012, %v3140
          %v3205 = vsel %vm3077, %v3013, %v3141
          %v3206 = vsel %vm3078, %v3014, %v3142
          %v3207 = vsel %vm3079, %v3015, %v3143
          %v3208 = vsel %vm3080, %v3016, %v3144
          %v3209 = vsel %vm3081, %v3017, %v3145
          %v3210 = vsel %vm3082, %v3018, %v3146
          %v3211 = vsel %vm3083, %v3019, %v3147
          %v3212 = vsel %vm3084, %v3020, %v3148
          %v3213 = vsel %vm3085, %v3021, %v3149
          %v3214 = vsel %vm3086, %v3022, %v3150
          %v3215 = vsel %vm3087, %v3023, %v3151
          %v3216 = vsel %vm3088, %v3024, %v3152
          %v3217 = vsel %vm3089, %v3025, %v3153
          %v3218 = vsel %vm3090, %v3026, %v3154
          %v3219 = vsel %vm3091, %v3027, %v3155
          %v3220 = vsel %vm3092, %v3028, %v3156
          %v3221 = vsel %vm3093, %v3029, %v3157
          %v3222 = vsel %vm3094, %v3030, %v3158
          %v3223 = vsel %vm3095, %v3031, %v3159
          %v3224 = vsel %vm3096, %v3032, %v3160
          %v3225 = vsel %vm3097, %v3033, %v3161
          %v3226 = vsel %vm3098, %v3034, %v3162
          %v3227 = vsel %vm3099, %v3035, %v3163
          %v3228 = vsel %vm3100, %v3036, %v3164
          %v3229 = vsel %vm3101, %v3037, %v3165
          %v3230 = vsel %vm3102, %v3038, %v3166
          %v3231 = vsel %vm3103, %v3039, %v3167
          %v3232 = vsel %vm3104, %v3040, %v3168
          %v3233 = vsel %vm3105, %v3041, %v3169
          %v3234 = vsel %vm3106, %v3042, %v3170
          %v3235 = vsel %vm3107, %v3043, %v3171
          %v3236 = vsel %vm3108, %v3044, %v3172
          %v3237 = vsel %vm3109, %v3045, %v3173
          %v3238 = vsel %vm3110, %v3046, %v3174
          %v3239 = vsel %vm3111, %v3047, %v3175
          %v3240 = vsel %vm3112, %v3048, %v3176
          %v3241 = vsel %vm3113, %v3049, %v3177
          %v3242 = vsel %vm3114, %v3050, %v3178
          %v3243 = vsel %vm3115, %v3051, %v3179
          %v3244 = vsel %vm3116, %v3052, %v3180
          %v3245 = vsel %vm3117, %v3053, %v3181
          %v3246 = vsel %vm3118, %v3054, %v3182
          %v3247 = vsel %vm3119, %v3055, %v3183
          %v3248 = vsel %vm3120, %v3056, %v3184
          %v3249 = vsel %vm3121, %v3057, %v3185
          %v3250 = vpack.c.bf16 %v3186, %v3186
          %v3251 = vpack.c.bf16 %v3187, %v3187
          %v3252 = vpack.c.bf16 %v3188, %v3188
          %v3253 = vpack.c.bf16 %v3189, %v3189
          %v3254 = vpack.c.bf16 %v3190, %v3190
          %v3255 = vpack.c.bf16 %v3191, %v3191
          %v3256 = vpack.c.bf16 %v3192, %v3192
          %v3257 = vpack.c.bf16 %v3193, %v3193
          %v3258 = vpack.c.bf16 %v3194, %v3194
          %v3259 = vpack.c.bf16 %v3195, %v3195
          %v3260 = vpack.c.bf16 %v3196, %v3196
          %v3261 = vpack.c.bf16 %v3197, %v3197
          %v3262 = vpack.c.bf16 %v3198, %v3198
          %v3263 = vpack.c.bf16 %v3199, %v3199
          %v3264 = vpack.c.bf16 %v3200, %v3200
          %v3265 = vpack.c.bf16 %v3201, %v3201
          %v3266 = vpack.c.bf16 %v3202, %v3202
          %v3267 = vpack.c.bf16 %v3203, %v3203
          %v3268 = vpack.c.bf16 %v3204, %v3204
          %v3269 = vpack.c.bf16 %v3205, %v3205
          %v3270 = vpack.c.bf16 %v3206, %v3206
          %v3271 = vpack.c.bf16 %v3207, %v3207
          %v3272 = vpack.c.bf16 %v3208, %v3208
          %v3273 = vpack.c.bf16 %v3209, %v3209
          %v3274 = vpack.c.bf16 %v3210, %v3210
          %v3275 = vpack.c.bf16 %v3211, %v3211
          %v3276 = vpack.c.bf16 %v3212, %v3212
          %v3277 = vpack.c.bf16 %v3213, %v3213
          %v3278 = vpack.c.bf16 %v3214, %v3214
          %v3279 = vpack.c.bf16 %v3215, %v3215
          %v3280 = vpack.c.bf16 %v3216, %v3216
          %v3281 = vpack.c.bf16 %v3217, %v3217
          %v3282 = vpack.c.bf16 %v3218, %v3218
          %v3283 = vpack.c.bf16 %v3219, %v3219
          %v3284 = vpack.c.bf16 %v3220, %v3220
          %v3285 = vpack.c.bf16 %v3221, %v3221
          %v3286 = vpack.c.bf16 %v3222, %v3222
          %v3287 = vpack.c.bf16 %v3223, %v3223
          %v3288 = vpack.c.bf16 %v3224, %v3224
          %v3289 = vpack.c.bf16 %v3225, %v3225
          %v3290 = vpack.c.bf16 %v3226, %v3226
          %v3291 = vpack.c.bf16 %v3227, %v3227
          %v3292 = vpack.c.bf16 %v3228, %v3228
          %v3293 = vpack.c.bf16 %v3229, %v3229
          %v3294 = vpack.c.bf16 %v3230, %v3230
          %v3295 = vpack.c.bf16 %v3231, %v3231
          %v3296 = vpack.c.bf16 %v3232, %v3232
          %v3297 = vpack.c.bf16 %v3233, %v3233
          %v3298 = vpack.c.bf16 %v3234, %v3234
          %v3299 = vpack.c.bf16 %v3235, %v3235
          %v3300 = vpack.c.bf16 %v3236, %v3236
          %v3301 = vpack.c.bf16 %v3237, %v3237
          %v3302 = vpack.c.bf16 %v3238, %v3238
          %v3303 = vpack.c.bf16 %v3239, %v3239
          %v3304 = vpack.c.bf16 %v3240, %v3240
          %v3305 = vpack.c.bf16 %v3241, %v3241
          %v3306 = vpack.c.bf16 %v3242, %v3242
          %v3307 = vpack.c.bf16 %v3243, %v3243
          %v3308 = vpack.c.bf16 %v3244, %v3244
          %v3309 = vpack.c.bf16 %v3245, %v3245
          %v3310 = vpack.c.bf16 %v3246, %v3246
          %v3311 = vpack.c.bf16 %v3247, %v3247
          %v3312 = vpack.c.bf16 %v3248, %v3248
          %v3313 = vpack.c.bf16 %v3249, %v3249
          %3314 = vst [vmem:[%s543] sm:$0xf] %v3250
          %3315 = vst [vmem:[%s543 + $0x4] sm:$0xf] %v3251
          %3316 = vst [vmem:[%s543 + $0x8] sm:$0xf] %v3252
          %3317 = vst [vmem:[%s543 + $0xc] sm:$0xf] %v3253
          %3318 = vst [vmem:[%s543 + $0x10] sm:$0xf] %v3254
          %3319 = vst [vmem:[%s543 + $0x14] sm:$0xf] %v3255
          %3320 = vst [vmem:[%s543 + $0x18] sm:$0xf] %v3256
          %3321 = vst [vmem:[%s543 + $0x1c] sm:$0xf] %v3257
          %3322 = vst [vmem:[%s543 + $0x20] sm:$0xf] %v3258
          %3323 = vst [vmem:[%s543 + $0x24] sm:$0xf] %v3259
          %3324 = vst [vmem:[%s543 + $0x28] sm:$0xf] %v3260
          %3325 = vst [vmem:[%s543 + $0x2c] sm:$0xf] %v3261
          %3326 = vst [vmem:[%s543 + $0x30] sm:$0xf] %v3262
          %3327 = vst [vmem:[%s543 + $0x34] sm:$0xf] %v3263
          %3328 = vst [vmem:[%s543 + $0x38] sm:$0xf] %v3264
          %3329 = vst [vmem:[%s543 + $0x3c] sm:$0xf] %v3265
          %3330 = vst [vmem:[%s543 + $0x40] sm:$0xf] %v3266
          %3331 = vst [vmem:[%s543 + $0x44] sm:$0xf] %v3267
          %3332 = vst [vmem:[%s543 + $0x48] sm:$0xf] %v3268
          %3333 = vst [vmem:[%s543 + $0x4c] sm:$0xf] %v3269
          %3334 = vst [vmem:[%s543 + $0x50] sm:$0xf] %v3270
          %3335 = vst [vmem:[%s543 + $0x54] sm:$0xf] %v3271
          %3336 = vst [vmem:[%s543 + $0x58] sm:$0xf] %v3272
          %3337 = vst [vmem:[%s543 + $0x5c] sm:$0xf] %v3273
          %3338 = vst [vmem:[%s543 + $0x60] sm:$0xf] %v3274
          %3339 = vst [vmem:[%s543 + $0x64] sm:$0xf] %v3275
          %3340 = vst [vmem:[%s543 + $0x68] sm:$0xf] %v3276
          %3341 = vst [vmem:[%s543 + $0x6c] sm:$0xf] %v3277
          %3342 = vst [vmem:[%s543 + $0x70] sm:$0xf] %v3278
          %3343 = vst [vmem:[%s543 + $0x74] sm:$0xf] %v3279
          %3344 = vst [vmem:[%s543 + $0x78] sm:$0xf] %v3280
          %3345 = vst [vmem:[%s543 + $0x7c] sm:$0xf] %v3281
          %3346 = vst [vmem:[%s543 + $0x80] sm:$0xf] %v3282
          %3347 = vst [vmem:[%s543 + $0x84] sm:$0xf] %v3283
          %3348 = vst [vmem:[%s543 + $0x88] sm:$0xf] %v3284
          %3349 = vst [vmem:[%s543 + $0x8c] sm:$0xf] %v3285
          %3350 = vst [vmem:[%s543 + $0x90] sm:$0xf] %v3286
          %3351 = vst [vmem:[%s543 + $0x94] sm:$0xf] %v3287
          %3352 = vst [vmem:[%s543 + $0x98] sm:$0xf] %v3288
          %3353 = vst [vmem:[%s543 + $0x9c] sm:$0xf] %v3289
          %3354 = vst [vmem:[%s543 + $0xa0] sm:$0xf] %v3290
          %3355 = vst [vmem:[%s543 + $0xa4] sm:$0xf] %v3291
          %3356 = vst [vmem:[%s543 + $0xa8] sm:$0xf] %v3292
          %3357 = vst [vmem:[%s543 + $0xac] sm:$0xf] %v3293
          %3358 = vst [vmem:[%s543 + $0xb0] sm:$0xf] %v3294
          %3359 = vst [vmem:[%s543 + $0xb4] sm:$0xf] %v3295
          %3360 = vst [vmem:[%s543 + $0xb8] sm:$0xf] %v3296
          %3361 = vst [vmem:[%s543 + $0xbc] sm:$0xf] %v3297
          %3362 = vst [vmem:[%s543 + $0xc0] sm:$0xf] %v3298
          %3363 = vst [vmem:[%s543 + $0xc4] sm:$0xf] %v3299
          %3364 = vst [vmem:[%s543 + $0xc8] sm:$0xf] %v3300
          %3365 = vst [vmem:[%s543 + $0xcc] sm:$0xf] %v3301
          %3366 = vst [vmem:[%s543 + $0xd0] sm:$0xf] %v3302
          %3367 = vst [vmem:[%s543 + $0xd4] sm:$0xf] %v3303
          %3368 = vst [vmem:[%s543 + $0xd8] sm:$0xf] %v3304
          %3369 = vst [vmem:[%s543 + $0xdc] sm:$0xf] %v3305
          %3370 = vst [vmem:[%s543 + $0xe0] sm:$0xf] %v3306
          %3371 = vst [vmem:[%s543 + $0xe4] sm:$0xf] %v3307
          %3372 = vst [vmem:[%s543 + $0xe8] sm:$0xf] %v3308
          %3373 = vst [vmem:[%s543 + $0xec] sm:$0xf] %v3309
          %3374 = vst [vmem:[%s543 + $0xf0] sm:$0xf] %v3310
          %3375 = vst [vmem:[%s543 + $0xf4] sm:$0xf] %v3311
          %3376 = vst [vmem:[%s543 + $0xf8] sm:$0xf] %v3312
          %3377 = vst [vmem:[%s543 + $0xfc] sm:$0xf] %v3313
        $region67: #{discriminator_forward.6} parent=54 // pred_fallthru
          _
        %p3378 = scmp.lt.s32.totalorder %s19, 0
        %s3379 = scalar_select %p3378, %s19, 0
        %s3380 = smul.addr %s3379, 4
        %s3381 = scalar_lea.vmem %s4, %s3380
        // Predicated region
        $region68: #{discriminator_forward.6} parent=54 // pred_check
          %p3382 = pneg %p151
        $region69: #{discriminator_forward.6} parent=54 // pred_check_branch
          %3384 = sbr.rel (%p3382) target = $region71
        $region70: #{discriminator_forward.6} parent=54 // pred_region
          _
        $region71: #{discriminator_forward.6} parent=54 // pred_fallthru
          _
        // Predicated region
        $region72: #{discriminator_forward.6} parent=54 // pred_check
          %p3385 = pneg %p151
        $region73: #{discriminator_forward.6} parent=54 // pred_check_branch
          %3387 = sbr.rel (%p3385) target = $region75
        $region74: #{discriminator_forward.6} parent=54 // pred_region
          %p3388 = scmp.lt.s32.totalorder %s19, 0
          %s3389 = scalar_select %p3388, %s19, 0
          %s3390 = smul.addr %s3389, 4
          %s3391 = scalar_lea.vmem %s4, %s3390
        $region75: #{discriminator_forward.6} parent=54 // pred_fallthru
          _
      $region55: #{discriminator_forward.6} parent=5 // pred_fallthru
        _
      %p3392 = scmp.le.s32.totalorder 2, %s10
      // Predicated region
      $region76: #{discriminator_forward.6} parent=5 // pred_check
        %p3393 = pneg %p3392
      $region77: #{discriminator_forward.6} parent=5 // pred_check_branch
        %3395 = sbr.rel (%p3393) target = $region79
      $region78: #{discriminator_forward.6} parent=5 // pred_region
        %s3396 = ssub.s32 %s10, 2
      $region79: #{discriminator_forward.6} parent=5 // pred_fallthru
        _
    $region6: #{discriminator_forward.6} parent=1 // loop_footer
      %s14 = sadd.s32 1, %s10
    $region7: #{discriminator_forward.6} parent=1 // loop_footer_branch
      %9 = sbr.rel target = $region3
    $region8: #{discriminator_forward.6} parent=1 // loop_exit
      _

// kernel: discriminator_forward.7
$region0: #{discriminator_forward.7}
  #allocation0 [shape = 'u32[]', space=smem, size = 0x4, offset = 0x4, fixed_abs, tag = 'smem constant byte address 0x4 - core index']
  #allocation1 [shape = 'u32[72,128]{1,0:T(1,128)}', space=vmem, size = 0x9000, scoped, tag = 'internal scratch']
  #allocation2 [shape = 'f32[128,128]{1,0:T(8,128)}', space=vmem, size = 0x10000, scoped, tag = 'scratch operand']
  %s0 = inlined_call_operand.vmem [shape: bf16[128,2048], index: 0, kind: input, shape index: {}]
  %s1 = inlined_call_operand.vmem [shape: bf16[2048,256], index: 1, kind: input, shape index: {}]
  %s2 = inlined_call_operand.vmem [shape: f32[1,256], index: 2, kind: input, shape index: {}]
  %s3 = inlined_call_operand.vmem [shape: f32[1,256], index: 3, kind: input, shape index: {}]
  %s4 = inlined_call_operand.vmem [shape: bf16[128,256], index: 4, kind: output, shape index: {}]
  %s5 = sld [smem:[#allocation0]]
  $region158: #{discriminator_forward.7} parent=0
    _
  %s7 = ssub.s32 1, %s5
  %s8 = scalar_select 0, %s7, %s5
  $region1: #{discriminator_forward.7} parent=0
    #allocation3 [shape = 'u8[262144]{0}', space=vmem, size = 0x40000, scoped, tag = 'input window, operand 0']
    #allocation4 [shape = 'u8[262144]{0}', space=vmem, size = 0x40000, scoped, tag = 'input window, operand 1']
    #allocation5 [shape = 'u8[65536]{0}', space=vmem, size = 0x10000, scoped, tag = 'output window, operand 0']
    loop: start=0, step=1, limit=10
    $region2: #{discriminator_forward.7} parent=1 // loop_pre_header
      _
    $region3: #{discriminator_forward.7} parent=1 // loop_header
      %s10 = sphi 0, %s14
      %p11 = scmp.ge.s32.totalorder %s10, 10
      %s17 = sphi 0, %s29
      %s18 = sphi 0, %s25
      %s19 = sphi 0, %s17
      %s20 = sphi 0, %s18
      %s21 = sphi 0, %s19
      %s22 = sphi 0, %s20
      %s32 = sphi 0, %s34
      %s35 = sphi 0, %s32
      %s36 = sphi 0, %s35
      %s52 = sphi 0, %s36
      %s60 = sphi 0, %s62
      %s63 = sphi 0, %s60
      %s64 = sphi 0, %s63
      %s80 = sphi 0, %s64
      %s86 = sphi 0, %s88
      %s89 = sphi 0, %s86
      %s90 = sphi 0, %s89
      %s106 = sphi 0, %s90
      %s112 = sphi 0, %s114
      %s115 = sphi 0, %s112
      %s116 = sphi 0, %s115
      %s132 = sphi 0, %s116
      %s138 = sphi 0, %s140
      %s141 = sphi 0, %s138
      %s142 = sphi 0, %s141
      %s158 = sphi 0, %s142
    $region4: #{discriminator_forward.7} parent=1 // loop_header_branch
      %13 = sbr.rel (%p11) target = $region8
    $region5: #{discriminator_forward.7} parent=1 // loop_body
      %s15 = ssub.s32 %s10, 1
      %s16 = ssub.s32 %s10, 2
      %s23 = sadd.s32 1, %s18
      %p24 = scmp.ge.s32.totalorder %s23, 4
      %s25 = scalar_select %p24, 0, %s23
      %s26 = sadd.s32 1, %s17
      %s27 = scalar_select %p24, %s26, %s17
      %p28 = scmp.ge.s32.totalorder %s27, 2
      %s29 = scalar_select %p28, 0, %s27
      %s30 = ssub.s32 %s18, %s25
      %p31 = scmp.eq.s32.totalorder %s30, 0
      %s33 = sadd.s32 %s32, 1
      %s34 = scalar_select %p31, %s32, %s33
      %p37 = pneg %p31
      %p38 = scmp.eq.s32.totalorder %s10, 7
      %p39 = por %p37, %p38
      %p40 = scmp.ne.s32.totalorder %s32, %s35
      %p41 = scmp.eq.s32.totalorder %s10, 0
      %p42 = por %p40, %p41
      %p43 = scmp.ne.s32.totalorder %s32, %s35
      %p44 = scmp.eq.s32.totalorder %s15, 7
      %p45 = por %p43, %p44
      %p46 = scmp.ne.s32.totalorder %s35, %s36
      %p47 = scmp.eq.s32.totalorder %s15, 0
      %p48 = por %p46, %p47
      %p49 = scmp.ne.s32.totalorder %s35, %s36
      %p50 = scmp.eq.s32.totalorder %s16, 7
      %p51 = por %p49, %p50
      %p53 = scmp.ne.s32.totalorder %s36, %s52
      %p54 = scmp.eq.s32.totalorder %s16, 0
      %p55 = por %p53, %p54
      %s56 = ssub.s32 %s18, %s25
      %s57 = ssub.s32 %s17, %s29
      %s58 = sor.u32 %s56, %s57
      %p59 = scmp.eq.s32.totalorder %s58, 0
      %s61 = sadd.s32 %s60, 1
      %s62 = scalar_select %p59, %s60, %s61
      %p65 = pneg %p59
      %p66 = scmp.eq.s32.totalorder %s10, 7
      %p67 = por %p65, %p66
      %p68 = scmp.ne.s32.totalorder %s60, %s63
      %p69 = scmp.eq.s32.totalorder %s10, 0
      %p70 = por %p68, %p69
      %p71 = scmp.ne.s32.totalorder %s60, %s63
      %p72 = scmp.eq.s32.totalorder %s15, 7
      %p73 = por %p71, %p72
      %p74 = scmp.ne.s32.totalorder %s63, %s64
      %p75 = scmp.eq.s32.totalorder %s15, 0
      %p76 = por %p74, %p75
      %p77 = scmp.ne.s32.totalorder %s63, %s64
      %p78 = scmp.eq.s32.totalorder %s16, 7
      %p79 = por %p77, %p78
      %p81 = scmp.ne.s32.totalorder %s64, %s80
      %p82 = scmp.eq.s32.totalorder %s16, 0
      %p83 = por %p81, %p82
      %s84 = ssub.s32 %s17, %s29
      %p85 = scmp.eq.s32.totalorder %s84, 0
      %s87 = sadd.s32 %s86, 1
      %s88 = scalar_select %p85, %s86, %s87
      %p91 = pneg %p85
      %p92 = scmp.eq.s32.totalorder %s10, 7
      %p93 = por %p91, %p92
      %p94 = scmp.ne.s32.totalorder %s86, %s89
      %p95 = scmp.eq.s32.totalorder %s10, 0
      %p96 = por %p94, %p95
      %p97 = scmp.ne.s32.totalorder %s86, %s89
      %p98 = scmp.eq.s32.totalorder %s15, 7
      %p99 = por %p97, %p98
      %p100 = scmp.ne.s32.totalorder %s89, %s90
      %p101 = scmp.eq.s32.totalorder %s15, 0
      %p102 = por %p100, %p101
      %p103 = scmp.ne.s32.totalorder %s89, %s90
      %p104 = scmp.eq.s32.totalorder %s16, 7
      %p105 = por %p103, %p104
      %p107 = scmp.ne.s32.totalorder %s90, %s106
      %p108 = scmp.eq.s32.totalorder %s16, 0
      %p109 = por %p107, %p108
      %s110 = ssub.s32 %s17, %s29
      %p111 = scmp.eq.s32.totalorder %s110, 0
      %s113 = sadd.s32 %s112, 1
      %s114 = scalar_select %p111, %s112, %s113
      %p117 = pneg %p111
      %p118 = scmp.eq.s32.totalorder %s10, 7
      %p119 = por %p117, %p118
      %p120 = scmp.ne.s32.totalorder %s112, %s115
      %p121 = scmp.eq.s32.totalorder %s10, 0
      %p122 = por %p120, %p121
      %p123 = scmp.ne.s32.totalorder %s112, %s115
      %p124 = scmp.eq.s32.totalorder %s15, 7
      %p125 = por %p123, %p124
      %p126 = scmp.ne.s32.totalorder %s115, %s116
      %p127 = scmp.eq.s32.totalorder %s15, 0
      %p128 = por %p126, %p127
      %p129 = scmp.ne.s32.totalorder %s115, %s116
      %p130 = scmp.eq.s32.totalorder %s16, 7
      %p131 = por %p129, %p130
      %p133 = scmp.ne.s32.totalorder %s116, %s132
      %p134 = scmp.eq.s32.totalorder %s16, 0
      %p135 = por %p133, %p134
      %s136 = ssub.s32 %s17, %s29
      %p137 = scmp.eq.s32.totalorder %s136, 0
      %s139 = sadd.s32 %s138, 1
      %s140 = scalar_select %p137, %s138, %s139
      %p143 = pneg %p137
      %p144 = scmp.eq.s32.totalorder %s10, 7
      %p145 = por %p143, %p144
      %p146 = scmp.ne.s32.totalorder %s138, %s141
      %p147 = scmp.eq.s32.totalorder %s10, 0
      %p148 = por %p146, %p147
      %p149 = scmp.ne.s32.totalorder %s138, %s141
      %p150 = scmp.eq.s32.totalorder %s15, 7
      %p151 = por %p149, %p150
      %p152 = scmp.ne.s32.totalorder %s141, %s142
      %p153 = scmp.eq.s32.totalorder %s15, 0
      %p154 = por %p152, %p153
      %p155 = scmp.ne.s32.totalorder %s141, %s142
      %p156 = scmp.eq.s32.totalorder %s16, 7
      %p157 = por %p155, %p156
      %p159 = scmp.ne.s32.totalorder %s142, %s158
      %p160 = scmp.eq.s32.totalorder %s16, 0
      %p161 = por %p159, %p160
      %p162 = scmp.le.s32.totalorder 1, %s10
      %p163 = scmp.lt.s32.totalorder %s10, 9
      %p164 = pnand %p162, %p163
      %p165 = pneg %p164
      // Predicated region
      $region9: #{discriminator_forward.7} parent=5 // pred_check
        _
      $region10: #{discriminator_forward.7} parent=5 // pred_check_branch
        %167 = sbr.rel (%p164) target = $region12
      $region11: #{discriminator_forward.7} parent=5 // pred_region
        %s168 = ssub.s32 %s10, 1
      $region12: #{discriminator_forward.7} parent=5 // pred_fallthru
        _
      %p169 = scmp.lt.s32.totalorder %s10, 8
      // Predicated region
      $region13: #{discriminator_forward.7} parent=5 // pred_check
        %p170 = pneg %p169
      $region14: #{discriminator_forward.7} parent=5 // pred_check_branch
        %172 = sbr.rel (%p170) target = $region16
      $region15: #{discriminator_forward.7} parent=5 // pred_region
        // Predicated region
        $region17: #{discriminator_forward.7} parent=15 // pred_check
          %p173 = pneg %p42
        $region18: #{discriminator_forward.7} parent=15 // pred_check_branch
          %175 = sbr.rel (%p173) target = $region20
        $region19: #{discriminator_forward.7} parent=15 // pred_region
          %s176 = sand.u32 %s32, 1
          %s177 = sand.u32 %s32, 1
          %s178 = smul.addr %s177, 256
          %s179 = scalar_lea.vmem [#allocation3], %s178
          %s180 = smul.u32 4, %s18
          %s181 = smul.addr %s180, 4
          %s182 = scalar_lea.vmem %s0, %s181
          // Predicated region
          $region21: #{discriminator_forward.7} parent=19 // pred_check
            _
          $region22: #{discriminator_forward.7} parent=19 // pred_check_branch
            %184 = sbr.rel (0) target = $region24
          $region23: #{discriminator_forward.7} parent=19 // pred_region
            // Predicated region
            $region25: #{discriminator_forward.7} parent=23 // pred_check
              _
            $region26: #{discriminator_forward.7} parent=23 // pred_check_branch
              %186 = sbr.rel (0) target = $region28
            $region27: #{discriminator_forward.7} parent=23 // pred_region
              loop: start=0, step=1, limit=1
              $region29: #{discriminator_forward.7} parent=27 // loop_pre_header
                _
              $region30: #{discriminator_forward.7} parent=27 // loop_header
                %s188 = sphi 0, %s192
                %p189 = scmp.ge.s32.totalorder %s188, 1
                %s193 = sphi %s182, %s182
                %s194 = sphi %s179, %s179
              $region31: #{discriminator_forward.7} parent=27 // loop_header_branch
                %191 = sbr.rel (%p189) target = $region35
              $region32: #{discriminator_forward.7} parent=27 // loop_body
                %v195 = vld [vmem:[%s193] sm:$0xff]
                %196 = vst [vmem:[%s194] sm:$0xff] %v195
                %v197 = vld [vmem:[%s193 + $0x8] sm:$0xff]
                %198 = vst [vmem:[%s194 + $0x8] sm:$0xff] %v197
                %v199 = vld [vmem:[%s193 + $0x40] sm:$0xff]
                %200 = vst [vmem:[%s194 + $0x10] sm:$0xff] %v199
                %v201 = vld [vmem:[%s193 + $0x48] sm:$0xff]
                %202 = vst [vmem:[%s194 + $0x18] sm:$0xff] %v201
                %v203 = vld [vmem:[%s193 + $0x80] sm:$0xff]
                %204 = vst [vmem:[%s194 + $0x20] sm:$0xff] %v203
                %v205 = vld [vmem:[%s193 + $0x88] sm:$0xff]
                %206 = vst [vmem:[%s194 + $0x28] sm:$0xff] %v205
                %v207 = vld [vmem:[%s193 + $0xc0] sm:$0xff]
                %208 = vst [vmem:[%s194 + $0x30] sm:$0xff] %v207
                %v209 = vld [vmem:[%s193 + $0xc8] sm:$0xff]
                %210 = vst [vmem:[%s194 + $0x38] sm:$0xff] %v209
                %v211 = vld [vmem:[%s193 + $0x100] sm:$0xff]
                %212 = vst [vmem:[%s194 + $0x40] sm:$0xff] %v211
                %v213 = vld [vmem:[%s193 + $0x108] sm:$0xff]
                %214 = vst [vmem:[%s194 + $0x48] sm:$0xff] %v213
                %v215 = vld [vmem:[%s193 + $0x140] sm:$0xff]
                %216 = vst [vmem:[%s194 + $0x50] sm:$0xff] %v215
                %v217 = vld [vmem:[%s193 + $0x148] sm:$0xff]
                %218 = vst [vmem:[%s194 + $0x58] sm:$0xff] %v217
                %v219 = vld [vmem:[%s193 + $0x180] sm:$0xff]
                %220 = vst [vmem:[%s194 + $0x60] sm:$0xff] %v219
                %v221 = vld [vmem:[%s193 + $0x188] sm:$0xff]
                %222 = vst [vmem:[%s194 + $0x68] sm:$0xff] %v221
                %v223 = vld [vmem:[%s193 + $0x1c0] sm:$0xff]
                %224 = vst [vmem:[%s194 + $0x70] sm:$0xff] %v223
                %v225 = vld [vmem:[%s193 + $0x1c8] sm:$0xff]
                %226 = vst [vmem:[%s194 + $0x78] sm:$0xff] %v225
                %v227 = vld [vmem:[%s193 + $0x200] sm:$0xff]
                %228 = vst [vmem:[%s194 + $0x80] sm:$0xff] %v227
                %v229 = vld [vmem:[%s193 + $0x208] sm:$0xff]
                %230 = vst [vmem:[%s194 + $0x88] sm:$0xff] %v229
                %v231 = vld [vmem:[%s193 + $0x240] sm:$0xff]
                %232 = vst [vmem:[%s194 + $0x90] sm:$0xff] %v231
                %v233 = vld [vmem:[%s193 + $0x248] sm:$0xff]
                %234 = vst [vmem:[%s194 + $0x98] sm:$0xff] %v233
                %v235 = vld [vmem:[%s193 + $0x280] sm:$0xff]
                %236 = vst [vmem:[%s194 + $0xa0] sm:$0xff] %v235
                %v237 = vld [vmem:[%s193 + $0x288] sm:$0xff]
                %238 = vst [vmem:[%s194 + $0xa8] sm:$0xff] %v237
                %v239 = vld [vmem:[%s193 + $0x2c0] sm:$0xff]
                %240 = vst [vmem:[%s194 + $0xb0] sm:$0xff] %v239
                %v241 = vld [vmem:[%s193 + $0x2c8] sm:$0xff]
                %242 = vst [vmem:[%s194 + $0xb8] sm:$0xff] %v241
                %v243 = vld [vmem:[%s193 + $0x300] sm:$0xff]
                %244 = vst [vmem:[%s194 + $0xc0] sm:$0xff] %v243
                %v245 = vld [vmem:[%s193 + $0x308] sm:$0xff]
                %246 = vst [vmem:[%s194 + $0xc8] sm:$0xff] %v245
                %v247 = vld [vmem:[%s193 + $0x340] sm:$0xff]
                %248 = vst [vmem:[%s194 + $0xd0] sm:$0xff] %v247
                %v249 = vld [vmem:[%s193 + $0x348] sm:$0xff]
                %250 = vst [vmem:[%s194 + $0xd8] sm:$0xff] %v249
                %v251 = vld [vmem:[%s193 + $0x380] sm:$0xff]
                %252 = vst [vmem:[%s194 + $0xe0] sm:$0xff] %v251
                %v253 = vld [vmem:[%s193 + $0x388] sm:$0xff]
                %254 = vst [vmem:[%s194 + $0xe8] sm:$0xff] %v253
                %v255 = vld [vmem:[%s193 + $0x3c0] sm:$0xff]
                %256 = vst [vmem:[%s194 + $0xf0] sm:$0xff] %v255
                %v257 = vld [vmem:[%s193 + $0x3c8] sm:$0xff]
                %258 = vst [vmem:[%s194 + $0xf8] sm:$0xff] %v257
              $region33: #{discriminator_forward.7} parent=27 // loop_footer
                %s192 = sadd.s32 1, %s188
              $region34: #{discriminator_forward.7} parent=27 // loop_footer_branch
                %187 = sbr.rel target = $region30
              $region35: #{discriminator_forward.7} parent=27 // loop_exit
                _
            $region28: #{discriminator_forward.7} parent=23 // pred_fallthru
              _
            // Predicated region
            $region36: #{discriminator_forward.7} parent=23 // pred_check
              _
            $region37: #{discriminator_forward.7} parent=23 // pred_check_branch
              %260 = sbr.rel target = $region39
            $region38: #{discriminator_forward.7} parent=23 // pred_region
              _
            $region39: #{discriminator_forward.7} parent=23 // pred_fallthru
              _
          $region24: #{discriminator_forward.7} parent=19 // pred_fallthru
            _
          %261 = vnop
        $region20: #{discriminator_forward.7} parent=15 // pred_fallthru
          _
        // Predicated region
        $region40: #{discriminator_forward.7} parent=15 // pred_check
          %p262 = pneg %p70
        $region41: #{discriminator_forward.7} parent=15 // pred_check_branch
          %264 = sbr.rel (%p262) target = $region43
        $region42: #{discriminator_forward.7} parent=15 // pred_region
          %s265 = sand.u32 %s60, 1
          %s266 = sand.u32 %s60, 1
          %s267 = smul.addr %s266, 256
          %s268 = scalar_lea.vmem [#allocation4], %s267
          %s269 = smul.u32 64, %s18
          %s270 = smul.addr %s269, 2
          %s271 = sadd.s32 %s17, %s270
          %s272 = smul.addr %s271, 4
          %s273 = scalar_lea.vmem %s1, %s272
          // Predicated region
          $region44: #{discriminator_forward.7} parent=42 // pred_check
            _
          $region45: #{discriminator_forward.7} parent=42 // pred_check_branch
            %275 = sbr.rel (0) target = $region47
          $region46: #{discriminator_forward.7} parent=42 // pred_region
            // Predicated region
            $region48: #{discriminator_forward.7} parent=46 // pred_check
              _
            $region49: #{discriminator_forward.7} parent=46 // pred_check_branch
              %277 = sbr.rel target = $region51
            $region50: #{discriminator_forward.7} parent=46 // pred_region
              // Predicated region
              $region63: #{discriminator_forward.7} parent=50 // pred_check
                _
              $region64: #{discriminator_forward.7} parent=50 // pred_check_branch
                %419 = sbr.rel (0) target = $region66
              $region65: #{discriminator_forward.7} parent=50 // pred_region
                loop: start=0, step=1, limit=1
                $region67: #{discriminator_forward.7} parent=65 // loop_pre_header
                  _
                $region68: #{discriminator_forward.7} parent=65 // loop_header
                  %s421 = sphi 0, %s425
                  %p422 = scmp.ge.s32.totalorder %s421, 1
                  %s426 = sphi %s273, %s273
                  %s427 = sphi %s268, %s268
                $region69: #{discriminator_forward.7} parent=65 // loop_header_branch
                  %424 = sbr.rel (%p422) target = $region73
                $region70: #{discriminator_forward.7} parent=65 // loop_body
                  _
                $region71: #{discriminator_forward.7} parent=65 // loop_footer
                  %s425 = sadd.s32 1, %s421
                $region72: #{discriminator_forward.7} parent=65 // loop_footer_branch
                  %420 = sbr.rel target = $region68
                $region73: #{discriminator_forward.7} parent=65 // loop_exit
                  _
                %s429 = ssub.s32 16, 1
                loop: start=0, step=1, limit=1
                $region74: #{discriminator_forward.7} parent=65 // loop_pre_header
                  _
                $region75: #{discriminator_forward.7} parent=65 // loop_header
                  %s431 = sphi 0, %s435
                  %p432 = scmp.ge.s32.totalorder %s431, 1
                  %s436 = sphi %s273, %s273
                  %s437 = sphi %s268, %s268
                $region76: #{discriminator_forward.7} parent=65 // loop_header_branch
                  %434 = sbr.rel (%p432) target = $region80
                $region77: #{discriminator_forward.7} parent=65 // loop_body
                  %v438 = vld [vmem:[%s436] sm:%s429]
                  %439 = vst [vmem:[%s437] sm:%s429] %v438
                  %v440 = vld [vmem:[%s436 + $0x8] sm:%s429]
                  %441 = vst [vmem:[%s437 + $0x4] sm:%s429] %v440
                  %v442 = vld [vmem:[%s436 + $0x10] sm:%s429]
                  %443 = vst [vmem:[%s437 + $0x8] sm:%s429] %v442
                  %v444 = vld [vmem:[%s436 + $0x18] sm:%s429]
                  %445 = vst [vmem:[%s437 + $0xc] sm:%s429] %v444
                  %v446 = vld [vmem:[%s436 + $0x20] sm:%s429]
                  %447 = vst [vmem:[%s437 + $0x10] sm:%s429] %v446
                  %v448 = vld [vmem:[%s436 + $0x28] sm:%s429]
                  %449 = vst [vmem:[%s437 + $0x14] sm:%s429] %v448
                  %v450 = vld [vmem:[%s436 + $0x30] sm:%s429]
                  %451 = vst [vmem:[%s437 + $0x18] sm:%s429] %v450
                  %v452 = vld [vmem:[%s436 + $0x38] sm:%s429]
                  %453 = vst [vmem:[%s437 + $0x1c] sm:%s429] %v452
                  %v454 = vld [vmem:[%s436 + $0x40] sm:%s429]
                  %455 = vst [vmem:[%s437 + $0x20] sm:%s429] %v454
                  %v456 = vld [vmem:[%s436 + $0x48] sm:%s429]
                  %457 = vst [vmem:[%s437 + $0x24] sm:%s429] %v456
                  %v458 = vld [vmem:[%s436 + $0x50] sm:%s429]
                  %459 = vst [vmem:[%s437 + $0x28] sm:%s429] %v458
                  %v460 = vld [vmem:[%s436 + $0x58] sm:%s429]
                  %461 = vst [vmem:[%s437 + $0x2c] sm:%s429] %v460
                  %v462 = vld [vmem:[%s436 + $0x60] sm:%s429]
                  %463 = vst [vmem:[%s437 + $0x30] sm:%s429] %v462
                  %v464 = vld [vmem:[%s436 + $0x68] sm:%s429]
                  %465 = vst [vmem:[%s437 + $0x34] sm:%s429] %v464
                  %v466 = vld [vmem:[%s436 + $0x70] sm:%s429]
                  %467 = vst [vmem:[%s437 + $0x38] sm:%s429] %v466
                  %v468 = vld [vmem:[%s436 + $0x78] sm:%s429]
                  %469 = vst [vmem:[%s437 + $0x3c] sm:%s429] %v468
                  %v470 = vld [vmem:[%s436 + $0x80] sm:%s429]
                  %471 = vst [vmem:[%s437 + $0x40] sm:%s429] %v470
                  %v472 = vld [vmem:[%s436 + $0x88] sm:%s429]
                  %473 = vst [vmem:[%s437 + $0x44] sm:%s429] %v472
                  %v474 = vld [vmem:[%s436 + $0x90] sm:%s429]
                  %475 = vst [vmem:[%s437 + $0x48] sm:%s429] %v474
                  %v476 = vld [vmem:[%s436 + $0x98] sm:%s429]
                  %477 = vst [vmem:[%s437 + $0x4c] sm:%s429] %v476
                  %v478 = vld [vmem:[%s436 + $0xa0] sm:%s429]
                  %479 = vst [vmem:[%s437 + $0x50] sm:%s429] %v478
                  %v480 = vld [vmem:[%s436 + $0xa8] sm:%s429]
                  %481 = vst [vmem:[%s437 + $0x54] sm:%s429] %v480
                  %v482 = vld [vmem:[%s436 + $0xb0] sm:%s429]
                  %483 = vst [vmem:[%s437 + $0x58] sm:%s429] %v482
                  %v484 = vld [vmem:[%s436 + $0xb8] sm:%s429]
                  %485 = vst [vmem:[%s437 + $0x5c] sm:%s429] %v484
                  %v486 = vld [vmem:[%s436 + $0xc0] sm:%s429]
                  %487 = vst [vmem:[%s437 + $0x60] sm:%s429] %v486
                  %v488 = vld [vmem:[%s436 + $0xc8] sm:%s429]
                  %489 = vst [vmem:[%s437 + $0x64] sm:%s429] %v488
                  %v490 = vld [vmem:[%s436 + $0xd0] sm:%s429]
                  %491 = vst [vmem:[%s437 + $0x68] sm:%s429] %v490
                  %v492 = vld [vmem:[%s436 + $0xd8] sm:%s429]
                  %493 = vst [vmem:[%s437 + $0x6c] sm:%s429] %v492
                  %v494 = vld [vmem:[%s436 + $0xe0] sm:%s429]
                  %495 = vst [vmem:[%s437 + $0x70] sm:%s429] %v494
                  %v496 = vld [vmem:[%s436 + $0xe8] sm:%s429]
                  %497 = vst [vmem:[%s437 + $0x74] sm:%s429] %v496
                  %v498 = vld [vmem:[%s436 + $0xf0] sm:%s429]
                  %499 = vst [vmem:[%s437 + $0x78] sm:%s429] %v498
                  %v500 = vld [vmem:[%s436 + $0xf8] sm:%s429]
                  %501 = vst [vmem:[%s437 + $0x7c] sm:%s429] %v500
                  %v502 = vld [vmem:[%s436 + $0x100] sm:%s429]
                  %503 = vst [vmem:[%s437 + $0x80] sm:%s429] %v502
                  %v504 = vld [vmem:[%s436 + $0x108] sm:%s429]
                  %505 = vst [vmem:[%s437 + $0x84] sm:%s429] %v504
                  %v506 = vld [vmem:[%s436 + $0x110] sm:%s429]
                  %507 = vst [vmem:[%s437 + $0x88] sm:%s429] %v506
                  %v508 = vld [vmem:[%s436 + $0x118] sm:%s429]
                  %509 = vst [vmem:[%s437 + $0x8c] sm:%s429] %v508
                  %v510 = vld [vmem:[%s436 + $0x120] sm:%s429]
                  %511 = vst [vmem:[%s437 + $0x90] sm:%s429] %v510
                  %v512 = vld [vmem:[%s436 + $0x128] sm:%s429]
                  %513 = vst [vmem:[%s437 + $0x94] sm:%s429] %v512
                  %v514 = vld [vmem:[%s436 + $0x130] sm:%s429]
                  %515 = vst [vmem:[%s437 + $0x98] sm:%s429] %v514
                  %v516 = vld [vmem:[%s436 + $0x138] sm:%s429]
                  %517 = vst [vmem:[%s437 + $0x9c] sm:%s429] %v516
                  %v518 = vld [vmem:[%s436 + $0x140] sm:%s429]
                  %519 = vst [vmem:[%s437 + $0xa0] sm:%s429] %v518
                  %v520 = vld [vmem:[%s436 + $0x148] sm:%s429]
                  %521 = vst [vmem:[%s437 + $0xa4] sm:%s429] %v520
                  %v522 = vld [vmem:[%s436 + $0x150] sm:%s429]
                  %523 = vst [vmem:[%s437 + $0xa8] sm:%s429] %v522
                  %v524 = vld [vmem:[%s436 + $0x158] sm:%s429]
                  %525 = vst [vmem:[%s437 + $0xac] sm:%s429] %v524
                  %v526 = vld [vmem:[%s436 + $0x160] sm:%s429]
                  %527 = vst [vmem:[%s437 + $0xb0] sm:%s429] %v526
                  %v528 = vld [vmem:[%s436 + $0x168] sm:%s429]
                  %529 = vst [vmem:[%s437 + $0xb4] sm:%s429] %v528
                  %v530 = vld [vmem:[%s436 + $0x170] sm:%s429]
                  %531 = vst [vmem:[%s437 + $0xb8] sm:%s429] %v530
                  %v532 = vld [vmem:[%s436 + $0x178] sm:%s429]
                  %533 = vst [vmem:[%s437 + $0xbc] sm:%s429] %v532
                  %v534 = vld [vmem:[%s436 + $0x180] sm:%s429]
                  %535 = vst [vmem:[%s437 + $0xc0] sm:%s429] %v534
                  %v536 = vld [vmem:[%s436 + $0x188] sm:%s429]
                  %537 = vst [vmem:[%s437 + $0xc4] sm:%s429] %v536
                  %v538 = vld [vmem:[%s436 + $0x190] sm:%s429]
                  %539 = vst [vmem:[%s437 + $0xc8] sm:%s429] %v538
                  %v540 = vld [vmem:[%s436 + $0x198] sm:%s429]
                  %541 = vst [vmem:[%s437 + $0xcc] sm:%s429] %v540
                  %v542 = vld [vmem:[%s436 + $0x1a0] sm:%s429]
                  %543 = vst [vmem:[%s437 + $0xd0] sm:%s429] %v542
                  %v544 = vld [vmem:[%s436 + $0x1a8] sm:%s429]
                  %545 = vst [vmem:[%s437 + $0xd4] sm:%s429] %v544
                  %v546 = vld [vmem:[%s436 + $0x1b0] sm:%s429]
                  %547 = vst [vmem:[%s437 + $0xd8] sm:%s429] %v546
                  %v548 = vld [vmem:[%s436 + $0x1b8] sm:%s429]
                  %549 = vst [vmem:[%s437 + $0xdc] sm:%s429] %v548
                  %v550 = vld [vmem:[%s436 + $0x1c0] sm:%s429]
                  %551 = vst [vmem:[%s437 + $0xe0] sm:%s429] %v550
                  %v552 = vld [vmem:[%s436 + $0x1c8] sm:%s429]
                  %553 = vst [vmem:[%s437 + $0xe4] sm:%s429] %v552
                  %v554 = vld [vmem:[%s436 + $0x1d0] sm:%s429]
                  %555 = vst [vmem:[%s437 + $0xe8] sm:%s429] %v554
                  %v556 = vld [vmem:[%s436 + $0x1d8] sm:%s429]
                  %557 = vst [vmem:[%s437 + $0xec] sm:%s429] %v556
                  %v558 = vld [vmem:[%s436 + $0x1e0] sm:%s429]
                  %559 = vst [vmem:[%s437 + $0xf0] sm:%s429] %v558
                  %v560 = vld [vmem:[%s436 + $0x1e8] sm:%s429]
                  %561 = vst [vmem:[%s437 + $0xf4] sm:%s429] %v560
                  %v562 = vld [vmem:[%s436 + $0x1f0] sm:%s429]
                  %563 = vst [vmem:[%s437 + $0xf8] sm:%s429] %v562
                  %v564 = vld [vmem:[%s436 + $0x1f8] sm:%s429]
                  %565 = vst [vmem:[%s437 + $0xfc] sm:%s429] %v564
                $region78: #{discriminator_forward.7} parent=65 // loop_footer
                  %s435 = sadd.s32 1, %s431
                $region79: #{discriminator_forward.7} parent=65 // loop_footer_branch
                  %430 = sbr.rel target = $region75
                $region80: #{discriminator_forward.7} parent=65 // loop_exit
                  _
              $region66: #{discriminator_forward.7} parent=50 // pred_fallthru
                _
            $region51: #{discriminator_forward.7} parent=46 // pred_fallthru
              _
            // Predicated region
            $region52: #{discriminator_forward.7} parent=46 // pred_check
              _
            $region53: #{discriminator_forward.7} parent=46 // pred_check_branch
              %279 = sbr.rel (0) target = $region55
            $region54: #{discriminator_forward.7} parent=46 // pred_region
              %s281 = ssub.s32 16, 1
              loop: start=0, step=1, limit=1
              $region56: #{discriminator_forward.7} parent=54 // loop_pre_header
                _
              $region57: #{discriminator_forward.7} parent=54 // loop_header
                %s283 = sphi 0, %s287
                %p284 = scmp.ge.s32.totalorder %s283, 1
                %s288 = sphi %s273, %s273
                %s289 = sphi %s268, %s268
              $region58: #{discriminator_forward.7} parent=54 // loop_header_branch
                %286 = sbr.rel (%p284) target = $region62
              $region59: #{discriminator_forward.7} parent=54 // loop_body
                %v290 = vld [vmem:[%s288] sm:%s281]
                %291 = vst [vmem:[%s289] sm:%s281] %v290
                %v292 = vld [vmem:[%s288 + $0x8] sm:%s281]
                %293 = vst [vmem:[%s289 + $0x4] sm:%s281] %v292
                %v294 = vld [vmem:[%s288 + $0x10] sm:%s281]
                %295 = vst [vmem:[%s289 + $0x8] sm:%s281] %v294
                %v296 = vld [vmem:[%s288 + $0x18] sm:%s281]
                %297 = vst [vmem:[%s289 + $0xc] sm:%s281] %v296
                %v298 = vld [vmem:[%s288 + $0x20] sm:%s281]
                %299 = vst [vmem:[%s289 + $0x10] sm:%s281] %v298
                %v300 = vld [vmem:[%s288 + $0x28] sm:%s281]
                %301 = vst [vmem:[%s289 + $0x14] sm:%s281] %v300
                %v302 = vld [vmem:[%s288 + $0x30] sm:%s281]
                %303 = vst [vmem:[%s289 + $0x18] sm:%s281] %v302
                %v304 = vld [vmem:[%s288 + $0x38] sm:%s281]
                %305 = vst [vmem:[%s289 + $0x1c] sm:%s281] %v304
                %v306 = vld [vmem:[%s288 + $0x40] sm:%s281]
                %307 = vst [vmem:[%s289 + $0x20] sm:%s281] %v306
                %v308 = vld [vmem:[%s288 + $0x48] sm:%s281]
                %309 = vst [vmem:[%s289 + $0x24] sm:%s281] %v308
                %v310 = vld [vmem:[%s288 + $0x50] sm:%s281]
                %311 = vst [vmem:[%s289 + $0x28] sm:%s281] %v310
                %v312 = vld [vmem:[%s288 + $0x58] sm:%s281]
                %313 = vst [vmem:[%s289 + $0x2c] sm:%s281] %v312
                %v314 = vld [vmem:[%s288 + $0x60] sm:%s281]
                %315 = vst [vmem:[%s289 + $0x30] sm:%s281] %v314
                %v316 = vld [vmem:[%s288 + $0x68] sm:%s281]
                %317 = vst [vmem:[%s289 + $0x34] sm:%s281] %v316
                %v318 = vld [vmem:[%s288 + $0x70] sm:%s281]
                %319 = vst [vmem:[%s289 + $0x38] sm:%s281] %v318
                %v320 = vld [vmem:[%s288 + $0x78] sm:%s281]
                %321 = vst [vmem:[%s289 + $0x3c] sm:%s281] %v320
                %v322 = vld [vmem:[%s288 + $0x80] sm:%s281]
                %323 = vst [vmem:[%s289 + $0x40] sm:%s281] %v322
                %v324 = vld [vmem:[%s288 + $0x88] sm:%s281]
                %325 = vst [vmem:[%s289 + $0x44] sm:%s281] %v324
                %v326 = vld [vmem:[%s288 + $0x90] sm:%s281]
                %327 = vst [vmem:[%s289 + $0x48] sm:%s281] %v326
                %v328 = vld [vmem:[%s288 + $0x98] sm:%s281]
                %329 = vst [vmem:[%s289 + $0x4c] sm:%s281] %v328
                %v330 = vld [vmem:[%s288 + $0xa0] sm:%s281]
                %331 = vst [vmem:[%s289 + $0x50] sm:%s281] %v330
                %v332 = vld [vmem:[%s288 + $0xa8] sm:%s281]
                %333 = vst [vmem:[%s289 + $0x54] sm:%s281] %v332
                %v334 = vld [vmem:[%s288 + $0xb0] sm:%s281]
                %335 = vst [vmem:[%s289 + $0x58] sm:%s281] %v334
                %v336 = vld [vmem:[%s288 + $0xb8] sm:%s281]
                %337 = vst [vmem:[%s289 + $0x5c] sm:%s281] %v336
                %v338 = vld [vmem:[%s288 + $0xc0] sm:%s281]
                %339 = vst [vmem:[%s289 + $0x60] sm:%s281] %v338
                %v340 = vld [vmem:[%s288 + $0xc8] sm:%s281]
                %341 = vst [vmem:[%s289 + $0x64] sm:%s281] %v340
                %v342 = vld [vmem:[%s288 + $0xd0] sm:%s281]
                %343 = vst [vmem:[%s289 + $0x68] sm:%s281] %v342
                %v344 = vld [vmem:[%s288 + $0xd8] sm:%s281]
                %345 = vst [vmem:[%s289 + $0x6c] sm:%s281] %v344
                %v346 = vld [vmem:[%s288 + $0xe0] sm:%s281]
                %347 = vst [vmem:[%s289 + $0x70] sm:%s281] %v346
                %v348 = vld [vmem:[%s288 + $0xe8] sm:%s281]
                %349 = vst [vmem:[%s289 + $0x74] sm:%s281] %v348
                %v350 = vld [vmem:[%s288 + $0xf0] sm:%s281]
                %351 = vst [vmem:[%s289 + $0x78] sm:%s281] %v350
                %v352 = vld [vmem:[%s288 + $0xf8] sm:%s281]
                %353 = vst [vmem:[%s289 + $0x7c] sm:%s281] %v352
                %v354 = vld [vmem:[%s288 + $0x100] sm:%s281]
                %355 = vst [vmem:[%s289 + $0x80] sm:%s281] %v354
                %v356 = vld [vmem:[%s288 + $0x108] sm:%s281]
                %357 = vst [vmem:[%s289 + $0x84] sm:%s281] %v356
                %v358 = vld [vmem:[%s288 + $0x110] sm:%s281]
                %359 = vst [vmem:[%s289 + $0x88] sm:%s281] %v358
                %v360 = vld [vmem:[%s288 + $0x118] sm:%s281]
                %361 = vst [vmem:[%s289 + $0x8c] sm:%s281] %v360
                %v362 = vld [vmem:[%s288 + $0x120] sm:%s281]
                %363 = vst [vmem:[%s289 + $0x90] sm:%s281] %v362
                %v364 = vld [vmem:[%s288 + $0x128] sm:%s281]
                %365 = vst [vmem:[%s289 + $0x94] sm:%s281] %v364
                %v366 = vld [vmem:[%s288 + $0x130] sm:%s281]
                %367 = vst [vmem:[%s289 + $0x98] sm:%s281] %v366
                %v368 = vld [vmem:[%s288 + $0x138] sm:%s281]
                %369 = vst [vmem:[%s289 + $0x9c] sm:%s281] %v368
                %v370 = vld [vmem:[%s288 + $0x140] sm:%s281]
                %371 = vst [vmem:[%s289 + $0xa0] sm:%s281] %v370
                %v372 = vld [vmem:[%s288 + $0x148] sm:%s281]
                %373 = vst [vmem:[%s289 + $0xa4] sm:%s281] %v372
                %v374 = vld [vmem:[%s288 + $0x150] sm:%s281]
                %375 = vst [vmem:[%s289 + $0xa8] sm:%s281] %v374
                %v376 = vld [vmem:[%s288 + $0x158] sm:%s281]
                %377 = vst [vmem:[%s289 + $0xac] sm:%s281] %v376
                %v378 = vld [vmem:[%s288 + $0x160] sm:%s281]
                %379 = vst [vmem:[%s289 + $0xb0] sm:%s281] %v378
                %v380 = vld [vmem:[%s288 + $0x168] sm:%s281]
                %381 = vst [vmem:[%s289 + $0xb4] sm:%s281] %v380
                %v382 = vld [vmem:[%s288 + $0x170] sm:%s281]
                %383 = vst [vmem:[%s289 + $0xb8] sm:%s281] %v382
                %v384 = vld [vmem:[%s288 + $0x178] sm:%s281]
                %385 = vst [vmem:[%s289 + $0xbc] sm:%s281] %v384
                %v386 = vld [vmem:[%s288 + $0x180] sm:%s281]
                %387 = vst [vmem:[%s289 + $0xc0] sm:%s281] %v386
                %v388 = vld [vmem:[%s288 + $0x188] sm:%s281]
                %389 = vst [vmem:[%s289 + $0xc4] sm:%s281] %v388
                %v390 = vld [vmem:[%s288 + $0x190] sm:%s281]
                %391 = vst [vmem:[%s289 + $0xc8] sm:%s281] %v390
                %v392 = vld [vmem:[%s288 + $0x198] sm:%s281]
                %393 = vst [vmem:[%s289 + $0xcc] sm:%s281] %v392
                %v394 = vld [vmem:[%s288 + $0x1a0] sm:%s281]
                %395 = vst [vmem:[%s289 + $0xd0] sm:%s281] %v394
                %v396 = vld [vmem:[%s288 + $0x1a8] sm:%s281]
                %397 = vst [vmem:[%s289 + $0xd4] sm:%s281] %v396
                %v398 = vld [vmem:[%s288 + $0x1b0] sm:%s281]
                %399 = vst [vmem:[%s289 + $0xd8] sm:%s281] %v398
                %v400 = vld [vmem:[%s288 + $0x1b8] sm:%s281]
                %401 = vst [vmem:[%s289 + $0xdc] sm:%s281] %v400
                %v402 = vld [vmem:[%s288 + $0x1c0] sm:%s281]
                %403 = vst [vmem:[%s289 + $0xe0] sm:%s281] %v402
                %v404 = vld [vmem:[%s288 + $0x1c8] sm:%s281]
                %405 = vst [vmem:[%s289 + $0xe4] sm:%s281] %v404
                %v406 = vld [vmem:[%s288 + $0x1d0] sm:%s281]
                %407 = vst [vmem:[%s289 + $0xe8] sm:%s281] %v406
                %v408 = vld [vmem:[%s288 + $0x1d8] sm:%s281]
                %409 = vst [vmem:[%s289 + $0xec] sm:%s281] %v408
                %v410 = vld [vmem:[%s288 + $0x1e0] sm:%s281]
                %411 = vst [vmem:[%s289 + $0xf0] sm:%s281] %v410
                %v412 = vld [vmem:[%s288 + $0x1e8] sm:%s281]
                %413 = vst [vmem:[%s289 + $0xf4] sm:%s281] %v412
                %v414 = vld [vmem:[%s288 + $0x1f0] sm:%s281]
                %415 = vst [vmem:[%s289 + $0xf8] sm:%s281] %v414
                %v416 = vld [vmem:[%s288 + $0x1f8] sm:%s281]
                %417 = vst [vmem:[%s289 + $0xfc] sm:%s281] %v416
              $region60: #{discriminator_forward.7} parent=54 // loop_footer
                %s287 = sadd.s32 1, %s283
              $region61: #{discriminator_forward.7} parent=54 // loop_footer_branch
                %282 = sbr.rel target = $region57
              $region62: #{discriminator_forward.7} parent=54 // loop_exit
                _
            $region55: #{discriminator_forward.7} parent=46 // pred_fallthru
              _
          $region47: #{discriminator_forward.7} parent=42 // pred_fallthru
            _
          %566 = vnop
        $region43: #{discriminator_forward.7} parent=15 // pred_fallthru
          _
        // Predicated region
        $region81: #{discriminator_forward.7} parent=15 // pred_check
          %p567 = pneg %p96
        $region82: #{discriminator_forward.7} parent=15 // pred_check_branch
          %569 = sbr.rel (%p567) target = $region84
        $region83: #{discriminator_forward.7} parent=15 // pred_region
          %p570 = scmp.lt.s32.totalorder %s17, 1
          %s571 = scalar_select %p570, %s17, 1
          %s572 = scalar_lea.vmem %s2, %s571
        $region84: #{discriminator_forward.7} parent=15 // pred_fallthru
          _
        // Predicated region
        $region85: #{discriminator_forward.7} parent=15 // pred_check
          %p573 = pneg %p122
        $region86: #{discriminator_forward.7} parent=15 // pred_check_branch
          %575 = sbr.rel (%p573) target = $region88
        $region87: #{discriminator_forward.7} parent=15 // pred_region
          %p576 = scmp.lt.s32.totalorder %s17, 1
          %s577 = scalar_select %p576, %s17, 1
          %s578 = scalar_lea.vmem %s3, %s577
        $region88: #{discriminator_forward.7} parent=15 // pred_fallthru
          _
      $region16: #{discriminator_forward.7} parent=5 // pred_fallthru
        _
      %p579 = scmp.le.s32.totalorder 1, %s10
      %p580 = scmp.lt.s32.totalorder %s10, 9
      %p581 = pnand %p579, %p580
      %p582 = pneg %p581
      // Predicated region
      $region89: #{discriminator_forward.7} parent=5 // pred_check
        _
      $region90: #{discriminator_forward.7} parent=5 // pred_check_branch
        %584 = sbr.rel (%p581) target = $region92
      $region91: #{discriminator_forward.7} parent=5 // pred_region
        %s585 = ssub.s32 %s10, 1
        %s586 = sand.u32 %s35, 1
        %s587 = sand.u32 %s35, 1
        %s588 = smul.addr %s587, 256
        %s589 = scalar_lea.vmem [#allocation3], %s588
        // Predicated region
        $region93: #{discriminator_forward.7} parent=91 // pred_check
          %p590 = pneg %p48
        $region94: #{discriminator_forward.7} parent=91 // pred_check_branch
          %592 = sbr.rel (%p590) target = $region96
        $region95: #{discriminator_forward.7} parent=91 // pred_region
          _
        $region96: #{discriminator_forward.7} parent=91 // pred_fallthru
          _
        %s593 = sand.u32 %s63, 1
        %s594 = sand.u32 %s63, 1
        %s595 = smul.addr %s594, 256
        %s596 = scalar_lea.vmem [#allocation4], %s595
        // Predicated region
        $region97: #{discriminator_forward.7} parent=91 // pred_check
          %p597 = pneg %p76
        $region98: #{discriminator_forward.7} parent=91 // pred_check_branch
          %599 = sbr.rel (%p597) target = $region100
        $region99: #{discriminator_forward.7} parent=91 // pred_region
          _
        $region100: #{discriminator_forward.7} parent=91 // pred_fallthru
          _
        %s600 = sand.u32 %s35, 1
        %s601 = sand.u32 %s35, 1
        %s602 = smul.addr %s601, 256
        %s603 = scalar_lea.vmem [#allocation3], %s602
        %p604 = pneg %p48
        %p605 = pneg %p45
        %s606 = sand.u32 %s63, 1
        %s607 = sand.u32 %s63, 1
        %s608 = smul.addr %s607, 256
        %s609 = scalar_lea.vmem [#allocation4], %s608
        %p610 = pneg %p76
        %p611 = pneg %p73
        %p612 = scmp.lt.s32.totalorder %s19, 1
        %s613 = scalar_select %p612, %s19, 1
        %s614 = scalar_lea.vmem %s2, %s613
        %p615 = pneg %p102
        %p616 = pneg %p99
        %p617 = scmp.lt.s32.totalorder %s19, 1
        %s618 = scalar_select %p617, %s19, 1
        %s619 = scalar_lea.vmem %s3, %s618
        %p620 = pneg %p128
        %p621 = pneg %p125
        %p622 = pneg %p154
        %p623 = pneg %p151
        %s624 = sand.u32 %s141, 1
        %s625 = sand.u32 %s141, 1
        %s626 = smul.addr %s625, 64
        %s627 = scalar_lea.vmem [#allocation5], %s626
        %s628 = smul.u32 4, %s20
        %s629 = smul.u32 64, %s20
        %p630 = scmp.lt.s32.totalorder %s19, 1
        %s631 = scalar_select %p630, %s19, 1
        %s632 = scalar_lea.vmem %s2, %s631
        %p633 = scmp.lt.s32.totalorder %s19, 1
        %s634 = scalar_select %p633, %s19, 1
        %s635 = scalar_lea.vmem %s3, %s634
        %p636 = scmp.eq.s32.totalorder %s20, 0
        // Predicated region
        $region101: #{discriminator_forward.7} parent=91 // pred_check
          %p637 = pneg %p636
        $region102: #{discriminator_forward.7} parent=91 // pred_check_branch
          %639 = sbr.rel (%p637) target = $region104
        $region103: #{discriminator_forward.7} parent=91 // pred_region
          %640 = vst [vmem:[#allocation2] sm:$0xff] 0.0
          %641 = vst [vmem:[#allocation2 + $0x8] sm:$0xff] 0.0
          %642 = vst [vmem:[#allocation2 + $0x10] sm:$0xff] 0.0
          %643 = vst [vmem:[#allocation2 + $0x18] sm:$0xff] 0.0
          %644 = vst [vmem:[#allocation2 + $0x20] sm:$0xff] 0.0
          %645 = vst [vmem:[#allocation2 + $0x28] sm:$0xff] 0.0
          %646 = vst [vmem:[#allocation2 + $0x30] sm:$0xff] 0.0
          %647 = vst [vmem:[#allocation2 + $0x38] sm:$0xff] 0.0
          %648 = vst [vmem:[#allocation2 + $0x40] sm:$0xff] 0.0
          %649 = vst [vmem:[#allocation2 + $0x48] sm:$0xff] 0.0
          %650 = vst [vmem:[#allocation2 + $0x50] sm:$0xff] 0.0
          %651 = vst [vmem:[#allocation2 + $0x58] sm:$0xff] 0.0
          %652 = vst [vmem:[#allocation2 + $0x60] sm:$0xff] 0.0
          %653 = vst [vmem:[#allocation2 + $0x68] sm:$0xff] 0.0
          %654 = vst [vmem:[#allocation2 + $0x70] sm:$0xff] 0.0
          %655 = vst [vmem:[#allocation2 + $0x78] sm:$0xff] 0.0
        $region104: #{discriminator_forward.7} parent=91 // pred_fallthru
          _
        %v656 = vld [vmem:[#allocation2] sm:$0xff]
        %v657 = vld [vmem:[#allocation2 + $0x8] sm:$0xff]
        %v658 = vld [vmem:[#allocation2 + $0x10] sm:$0xff]
        %v659 = vld [vmem:[#allocation2 + $0x18] sm:$0xff]
        %v660 = vld [vmem:[#allocation2 + $0x20] sm:$0xff]
        %v661 = vld [vmem:[#allocation2 + $0x28] sm:$0xff]
        %v662 = vld [vmem:[#allocation2 + $0x30] sm:$0xff]
        %v663 = vld [vmem:[#allocation2 + $0x38] sm:$0xff]
        %v664 = vld [vmem:[#allocation2 + $0x40] sm:$0xff]
        %v665 = vld [vmem:[#allocation2 + $0x48] sm:$0xff]
        %v666 = vld [vmem:[#allocation2 + $0x50] sm:$0xff]
        %v667 = vld [vmem:[#allocation2 + $0x58] sm:$0xff]
        %v668 = vld [vmem:[#allocation2 + $0x60] sm:$0xff]
        %v669 = vld [vmem:[#allocation2 + $0x68] sm:$0xff]
        %v670 = vld [vmem:[#allocation2 + $0x70] sm:$0xff]
        %v671 = vld [vmem:[#allocation2 + $0x78] sm:$0xff]
        %v672 = vld [vmem:[%s589] sm:$0xff]
        %v673 = vld [vmem:[%s589 + $0x8] sm:$0xff]
        %v674 = vld [vmem:[%s589 + $0x10] sm:$0xff]
        %v675 = vld [vmem:[%s589 + $0x18] sm:$0xff]
        %v676 = vld [vmem:[%s589 + $0x20] sm:$0xff]
        %v677 = vld [vmem:[%s589 + $0x28] sm:$0xff]
        %v678 = vld [vmem:[%s589 + $0x30] sm:$0xff]
        %v679 = vld [vmem:[%s589 + $0x38] sm:$0xff]
        %v680 = vld [vmem:[%s589 + $0x40] sm:$0xff]
        %v681 = vld [vmem:[%s589 + $0x48] sm:$0xff]
        %v682 = vld [vmem:[%s589 + $0x50] sm:$0xff]
        %v683 = vld [vmem:[%s589 + $0x58] sm:$0xff]
        %v684 = vld [vmem:[%s589 + $0x60] sm:$0xff]
        %v685 = vld [vmem:[%s589 + $0x68] sm:$0xff]
        %v686 = vld [vmem:[%s589 + $0x70] sm:$0xff]
        %v687 = vld [vmem:[%s589 + $0x78] sm:$0xff]
        %v688 = vld [vmem:[%s589 + $0x80] sm:$0xff]
        %v689 = vld [vmem:[%s589 + $0x88] sm:$0xff]
        %v690 = vld [vmem:[%s589 + $0x90] sm:$0xff]
        %v691 = vld [vmem:[%s589 + $0x98] sm:$0xff]
        %v692 = vld [vmem:[%s589 + $0xa0] sm:$0xff]
        %v693 = vld [vmem:[%s589 + $0xa8] sm:$0xff]
        %v694 = vld [vmem:[%s589 + $0xb0] sm:$0xff]
        %v695 = vld [vmem:[%s589 + $0xb8] sm:$0xff]
        %v696 = vld [vmem:[%s589 + $0xc0] sm:$0xff]
        %v697 = vld [vmem:[%s589 + $0xc8] sm:$0xff]
        %v698 = vld [vmem:[%s589 + $0xd0] sm:$0xff]
        %v699 = vld [vmem:[%s589 + $0xd8] sm:$0xff]
        %v700 = vld [vmem:[%s589 + $0xe0] sm:$0xff]
        %v701 = vld [vmem:[%s589 + $0xe8] sm:$0xff]
        %v702 = vld [vmem:[%s589 + $0xf0] sm:$0xff]
        %v703 = vld [vmem:[%s589 + $0xf8] sm:$0xff]
        %v704 = vld [vmem:[%s596] sm:$0xf]
        %v705 = vld [vmem:[%s596 + $0x4] sm:$0xf]
        %v706 = vld [vmem:[%s596 + $0x8] sm:$0xf]
        %v707 = vld [vmem:[%s596 + $0xc] sm:$0xf]
        %v708 = vld [vmem:[%s596 + $0x10] sm:$0xf]
        %v709 = vld [vmem:[%s596 + $0x14] sm:$0xf]
        %v710 = vld [vmem:[%s596 + $0x18] sm:$0xf]
        %v711 = vld [vmem:[%s596 + $0x1c] sm:$0xf]
        %v712 = vld [vmem:[%s596 + $0x20] sm:$0xf]
        %v713 = vld [vmem:[%s596 + $0x24] sm:$0xf]
        %v714 = vld [vmem:[%s596 + $0x28] sm:$0xf]
        %v715 = vld [vmem:[%s596 + $0x2c] sm:$0xf]
        %v716 = vld [vmem:[%s596 + $0x30] sm:$0xf]
        %v717 = vld [vmem:[%s596 + $0x34] sm:$0xf]
        %v718 = vld [vmem:[%s596 + $0x38] sm:$0xf]
        %v719 = vld [vmem:[%s596 + $0x3c] sm:$0xf]
        %v720 = vld [vmem:[%s596 + $0x40] sm:$0xf]
        %v721 = vld [vmem:[%s596 + $0x44] sm:$0xf]
        %v722 = vld [vmem:[%s596 + $0x48] sm:$0xf]
        %v723 = vld [vmem:[%s596 + $0x4c] sm:$0xf]
        %v724 = vld [vmem:[%s596 + $0x50] sm:$0xf]
        %v725 = vld [vmem:[%s596 + $0x54] sm:$0xf]
        %v726 = vld [vmem:[%s596 + $0x58] sm:$0xf]
        %v727 = vld [vmem:[%s596 + $0x5c] sm:$0xf]
        %v728 = vld [vmem:[%s596 + $0x60] sm:$0xf]
        %v729 = vld [vmem:[%s596 + $0x64] sm:$0xf]
        %v730 = vld [vmem:[%s596 + $0x68] sm:$0xf]
        %v731 = vld [vmem:[%s596 + $0x6c] sm:$0xf]
        %v732 = vld [vmem:[%s596 + $0x70] sm:$0xf]
        %v733 = vld [vmem:[%s596 + $0x74] sm:$0xf]
        %v734 = vld [vmem:[%s596 + $0x78] sm:$0xf]
        %v735 = vld [vmem:[%s596 + $0x7c] sm:$0xf]
        %v736 = vld [vmem:[%s596 + $0x80] sm:$0xf]
        %v737 = vld [vmem:[%s596 + $0x84] sm:$0xf]
        %v738 = vld [vmem:[%s596 + $0x88] sm:$0xf]
        %v739 = vld [vmem:[%s596 + $0x8c] sm:$0xf]
        %v740 = vld [vmem:[%s596 + $0x90] sm:$0xf]
        %v741 = vld [vmem:[%s596 + $0x94] sm:$0xf]
        %v742 = vld [vmem:[%s596 + $0x98] sm:$0xf]
        %v743 = vld [vmem:[%s596 + $0x9c] sm:$0xf]
        %v744 = vld [vmem:[%s596 + $0xa0] sm:$0xf]
        %v745 = vld [vmem:[%s596 + $0xa4] sm:$0xf]
        %v746 = vld [vmem:[%s596 + $0xa8] sm:$0xf]
        %v747 = vld [vmem:[%s596 + $0xac] sm:$0xf]
        %v748 = vld [vmem:[%s596 + $0xb0] sm:$0xf]
        %v749 = vld [vmem:[%s596 + $0xb4] sm:$0xf]
        %v750 = vld [vmem:[%s596 + $0xb8] sm:$0xf]
        %v751 = vld [vmem:[%s596 + $0xbc] sm:$0xf]
        %v752 = vld [vmem:[%s596 + $0xc0] sm:$0xf]
        %v753 = vld [vmem:[%s596 + $0xc4] sm:$0xf]
        %v754 = vld [vmem:[%s596 + $0xc8] sm:$0xf]
        %v755 = vld [vmem:[%s596 + $0xcc] sm:$0xf]
        %v756 = vld [vmem:[%s596 + $0xd0] sm:$0xf]
        %v757 = vld [vmem:[%s596 + $0xd4] sm:$0xf]
        %v758 = vld [vmem:[%s596 + $0xd8] sm:$0xf]
        %v759 = vld [vmem:[%s596 + $0xdc] sm:$0xf]
        %v760 = vld [vmem:[%s596 + $0xe0] sm:$0xf]
        %v761 = vld [vmem:[%s596 + $0xe4] sm:$0xf]
        %v762 = vld [vmem:[%s596 + $0xe8] sm:$0xf]
        %v763 = vld [vmem:[%s596 + $0xec] sm:$0xf]
        %v764 = vld [vmem:[%s596 + $0xf0] sm:$0xf]
        %v765 = vld [vmem:[%s596 + $0xf4] sm:$0xf]
        %v766 = vld [vmem:[%s596 + $0xf8] sm:$0xf]
        %v767 = vld [vmem:[%s596 + $0xfc] sm:$0xf]
        %v800 = vunpack.c.l.b16 %v672
        %v801 = vunpack.c.h.b16 %v672
        %v802 = vunpack.c.l.b16 %v673
        %v803 = vunpack.c.h.b16 %v673
        %v804 = vunpack.c.l.b16 %v674
        %v805 = vunpack.c.h.b16 %v674
        %v806 = vunpack.c.l.b16 %v675
        %v807 = vunpack.c.h.b16 %v675
        %v808 = vunpack.c.l.b16 %v676
        %v809 = vunpack.c.h.b16 %v676
        %v810 = vunpack.c.l.b16 %v677
        %v811 = vunpack.c.h.b16 %v677
        %v812 = vunpack.c.l.b16 %v678
        %v813 = vunpack.c.h.b16 %v678
        %v814 = vunpack.c.l.b16 %v679
        %v815 = vunpack.c.h.b16 %v679
        %v816 = vunpack.c.l.b16 %v680
        %v817 = vunpack.c.h.b16 %v680
        %v818 = vunpack.c.l.b16 %v681
        %v819 = vunpack.c.h.b16 %v681
        %v820 = vunpack.c.l.b16 %v682
        %v821 = vunpack.c.h.b16 %v682
        %v822 = vunpack.c.l.b16 %v683
        %v823 = vunpack.c.h.b16 %v683
        %v824 = vunpack.c.l.b16 %v684
        %v825 = vunpack.c.h.b16 %v684
        %v826 = vunpack.c.l.b16 %v685
        %v827 = vunpack.c.h.b16 %v685
        %v828 = vunpack.c.l.b16 %v686
        %v829 = vunpack.c.h.b16 %v686
        %v830 = vunpack.c.l.b16 %v687
        %v831 = vunpack.c.h.b16 %v687
        %v832 = vunpack.c.l.b16 %v688
        %v833 = vunpack.c.h.b16 %v688
        %v834 = vunpack.c.l.b16 %v689
        %v835 = vunpack.c.h.b16 %v689
        %v836 = vunpack.c.l.b16 %v690
        %v837 = vunpack.c.h.b16 %v690
        %v838 = vunpack.c.l.b16 %v691
        %v839 = vunpack.c.h.b16 %v691
        %v840 = vunpack.c.l.b16 %v692
        %v841 = vunpack.c.h.b16 %v692
        %v842 = vunpack.c.l.b16 %v693
        %v843 = vunpack.c.h.b16 %v693
        %v844 = vunpack.c.l.b16 %v694
        %v845 = vunpack.c.h.b16 %v694
        %v846 = vunpack.c.l.b16 %v695
        %v847 = vunpack.c.h.b16 %v695
        %v848 = vunpack.c.l.b16 %v696
        %v849 = vunpack.c.h.b16 %v696
        %v850 = vunpack.c.l.b16 %v697
        %v851 = vunpack.c.h.b16 %v697
        %v852 = vunpack.c.l.b16 %v698
        %v853 = vunpack.c.h.b16 %v698
        %v854 = vunpack.c.l.b16 %v699
        %v855 = vunpack.c.h.b16 %v699
        %v856 = vunpack.c.l.b16 %v700
        %v857 = vunpack.c.h.b16 %v700
        %v858 = vunpack.c.l.b16 %v701
        %v859 = vunpack.c.h.b16 %v701
        %v860 = vunpack.c.l.b16 %v702
        %v861 = vunpack.c.h.b16 %v702
        %v862 = vunpack.c.l.b16 %v703
        %v863 = vunpack.c.h.b16 %v703
        %v864 = vpack.c.b16 %v804, %v800
        %v865 = vpack.c.b16 %v805, %v801
        %v866 = vpack.c.b16 %v806, %v802
        %v867 = vpack.c.b16 %v807, %v803
        %v868 = vpack.c.b16 %v812, %v808
        %v869 = vpack.c.b16 %v813, %v809
        %v870 = vpack.c.b16 %v814, %v810
        %v871 = vpack.c.b16 %v815, %v811
        %v872 = vpack.c.b16 %v820, %v816
        %v873 = vpack.c.b16 %v821, %v817
        %v874 = vpack.c.b16 %v822, %v818
        %v875 = vpack.c.b16 %v823, %v819
        %v876 = vpack.c.b16 %v828, %v824
        %v877 = vpack.c.b16 %v829, %v825
        %v878 = vpack.c.b16 %v830, %v826
        %v879 = vpack.c.b16 %v831, %v827
        %v880 = vpack.c.b16 %v836, %v832
        %v881 = vpack.c.b16 %v837, %v833
        %v882 = vpack.c.b16 %v838, %v834
        %v883 = vpack.c.b16 %v839, %v835
        %v884 = vpack.c.b16 %v844, %v840
        %v885 = vpack.c.b16 %v845, %v841
        %v886 = vpack.c.b16 %v846, %v842
        %v887 = vpack.c.b16 %v847, %v843
        %v888 = vpack.c.b16 %v852, %v848
        %v889 = vpack.c.b16 %v853, %v849
        %v890 = vpack.c.b16 %v854, %v850
        %v891 = vpack.c.b16 %v855, %v851
        %v892 = vpack.c.b16 %v860, %v856
        %v893 = vpack.c.b16 %v861, %v857
        %v894 = vpack.c.b16 %v862, %v858
        %v895 = vpack.c.b16 %v863, %v859
        %v992 = vunpack.c.l.b16 %v704
        %v993 = vunpack.c.l.b16 %v705
        %v994 = vunpack.c.l.b16 %v706
        %v995 = vunpack.c.l.b16 %v707
        %v996 = vunpack.c.l.b16 %v708
        %v997 = vunpack.c.l.b16 %v709
        %v998 = vunpack.c.l.b16 %v710
        %v999 = vunpack.c.l.b16 %v711
        %v1000 = vunpack.c.l.b16 %v712
        %v1001 = vunpack.c.l.b16 %v713
        %v1002 = vunpack.c.l.b16 %v714
        %v1003 = vunpack.c.l.b16 %v715
        %v1004 = vunpack.c.l.b16 %v716
        %v1005 = vunpack.c.l.b16 %v717
        %v1006 = vunpack.c.l.b16 %v718
        %v1007 = vunpack.c.l.b16 %v719
        %v1008 = vunpack.c.l.b16 %v720
        %v1009 = vunpack.c.l.b16 %v721
        %v1010 = vunpack.c.l.b16 %v722
        %v1011 = vunpack.c.l.b16 %v723
        %v1012 = vunpack.c.l.b16 %v724
        %v1013 = vunpack.c.l.b16 %v725
        %v1014 = vunpack.c.l.b16 %v726
        %v1015 = vunpack.c.l.b16 %v727
        %v1016 = vunpack.c.l.b16 %v728
        %v1017 = vunpack.c.l.b16 %v729
        %v1018 = vunpack.c.l.b16 %v730
        %v1019 = vunpack.c.l.b16 %v731
        %v1020 = vunpack.c.l.b16 %v732
        %v1021 = vunpack.c.l.b16 %v733
        %v1022 = vunpack.c.l.b16 %v734
        %v1023 = vunpack.c.l.b16 %v735
        %v1024 = vunpack.c.l.b16 %v736
        %v1025 = vunpack.c.l.b16 %v737
        %v1026 = vunpack.c.l.b16 %v738
        %v1027 = vunpack.c.l.b16 %v739
        %v1028 = vunpack.c.l.b16 %v740
        %v1029 = vunpack.c.l.b16 %v741
        %v1030 = vunpack.c.l.b16 %v742
        %v1031 = vunpack.c.l.b16 %v743
        %v1032 = vunpack.c.l.b16 %v744
        %v1033 = vunpack.c.l.b16 %v745
        %v1034 = vunpack.c.l.b16 %v746
        %v1035 = vunpack.c.l.b16 %v747
        %v1036 = vunpack.c.l.b16 %v748
        %v1037 = vunpack.c.l.b16 %v749
        %v1038 = vunpack.c.l.b16 %v750
        %v1039 = vunpack.c.l.b16 %v751
        %v1040 = vunpack.c.l.b16 %v752
        %v1041 = vunpack.c.l.b16 %v753
        %v1042 = vunpack.c.l.b16 %v754
        %v1043 = vunpack.c.l.b16 %v755
        %v1044 = vunpack.c.l.b16 %v756
        %v1045 = vunpack.c.l.b16 %v757
        %v1046 = vunpack.c.l.b16 %v758
        %v1047 = vunpack.c.l.b16 %v759
        %v1048 = vunpack.c.l.b16 %v760
        %v1049 = vunpack.c.l.b16 %v761
        %v1050 = vunpack.c.l.b16 %v762
        %v1051 = vunpack.c.l.b16 %v763
        %v1052 = vunpack.c.l.b16 %v764
        %v1053 = vunpack.c.l.b16 %v765
        %v1054 = vunpack.c.l.b16 %v766
        %v1055 = vunpack.c.l.b16 %v767
        %v1056 = vpack.c.b16 %v993, %v992
        %v1057 = vpack.c.b16 %v995, %v994
        %v1058 = vpack.c.b16 %v997, %v996
        %v1059 = vpack.c.b16 %v999, %v998
        %v1060 = vpack.c.b16 %v1001, %v1000
        %v1061 = vpack.c.b16 %v1003, %v1002
        %v1062 = vpack.c.b16 %v1005, %v1004
        %v1063 = vpack.c.b16 %v1007, %v1006
        %v1064 = vpack.c.b16 %v1009, %v1008
        %v1065 = vpack.c.b16 %v1011, %v1010
        %v1066 = vpack.c.b16 %v1013, %v1012
        %v1067 = vpack.c.b16 %v1015, %v1014
        %v1068 = vpack.c.b16 %v1017, %v1016
        %v1069 = vpack.c.b16 %v1019, %v1018
        %v1070 = vpack.c.b16 %v1021, %v1020
        %v1071 = vpack.c.b16 %v1023, %v1022
        %v1072 = vpack.c.b16 %v1025, %v1024
        %v1073 = vpack.c.b16 %v1027, %v1026
        %v1074 = vpack.c.b16 %v1029, %v1028
        %v1075 = vpack.c.b16 %v1031, %v1030
        %v1076 = vpack.c.b16 %v1033, %v1032
        %v1077 = vpack.c.b16 %v1035, %v1034
        %v1078 = vpack.c.b16 %v1037, %v1036
        %v1079 = vpack.c.b16 %v1039, %v1038
        %v1080 = vpack.c.b16 %v1041, %v1040
        %v1081 = vpack.c.b16 %v1043, %v1042
        %v1082 = vpack.c.b16 %v1045, %v1044
        %v1083 = vpack.c.b16 %v1047, %v1046
        %v1084 = vpack.c.b16 %v1049, %v1048
        %v1085 = vpack.c.b16 %v1051, %v1050
        %v1086 = vpack.c.b16 %v1053, %v1052
        %v1087 = vpack.c.b16 %v1055, %v1054
        %1120 = vmatpush.bf16.msra.mxu0 %v1063
        %1121 = vmatpush.bf16.msra.mxu0 %v1062
        %1122 = vmatpush.bf16.msra.mxu0 %v1061
        %1123 = vmatpush.bf16.msra.mxu0 %v1060
        %1124 = vmatpush.bf16.msra.mxu0 %v1059
        %1125 = vmatpush.bf16.msra.mxu0 %v1058
        %1126 = vmatpush.bf16.msra.mxu0 %v1057
        %1127 = vmatpush.bf16.msra.mxu0 %v1056
        %1128 = vmatmul.bf16.gmra.mxu0 %v864
        %v1129 = vpop.f32.mrf.mxu0
        %v1130 = vadd.f32 0.0, %v1129
        %v1131 = vpop.f32.mrf.mxu0
        %v1132 = vadd.f32 0.0, %v1131
        %1133 = vmatmul.bf16.gmra.mxu0 %v868
        %v1134 = vpop.f32.mrf.mxu0
        %v1135 = vadd.f32 0.0, %v1134
        %v1136 = vpop.f32.mrf.mxu0
        %v1137 = vadd.f32 0.0, %v1136
        %1138 = vmatmul.bf16.gmra.mxu0 %v872
        %v1139 = vpop.f32.mrf.mxu0
        %v1140 = vadd.f32 0.0, %v1139
        %v1141 = vpop.f32.mrf.mxu0
        %v1142 = vadd.f32 0.0, %v1141
        %1143 = vmatmul.bf16.gmra.mxu0 %v876
        %v1144 = vpop.f32.mrf.mxu0
        %v1145 = vadd.f32 0.0, %v1144
        %v1146 = vpop.f32.mrf.mxu0
        %v1147 = vadd.f32 0.0, %v1146
        %1148 = vmatmul.bf16.gmra.mxu0 %v880
        %v1149 = vpop.f32.mrf.mxu0
        %v1150 = vadd.f32 0.0, %v1149
        %v1151 = vpop.f32.mrf.mxu0
        %v1152 = vadd.f32 0.0, %v1151
        %1153 = vmatmul.bf16.gmra.mxu0 %v884
        %v1154 = vpop.f32.mrf.mxu0
        %v1155 = vadd.f32 0.0, %v1154
        %v1156 = vpop.f32.mrf.mxu0
        %v1157 = vadd.f32 0.0, %v1156
        %1158 = vmatmul.bf16.gmra.mxu0 %v888
        %v1159 = vpop.f32.mrf.mxu0
        %v1160 = vadd.f32 0.0, %v1159
        %v1161 = vpop.f32.mrf.mxu0
        %v1162 = vadd.f32 0.0, %v1161
        %1163 = vmatmul.bf16.gmra.mxu0 %v892
        %v1164 = vpop.f32.mrf.mxu0
        %v1165 = vadd.f32 0.0, %v1164
        %v1166 = vpop.f32.mrf.mxu0
        %v1167 = vadd.f32 0.0, %v1166
        %1168 = vdwg.mxu0
        %1169 = vmatpush.bf16.msra.mxu0 %v1071
        %1170 = vmatpush.bf16.msra.mxu0 %v1070
        %1171 = vmatpush.bf16.msra.mxu0 %v1069
        %1172 = vmatpush.bf16.msra.mxu0 %v1068
        %1173 = vmatpush.bf16.msra.mxu0 %v1067
        %1174 = vmatpush.bf16.msra.mxu0 %v1066
        %1175 = vmatpush.bf16.msra.mxu0 %v1065
        %1176 = vmatpush.bf16.msra.mxu0 %v1064
        %1177 = vmatmul.bf16.gmra.mxu0 %v865
        %v1178 = vpop.f32.mrf.mxu0
        %v1179 = vadd.f32 %v1130, %v1178
        %v1180 = vpop.f32.mrf.mxu0
        %v1181 = vadd.f32 %v1132, %v1180
        %1182 = vmatmul.bf16.gmra.mxu0 %v869
        %v1183 = vpop.f32.mrf.mxu0
        %v1184 = vadd.f32 %v1135, %v1183
        %v1185 = vpop.f32.mrf.mxu0
        %v1186 = vadd.f32 %v1137, %v1185
        %1187 = vmatmul.bf16.gmra.mxu0 %v873
        %v1188 = vpop.f32.mrf.mxu0
        %v1189 = vadd.f32 %v1140, %v1188
        %v1190 = vpop.f32.mrf.mxu0
        %v1191 = vadd.f32 %v1142, %v1190
        %1192 = vmatmul.bf16.gmra.mxu0 %v877
        %v1193 = vpop.f32.mrf.mxu0
        %v1194 = vadd.f32 %v1145, %v1193
        %v1195 = vpop.f32.mrf.mxu0
        %v1196 = vadd.f32 %v1147, %v1195
        %1197 = vmatmul.bf16.gmra.mxu0 %v881
        %v1198 = vpop.f32.mrf.mxu0
        %v1199 = vadd.f32 %v1150, %v1198
        %v1200 = vpop.f32.mrf.mxu0
        %v1201 = vadd.f32 %v1152, %v1200
        %1202 = vmatmul.bf16.gmra.mxu0 %v885
        %v1203 = vpop.f32.mrf.mxu0
        %v1204 = vadd.f32 %v1155, %v1203
        %v1205 = vpop.f32.mrf.mxu0
        %v1206 = vadd.f32 %v1157, %v1205
        %1207 = vmatmul.bf16.gmra.mxu0 %v889
        %v1208 = vpop.f32.mrf.mxu0
        %v1209 = vadd.f32 %v1160, %v1208
        %v1210 = vpop.f32.mrf.mxu0
        %v1211 = vadd.f32 %v1162, %v1210
        %1212 = vmatmul.bf16.gmra.mxu0 %v893
        %v1213 = vpop.f32.mrf.mxu0
        %v1214 = vadd.f32 %v1165, %v1213
        %v1215 = vpop.f32.mrf.mxu0
        %v1216 = vadd.f32 %v1167, %v1215
        %1217 = vdwg.mxu0
        %1218 = vmatpush.bf16.msra.mxu0 %v1079
        %1219 = vmatpush.bf16.msra.mxu0 %v1078
        %1220 = vmatpush.bf16.msra.mxu0 %v1077
        %1221 = vmatpush.bf16.msra.mxu0 %v1076
        %1222 = vmatpush.bf16.msra.mxu0 %v1075
        %1223 = vmatpush.bf16.msra.mxu0 %v1074
        %1224 = vmatpush.bf16.msra.mxu0 %v1073
        %1225 = vmatpush.bf16.msra.mxu0 %v1072
        %1226 = vmatmul.bf16.gmra.mxu0 %v866
        %v1227 = vpop.f32.mrf.mxu0
        %v1228 = vadd.f32 %v1179, %v1227
        %v1229 = vpop.f32.mrf.mxu0
        %v1230 = vadd.f32 %v1181, %v1229
        %1231 = vmatmul.bf16.gmra.mxu0 %v870
        %v1232 = vpop.f32.mrf.mxu0
        %v1233 = vadd.f32 %v1184, %v1232
        %v1234 = vpop.f32.mrf.mxu0
        %v1235 = vadd.f32 %v1186, %v1234
        %1236 = vmatmul.bf16.gmra.mxu0 %v874
        %v1237 = vpop.f32.mrf.mxu0
        %v1238 = vadd.f32 %v1189, %v1237
        %v1239 = vpop.f32.mrf.mxu0
        %v1240 = vadd.f32 %v1191, %v1239
        %1241 = vmatmul.bf16.gmra.mxu0 %v878
        %v1242 = vpop.f32.mrf.mxu0
        %v1243 = vadd.f32 %v1194, %v1242
        %v1244 = vpop.f32.mrf.mxu0
        %v1245 = vadd.f32 %v1196, %v1244
        %1246 = vmatmul.bf16.gmra.mxu0 %v882
        %v1247 = vpop.f32.mrf.mxu0
        %v1248 = vadd.f32 %v1199, %v1247
        %v1249 = vpop.f32.mrf.mxu0
        %v1250 = vadd.f32 %v1201, %v1249
        %1251 = vmatmul.bf16.gmra.mxu0 %v886
        %v1252 = vpop.f32.mrf.mxu0
        %v1253 = vadd.f32 %v1204, %v1252
        %v1254 = vpop.f32.mrf.mxu0
        %v1255 = vadd.f32 %v1206, %v1254
        %1256 = vmatmul.bf16.gmra.mxu0 %v890
        %v1257 = vpop.f32.mrf.mxu0
        %v1258 = vadd.f32 %v1209, %v1257
        %v1259 = vpop.f32.mrf.mxu0
        %v1260 = vadd.f32 %v1211, %v1259
        %1261 = vmatmul.bf16.gmra.mxu0 %v894
        %v1262 = vpop.f32.mrf.mxu0
        %v1263 = vadd.f32 %v1214, %v1262
        %v1264 = vpop.f32.mrf.mxu0
        %v1265 = vadd.f32 %v1216, %v1264
        %1266 = vdwg.mxu0
        %1267 = vmatpush.bf16.msra.mxu0 %v1087
        %1268 = vmatpush.bf16.msra.mxu0 %v1086
        %1269 = vmatpush.bf16.msra.mxu0 %v1085
        %1270 = vmatpush.bf16.msra.mxu0 %v1084
        %1271 = vmatpush.bf16.msra.mxu0 %v1083
        %1272 = vmatpush.bf16.msra.mxu0 %v1082
        %1273 = vmatpush.bf16.msra.mxu0 %v1081
        %1274 = vmatpush.bf16.msra.mxu0 %v1080
        %1275 = vmatmul.bf16.gmra.mxu0 %v867
        %v1276 = vpop.f32.mrf.mxu0
        %v1277 = vadd.f32 %v1228, %v1276
        %v1278 = vpop.f32.mrf.mxu0
        %v1279 = vadd.f32 %v1230, %v1278
        %1280 = vmatmul.bf16.gmra.mxu0 %v871
        %v1281 = vpop.f32.mrf.mxu0
        %v1282 = vadd.f32 %v1233, %v1281
        %v1283 = vpop.f32.mrf.mxu0
        %v1284 = vadd.f32 %v1235, %v1283
        %1285 = vmatmul.bf16.gmra.mxu0 %v875
        %v1286 = vpop.f32.mrf.mxu0
        %v1287 = vadd.f32 %v1238, %v1286
        %v1288 = vpop.f32.mrf.mxu0
        %v1289 = vadd.f32 %v1240, %v1288
        %1290 = vmatmul.bf16.gmra.mxu0 %v879
        %v1291 = vpop.f32.mrf.mxu0
        %v1292 = vadd.f32 %v1243, %v1291
        %v1293 = vpop.f32.mrf.mxu0
        %v1294 = vadd.f32 %v1245, %v1293
        %1295 = vmatmul.bf16.gmra.mxu0 %v883
        %v1296 = vpop.f32.mrf.mxu0
        %v1297 = vadd.f32 %v1248, %v1296
        %v1298 = vpop.f32.mrf.mxu0
        %v1299 = vadd.f32 %v1250, %v1298
        %1300 = vmatmul.bf16.gmra.mxu0 %v887
        %v1301 = vpop.f32.mrf.mxu0
        %v1302 = vadd.f32 %v1253, %v1301
        %v1303 = vpop.f32.mrf.mxu0
        %v1304 = vadd.f32 %v1255, %v1303
        %1305 = vmatmul.bf16.gmra.mxu0 %v891
        %v1306 = vpop.f32.mrf.mxu0
        %v1307 = vadd.f32 %v1258, %v1306
        %v1308 = vpop.f32.mrf.mxu0
        %v1309 = vadd.f32 %v1260, %v1308
        %1310 = vmatmul.bf16.gmra.mxu0 %v895
        %v1311 = vpop.f32.mrf.mxu0
        %v1312 = vadd.f32 %v1263, %v1311
        %v1313 = vpop.f32.mrf.mxu0
        %v1314 = vadd.f32 %v1265, %v1313
        %1315 = vdwg.mxu0
        %v1316 = vadd.f32 %v656, %v1277
        %v1317 = vadd.f32 %v657, %v1279
        %v1318 = vadd.f32 %v658, %v1282
        %v1319 = vadd.f32 %v659, %v1284
        %v1320 = vadd.f32 %v660, %v1287
        %v1321 = vadd.f32 %v661, %v1289
        %v1322 = vadd.f32 %v662, %v1292
        %v1323 = vadd.f32 %v663, %v1294
        %v1324 = vadd.f32 %v664, %v1297
        %v1325 = vadd.f32 %v665, %v1299
        %v1326 = vadd.f32 %v666, %v1302
        %v1327 = vadd.f32 %v667, %v1304
        %v1328 = vadd.f32 %v668, %v1307
        %v1329 = vadd.f32 %v669, %v1309
        %v1330 = vadd.f32 %v670, %v1312
        %v1331 = vadd.f32 %v671, %v1314
        %1332 = vst [vmem:[#allocation2] sm:$0xff] %v1316
        %1333 = vst [vmem:[#allocation2 + $0x8] sm:$0xff] %v1317
        %1334 = vst [vmem:[#allocation2 + $0x10] sm:$0xff] %v1318
        %1335 = vst [vmem:[#allocation2 + $0x18] sm:$0xff] %v1319
        %1336 = vst [vmem:[#allocation2 + $0x20] sm:$0xff] %v1320
        %1337 = vst [vmem:[#allocation2 + $0x28] sm:$0xff] %v1321
        %1338 = vst [vmem:[#allocation2 + $0x30] sm:$0xff] %v1322
        %1339 = vst [vmem:[#allocation2 + $0x38] sm:$0xff] %v1323
        %1340 = vst [vmem:[#allocation2 + $0x40] sm:$0xff] %v1324
        %1341 = vst [vmem:[#allocation2 + $0x48] sm:$0xff] %v1325
        %1342 = vst [vmem:[#allocation2 + $0x50] sm:$0xff] %v1326
        %1343 = vst [vmem:[#allocation2 + $0x58] sm:$0xff] %v1327
        %1344 = vst [vmem:[#allocation2 + $0x60] sm:$0xff] %v1328
        %1345 = vst [vmem:[#allocation2 + $0x68] sm:$0xff] %v1329
        %1346 = vst [vmem:[#allocation2 + $0x70] sm:$0xff] %v1330
        %1347 = vst [vmem:[#allocation2 + $0x78] sm:$0xff] %v1331
        %p1348 = scmp.eq.s32.totalorder %s20, 3
        // Predicated region
        $region105: #{discriminator_forward.7} parent=91 // pred_check
          %p1349 = pneg %p1348
        $region106: #{discriminator_forward.7} parent=91 // pred_check_branch
          %1351 = sbr.rel (%p1349) target = $region108
        $region107: #{discriminator_forward.7} parent=91 // pred_region
          %v1352 = vld [vmem:[#allocation2] sm:$0xff]
          %v1353 = vld [vmem:[#allocation2 + $0x8] sm:$0xff]
          %v1354 = vld [vmem:[#allocation2 + $0x10] sm:$0xff]
          %v1355 = vld [vmem:[#allocation2 + $0x18] sm:$0xff]
          %v1356 = vld [vmem:[#allocation2 + $0x20] sm:$0xff]
          %v1357 = vld [vmem:[#allocation2 + $0x28] sm:$0xff]
          %v1358 = vld [vmem:[#allocation2 + $0x30] sm:$0xff]
          %v1359 = vld [vmem:[#allocation2 + $0x38] sm:$0xff]
          %v1360 = vld [vmem:[#allocation2 + $0x40] sm:$0xff]
          %v1361 = vld [vmem:[#allocation2 + $0x48] sm:$0xff]
          %v1362 = vld [vmem:[#allocation2 + $0x50] sm:$0xff]
          %v1363 = vld [vmem:[#allocation2 + $0x58] sm:$0xff]
          %v1364 = vld [vmem:[#allocation2 + $0x60] sm:$0xff]
          %v1365 = vld [vmem:[#allocation2 + $0x68] sm:$0xff]
          %v1366 = vld [vmem:[#allocation2 + $0x70] sm:$0xff]
          %v1367 = vld [vmem:[#allocation2 + $0x78] sm:$0xff]
          %v1368 = vadd.f32 %v1352, %v1353
          %v1369 = vadd.f32 %v1368, %v1354
          %v1370 = vadd.f32 %v1369, %v1355
          %v1371 = vadd.f32 %v1370, %v1356
          %v1372 = vadd.f32 %v1371, %v1357
          %v1373 = vadd.f32 %v1372, %v1358
          %v1374 = vadd.f32 %v1373, %v1359
          %v1375 = vadd.f32 %v1374, %v1360
          %v1376 = vadd.f32 %v1375, %v1361
          %v1377 = vadd.f32 %v1376, %v1362
          %v1378 = vadd.f32 %v1377, %v1363
          %v1379 = vadd.f32 %v1378, %v1364
          %v1380 = vadd.f32 %v1379, %v1365
          %v1381 = vadd.f32 %v1380, %v1366
          %v1382 = vadd.f32 %v1381, %v1367
          %v1383 = vrot.slane %v1382, 4
          %v1384 = vadd.f32 %v1382, %v1383
          %v1385 = vrot.slane %v1384, 2
          %v1386 = vadd.f32 %v1384, %v1385
          %v1387 = vrot.slane %v1386, 1
          %v1388 = vadd.f32 %v1386, %v1387
          %v1389 = vrcp.pop 128.0
          %v1390 = vmul.f32 128.0, %v1389
          %v1391 = vsub.f32 1.0, %v1390
          %v1392 = vmul.f32 %v1389, %v1391
          %v1393 = vadd.f32 %v1389, %v1392
          %vm1394 = vweird.f32 %v1389
          %v1395 = vsel %vm1394, %v1389, %v1393
          %v1396 = vmul.f32 %v1388, %v1395
          %v1397 = vsub.f32 %v1352, %v1396
          %v1398 = vsub.f32 %v1353, %v1396
          %v1399 = vsub.f32 %v1354, %v1396
          %v1400 = vsub.f32 %v1355, %v1396
          %v1401 = vsub.f32 %v1356, %v1396
          %v1402 = vsub.f32 %v1357, %v1396
          %v1403 = vsub.f32 %v1358, %v1396
          %v1404 = vsub.f32 %v1359, %v1396
          %v1405 = vsub.f32 %v1360, %v1396
          %v1406 = vsub.f32 %v1361, %v1396
          %v1407 = vsub.f32 %v1362, %v1396
          %v1408 = vsub.f32 %v1363, %v1396
          %v1409 = vsub.f32 %v1364, %v1396
          %v1410 = vsub.f32 %v1365, %v1396
          %v1411 = vsub.f32 %v1366, %v1396
          %v1412 = vsub.f32 %v1367, %v1396
          %v1413 = vmul.f32 %v1397, %v1397
          %v1414 = vmul.f32 %v1398, %v1398
          %v1415 = vmul.f32 %v1399, %v1399
          %v1416 = vmul.f32 %v1400, %v1400
          %v1417 = vmul.f32 %v1401, %v1401
          %v1418 = vmul.f32 %v1402, %v1402
          %v1419 = vmul.f32 %v1403, %v1403
          %v1420 = vmul.f32 %v1404, %v1404
          %v1421 = vmul.f32 %v1405, %v1405
          %v1422 = vmul.f32 %v1406, %v1406
          %v1423 = vmul.f32 %v1407, %v1407
          %v1424 = vmul.f32 %v1408, %v1408
          %v1425 = vmul.f32 %v1409, %v1409
          %v1426 = vmul.f32 %v1410, %v1410
          %v1427 = vmul.f32 %v1411, %v1411
          %v1428 = vmul.f32 %v1412, %v1412
          %v1429 = vadd.f32 %v1413, %v1414
          %v1430 = vadd.f32 %v1429, %v1415
          %v1431 = vadd.f32 %v1430, %v1416
          %v1432 = vadd.f32 %v1431, %v1417
          %v1433 = vadd.f32 %v1432, %v1418
          %v1434 = vadd.f32 %v1433, %v1419
          %v1435 = vadd.f32 %v1434, %v1420
          %v1436 = vadd.f32 %v1435, %v1421
          %v1437 = vadd.f32 %v1436, %v1422
          %v1438 = vadd.f32 %v1437, %v1423
          %v1439 = vadd.f32 %v1438, %v1424
          %v1440 = vadd.f32 %v1439, %v1425
          %v1441 = vadd.f32 %v1440, %v1426
          %v1442 = vadd.f32 %v1441, %v1427
          %v1443 = vadd.f32 %v1442, %v1428
          %v1444 = vrot.slane %v1443, 4
          %v1445 = vadd.f32 %v1443, %v1444
          %v1446 = vrot.slane %v1445, 2
          %v1447 = vadd.f32 %v1445, %v1446
          %v1448 = vrot.slane %v1447, 1
          %v1449 = vadd.f32 %v1447, %v1448
          %v1450 = vmul.f32 %v1449, %v1395
          %v1451 = vadd.f32 %v1450, 1e-05
          %v1452 = vrsqrt.pop %v1451
          %v1453 = vmul.f32 %v1452, %v1451
          %v1454 = vmul.f32 %v1453, %v1452
          %v1455 = vmul.f32 0.5, %v1454
          %v1456 = vsub.f32 1.5, %v1455
          %v1457 = vmul.f32 %v1452, %v1456
          %vm1458 = vweird.f32 %v1451
          %vm1459 = vweird.f32 %v1452
          %vm1460 = vmor %vm1458, %vm1459
          %v1461 = vsel %vm1460, %v1452, %v1457
          %v1462 = vmul.f32 %v1397, %v1461
          %v1463 = vmul.f32 %v1398, %v1461
          %v1464 = vmul.f32 %v1399, %v1461
          %v1465 = vmul.f32 %v1400, %v1461
          %v1466 = vmul.f32 %v1401, %v1461
          %v1467 = vmul.f32 %v1402, %v1461
          %v1468 = vmul.f32 %v1403, %v1461
          %v1469 = vmul.f32 %v1404, %v1461
          %v1470 = vmul.f32 %v1405, %v1461
          %v1471 = vmul.f32 %v1406, %v1461
          %v1472 = vmul.f32 %v1407, %v1461
          %v1473 = vmul.f32 %v1408, %v1461
          %v1474 = vmul.f32 %v1409, %v1461
          %v1475 = vmul.f32 %v1410, %v1461
          %v1476 = vmul.f32 %v1411, %v1461
          %v1477 = vmul.f32 %v1412, %v1461
          %v1478 = vld [vmem:[%s632] sm:$0x1]
          %v1480 = vperm.slane %v1478, 0
          %v1482 = vmul.f32 %v1462, %v1480
          %v1483 = vmul.f32 %v1463, %v1480
          %v1484 = vmul.f32 %v1464, %v1480
          %v1485 = vmul.f32 %v1465, %v1480
          %v1486 = vmul.f32 %v1466, %v1480
          %v1487 = vmul.f32 %v1467, %v1480
          %v1488 = vmul.f32 %v1468, %v1480
          %v1489 = vmul.f32 %v1469, %v1480
          %v1490 = vmul.f32 %v1470, %v1480
          %v1491 = vmul.f32 %v1471, %v1480
          %v1492 = vmul.f32 %v1472, %v1480
          %v1493 = vmul.f32 %v1473, %v1480
          %v1494 = vmul.f32 %v1474, %v1480
          %v1495 = vmul.f32 %v1475, %v1480
          %v1496 = vmul.f32 %v1476, %v1480
          %v1497 = vmul.f32 %v1477, %v1480
          %v1498 = vld [vmem:[%s635] sm:$0x1]
          %v1500 = vperm.slane %v1498, 0
          %v1502 = vadd.f32 %v1482, %v1500
          %v1503 = vadd.f32 %v1483, %v1500
          %v1504 = vadd.f32 %v1484, %v1500
          %v1505 = vadd.f32 %v1485, %v1500
          %v1506 = vadd.f32 %v1486, %v1500
          %v1507 = vadd.f32 %v1487, %v1500
          %v1508 = vadd.f32 %v1488, %v1500
          %v1509 = vadd.f32 %v1489, %v1500
          %v1510 = vadd.f32 %v1490, %v1500
          %v1511 = vadd.f32 %v1491, %v1500
          %v1512 = vadd.f32 %v1492, %v1500
          %v1513 = vadd.f32 %v1493, %v1500
          %v1514 = vadd.f32 %v1494, %v1500
          %v1515 = vadd.f32 %v1495, %v1500
          %v1516 = vadd.f32 %v1496, %v1500
          %v1517 = vadd.f32 %v1497, %v1500
          %vm1518 = vcmp.gt.f32.partialorder %v1502, 0.0
          %vm1519 = vcmp.gt.f32.partialorder %v1503, 0.0
          %vm1520 = vcmp.gt.f32.partialorder %v1504, 0.0
          %vm1521 = vcmp.gt.f32.partialorder %v1505, 0.0
          %vm1522 = vcmp.gt.f32.partialorder %v1506, 0.0
          %vm1523 = vcmp.gt.f32.partialorder %v1507, 0.0
          %vm1524 = vcmp.gt.f32.partialorder %v1508, 0.0
          %vm1525 = vcmp.gt.f32.partialorder %v1509, 0.0
          %vm1526 = vcmp.gt.f32.partialorder %v1510, 0.0
          %vm1527 = vcmp.gt.f32.partialorder %v1511, 0.0
          %vm1528 = vcmp.gt.f32.partialorder %v1512, 0.0
          %vm1529 = vcmp.gt.f32.partialorder %v1513, 0.0
          %vm1530 = vcmp.gt.f32.partialorder %v1514, 0.0
          %vm1531 = vcmp.gt.f32.partialorder %v1515, 0.0
          %vm1532 = vcmp.gt.f32.partialorder %v1516, 0.0
          %vm1533 = vcmp.gt.f32.partialorder %v1517, 0.0
          %v1534 = vmul.f32 %v1502, 0.2
          %v1535 = vmul.f32 %v1503, 0.2
          %v1536 = vmul.f32 %v1504, 0.2
          %v1537 = vmul.f32 %v1505, 0.2
          %v1538 = vmul.f32 %v1506, 0.2
          %v1539 = vmul.f32 %v1507, 0.2
          %v1540 = vmul.f32 %v1508, 0.2
          %v1541 = vmul.f32 %v1509, 0.2
          %v1542 = vmul.f32 %v1510, 0.2
          %v1543 = vmul.f32 %v1511, 0.2
          %v1544 = vmul.f32 %v1512, 0.2
          %v1545 = vmul.f32 %v1513, 0.2
          %v1546 = vmul.f32 %v1514, 0.2
          %v1547 = vmul.f32 %v1515, 0.2
          %v1548 = vmul.f32 %v1516, 0.2
          %v1549 = vmul.f32 %v1517, 0.2
          %v1550 = vsel %vm1518, %v1502, %v1534
          %v1551 = vsel %vm1519, %v1503, %v1535
          %v1552 = vsel %vm1520, %v1504, %v1536
          %v1553 = vsel %vm1521, %v1505, %v1537
          %v1554 = vsel %vm1522, %v1506, %v1538
          %v1555 = vsel %vm1523, %v1507, %v1539
          %v1556 = vsel %vm1524, %v1508, %v1540
          %v1557 = vsel %vm1525, %v1509, %v1541
          %v1558 = vsel %vm1526, %v1510, %v1542
          %v1559 = vsel %vm1527, %v1511, %v1543
          %v1560 = vsel %vm1528, %v1512, %v1544
          %v1561 = vsel %vm1529, %v1513, %v1545
          %v1562 = vsel %vm1530, %v1514, %v1546
          %v1563 = vsel %vm1531, %v1515, %v1547
          %v1564 = vsel %vm1532, %v1516, %v1548
          %v1565 = vsel %vm1533, %v1517, %v1549
          %v1566 = vpack.c.bf16 %v1550, %v1550
          %v1567 = vpack.c.bf16 %v1551, %v1551
          %v1568 = vpack.c.bf16 %v1552, %v1552
          %v1569 = vpack.c.bf16 %v1553, %v1553
          %v1570 = vpack.c.bf16 %v1554, %v1554
          %v1571 = vpack.c.bf16 %v1555, %v1555
          %v1572 = vpack.c.bf16 %v1556, %v1556
          %v1573 = vpack.c.bf16 %v1557, %v1557
          %v1574 = vpack.c.bf16 %v1558, %v1558
          %v1575 = vpack.c.bf16 %v1559, %v1559
          %v1576 = vpack.c.bf16 %v1560, %v1560
          %v1577 = vpack.c.bf16 %v1561, %v1561
          %v1578 = vpack.c.bf16 %v1562, %v1562
          %v1579 = vpack.c.bf16 %v1563, %v1563
          %v1580 = vpack.c.bf16 %v1564, %v1564
          %v1581 = vpack.c.bf16 %v1565, %v1565
          %1582 = vst [vmem:[%s627] sm:$0xf] %v1566
          %1583 = vst [vmem:[%s627 + $0x4] sm:$0xf] %v1567
          %1584 = vst [vmem:[%s627 + $0x8] sm:$0xf] %v1568
          %1585 = vst [vmem:[%s627 + $0xc] sm:$0xf] %v1569
          %1586 = vst [vmem:[%s627 + $0x10] sm:$0xf] %v1570
          %1587 = vst [vmem:[%s627 + $0x14] sm:$0xf] %v1571
          %1588 = vst [vmem:[%s627 + $0x18] sm:$0xf] %v1572
          %1589 = vst [vmem:[%s627 + $0x1c] sm:$0xf] %v1573
          %1590 = vst [vmem:[%s627 + $0x20] sm:$0xf] %v1574
          %1591 = vst [vmem:[%s627 + $0x24] sm:$0xf] %v1575
          %1592 = vst [vmem:[%s627 + $0x28] sm:$0xf] %v1576
          %1593 = vst [vmem:[%s627 + $0x2c] sm:$0xf] %v1577
          %1594 = vst [vmem:[%s627 + $0x30] sm:$0xf] %v1578
          %1595 = vst [vmem:[%s627 + $0x34] sm:$0xf] %v1579
          %1596 = vst [vmem:[%s627 + $0x38] sm:$0xf] %v1580
          %1597 = vst [vmem:[%s627 + $0x3c] sm:$0xf] %v1581
        $region108: #{discriminator_forward.7} parent=91 // pred_fallthru
          _
        %s1598 = sand.u32 %s141, 1
        %s1599 = sand.u32 %s141, 1
        %s1600 = smul.addr %s1599, 64
        %s1601 = scalar_lea.vmem [#allocation5], %s1600
        // Predicated region
        $region109: #{discriminator_forward.7} parent=91 // pred_check
          %p1602 = pneg %p151
        $region110: #{discriminator_forward.7} parent=91 // pred_check_branch
          %1604 = sbr.rel (%p1602) target = $region112
        $region111: #{discriminator_forward.7} parent=91 // pred_region
          %s1605 = smul.addr %s19, 4
          %s1606 = scalar_lea.vmem %s4, %s1605
          // Predicated region
          $region113: #{discriminator_forward.7} parent=111 // pred_check
            _
          $region114: #{discriminator_forward.7} parent=111 // pred_check_branch
            %1608 = sbr.rel (0) target = $region116
          $region115: #{discriminator_forward.7} parent=111 // pred_region
            // Predicated region
            $region117: #{discriminator_forward.7} parent=115 // pred_check
              _
            $region118: #{discriminator_forward.7} parent=115 // pred_check_branch
              %1610 = sbr.rel target = $region120
            $region119: #{discriminator_forward.7} parent=115 // pred_region
              // Predicated region
              $region132: #{discriminator_forward.7} parent=119 // pred_check
                _
              $region133: #{discriminator_forward.7} parent=119 // pred_check_branch
                %1656 = sbr.rel (0) target = $region135
              $region134: #{discriminator_forward.7} parent=119 // pred_region
                loop: start=0, step=1, limit=1
                $region136: #{discriminator_forward.7} parent=134 // loop_pre_header
                  _
                $region137: #{discriminator_forward.7} parent=134 // loop_header
                  %s1658 = sphi 0, %s1662
                  %p1659 = scmp.ge.s32.totalorder %s1658, 1
                  %s1663 = sphi %s1601, %s1601
                  %s1664 = sphi %s1606, %s1606
                $region138: #{discriminator_forward.7} parent=134 // loop_header_branch
                  %1661 = sbr.rel (%p1659) target = $region142
                $region139: #{discriminator_forward.7} parent=134 // loop_body
                  _
                $region140: #{discriminator_forward.7} parent=134 // loop_footer
                  %s1662 = sadd.s32 1, %s1658
                $region141: #{discriminator_forward.7} parent=134 // loop_footer_branch
                  %1657 = sbr.rel target = $region137
                $region142: #{discriminator_forward.7} parent=134 // loop_exit
                  _
                %s1666 = ssub.s32 16, 1
                loop: start=0, step=1, limit=1
                $region143: #{discriminator_forward.7} parent=134 // loop_pre_header
                  _
                $region144: #{discriminator_forward.7} parent=134 // loop_header
                  %s1668 = sphi 0, %s1672
                  %p1669 = scmp.ge.s32.totalorder %s1668, 1
                  %s1673 = sphi %s1601, %s1601
                  %s1674 = sphi %s1606, %s1606
                $region145: #{discriminator_forward.7} parent=134 // loop_header_branch
                  %1671 = sbr.rel (%p1669) target = $region149
                $region146: #{discriminator_forward.7} parent=134 // loop_body
                  %v1675 = vld [vmem:[%s1673] sm:%s1666]
                  %1676 = vst [vmem:[%s1674] sm:%s1666] %v1675
                  %v1677 = vld [vmem:[%s1673 + $0x4] sm:%s1666]
                  %1678 = vst [vmem:[%s1674 + $0x8] sm:%s1666] %v1677
                  %v1679 = vld [vmem:[%s1673 + $0x8] sm:%s1666]
                  %1680 = vst [vmem:[%s1674 + $0x10] sm:%s1666] %v1679
                  %v1681 = vld [vmem:[%s1673 + $0xc] sm:%s1666]
                  %1682 = vst [vmem:[%s1674 + $0x18] sm:%s1666] %v1681
                  %v1683 = vld [vmem:[%s1673 + $0x10] sm:%s1666]
                  %1684 = vst [vmem:[%s1674 + $0x20] sm:%s1666] %v1683
                  %v1685 = vld [vmem:[%s1673 + $0x14] sm:%s1666]
                  %1686 = vst [vmem:[%s1674 + $0x28] sm:%s1666] %v1685
                  %v1687 = vld [vmem:[%s1673 + $0x18] sm:%s1666]
                  %1688 = vst [vmem:[%s1674 + $0x30] sm:%s1666] %v1687
                  %v1689 = vld [vmem:[%s1673 + $0x1c] sm:%s1666]
                  %1690 = vst [vmem:[%s1674 + $0x38] sm:%s1666] %v1689
                  %v1691 = vld [vmem:[%s1673 + $0x20] sm:%s1666]
                  %1692 = vst [vmem:[%s1674 + $0x40] sm:%s1666] %v1691
                  %v1693 = vld [vmem:[%s1673 + $0x24] sm:%s1666]
                  %1694 = vst [vmem:[%s1674 + $0x48] sm:%s1666] %v1693
                  %v1695 = vld [vmem:[%s1673 + $0x28] sm:%s1666]
                  %1696 = vst [vmem:[%s1674 + $0x50] sm:%s1666] %v1695
                  %v1697 = vld [vmem:[%s1673 + $0x2c] sm:%s1666]
                  %1698 = vst [vmem:[%s1674 + $0x58] sm:%s1666] %v1697
                  %v1699 = vld [vmem:[%s1673 + $0x30] sm:%s1666]
                  %1700 = vst [vmem:[%s1674 + $0x60] sm:%s1666] %v1699
                  %v1701 = vld [vmem:[%s1673 + $0x34] sm:%s1666]
                  %1702 = vst [vmem:[%s1674 + $0x68] sm:%s1666] %v1701
                  %v1703 = vld [vmem:[%s1673 + $0x38] sm:%s1666]
                  %1704 = vst [vmem:[%s1674 + $0x70] sm:%s1666] %v1703
                  %v1705 = vld [vmem:[%s1673 + $0x3c] sm:%s1666]
                  %1706 = vst [vmem:[%s1674 + $0x78] sm:%s1666] %v1705
                $region147: #{discriminator_forward.7} parent=134 // loop_footer
                  %s1672 = sadd.s32 1, %s1668
                $region148: #{discriminator_forward.7} parent=134 // loop_footer_branch
                  %1667 = sbr.rel target = $region144
                $region149: #{discriminator_forward.7} parent=134 // loop_exit
                  _
              $region135: #{discriminator_forward.7} parent=119 // pred_fallthru
                _
            $region120: #{discriminator_forward.7} parent=115 // pred_fallthru
              _
            // Predicated region
            $region121: #{discriminator_forward.7} parent=115 // pred_check
              _
            $region122: #{discriminator_forward.7} parent=115 // pred_check_branch
              %1612 = sbr.rel (0) target = $region124
            $region123: #{discriminator_forward.7} parent=115 // pred_region
              %s1614 = ssub.s32 16, 1
              loop: start=0, step=1, limit=1
              $region125: #{discriminator_forward.7} parent=123 // loop_pre_header
                _
              $region126: #{discriminator_forward.7} parent=123 // loop_header
                %s1616 = sphi 0, %s1620
                %p1617 = scmp.ge.s32.totalorder %s1616, 1
                %s1621 = sphi %s1601, %s1601
                %s1622 = sphi %s1606, %s1606
              $region127: #{discriminator_forward.7} parent=123 // loop_header_branch
                %1619 = sbr.rel (%p1617) target = $region131
              $region128: #{discriminator_forward.7} parent=123 // loop_body
                %v1623 = vld [vmem:[%s1621] sm:%s1614]
                %1624 = vst [vmem:[%s1622] sm:%s1614] %v1623
                %v1625 = vld [vmem:[%s1621 + $0x4] sm:%s1614]
                %1626 = vst [vmem:[%s1622 + $0x8] sm:%s1614] %v1625
                %v1627 = vld [vmem:[%s1621 + $0x8] sm:%s1614]
                %1628 = vst [vmem:[%s1622 + $0x10] sm:%s1614] %v1627
                %v1629 = vld [vmem:[%s1621 + $0xc] sm:%s1614]
                %1630 = vst [vmem:[%s1622 + $0x18] sm:%s1614] %v1629
                %v1631 = vld [vmem:[%s1621 + $0x10] sm:%s1614]
                %1632 = vst [vmem:[%s1622 + $0x20] sm:%s1614] %v1631
                %v1633 = vld [vmem:[%s1621 + $0x14] sm:%s1614]
                %1634 = vst [vmem:[%s1622 + $0x28] sm:%s1614] %v1633
                %v1635 = vld [vmem:[%s1621 + $0x18] sm:%s1614]
                %1636 = vst [vmem:[%s1622 + $0x30] sm:%s1614] %v1635
                %v1637 = vld [vmem:[%s1621 + $0x1c] sm:%s1614]
                %1638 = vst [vmem:[%s1622 + $0x38] sm:%s1614] %v1637
                %v1639 = vld [vmem:[%s1621 + $0x20] sm:%s1614]
                %1640 = vst [vmem:[%s1622 + $0x40] sm:%s1614] %v1639
                %v1641 = vld [vmem:[%s1621 + $0x24] sm:%s1614]
                %1642 = vst [vmem:[%s1622 + $0x48] sm:%s1614] %v1641
                %v1643 = vld [vmem:[%s1621 + $0x28] sm:%s1614]
                %1644 = vst [vmem:[%s1622 + $0x50] sm:%s1614] %v1643
                %v1645 = vld [vmem:[%s1621 + $0x2c] sm:%s1614]
                %1646 = vst [vmem:[%s1622 + $0x58] sm:%s1614] %v1645
                %v1647 = vld [vmem:[%s1621 + $0x30] sm:%s1614]
                %1648 = vst [vmem:[%s1622 + $0x60] sm:%s1614] %v1647
                %v1649 = vld [vmem:[%s1621 + $0x34] sm:%s1614]
                %1650 = vst [vmem:[%s1622 + $0x68] sm:%s1614] %v1649
                %v1651 = vld [vmem:[%s1621 + $0x38] sm:%s1614]
                %1652 = vst [vmem:[%s1622 + $0x70] sm:%s1614] %v1651
                %v1653 = vld [vmem:[%s1621 + $0x3c] sm:%s1614]
                %1654 = vst [vmem:[%s1622 + $0x78] sm:%s1614] %v1653
              $region129: #{discriminator_forward.7} parent=123 // loop_footer
                %s1620 = sadd.s32 1, %s1616
              $region130: #{discriminator_forward.7} parent=123 // loop_footer_branch
                %1615 = sbr.rel target = $region126
              $region131: #{discriminator_forward.7} parent=123 // loop_exit
                _
            $region124: #{discriminator_forward.7} parent=115 // pred_fallthru
              _
          $region116: #{discriminator_forward.7} parent=111 // pred_fallthru
            _
          %1707 = vnop
        $region112: #{discriminator_forward.7} parent=91 // pred_fallthru
          _
      $region92: #{discriminator_forward.7} parent=5 // pred_fallthru
        _
      %p1708 = scmp.le.s32.totalorder 2, %s10
      // Predicated region
      $region150: #{discriminator_forward.7} parent=5 // pred_check
        %p1709 = pneg %p1708
      $region151: #{discriminator_forward.7} parent=5 // pred_check_branch
        %1711 = sbr.rel (%p1709) target = $region153
      $region152: #{discriminator_forward.7} parent=5 // pred_region
        %s1712 = ssub.s32 %s10, 2
        // Predicated region
        $region154: #{discriminator_forward.7} parent=152 // pred_check
          %p1713 = pneg %p157
        $region155: #{discriminator_forward.7} parent=152 // pred_check_branch
          %1715 = sbr.rel (%p1713) target = $region157
        $region156: #{discriminator_forward.7} parent=152 // pred_region
          %s1716 = sand.u32 %s142, 1
          %s1717 = sand.u32 %s142, 1
          %s1718 = smul.addr %s1717, 64
          %s1719 = scalar_lea.vmem [#allocation5], %s1718
        $region157: #{discriminator_forward.7} parent=152 // pred_fallthru
          _
      $region153: #{discriminator_forward.7} parent=5 // pred_fallthru
        _
    $region6: #{discriminator_forward.7} parent=1 // loop_footer
      %s14 = sadd.s32 1, %s10
    $region7: #{discriminator_forward.7} parent=1 // loop_footer_branch
      %9 = sbr.rel target = $region3
    $region8: #{discriminator_forward.7} parent=1 // loop_exit
      _

// kernel: discriminator_forward.8
$region0: #{discriminator_forward.8}
  #allocation0 [shape = 'u32[]', space=smem, size = 0x4, offset = 0x4, fixed_abs, tag = 'smem constant byte address 0x4 - core index']
  #allocation1 [shape = 'u32[72,128]{1,0:T(1,128)}', space=vmem, size = 0x9000, scoped, tag = 'internal scratch']
  #allocation2 [shape = 'f32[32,128]{1,0:T(8,128)}', space=vmem, size = 0x4000, scoped, tag = 'scratch operand']
  %s0 = inlined_call_operand.vmem [shape: bf16[32,4096], index: 0, kind: input, shape index: {}]
  %s1 = inlined_call_operand.vmem [shape: bf16[4096,512], index: 1, kind: input, shape index: {}]
  %s2 = inlined_call_operand.vmem [shape: f32[1,512], index: 2, kind: input, shape index: {}]
  %s3 = inlined_call_operand.vmem [shape: f32[1,512], index: 3, kind: input, shape index: {}]
  %s4 = inlined_call_operand.vmem [shape: bf16[32,512], index: 4, kind: output, shape index: {}]
  %s5 = sld [smem:[#allocation0]]
  $region158: #{discriminator_forward.8} parent=0
    _
  %s7 = ssub.s32 1, %s5
  %s8 = scalar_select 0, %s7, %s5
  $region1: #{discriminator_forward.8} parent=0
    #allocation3 [shape = 'u8[65536]{0}', space=vmem, size = 0x10000, scoped, tag = 'input window, operand 0']
    #allocation4 [shape = 'u8[262144]{0}', space=vmem, size = 0x40000, scoped, tag = 'input window, operand 1']
    #allocation5 [shape = 'u8[16384]{0}', space=vmem, size = 0x4000, scoped, tag = 'output window, operand 0']
    loop: start=0, step=1, limit=34
    $region2: #{discriminator_forward.8} parent=1 // loop_pre_header
      _
    $region3: #{discriminator_forward.8} parent=1 // loop_header
      %s10 = sphi 0, %s14
      %p11 = scmp.ge.s32.totalorder %s10, 34
      %s17 = sphi 0, %s29
      %s18 = sphi 0, %s25
      %s19 = sphi 0, %s17
      %s20 = sphi 0, %s18
      %s21 = sphi 0, %s19
      %s22 = sphi 0, %s20
      %s32 = sphi 0, %s34
      %s35 = sphi 0, %s32
      %s36 = sphi 0, %s35
      %s52 = sphi 0, %s36
      %s60 = sphi 0, %s62
      %s63 = sphi 0, %s60
      %s64 = sphi 0, %s63
      %s80 = sphi 0, %s64
      %s86 = sphi 0, %s88
      %s89 = sphi 0, %s86
      %s90 = sphi 0, %s89
      %s106 = sphi 0, %s90
      %s112 = sphi 0, %s114
      %s115 = sphi 0, %s112
      %s116 = sphi 0, %s115
      %s132 = sphi 0, %s116
      %s138 = sphi 0, %s140
      %s141 = sphi 0, %s138
      %s142 = sphi 0, %s141
      %s158 = sphi 0, %s142
    $region4: #{discriminator_forward.8} parent=1 // loop_header_branch
      %13 = sbr.rel (%p11) target = $region8
    $region5: #{discriminator_forward.8} parent=1 // loop_body
      %s15 = ssub.s32 %s10, 1
      %s16 = ssub.s32 %s10, 2
      %s23 = sadd.s32 1, %s18
      %p24 = scmp.ge.s32.totalorder %s23, 8
      %s25 = scalar_select %p24, 0, %s23
      %s26 = sadd.s32 1, %s17
      %s27 = scalar_select %p24, %s26, %s17
      %p28 = scmp.ge.s32.totalorder %s27, 4
      %s29 = scalar_select %p28, 0, %s27
      %s30 = ssub.s32 %s18, %s25
      %p31 = scmp.eq.s32.totalorder %s30, 0
      %s33 = sadd.s32 %s32, 1
      %s34 = scalar_select %p31, %s32, %s33
      %p37 = pneg %p31
      %p38 = scmp.eq.s32.totalorder %s10, 31
      %p39 = por %p37, %p38
      %p40 = scmp.ne.s32.totalorder %s32, %s35
      %p41 = scmp.eq.s32.totalorder %s10, 0
      %p42 = por %p40, %p41
      %p43 = scmp.ne.s32.totalorder %s32, %s35
      %p44 = scmp.eq.s32.totalorder %s15, 31
      %p45 = por %p43, %p44
      %p46 = scmp.ne.s32.totalorder %s35, %s36
      %p47 = scmp.eq.s32.totalorder %s15, 0
      %p48 = por %p46, %p47
      %p49 = scmp.ne.s32.totalorder %s35, %s36
      %p50 = scmp.eq.s32.totalorder %s16, 31
      %p51 = por %p49, %p50
      %p53 = scmp.ne.s32.totalorder %s36, %s52
      %p54 = scmp.eq.s32.totalorder %s16, 0
      %p55 = por %p53, %p54
      %s56 = ssub.s32 %s18, %s25
      %s57 = ssub.s32 %s17, %s29
      %s58 = sor.u32 %s56, %s57
      %p59 = scmp.eq.s32.totalorder %s58, 0
      %s61 = sadd.s32 %s60, 1
      %s62 = scalar_select %p59, %s60, %s61
      %p65 = pneg %p59
      %p66 = scmp.eq.s32.totalorder %s10, 31
      %p67 = por %p65, %p66
      %p68 = scmp.ne.s32.totalorder %s60, %s63
      %p69 = scmp.eq.s32.totalorder %s10, 0
      %p70 = por %p68, %p69
      %p71 = scmp.ne.s32.totalorder %s60, %s63
      %p72 = scmp.eq.s32.totalorder %s15, 31
      %p73 = por %p71, %p72
      %p74 = scmp.ne.s32.totalorder %s63, %s64
      %p75 = scmp.eq.s32.totalorder %s15, 0
      %p76 = por %p74, %p75
      %p77 = scmp.ne.s32.totalorder %s63, %s64
      %p78 = scmp.eq.s32.totalorder %s16, 31
      %p79 = por %p77, %p78
      %p81 = scmp.ne.s32.totalorder %s64, %s80
      %p82 = scmp.eq.s32.totalorder %s16, 0
      %p83 = por %p81, %p82
      %s84 = ssub.s32 %s17, %s29
      %p85 = scmp.eq.s32.totalorder %s84, 0
      %s87 = sadd.s32 %s86, 1
      %s88 = scalar_select %p85, %s86, %s87
      %p91 = pneg %p85
      %p92 = scmp.eq.s32.totalorder %s10, 31
      %p93 = por %p91, %p92
      %p94 = scmp.ne.s32.totalorder %s86, %s89
      %p95 = scmp.eq.s32.totalorder %s10, 0
      %p96 = por %p94, %p95
      %p97 = scmp.ne.s32.totalorder %s86, %s89
      %p98 = scmp.eq.s32.totalorder %s15, 31
      %p99 = por %p97, %p98
      %p100 = scmp.ne.s32.totalorder %s89, %s90
      %p101 = scmp.eq.s32.totalorder %s15, 0
      %p102 = por %p100, %p101
      %p103 = scmp.ne.s32.totalorder %s89, %s90
      %p104 = scmp.eq.s32.totalorder %s16, 31
      %p105 = por %p103, %p104
      %p107 = scmp.ne.s32.totalorder %s90, %s106
      %p108 = scmp.eq.s32.totalorder %s16, 0
      %p109 = por %p107, %p108
      %s110 = ssub.s32 %s17, %s29
      %p111 = scmp.eq.s32.totalorder %s110, 0
      %s113 = sadd.s32 %s112, 1
      %s114 = scalar_select %p111, %s112, %s113
      %p117 = pneg %p111
      %p118 = scmp.eq.s32.totalorder %s10, 31
      %p119 = por %p117, %p118
      %p120 = scmp.ne.s32.totalorder %s112, %s115
      %p121 = scmp.eq.s32.totalorder %s10, 0
      %p122 = por %p120, %p121
      %p123 = scmp.ne.s32.totalorder %s112, %s115
      %p124 = scmp.eq.s32.totalorder %s15, 31
      %p125 = por %p123, %p124
      %p126 = scmp.ne.s32.totalorder %s115, %s116
      %p127 = scmp.eq.s32.totalorder %s15, 0
      %p128 = por %p126, %p127
      %p129 = scmp.ne.s32.totalorder %s115, %s116
      %p130 = scmp.eq.s32.totalorder %s16, 31
      %p131 = por %p129, %p130
      %p133 = scmp.ne.s32.totalorder %s116, %s132
      %p134 = scmp.eq.s32.totalorder %s16, 0
      %p135 = por %p133, %p134
      %s136 = ssub.s32 %s17, %s29
      %p137 = scmp.eq.s32.totalorder %s136, 0
      %s139 = sadd.s32 %s138, 1
      %s140 = scalar_select %p137, %s138, %s139
      %p143 = pneg %p137
      %p144 = scmp.eq.s32.totalorder %s10, 31
      %p145 = por %p143, %p144
      %p146 = scmp.ne.s32.totalorder %s138, %s141
      %p147 = scmp.eq.s32.totalorder %s10, 0
      %p148 = por %p146, %p147
      %p149 = scmp.ne.s32.totalorder %s138, %s141
      %p150 = scmp.eq.s32.totalorder %s15, 31
      %p151 = por %p149, %p150
      %p152 = scmp.ne.s32.totalorder %s141, %s142
      %p153 = scmp.eq.s32.totalorder %s15, 0
      %p154 = por %p152, %p153
      %p155 = scmp.ne.s32.totalorder %s141, %s142
      %p156 = scmp.eq.s32.totalorder %s16, 31
      %p157 = por %p155, %p156
      %p159 = scmp.ne.s32.totalorder %s142, %s158
      %p160 = scmp.eq.s32.totalorder %s16, 0
      %p161 = por %p159, %p160
      %p162 = scmp.le.s32.totalorder 1, %s10
      %p163 = scmp.lt.s32.totalorder %s10, 33
      %p164 = pnand %p162, %p163
      %p165 = pneg %p164
      // Predicated region
      $region9: #{discriminator_forward.8} parent=5 // pred_check
        _
      $region10: #{discriminator_forward.8} parent=5 // pred_check_branch
        %167 = sbr.rel (%p164) target = $region12
      $region11: #{discriminator_forward.8} parent=5 // pred_region
        %s168 = ssub.s32 %s10, 1
      $region12: #{discriminator_forward.8} parent=5 // pred_fallthru
        _
      %p169 = scmp.lt.s32.totalorder %s10, 32
      // Predicated region
      $region13: #{discriminator_forward.8} parent=5 // pred_check
        %p170 = pneg %p169
      $region14: #{discriminator_forward.8} parent=5 // pred_check_branch
        %172 = sbr.rel (%p170) target = $region16
      $region15: #{discriminator_forward.8} parent=5 // pred_region
        // Predicated region
        $region17: #{discriminator_forward.8} parent=15 // pred_check
          %p173 = pneg %p42
        $region18: #{discriminator_forward.8} parent=15 // pred_check_branch
          %175 = sbr.rel (%p173) target = $region20
        $region19: #{discriminator_forward.8} parent=15 // pred_region
          %s176 = sand.u32 %s32, 1
          %s177 = sand.u32 %s32, 1
          %s178 = smul.addr %s177, 64
          %s179 = scalar_lea.vmem [#allocation3], %s178
          %s180 = smul.u32 4, %s18
          %s181 = smul.addr %s180, 4
          %s182 = scalar_lea.vmem %s0, %s181
          // Predicated region
          $region21: #{discriminator_forward.8} parent=19 // pred_check
            _
          $region22: #{discriminator_forward.8} parent=19 // pred_check_branch
            %184 = sbr.rel (0) target = $region24
          $region23: #{discriminator_forward.8} parent=19 // pred_region
            // Predicated region
            $region25: #{discriminator_forward.8} parent=23 // pred_check
              _
            $region26: #{discriminator_forward.8} parent=23 // pred_check_branch
              %186 = sbr.rel (0) target = $region28
            $region27: #{discriminator_forward.8} parent=23 // pred_region
              loop: start=0, step=1, limit=1
              $region29: #{discriminator_forward.8} parent=27 // loop_pre_header
                _
              $region30: #{discriminator_forward.8} parent=27 // loop_header
                %s188 = sphi 0, %s192
                %p189 = scmp.ge.s32.totalorder %s188, 1
                %s193 = sphi %s182, %s182
                %s194 = sphi %s179, %s179
              $region31: #{discriminator_forward.8} parent=27 // loop_header_branch
                %191 = sbr.rel (%p189) target = $region35
              $region32: #{discriminator_forward.8} parent=27 // loop_body
                %v195 = vld [vmem:[%s193] sm:$0xff]
                %196 = vst [vmem:[%s194] sm:$0xff] %v195
                %v197 = vld [vmem:[%s193 + $0x8] sm:$0xff]
                %198 = vst [vmem:[%s194 + $0x8] sm:$0xff] %v197
                %v199 = vld [vmem:[%s193 + $0x80] sm:$0xff]
                %200 = vst [vmem:[%s194 + $0x10] sm:$0xff] %v199
                %v201 = vld [vmem:[%s193 + $0x88] sm:$0xff]
                %202 = vst [vmem:[%s194 + $0x18] sm:$0xff] %v201
                %v203 = vld [vmem:[%s193 + $0x100] sm:$0xff]
                %204 = vst [vmem:[%s194 + $0x20] sm:$0xff] %v203
                %v205 = vld [vmem:[%s193 + $0x108] sm:$0xff]
                %206 = vst [vmem:[%s194 + $0x28] sm:$0xff] %v205
                %v207 = vld [vmem:[%s193 + $0x180] sm:$0xff]
                %208 = vst [vmem:[%s194 + $0x30] sm:$0xff] %v207
                %v209 = vld [vmem:[%s193 + $0x188] sm:$0xff]
                %210 = vst [vmem:[%s194 + $0x38] sm:$0xff] %v209
              $region33: #{discriminator_forward.8} parent=27 // loop_footer
                %s192 = sadd.s32 1, %s188
              $region34: #{discriminator_forward.8} parent=27 // loop_footer_branch
                %187 = sbr.rel target = $region30
              $region35: #{discriminator_forward.8} parent=27 // loop_exit
                _
            $region28: #{discriminator_forward.8} parent=23 // pred_fallthru
              _
            // Predicated region
            $region36: #{discriminator_forward.8} parent=23 // pred_check
              _
            $region37: #{discriminator_forward.8} parent=23 // pred_check_branch
              %212 = sbr.rel target = $region39
            $region38: #{discriminator_forward.8} parent=23 // pred_region
              _
            $region39: #{discriminator_forward.8} parent=23 // pred_fallthru
              _
          $region24: #{discriminator_forward.8} parent=19 // pred_fallthru
            _
          %213 = vnop
        $region20: #{discriminator_forward.8} parent=15 // pred_fallthru
          _
        // Predicated region
        $region40: #{discriminator_forward.8} parent=15 // pred_check
          %p214 = pneg %p70
        $region41: #{discriminator_forward.8} parent=15 // pred_check_branch
          %216 = sbr.rel (%p214) target = $region43
        $region42: #{discriminator_forward.8} parent=15 // pred_region
          %s217 = sand.u32 %s60, 1
          %s218 = sand.u32 %s60, 1
          %s219 = smul.addr %s218, 256
          %s220 = scalar_lea.vmem [#allocation4], %s219
          %s221 = smul.u32 64, %s18
          %s222 = smul.addr %s221, 4
          %s223 = sadd.s32 %s17, %s222
          %s224 = smul.addr %s223, 4
          %s225 = scalar_lea.vmem %s1, %s224
          // Predicated region
          $region44: #{discriminator_forward.8} parent=42 // pred_check
            _
          $region45: #{discriminator_forward.8} parent=42 // pred_check_branch
            %227 = sbr.rel (0) target = $region47
          $region46: #{discriminator_forward.8} parent=42 // pred_region
            // Predicated region
            $region48: #{discriminator_forward.8} parent=46 // pred_check
              _
            $region49: #{discriminator_forward.8} parent=46 // pred_check_branch
              %229 = sbr.rel target = $region51
            $region50: #{discriminator_forward.8} parent=46 // pred_region
              // Predicated region
              $region63: #{discriminator_forward.8} parent=50 // pred_check
                _
              $region64: #{discriminator_forward.8} parent=50 // pred_check_branch
                %371 = sbr.rel (0) target = $region66
              $region65: #{discriminator_forward.8} parent=50 // pred_region
                loop: start=0, step=1, limit=1
                $region67: #{discriminator_forward.8} parent=65 // loop_pre_header
                  _
                $region68: #{discriminator_forward.8} parent=65 // loop_header
                  %s373 = sphi 0, %s377
                  %p374 = scmp.ge.s32.totalorder %s373, 1
                  %s378 = sphi %s225, %s225
                  %s379 = sphi %s220, %s220
                $region69: #{discriminator_forward.8} parent=65 // loop_header_branch
                  %376 = sbr.rel (%p374) target = $region73
                $region70: #{discriminator_forward.8} parent=65 // loop_body
                  _
                $region71: #{discriminator_forward.8} parent=65 // loop_footer
                  %s377 = sadd.s32 1, %s373
                $region72: #{discriminator_forward.8} parent=65 // loop_footer_branch
                  %372 = sbr.rel target = $region68
                $region73: #{discriminator_forward.8} parent=65 // loop_exit
                  _
                %s381 = ssub.s32 16, 1
                loop: start=0, step=1, limit=1
                $region74: #{discriminator_forward.8} parent=65 // loop_pre_header
                  _
                $region75: #{discriminator_forward.8} parent=65 // loop_header
                  %s383 = sphi 0, %s387
                  %p384 = scmp.ge.s32.totalorder %s383, 1
                  %s388 = sphi %s225, %s225
                  %s389 = sphi %s220, %s220
                $region76: #{discriminator_forward.8} parent=65 // loop_header_branch
                  %386 = sbr.rel (%p384) target = $region80
                $region77: #{discriminator_forward.8} parent=65 // loop_body
                  %v390 = vld [vmem:[%s388] sm:%s381]
                  %391 = vst [vmem:[%s389] sm:%s381] %v390
                  %v392 = vld [vmem:[%s388 + $0x10] sm:%s381]
                  %393 = vst [vmem:[%s389 + $0x4] sm:%s381] %v392
                  %v394 = vld [vmem:[%s388 + $0x20] sm:%s381]
                  %395 = vst [vmem:[%s389 + $0x8] sm:%s381] %v394
                  %v396 = vld [vmem:[%s388 + $0x30] sm:%s381]
                  %397 = vst [vmem:[%s389 + $0xc] sm:%s381] %v396
                  %v398 = vld [vmem:[%s388 + $0x40] sm:%s381]
                  %399 = vst [vmem:[%s389 + $0x10] sm:%s381] %v398
                  %v400 = vld [vmem:[%s388 + $0x50] sm:%s381]
                  %401 = vst [vmem:[%s389 + $0x14] sm:%s381] %v400
                  %v402 = vld [vmem:[%s388 + $0x60] sm:%s381]
                  %403 = vst [vmem:[%s389 + $0x18] sm:%s381] %v402
                  %v404 = vld [vmem:[%s388 + $0x70] sm:%s381]
                  %405 = vst [vmem:[%s389 + $0x1c] sm:%s381] %v404
                  %v406 = vld [vmem:[%s388 + $0x80] sm:%s381]
                  %407 = vst [vmem:[%s389 + $0x20] sm:%s381] %v406
                  %v408 = vld [vmem:[%s388 + $0x90] sm:%s381]
                  %409 = vst [vmem:[%s389 + $0x24] sm:%s381] %v408
                  %v410 = vld [vmem:[%s388 + $0xa0] sm:%s381]
                  %411 = vst [vmem:[%s389 + $0x28] sm:%s381] %v410
                  %v412 = vld [vmem:[%s388 + $0xb0] sm:%s381]
                  %413 = vst [vmem:[%s389 + $0x2c] sm:%s381] %v412
                  %v414 = vld [vmem:[%s388 + $0xc0] sm:%s381]
                  %415 = vst [vmem:[%s389 + $0x30] sm:%s381] %v414
                  %v416 = vld [vmem:[%s388 + $0xd0] sm:%s381]
                  %417 = vst [vmem:[%s389 + $0x34] sm:%s381] %v416
                  %v418 = vld [vmem:[%s388 + $0xe0] sm:%s381]
                  %419 = vst [vmem:[%s389 + $0x38] sm:%s381] %v418
                  %v420 = vld [vmem:[%s388 + $0xf0] sm:%s381]
                  %421 = vst [vmem:[%s389 + $0x3c] sm:%s381] %v420
                  %v422 = vld [vmem:[%s388 + $0x100] sm:%s381]
                  %423 = vst [vmem:[%s389 + $0x40] sm:%s381] %v422
                  %v424 = vld [vmem:[%s388 + $0x110] sm:%s381]
                  %425 = vst [vmem:[%s389 + $0x44] sm:%s381] %v424
                  %v426 = vld [vmem:[%s388 + $0x120] sm:%s381]
                  %427 = vst [vmem:[%s389 + $0x48] sm:%s381] %v426
                  %v428 = vld [vmem:[%s388 + $0x130] sm:%s381]
                  %429 = vst [vmem:[%s389 + $0x4c] sm:%s381] %v428
                  %v430 = vld [vmem:[%s388 + $0x140] sm:%s381]
                  %431 = vst [vmem:[%s389 + $0x50] sm:%s381] %v430
                  %v432 = vld [vmem:[%s388 + $0x150] sm:%s381]
                  %433 = vst [vmem:[%s389 + $0x54] sm:%s381] %v432
                  %v434 = vld [vmem:[%s388 + $0x160] sm:%s381]
                  %435 = vst [vmem:[%s389 + $0x58] sm:%s381] %v434
                  %v436 = vld [vmem:[%s388 + $0x170] sm:%s381]
                  %437 = vst [vmem:[%s389 + $0x5c] sm:%s381] %v436
                  %v438 = vld [vmem:[%s388 + $0x180] sm:%s381]
                  %439 = vst [vmem:[%s389 + $0x60] sm:%s381] %v438
                  %v440 = vld [vmem:[%s388 + $0x190] sm:%s381]
                  %441 = vst [vmem:[%s389 + $0x64] sm:%s381] %v440
                  %v442 = vld [vmem:[%s388 + $0x1a0] sm:%s381]
                  %443 = vst [vmem:[%s389 + $0x68] sm:%s381] %v442
                  %v444 = vld [vmem:[%s388 + $0x1b0] sm:%s381]
                  %445 = vst [vmem:[%s389 + $0x6c] sm:%s381] %v444
                  %v446 = vld [vmem:[%s388 + $0x1c0] sm:%s381]
                  %447 = vst [vmem:[%s389 + $0x70] sm:%s381] %v446
                  %v448 = vld [vmem:[%s388 + $0x1d0] sm:%s381]
                  %449 = vst [vmem:[%s389 + $0x74] sm:%s381] %v448
                  %v450 = vld [vmem:[%s388 + $0x1e0] sm:%s381]
                  %451 = vst [vmem:[%s389 + $0x78] sm:%s381] %v450
                  %v452 = vld [vmem:[%s388 + $0x1f0] sm:%s381]
                  %453 = vst [vmem:[%s389 + $0x7c] sm:%s381] %v452
                  %v454 = vld [vmem:[%s388 + $0x200] sm:%s381]
                  %455 = vst [vmem:[%s389 + $0x80] sm:%s381] %v454
                  %v456 = vld [vmem:[%s388 + $0x210] sm:%s381]
                  %457 = vst [vmem:[%s389 + $0x84] sm:%s381] %v456
                  %v458 = vld [vmem:[%s388 + $0x220] sm:%s381]
                  %459 = vst [vmem:[%s389 + $0x88] sm:%s381] %v458
                  %v460 = vld [vmem:[%s388 + $0x230] sm:%s381]
                  %461 = vst [vmem:[%s389 + $0x8c] sm:%s381] %v460
                  %v462 = vld [vmem:[%s388 + $0x240] sm:%s381]
                  %463 = vst [vmem:[%s389 + $0x90] sm:%s381] %v462
                  %v464 = vld [vmem:[%s388 + $0x250] sm:%s381]
                  %465 = vst [vmem:[%s389 + $0x94] sm:%s381] %v464
                  %v466 = vld [vmem:[%s388 + $0x260] sm:%s381]
                  %467 = vst [vmem:[%s389 + $0x98] sm:%s381] %v466
                  %v468 = vld [vmem:[%s388 + $0x270] sm:%s381]
                  %469 = vst [vmem:[%s389 + $0x9c] sm:%s381] %v468
                  %v470 = vld [vmem:[%s388 + $0x280] sm:%s381]
                  %471 = vst [vmem:[%s389 + $0xa0] sm:%s381] %v470
                  %v472 = vld [vmem:[%s388 + $0x290] sm:%s381]
                  %473 = vst [vmem:[%s389 + $0xa4] sm:%s381] %v472
                  %v474 = vld [vmem:[%s388 + $0x2a0] sm:%s381]
                  %475 = vst [vmem:[%s389 + $0xa8] sm:%s381] %v474
                  %v476 = vld [vmem:[%s388 + $0x2b0] sm:%s381]
                  %477 = vst [vmem:[%s389 + $0xac] sm:%s381] %v476
                  %v478 = vld [vmem:[%s388 + $0x2c0] sm:%s381]
                  %479 = vst [vmem:[%s389 + $0xb0] sm:%s381] %v478
                  %v480 = vld [vmem:[%s388 + $0x2d0] sm:%s381]
                  %481 = vst [vmem:[%s389 + $0xb4] sm:%s381] %v480
                  %v482 = vld [vmem:[%s388 + $0x2e0] sm:%s381]
                  %483 = vst [vmem:[%s389 + $0xb8] sm:%s381] %v482
                  %v484 = vld [vmem:[%s388 + $0x2f0] sm:%s381]
                  %485 = vst [vmem:[%s389 + $0xbc] sm:%s381] %v484
                  %v486 = vld [vmem:[%s388 + $0x300] sm:%s381]
                  %487 = vst [vmem:[%s389 + $0xc0] sm:%s381] %v486
                  %v488 = vld [vmem:[%s388 + $0x310] sm:%s381]
                  %489 = vst [vmem:[%s389 + $0xc4] sm:%s381] %v488
                  %v490 = vld [vmem:[%s388 + $0x320] sm:%s381]
                  %491 = vst [vmem:[%s389 + $0xc8] sm:%s381] %v490
                  %v492 = vld [vmem:[%s388 + $0x330] sm:%s381]
                  %493 = vst [vmem:[%s389 + $0xcc] sm:%s381] %v492
                  %v494 = vld [vmem:[%s388 + $0x340] sm:%s381]
                  %495 = vst [vmem:[%s389 + $0xd0] sm:%s381] %v494
                  %v496 = vld [vmem:[%s388 + $0x350] sm:%s381]
                  %497 = vst [vmem:[%s389 + $0xd4] sm:%s381] %v496
                  %v498 = vld [vmem:[%s388 + $0x360] sm:%s381]
                  %499 = vst [vmem:[%s389 + $0xd8] sm:%s381] %v498
                  %v500 = vld [vmem:[%s388 + $0x370] sm:%s381]
                  %501 = vst [vmem:[%s389 + $0xdc] sm:%s381] %v500
                  %v502 = vld [vmem:[%s388 + $0x380] sm:%s381]
                  %503 = vst [vmem:[%s389 + $0xe0] sm:%s381] %v502
                  %v504 = vld [vmem:[%s388 + $0x390] sm:%s381]
                  %505 = vst [vmem:[%s389 + $0xe4] sm:%s381] %v504
                  %v506 = vld [vmem:[%s388 + $0x3a0] sm:%s381]
                  %507 = vst [vmem:[%s389 + $0xe8] sm:%s381] %v506
                  %v508 = vld [vmem:[%s388 + $0x3b0] sm:%s381]
                  %509 = vst [vmem:[%s389 + $0xec] sm:%s381] %v508
                  %v510 = vld [vmem:[%s388 + $0x3c0] sm:%s381]
                  %511 = vst [vmem:[%s389 + $0xf0] sm:%s381] %v510
                  %v512 = vld [vmem:[%s388 + $0x3d0] sm:%s381]
                  %513 = vst [vmem:[%s389 + $0xf4] sm:%s381] %v512
                  %v514 = vld [vmem:[%s388 + $0x3e0] sm:%s381]
                  %515 = vst [vmem:[%s389 + $0xf8] sm:%s381] %v514
                  %v516 = vld [vmem:[%s388 + $0x3f0] sm:%s381]
                  %517 = vst [vmem:[%s389 + $0xfc] sm:%s381] %v516
                $region78: #{discriminator_forward.8} parent=65 // loop_footer
                  %s387 = sadd.s32 1, %s383
                $region79: #{discriminator_forward.8} parent=65 // loop_footer_branch
                  %382 = sbr.rel target = $region75
                $region80: #{discriminator_forward.8} parent=65 // loop_exit
                  _
              $region66: #{discriminator_forward.8} parent=50 // pred_fallthru
                _
            $region51: #{discriminator_forward.8} parent=46 // pred_fallthru
              _
            // Predicated region
            $region52: #{discriminator_forward.8} parent=46 // pred_check
              _
            $region53: #{discriminator_forward.8} parent=46 // pred_check_branch
              %231 = sbr.rel (0) target = $region55
            $region54: #{discriminator_forward.8} parent=46 // pred_region
              %s233 = ssub.s32 16, 1
              loop: start=0, step=1, limit=1
              $region56: #{discriminator_forward.8} parent=54 // loop_pre_header
                _
              $region57: #{discriminator_forward.8} parent=54 // loop_header
                %s235 = sphi 0, %s239
                %p236 = scmp.ge.s32.totalorder %s235, 1
                %s240 = sphi %s225, %s225
                %s241 = sphi %s220, %s220
              $region58: #{discriminator_forward.8} parent=54 // loop_header_branch
                %238 = sbr.rel (%p236) target = $region62
              $region59: #{discriminator_forward.8} parent=54 // loop_body
                %v242 = vld [vmem:[%s240] sm:%s233]
                %243 = vst [vmem:[%s241] sm:%s233] %v242
                %v244 = vld [vmem:[%s240 + $0x10] sm:%s233]
                %245 = vst [vmem:[%s241 + $0x4] sm:%s233] %v244
                %v246 = vld [vmem:[%s240 + $0x20] sm:%s233]
                %247 = vst [vmem:[%s241 + $0x8] sm:%s233] %v246
                %v248 = vld [vmem:[%s240 + $0x30] sm:%s233]
                %249 = vst [vmem:[%s241 + $0xc] sm:%s233] %v248
                %v250 = vld [vmem:[%s240 + $0x40] sm:%s233]
                %251 = vst [vmem:[%s241 + $0x10] sm:%s233] %v250
                %v252 = vld [vmem:[%s240 + $0x50] sm:%s233]
                %253 = vst [vmem:[%s241 + $0x14] sm:%s233] %v252
                %v254 = vld [vmem:[%s240 + $0x60] sm:%s233]
                %255 = vst [vmem:[%s241 + $0x18] sm:%s233] %v254
                %v256 = vld [vmem:[%s240 + $0x70] sm:%s233]
                %257 = vst [vmem:[%s241 + $0x1c] sm:%s233] %v256
                %v258 = vld [vmem:[%s240 + $0x80] sm:%s233]
                %259 = vst [vmem:[%s241 + $0x20] sm:%s233] %v258
                %v260 = vld [vmem:[%s240 + $0x90] sm:%s233]
                %261 = vst [vmem:[%s241 + $0x24] sm:%s233] %v260
                %v262 = vld [vmem:[%s240 + $0xa0] sm:%s233]
                %263 = vst [vmem:[%s241 + $0x28] sm:%s233] %v262
                %v264 = vld [vmem:[%s240 + $0xb0] sm:%s233]
                %265 = vst [vmem:[%s241 + $0x2c] sm:%s233] %v264
                %v266 = vld [vmem:[%s240 + $0xc0] sm:%s233]
                %267 = vst [vmem:[%s241 + $0x30] sm:%s233] %v266
                %v268 = vld [vmem:[%s240 + $0xd0] sm:%s233]
                %269 = vst [vmem:[%s241 + $0x34] sm:%s233] %v268
                %v270 = vld [vmem:[%s240 + $0xe0] sm:%s233]
                %271 = vst [vmem:[%s241 + $0x38] sm:%s233] %v270
                %v272 = vld [vmem:[%s240 + $0xf0] sm:%s233]
                %273 = vst [vmem:[%s241 + $0x3c] sm:%s233] %v272
                %v274 = vld [vmem:[%s240 + $0x100] sm:%s233]
                %275 = vst [vmem:[%s241 + $0x40] sm:%s233] %v274
                %v276 = vld [vmem:[%s240 + $0x110] sm:%s233]
                %277 = vst [vmem:[%s241 + $0x44] sm:%s233] %v276
                %v278 = vld [vmem:[%s240 + $0x120] sm:%s233]
                %279 = vst [vmem:[%s241 + $0x48] sm:%s233] %v278
                %v280 = vld [vmem:[%s240 + $0x130] sm:%s233]
                %281 = vst [vmem:[%s241 + $0x4c] sm:%s233] %v280
                %v282 = vld [vmem:[%s240 + $0x140] sm:%s233]
                %283 = vst [vmem:[%s241 + $0x50] sm:%s233] %v282
                %v284 = vld [vmem:[%s240 + $0x150] sm:%s233]
                %285 = vst [vmem:[%s241 + $0x54] sm:%s233] %v284
                %v286 = vld [vmem:[%s240 + $0x160] sm:%s233]
                %287 = vst [vmem:[%s241 + $0x58] sm:%s233] %v286
                %v288 = vld [vmem:[%s240 + $0x170] sm:%s233]
                %289 = vst [vmem:[%s241 + $0x5c] sm:%s233] %v288
                %v290 = vld [vmem:[%s240 + $0x180] sm:%s233]
                %291 = vst [vmem:[%s241 + $0x60] sm:%s233] %v290
                %v292 = vld [vmem:[%s240 + $0x190] sm:%s233]
                %293 = vst [vmem:[%s241 + $0x64] sm:%s233] %v292
                %v294 = vld [vmem:[%s240 + $0x1a0] sm:%s233]
                %295 = vst [vmem:[%s241 + $0x68] sm:%s233] %v294
                %v296 = vld [vmem:[%s240 + $0x1b0] sm:%s233]
                %297 = vst [vmem:[%s241 + $0x6c] sm:%s233] %v296
                %v298 = vld [vmem:[%s240 + $0x1c0] sm:%s233]
                %299 = vst [vmem:[%s241 + $0x70] sm:%s233] %v298
                %v300 = vld [vmem:[%s240 + $0x1d0] sm:%s233]
                %301 = vst [vmem:[%s241 + $0x74] sm:%s233] %v300
                %v302 = vld [vmem:[%s240 + $0x1e0] sm:%s233]
                %303 = vst [vmem:[%s241 + $0x78] sm:%s233] %v302
                %v304 = vld [vmem:[%s240 + $0x1f0] sm:%s233]
                %305 = vst [vmem:[%s241 + $0x7c] sm:%s233] %v304
                %v306 = vld [vmem:[%s240 + $0x200] sm:%s233]
                %307 = vst [vmem:[%s241 + $0x80] sm:%s233] %v306
                %v308 = vld [vmem:[%s240 + $0x210] sm:%s233]
                %309 = vst [vmem:[%s241 + $0x84] sm:%s233] %v308
                %v310 = vld [vmem:[%s240 + $0x220] sm:%s233]
                %311 = vst [vmem:[%s241 + $0x88] sm:%s233] %v310
                %v312 = vld [vmem:[%s240 + $0x230] sm:%s233]
                %313 = vst [vmem:[%s241 + $0x8c] sm:%s233] %v312
                %v314 = vld [vmem:[%s240 + $0x240] sm:%s233]
                %315 = vst [vmem:[%s241 + $0x90] sm:%s233] %v314
                %v316 = vld [vmem:[%s240 + $0x250] sm:%s233]
                %317 = vst [vmem:[%s241 + $0x94] sm:%s233] %v316
                %v318 = vld [vmem:[%s240 + $0x260] sm:%s233]
                %319 = vst [vmem:[%s241 + $0x98] sm:%s233] %v318
                %v320 = vld [vmem:[%s240 + $0x270] sm:%s233]
                %321 = vst [vmem:[%s241 + $0x9c] sm:%s233] %v320
                %v322 = vld [vmem:[%s240 + $0x280] sm:%s233]
                %323 = vst [vmem:[%s241 + $0xa0] sm:%s233] %v322
                %v324 = vld [vmem:[%s240 + $0x290] sm:%s233]
                %325 = vst [vmem:[%s241 + $0xa4] sm:%s233] %v324
                %v326 = vld [vmem:[%s240 + $0x2a0] sm:%s233]
                %327 = vst [vmem:[%s241 + $0xa8] sm:%s233] %v326
                %v328 = vld [vmem:[%s240 + $0x2b0] sm:%s233]
                %329 = vst [vmem:[%s241 + $0xac] sm:%s233] %v328
                %v330 = vld [vmem:[%s240 + $0x2c0] sm:%s233]
                %331 = vst [vmem:[%s241 + $0xb0] sm:%s233] %v330
                %v332 = vld [vmem:[%s240 + $0x2d0] sm:%s233]
                %333 = vst [vmem:[%s241 + $0xb4] sm:%s233] %v332
                %v334 = vld [vmem:[%s240 + $0x2e0] sm:%s233]
                %335 = vst [vmem:[%s241 + $0xb8] sm:%s233] %v334
                %v336 = vld [vmem:[%s240 + $0x2f0] sm:%s233]
                %337 = vst [vmem:[%s241 + $0xbc] sm:%s233] %v336
                %v338 = vld [vmem:[%s240 + $0x300] sm:%s233]
                %339 = vst [vmem:[%s241 + $0xc0] sm:%s233] %v338
                %v340 = vld [vmem:[%s240 + $0x310] sm:%s233]
                %341 = vst [vmem:[%s241 + $0xc4] sm:%s233] %v340
                %v342 = vld [vmem:[%s240 + $0x320] sm:%s233]
                %343 = vst [vmem:[%s241 + $0xc8] sm:%s233] %v342
                %v344 = vld [vmem:[%s240 + $0x330] sm:%s233]
                %345 = vst [vmem:[%s241 + $0xcc] sm:%s233] %v344
                %v346 = vld [vmem:[%s240 + $0x340] sm:%s233]
                %347 = vst [vmem:[%s241 + $0xd0] sm:%s233] %v346
                %v348 = vld [vmem:[%s240 + $0x350] sm:%s233]
                %349 = vst [vmem:[%s241 + $0xd4] sm:%s233] %v348
                %v350 = vld [vmem:[%s240 + $0x360] sm:%s233]
                %351 = vst [vmem:[%s241 + $0xd8] sm:%s233] %v350
                %v352 = vld [vmem:[%s240 + $0x370] sm:%s233]
                %353 = vst [vmem:[%s241 + $0xdc] sm:%s233] %v352
                %v354 = vld [vmem:[%s240 + $0x380] sm:%s233]
                %355 = vst [vmem:[%s241 + $0xe0] sm:%s233] %v354
                %v356 = vld [vmem:[%s240 + $0x390] sm:%s233]
                %357 = vst [vmem:[%s241 + $0xe4] sm:%s233] %v356
                %v358 = vld [vmem:[%s240 + $0x3a0] sm:%s233]
                %359 = vst [vmem:[%s241 + $0xe8] sm:%s233] %v358
                %v360 = vld [vmem:[%s240 + $0x3b0] sm:%s233]
                %361 = vst [vmem:[%s241 + $0xec] sm:%s233] %v360
                %v362 = vld [vmem:[%s240 + $0x3c0] sm:%s233]
                %363 = vst [vmem:[%s241 + $0xf0] sm:%s233] %v362
                %v364 = vld [vmem:[%s240 + $0x3d0] sm:%s233]
                %365 = vst [vmem:[%s241 + $0xf4] sm:%s233] %v364
                %v366 = vld [vmem:[%s240 + $0x3e0] sm:%s233]
                %367 = vst [vmem:[%s241 + $0xf8] sm:%s233] %v366
                %v368 = vld [vmem:[%s240 + $0x3f0] sm:%s233]
                %369 = vst [vmem:[%s241 + $0xfc] sm:%s233] %v368
              $region60: #{discriminator_forward.8} parent=54 // loop_footer
                %s239 = sadd.s32 1, %s235
              $region61: #{discriminator_forward.8} parent=54 // loop_footer_branch
                %234 = sbr.rel target = $region57
              $region62: #{discriminator_forward.8} parent=54 // loop_exit
                _
            $region55: #{discriminator_forward.8} parent=46 // pred_fallthru
              _
          $region47: #{discriminator_forward.8} parent=42 // pred_fallthru
            _
          %518 = vnop
        $region43: #{discriminator_forward.8} parent=15 // pred_fallthru
          _
        // Predicated region
        $region81: #{discriminator_forward.8} parent=15 // pred_check
          %p519 = pneg %p96
        $region82: #{discriminator_forward.8} parent=15 // pred_check_branch
          %521 = sbr.rel (%p519) target = $region84
        $region83: #{discriminator_forward.8} parent=15 // pred_region
          %p522 = scmp.lt.s32.totalorder %s17, 3
          %s523 = scalar_select %p522, %s17, 3
          %s524 = scalar_lea.vmem %s2, %s523
        $region84: #{discriminator_forward.8} parent=15 // pred_fallthru
          _
        // Predicated region
        $region85: #{discriminator_forward.8} parent=15 // pred_check
          %p525 = pneg %p122
        $region86: #{discriminator_forward.8} parent=15 // pred_check_branch
          %527 = sbr.rel (%p525) target = $region88
        $region87: #{discriminator_forward.8} parent=15 // pred_region
          %p528 = scmp.lt.s32.totalorder %s17, 3
          %s529 = scalar_select %p528, %s17, 3
          %s530 = scalar_lea.vmem %s3, %s529
        $region88: #{discriminator_forward.8} parent=15 // pred_fallthru
          _
      $region16: #{discriminator_forward.8} parent=5 // pred_fallthru
        _
      %p531 = scmp.le.s32.totalorder 1, %s10
      %p532 = scmp.lt.s32.totalorder %s10, 33
      %p533 = pnand %p531, %p532
      %p534 = pneg %p533
      // Predicated region
      $region89: #{discriminator_forward.8} parent=5 // pred_check
        _
      $region90: #{discriminator_forward.8} parent=5 // pred_check_branch
        %536 = sbr.rel (%p533) target = $region92
      $region91: #{discriminator_forward.8} parent=5 // pred_region
        %s537 = ssub.s32 %s10, 1
        %s538 = sand.u32 %s35, 1
        %s539 = sand.u32 %s35, 1
        %s540 = smul.addr %s539, 64
        %s541 = scalar_lea.vmem [#allocation3], %s540
        // Predicated region
        $region93: #{discriminator_forward.8} parent=91 // pred_check
          %p542 = pneg %p48
        $region94: #{discriminator_forward.8} parent=91 // pred_check_branch
          %544 = sbr.rel (%p542) target = $region96
        $region95: #{discriminator_forward.8} parent=91 // pred_region
          _
        $region96: #{discriminator_forward.8} parent=91 // pred_fallthru
          _
        %s545 = sand.u32 %s63, 1
        %s546 = sand.u32 %s63, 1
        %s547 = smul.addr %s546, 256
        %s548 = scalar_lea.vmem [#allocation4], %s547
        // Predicated region
        $region97: #{discriminator_forward.8} parent=91 // pred_check
          %p549 = pneg %p76
        $region98: #{discriminator_forward.8} parent=91 // pred_check_branch
          %551 = sbr.rel (%p549) target = $region100
        $region99: #{discriminator_forward.8} parent=91 // pred_region
          _
        $region100: #{discriminator_forward.8} parent=91 // pred_fallthru
          _
        %s552 = sand.u32 %s35, 1
        %s553 = sand.u32 %s35, 1
        %s554 = smul.addr %s553, 64
        %s555 = scalar_lea.vmem [#allocation3], %s554
        %p556 = pneg %p48
        %p557 = pneg %p45
        %s558 = sand.u32 %s63, 1
        %s559 = sand.u32 %s63, 1
        %s560 = smul.addr %s559, 256
        %s561 = scalar_lea.vmem [#allocation4], %s560
        %p562 = pneg %p76
        %p563 = pneg %p73
        %p564 = scmp.lt.s32.totalorder %s19, 3
        %s565 = scalar_select %p564, %s19, 3
        %s566 = scalar_lea.vmem %s2, %s565
        %p567 = pneg %p102
        %p568 = pneg %p99
        %p569 = scmp.lt.s32.totalorder %s19, 3
        %s570 = scalar_select %p569, %s19, 3
        %s571 = scalar_lea.vmem %s3, %s570
        %p572 = pneg %p128
        %p573 = pneg %p125
        %p574 = pneg %p154
        %p575 = pneg %p151
        %s576 = sand.u32 %s141, 1
        %s577 = sand.u32 %s141, 1
        %s578 = smul.addr %s577, 16
        %s579 = scalar_lea.vmem [#allocation5], %s578
        %s580 = smul.u32 4, %s20
        %s581 = smul.u32 64, %s20
        %p582 = scmp.lt.s32.totalorder %s19, 3
        %s583 = scalar_select %p582, %s19, 3
        %s584 = scalar_lea.vmem %s2, %s583
        %p585 = scmp.lt.s32.totalorder %s19, 3
        %s586 = scalar_select %p585, %s19, 3
        %s587 = scalar_lea.vmem %s3, %s586
        %p588 = scmp.eq.s32.totalorder %s20, 0
        // Predicated region
        $region101: #{discriminator_forward.8} parent=91 // pred_check
          %p589 = pneg %p588
        $region102: #{discriminator_forward.8} parent=91 // pred_check_branch
          %591 = sbr.rel (%p589) target = $region104
        $region103: #{discriminator_forward.8} parent=91 // pred_region
          %592 = vst [vmem:[#allocation2] sm:$0xff] 0.0
          %593 = vst [vmem:[#allocation2 + $0x8] sm:$0xff] 0.0
          %594 = vst [vmem:[#allocation2 + $0x10] sm:$0xff] 0.0
          %595 = vst [vmem:[#allocation2 + $0x18] sm:$0xff] 0.0
        $region104: #{discriminator_forward.8} parent=91 // pred_fallthru
          _
        %v596 = vld [vmem:[#allocation2] sm:$0xff]
        %v597 = vld [vmem:[#allocation2 + $0x8] sm:$0xff]
        %v598 = vld [vmem:[#allocation2 + $0x10] sm:$0xff]
        %v599 = vld [vmem:[#allocation2 + $0x18] sm:$0xff]
        %v600 = vld [vmem:[%s541] sm:$0xff]
        %v601 = vld [vmem:[%s541 + $0x8] sm:$0xff]
        %v602 = vld [vmem:[%s541 + $0x10] sm:$0xff]
        %v603 = vld [vmem:[%s541 + $0x18] sm:$0xff]
        %v604 = vld [vmem:[%s541 + $0x20] sm:$0xff]
        %v605 = vld [vmem:[%s541 + $0x28] sm:$0xff]
        %v606 = vld [vmem:[%s541 + $0x30] sm:$0xff]
        %v607 = vld [vmem:[%s541 + $0x38] sm:$0xff]
        %v608 = vld [vmem:[%s548] sm:$0xf]
        %v609 = vld [vmem:[%s548 + $0x4] sm:$0xf]
        %v610 = vld [vmem:[%s548 + $0x8] sm:$0xf]
        %v611 = vld [vmem:[%s548 + $0xc] sm:$0xf]
        %v612 = vld [vmem:[%s548 + $0x10] sm:$0xf]
        %v613 = vld [vmem:[%s548 + $0x14] sm:$0xf]
        %v614 = vld [vmem:[%s548 + $0x18] sm:$0xf]
        %v615 = vld [vmem:[%s548 + $0x1c] sm:$0xf]
        %v616 = vld [vmem:[%s548 + $0x20] sm:$0xf]
        %v617 = vld [vmem:[%s548 + $0x24] sm:$0xf]
        %v618 = vld [vmem:[%s548 + $0x28] sm:$0xf]
        %v619 = vld [vmem:[%s548 + $0x2c] sm:$0xf]
        %v620 = vld [vmem:[%s548 + $0x30] sm:$0xf]
        %v621 = vld [vmem:[%s548 + $0x34] sm:$0xf]
        %v622 = vld [vmem:[%s548 + $0x38] sm:$0xf]
        %v623 = vld [vmem:[%s548 + $0x3c] sm:$0xf]
        %v624 = vld [vmem:[%s548 + $0x40] sm:$0xf]
        %v625 = vld [vmem:[%s548 + $0x44] sm:$0xf]
        %v626 = vld [vmem:[%s548 + $0x48] sm:$0xf]
        %v627 = vld [vmem:[%s548 + $0x4c] sm:$0xf]
        %v628 = vld [vmem:[%s548 + $0x50] sm:$0xf]
        %v629 = vld [vmem:[%s548 + $0x54] sm:$0xf]
        %v630 = vld [vmem:[%s548 + $0x58] sm:$0xf]
        %v631 = vld [vmem:[%s548 + $0x5c] sm:$0xf]
        %v632 = vld [vmem:[%s548 + $0x60] sm:$0xf]
        %v633 = vld [vmem:[%s548 + $0x64] sm:$0xf]
        %v634 = vld [vmem:[%s548 + $0x68] sm:$0xf]
        %v635 = vld [vmem:[%s548 + $0x6c] sm:$0xf]
        %v636 = vld [vmem:[%s548 + $0x70] sm:$0xf]
        %v637 = vld [vmem:[%s548 + $0x74] sm:$0xf]
        %v638 = vld [vmem:[%s548 + $0x78] sm:$0xf]
        %v639 = vld [vmem:[%s548 + $0x7c] sm:$0xf]
        %v640 = vld [vmem:[%s548 + $0x80] sm:$0xf]
        %v641 = vld [vmem:[%s548 + $0x84] sm:$0xf]
        %v642 = vld [vmem:[%s548 + $0x88] sm:$0xf]
        %v643 = vld [vmem:[%s548 + $0x8c] sm:$0xf]
        %v644 = vld [vmem:[%s548 + $0x90] sm:$0xf]
        %v645 = vld [vmem:[%s548 + $0x94] sm:$0xf]
        %v646 = vld [vmem:[%s548 + $0x98] sm:$0xf]
        %v647 = vld [vmem:[%s548 + $0x9c] sm:$0xf]
        %v648 = vld [vmem:[%s548 + $0xa0] sm:$0xf]
        %v649 = vld [vmem:[%s548 + $0xa4] sm:$0xf]
        %v650 = vld [vmem:[%s548 + $0xa8] sm:$0xf]
        %v651 = vld [vmem:[%s548 + $0xac] sm:$0xf]
        %v652 = vld [vmem:[%s548 + $0xb0] sm:$0xf]
        %v653 = vld [vmem:[%s548 + $0xb4] sm:$0xf]
        %v654 = vld [vmem:[%s548 + $0xb8] sm:$0xf]
        %v655 = vld [vmem:[%s548 + $0xbc] sm:$0xf]
        %v656 = vld [vmem:[%s548 + $0xc0] sm:$0xf]
        %v657 = vld [vmem:[%s548 + $0xc4] sm:$0xf]
        %v658 = vld [vmem:[%s548 + $0xc8] sm:$0xf]
        %v659 = vld [vmem:[%s548 + $0xcc] sm:$0xf]
        %v660 = vld [vmem:[%s548 + $0xd0] sm:$0xf]
        %v661 = vld [vmem:[%s548 + $0xd4] sm:$0xf]
        %v662 = vld [vmem:[%s548 + $0xd8] sm:$0xf]
        %v663 = vld [vmem:[%s548 + $0xdc] sm:$0xf]
        %v664 = vld [vmem:[%s548 + $0xe0] sm:$0xf]
        %v665 = vld [vmem:[%s548 + $0xe4] sm:$0xf]
        %v666 = vld [vmem:[%s548 + $0xe8] sm:$0xf]
        %v667 = vld [vmem:[%s548 + $0xec] sm:$0xf]
        %v668 = vld [vmem:[%s548 + $0xf0] sm:$0xf]
        %v669 = vld [vmem:[%s548 + $0xf4] sm:$0xf]
        %v670 = vld [vmem:[%s548 + $0xf8] sm:$0xf]
        %v671 = vld [vmem:[%s548 + $0xfc] sm:$0xf]
        %v680 = vunpack.c.l.b16 %v600
        %v681 = vunpack.c.h.b16 %v600
        %v682 = vunpack.c.l.b16 %v601
        %v683 = vunpack.c.h.b16 %v601
        %v684 = vunpack.c.l.b16 %v602
        %v685 = vunpack.c.h.b16 %v602
        %v686 = vunpack.c.l.b16 %v603
        %v687 = vunpack.c.h.b16 %v603
        %v688 = vunpack.c.l.b16 %v604
        %v689 = vunpack.c.h.b16 %v604
        %v690 = vunpack.c.l.b16 %v605
        %v691 = vunpack.c.h.b16 %v605
        %v692 = vunpack.c.l.b16 %v606
        %v693 = vunpack.c.h.b16 %v606
        %v694 = vunpack.c.l.b16 %v607
        %v695 = vunpack.c.h.b16 %v607
        %v696 = vpack.c.b16 %v684, %v680
        %v697 = vpack.c.b16 %v685, %v681
        %v698 = vpack.c.b16 %v686, %v682
        %v699 = vpack.c.b16 %v687, %v683
        %v700 = vpack.c.b16 %v692, %v688
        %v701 = vpack.c.b16 %v693, %v689
        %v702 = vpack.c.b16 %v694, %v690
        %v703 = vpack.c.b16 %v695, %v691
        %v776 = vunpack.c.l.b16 %v608
        %v777 = vunpack.c.l.b16 %v609
        %v778 = vunpack.c.l.b16 %v610
        %v779 = vunpack.c.l.b16 %v611
        %v780 = vunpack.c.l.b16 %v612
        %v781 = vunpack.c.l.b16 %v613
        %v782 = vunpack.c.l.b16 %v614
        %v783 = vunpack.c.l.b16 %v615
        %v784 = vunpack.c.l.b16 %v616
        %v785 = vunpack.c.l.b16 %v617
        %v786 = vunpack.c.l.b16 %v618
        %v787 = vunpack.c.l.b16 %v619
        %v788 = vunpack.c.l.b16 %v620
        %v789 = vunpack.c.l.b16 %v621
        %v790 = vunpack.c.l.b16 %v622
        %v791 = vunpack.c.l.b16 %v623
        %v792 = vunpack.c.l.b16 %v624
        %v793 = vunpack.c.l.b16 %v625
        %v794 = vunpack.c.l.b16 %v626
        %v795 = vunpack.c.l.b16 %v627
        %v796 = vunpack.c.l.b16 %v628
        %v797 = vunpack.c.l.b16 %v629
        %v798 = vunpack.c.l.b16 %v630
        %v799 = vunpack.c.l.b16 %v631
        %v800 = vunpack.c.l.b16 %v632
        %v801 = vunpack.c.l.b16 %v633
        %v802 = vunpack.c.l.b16 %v634
        %v803 = vunpack.c.l.b16 %v635
        %v804 = vunpack.c.l.b16 %v636
        %v805 = vunpack.c.l.b16 %v637
        %v806 = vunpack.c.l.b16 %v638
        %v807 = vunpack.c.l.b16 %v639
        %v808 = vunpack.c.l.b16 %v640
        %v809 = vunpack.c.l.b16 %v641
        %v810 = vunpack.c.l.b16 %v642
        %v811 = vunpack.c.l.b16 %v643
        %v812 = vunpack.c.l.b16 %v644
        %v813 = vunpack.c.l.b16 %v645
        %v814 = vunpack.c.l.b16 %v646
        %v815 = vunpack.c.l.b16 %v647
        %v816 = vunpack.c.l.b16 %v648
        %v817 = vunpack.c.l.b16 %v649
        %v818 = vunpack.c.l.b16 %v650
        %v819 = vunpack.c.l.b16 %v651
        %v820 = vunpack.c.l.b16 %v652
        %v821 = vunpack.c.l.b16 %v653
        %v822 = vunpack.c.l.b16 %v654
        %v823 = vunpack.c.l.b16 %v655
        %v824 = vunpack.c.l.b16 %v656
        %v825 = vunpack.c.l.b16 %v657
        %v826 = vunpack.c.l.b16 %v658
        %v827 = vunpack.c.l.b16 %v659
        %v828 = vunpack.c.l.b16 %v660
        %v829 = vunpack.c.l.b16 %v661
        %v830 = vunpack.c.l.b16 %v662
        %v831 = vunpack.c.l.b16 %v663
        %v832 = vunpack.c.l.b16 %v664
        %v833 = vunpack.c.l.b16 %v665
        %v834 = vunpack.c.l.b16 %v666
        %v835 = vunpack.c.l.b16 %v667
        %v836 = vunpack.c.l.b16 %v668
        %v837 = vunpack.c.l.b16 %v669
        %v838 = vunpack.c.l.b16 %v670
        %v839 = vunpack.c.l.b16 %v671
        %v840 = vpack.c.b16 %v777, %v776
        %v841 = vpack.c.b16 %v779, %v778
        %v842 = vpack.c.b16 %v781, %v780
        %v843 = vpack.c.b16 %v783, %v782
        %v844 = vpack.c.b16 %v785, %v784
        %v845 = vpack.c.b16 %v787, %v786
        %v846 = vpack.c.b16 %v789, %v788
        %v847 = vpack.c.b16 %v791, %v790
        %v848 = vpack.c.b16 %v793, %v792
        %v849 = vpack.c.b16 %v795, %v794
        %v850 = vpack.c.b16 %v797, %v796
        %v851 = vpack.c.b16 %v799, %v798
        %v852 = vpack.c.b16 %v801, %v800
        %v853 = vpack.c.b16 %v803, %v802
        %v854 = vpack.c.b16 %v805, %v804
        %v855 = vpack.c.b16 %v807, %v806
        %v856 = vpack.c.b16 %v809, %v808
        %v857 = vpack.c.b16 %v811, %v810
        %v858 = vpack.c.b16 %v813, %v812
        %v859 = vpack.c.b16 %v815, %v814
        %v860 = vpack.c.b16 %v817, %v816
        %v861 = vpack.c.b16 %v819, %v818
        %v862 = vpack.c.b16 %v821, %v820
        %v863 = vpack.c.b16 %v823, %v822
        %v864 = vpack.c.b16 %v825, %v824
        %v865 = vpack.c.b16 %v827, %v826
        %v866 = vpack.c.b16 %v829, %v828
        %v867 = vpack.c.b16 %v831, %v830
        %v868 = vpack.c.b16 %v833, %v832
        %v869 = vpack.c.b16 %v835, %v834
        %v870 = vpack.c.b16 %v837, %v836
        %v871 = vpack.c.b16 %v839, %v838
        %904 = vmatpush.bf16.msra.mxu0 %v847
        %905 = vmatpush.bf16.msra.mxu0 %v846
        %906 = vmatpush.bf16.msra.mxu0 %v845
        %907 = vmatpush.bf16.msra.mxu0 %v844
        %908 = vmatpush.bf16.msra.mxu0 %v843
        %909 = vmatpush.bf16.msra.mxu0 %v842
        %910 = vmatpush.bf16.msra.mxu0 %v841
        %911 = vmatpush.bf16.msra.mxu0 %v840
        %912 = vmatmul.bf16.gmra.mxu0 %v696
        %v913 = vpop.f32.mrf.mxu0
        %v914 = vadd.f32 0.0, %v913
        %v915 = vpop.f32.mrf.mxu0
        %v916 = vadd.f32 0.0, %v915
        %917 = vmatmul.bf16.gmra.mxu0 %v700
        %v918 = vpop.f32.mrf.mxu0
        %v919 = vadd.f32 0.0, %v918
        %v920 = vpop.f32.mrf.mxu0
        %v921 = vadd.f32 0.0, %v920
        %922 = vdwg.mxu0
        %923 = vmatpush.bf16.msra.mxu0 %v855
        %924 = vmatpush.bf16.msra.mxu0 %v854
        %925 = vmatpush.bf16.msra.mxu0 %v853
        %926 = vmatpush.bf16.msra.mxu0 %v852
        %927 = vmatpush.bf16.msra.mxu0 %v851
        %928 = vmatpush.bf16.msra.mxu0 %v850
        %929 = vmatpush.bf16.msra.mxu0 %v849
        %930 = vmatpush.bf16.msra.mxu0 %v848
        %931 = vmatmul.bf16.gmra.mxu0 %v697
        %v932 = vpop.f32.mrf.mxu0
        %v933 = vadd.f32 %v914, %v932
        %v934 = vpop.f32.mrf.mxu0
        %v935 = vadd.f32 %v916, %v934
        %936 = vmatmul.bf16.gmra.mxu0 %v701
        %v937 = vpop.f32.mrf.mxu0
        %v938 = vadd.f32 %v919, %v937
        %v939 = vpop.f32.mrf.mxu0
        %v940 = vadd.f32 %v921, %v939
        %941 = vdwg.mxu0
        %942 = vmatpush.bf16.msra.mxu0 %v863
        %943 = vmatpush.bf16.msra.mxu0 %v862
        %944 = vmatpush.bf16.msra.mxu0 %v861
        %945 = vmatpush.bf16.msra.mxu0 %v860
        %946 = vmatpush.bf16.msra.mxu0 %v859
        %947 = vmatpush.bf16.msra.mxu0 %v858
        %948 = vmatpush.bf16.msra.mxu0 %v857
        %949 = vmatpush.bf16.msra.mxu0 %v856
        %950 = vmatmul.bf16.gmra.mxu0 %v698
        %v951 = vpop.f32.mrf.mxu0
        %v952 = vadd.f32 %v933, %v951
        %v953 = vpop.f32.mrf.mxu0
        %v954 = vadd.f32 %v935, %v953
        %955 = vmatmul.bf16.gmra.mxu0 %v702
        %v956 = vpop.f32.mrf.mxu0
        %v957 = vadd.f32 %v938, %v956
        %v958 = vpop.f32.mrf.mxu0
        %v959 = vadd.f32 %v940, %v958
        %960 = vdwg.mxu0
        %961 = vmatpush.bf16.msra.mxu0 %v871
        %962 = vmatpush.bf16.msra.mxu0 %v870
        %963 = vmatpush.bf16.msra.mxu0 %v869
        %964 = vmatpush.bf16.msra.mxu0 %v868
        %965 = vmatpush.bf16.msra.mxu0 %v867
        %966 = vmatpush.bf16.msra.mxu0 %v866
        %967 = vmatpush.bf16.msra.mxu0 %v865
        %968 = vmatpush.bf16.msra.mxu0 %v864
        %969 = vmatmul.bf16.gmra.mxu0 %v699
        %v970 = vpop.f32.mrf.mxu0
        %v971 = vadd.f32 %v952, %v970
        %v972 = vpop.f32.mrf.mxu0
        %v973 = vadd.f32 %v954, %v972
        %974 = vmatmul.bf16.gmra.mxu0 %v703
        %v975 = vpop.f32.mrf.mxu0
        %v976 = vadd.f32 %v957, %v975
        %v977 = vpop.f32.mrf.mxu0
        %v978 = vadd.f32 %v959, %v977
        %979 = vdwg.mxu0
        %v980 = vadd.f32 %v596, %v971
        %v981 = vadd.f32 %v597, %v973
        %v982 = vadd.f32 %v598, %v976
        %v983 = vadd.f32 %v599, %v978
        %984 = vst [vmem:[#allocation2] sm:$0xff] %v980
        %985 = vst [vmem:[#allocation2 + $0x8] sm:$0xff] %v981
        %986 = vst [vmem:[#allocation2 + $0x10] sm:$0xff] %v982
        %987 = vst [vmem:[#allocation2 + $0x18] sm:$0xff] %v983
        %p988 = scmp.eq.s32.totalorder %s20, 7
        // Predicated region
        $region105: #{discriminator_forward.8} parent=91 // pred_check
          %p989 = pneg %p988
        $region106: #{discriminator_forward.8} parent=91 // pred_check_branch
          %991 = sbr.rel (%p989) target = $region108
        $region107: #{discriminator_forward.8} parent=91 // pred_region
          %v992 = vld [vmem:[#allocation2] sm:$0xff]
          %v993 = vld [vmem:[#allocation2 + $0x8] sm:$0xff]
          %v994 = vld [vmem:[#allocation2 + $0x10] sm:$0xff]
          %v995 = vld [vmem:[#allocation2 + $0x18] sm:$0xff]
          %v996 = vadd.f32 %v992, %v993
          %v997 = vadd.f32 %v996, %v994
          %v998 = vadd.f32 %v997, %v995
          %v999 = vrot.slane %v998, 4
          %v1000 = vadd.f32 %v998, %v999
          %v1001 = vrot.slane %v1000, 2
          %v1002 = vadd.f32 %v1000, %v1001
          %v1003 = vrot.slane %v1002, 1
          %v1004 = vadd.f32 %v1002, %v1003
          %v1005 = vrcp.pop 32.0
          %v1006 = vmul.f32 32.0, %v1005
          %v1007 = vsub.f32 1.0, %v1006
          %v1008 = vmul.f32 %v1005, %v1007
          %v1009 = vadd.f32 %v1005, %v1008
          %vm1010 = vweird.f32 %v1005
          %v1011 = vsel %vm1010, %v1005, %v1009
          %v1012 = vmul.f32 %v1004, %v1011
          %v1013 = vsub.f32 %v992, %v1012
          %v1014 = vsub.f32 %v993, %v1012
          %v1015 = vsub.f32 %v994, %v1012
          %v1016 = vsub.f32 %v995, %v1012
          %v1017 = vmul.f32 %v1013, %v1013
          %v1018 = vmul.f32 %v1014, %v1014
          %v1019 = vmul.f32 %v1015, %v1015
          %v1020 = vmul.f32 %v1016, %v1016
          %v1021 = vadd.f32 %v1017, %v1018
          %v1022 = vadd.f32 %v1021, %v1019
          %v1023 = vadd.f32 %v1022, %v1020
          %v1024 = vrot.slane %v1023, 4
          %v1025 = vadd.f32 %v1023, %v1024
          %v1026 = vrot.slane %v1025, 2
          %v1027 = vadd.f32 %v1025, %v1026
          %v1028 = vrot.slane %v1027, 1
          %v1029 = vadd.f32 %v1027, %v1028
          %v1030 = vmul.f32 %v1029, %v1011
          %v1031 = vadd.f32 %v1030, 1e-05
          %v1032 = vrsqrt.pop %v1031
          %v1033 = vmul.f32 %v1032, %v1031
          %v1034 = vmul.f32 %v1033, %v1032
          %v1035 = vmul.f32 0.5, %v1034
          %v1036 = vsub.f32 1.5, %v1035
          %v1037 = vmul.f32 %v1032, %v1036
          %vm1038 = vweird.f32 %v1031
          %vm1039 = vweird.f32 %v1032
          %vm1040 = vmor %vm1038, %vm1039
          %v1041 = vsel %vm1040, %v1032, %v1037
          %v1042 = vmul.f32 %v1013, %v1041
          %v1043 = vmul.f32 %v1014, %v1041
          %v1044 = vmul.f32 %v1015, %v1041
          %v1045 = vmul.f32 %v1016, %v1041
          %v1046 = vld [vmem:[%s584] sm:$0x1]
          %v1048 = vperm.slane %v1046, 0
          %v1050 = vmul.f32 %v1042, %v1048
          %v1051 = vmul.f32 %v1043, %v1048
          %v1052 = vmul.f32 %v1044, %v1048
          %v1053 = vmul.f32 %v1045, %v1048
          %v1054 = vld [vmem:[%s587] sm:$0x1]
          %v1056 = vperm.slane %v1054, 0
          %v1058 = vadd.f32 %v1050, %v1056
          %v1059 = vadd.f32 %v1051, %v1056
          %v1060 = vadd.f32 %v1052, %v1056
          %v1061 = vadd.f32 %v1053, %v1056
          %vm1062 = vcmp.gt.f32.partialorder %v1058, 0.0
          %vm1063 = vcmp.gt.f32.partialorder %v1059, 0.0
          %vm1064 = vcmp.gt.f32.partialorder %v1060, 0.0
          %vm1065 = vcmp.gt.f32.partialorder %v1061, 0.0
          %v1066 = vmul.f32 %v1058, 0.2
          %v1067 = vmul.f32 %v1059, 0.2
          %v1068 = vmul.f32 %v1060, 0.2
          %v1069 = vmul.f32 %v1061, 0.2
          %v1070 = vsel %vm1062, %v1058, %v1066
          %v1071 = vsel %vm1063, %v1059, %v1067
          %v1072 = vsel %vm1064, %v1060, %v1068
          %v1073 = vsel %vm1065, %v1061, %v1069
          %v1074 = vpack.c.bf16 %v1070, %v1070
          %v1075 = vpack.c.bf16 %v1071, %v1071
          %v1076 = vpack.c.bf16 %v1072, %v1072
          %v1077 = vpack.c.bf16 %v1073, %v1073
          %1078 = vst [vmem:[%s579] sm:$0xf] %v1074
          %1079 = vst [vmem:[%s579 + $0x4] sm:$0xf] %v1075
          %1080 = vst [vmem:[%s579 + $0x8] sm:$0xf] %v1076
          %1081 = vst [vmem:[%s579 + $0xc] sm:$0xf] %v1077
        $region108: #{discriminator_forward.8} parent=91 // pred_fallthru
          _
        %s1082 = sand.u32 %s141, 1
        %s1083 = sand.u32 %s141, 1
        %s1084 = smul.addr %s1083, 16
        %s1085 = scalar_lea.vmem [#allocation5], %s1084
        // Predicated region
        $region109: #{discriminator_forward.8} parent=91 // pred_check
          %p1086 = pneg %p151
        $region110: #{discriminator_forward.8} parent=91 // pred_check_branch
          %1088 = sbr.rel (%p1086) target = $region112
        $region111: #{discriminator_forward.8} parent=91 // pred_region
          %s1089 = smul.addr %s19, 4
          %s1090 = scalar_lea.vmem %s4, %s1089
          // Predicated region
          $region113: #{discriminator_forward.8} parent=111 // pred_check
            _
          $region114: #{discriminator_forward.8} parent=111 // pred_check_branch
            %1092 = sbr.rel (0) target = $region116
          $region115: #{discriminator_forward.8} parent=111 // pred_region
            // Predicated region
            $region117: #{discriminator_forward.8} parent=115 // pred_check
              _
            $region118: #{discriminator_forward.8} parent=115 // pred_check_branch
              %1094 = sbr.rel target = $region120
            $region119: #{discriminator_forward.8} parent=115 // pred_region
              // Predicated region
              $region132: #{discriminator_forward.8} parent=119 // pred_check
                _
              $region133: #{discriminator_forward.8} parent=119 // pred_check_branch
                %1116 = sbr.rel (0) target = $region135
              $region134: #{discriminator_forward.8} parent=119 // pred_region
                loop: start=0, step=1, limit=1
                $region136: #{discriminator_forward.8} parent=134 // loop_pre_header
                  _
                $region137: #{discriminator_forward.8} parent=134 // loop_header
                  %s1118 = sphi 0, %s1122
                  %p1119 = scmp.ge.s32.totalorder %s1118, 1
                  %s1123 = sphi %s1085, %s1085
                  %s1124 = sphi %s1090, %s1090
                $region138: #{discriminator_forward.8} parent=134 // loop_header_branch
                  %1121 = sbr.rel (%p1119) target = $region142
                $region139: #{discriminator_forward.8} parent=134 // loop_body
                  _
                $region140: #{discriminator_forward.8} parent=134 // loop_footer
                  %s1122 = sadd.s32 1, %s1118
                $region141: #{discriminator_forward.8} parent=134 // loop_footer_branch
                  %1117 = sbr.rel target = $region137
                $region142: #{discriminator_forward.8} parent=134 // loop_exit
                  _
                %s1126 = ssub.s32 16, 1
                loop: start=0, step=1, limit=1
                $region143: #{discriminator_forward.8} parent=134 // loop_pre_header
                  _
                $region144: #{discriminator_forward.8} parent=134 // loop_header
                  %s1128 = sphi 0, %s1132
                  %p1129 = scmp.ge.s32.totalorder %s1128, 1
                  %s1133 = sphi %s1085, %s1085
                  %s1134 = sphi %s1090, %s1090
                $region145: #{discriminator_forward.8} parent=134 // loop_header_branch
                  %1131 = sbr.rel (%p1129) target = $region149
                $region146: #{discriminator_forward.8} parent=134 // loop_body
                  %v1135 = vld [vmem:[%s1133] sm:%s1126]
                  %1136 = vst [vmem:[%s1134] sm:%s1126] %v1135
                  %v1137 = vld [vmem:[%s1133 + $0x4] sm:%s1126]
                  %1138 = vst [vmem:[%s1134 + $0x10] sm:%s1126] %v1137
                  %v1139 = vld [vmem:[%s1133 + $0x8] sm:%s1126]
                  %1140 = vst [vmem:[%s1134 + $0x20] sm:%s1126] %v1139
                  %v1141 = vld [vmem:[%s1133 + $0xc] sm:%s1126]
                  %1142 = vst [vmem:[%s1134 + $0x30] sm:%s1126] %v1141
                $region147: #{discriminator_forward.8} parent=134 // loop_footer
                  %s1132 = sadd.s32 1, %s1128
                $region148: #{discriminator_forward.8} parent=134 // loop_footer_branch
                  %1127 = sbr.rel target = $region144
                $region149: #{discriminator_forward.8} parent=134 // loop_exit
                  _
              $region135: #{discriminator_forward.8} parent=119 // pred_fallthru
                _
            $region120: #{discriminator_forward.8} parent=115 // pred_fallthru
              _
            // Predicated region
            $region121: #{discriminator_forward.8} parent=115 // pred_check
              _
            $region122: #{discriminator_forward.8} parent=115 // pred_check_branch
              %1096 = sbr.rel (0) target = $region124
            $region123: #{discriminator_forward.8} parent=115 // pred_region
              %s1098 = ssub.s32 16, 1
              loop: start=0, step=1, limit=1
              $region125: #{discriminator_forward.8} parent=123 // loop_pre_header
                _
              $region126: #{discriminator_forward.8} parent=123 // loop_header
                %s1100 = sphi 0, %s1104
                %p1101 = scmp.ge.s32.totalorder %s1100, 1
                %s1105 = sphi %s1085, %s1085
                %s1106 = sphi %s1090, %s1090
              $region127: #{discriminator_forward.8} parent=123 // loop_header_branch
                %1103 = sbr.rel (%p1101) target = $region131
              $region128: #{discriminator_forward.8} parent=123 // loop_body
                %v1107 = vld [vmem:[%s1105] sm:%s1098]
                %1108 = vst [vmem:[%s1106] sm:%s1098] %v1107
                %v1109 = vld [vmem:[%s1105 + $0x4] sm:%s1098]
                %1110 = vst [vmem:[%s1106 + $0x10] sm:%s1098] %v1109
                %v1111 = vld [vmem:[%s1105 + $0x8] sm:%s1098]
                %1112 = vst [vmem:[%s1106 + $0x20] sm:%s1098] %v1111
                %v1113 = vld [vmem:[%s1105 + $0xc] sm:%s1098]
                %1114 = vst [vmem:[%s1106 + $0x30] sm:%s1098] %v1113
              $region129: #{discriminator_forward.8} parent=123 // loop_footer
                %s1104 = sadd.s32 1, %s1100
              $region130: #{discriminator_forward.8} parent=123 // loop_footer_branch
                %1099 = sbr.rel target = $region126
              $region131: #{discriminator_forward.8} parent=123 // loop_exit
                _
            $region124: #{discriminator_forward.8} parent=115 // pred_fallthru
              _
          $region116: #{discriminator_forward.8} parent=111 // pred_fallthru
            _
          %1143 = vnop
        $region112: #{discriminator_forward.8} parent=91 // pred_fallthru
          _
      $region92: #{discriminator_forward.8} parent=5 // pred_fallthru
        _
      %p1144 = scmp.le.s32.totalorder 2, %s10
      // Predicated region
      $region150: #{discriminator_forward.8} parent=5 // pred_check
        %p1145 = pneg %p1144
      $region151: #{discriminator_forward.8} parent=5 // pred_check_branch
        %1147 = sbr.rel (%p1145) target = $region153
      $region152: #{discriminator_forward.8} parent=5 // pred_region
        %s1148 = ssub.s32 %s10, 2
        // Predicated region
        $region154: #{discriminator_forward.8} parent=152 // pred_check
          %p1149 = pneg %p157
        $region155: #{discriminator_forward.8} parent=152 // pred_check_branch
          %1151 = sbr.rel (%p1149) target = $region157
        $region156: #{discriminator_forward.8} parent=152 // pred_region
          %s1152 = sand.u32 %s142, 1
          %s1153 = sand.u32 %s142, 1
          %s1154 = smul.addr %s1153, 16
          %s1155 = scalar_lea.vmem [#allocation5], %s1154
        $region157: #{discriminator_forward.8} parent=152 // pred_fallthru
          _
      $region153: #{discriminator_forward.8} parent=5 // pred_fallthru
        _
    $region6: #{discriminator_forward.8} parent=1 // loop_footer
      %s14 = sadd.s32 1, %s10
    $region7: #{discriminator_forward.8} parent=1 // loop_footer_branch
      %9 = sbr.rel target = $region3
    $region8: #{discriminator_forward.8} parent=1 // loop_exit
      _

// kernel: discriminator_forward.9
$region0: #{discriminator_forward.9}
  #allocation0 [shape = 'u32[]', space=smem, size = 0x4, offset = 0x4, fixed_abs, tag = 'smem constant byte address 0x4 - core index']
  #allocation1 [shape = 'u32[72,128]{1,0:T(1,128)}', space=vmem, size = 0x9000, scoped, tag = 'internal scratch']
  #allocation2 [shape = 'f32[2,128]{1,0:T(2,128)}', space=vmem, size = 0x400, scoped, tag = 'scratch operand']
  %s0 = inlined_call_operand.vmem [shape: bf16[2,8192], index: 0, kind: input, shape index: {}]
  %s1 = inlined_call_operand.vmem [shape: bf16[8192,128], index: 1, kind: input, shape index: {}]
  %s2 = inlined_call_operand.vmem [shape: f32[2,128], index: 2, kind: output, shape index: {}]
  %s3 = sld [smem:[#allocation0]]
  $region49: #{discriminator_forward.9} parent=0
    _
  %s5 = ssub.s32 1, %s3
  %s6 = scalar_select 0, %s5, %s3
  loop: start=0, step=1, limit=18
  $region2: #{discriminator_forward.9} parent=0 // loop_pre_header
    _
  $region3: #{discriminator_forward.9} parent=0 // loop_header
    %s8 = sphi 0, %s12
    %p9 = scmp.ge.s32.totalorder %s8, 18
    %s15 = sphi 0, %s27
    %s16 = sphi 0, %s23
    %s17 = sphi 0, %s15
    %s18 = sphi 0, %s16
    %s19 = sphi 0, %s17
    %s20 = sphi 0, %s18
    %s32 = sphi 0, %s34
    %s35 = sphi 0, %s32
    %s36 = sphi 0, %s35
    %s52 = sphi 0, %s36
    %s58 = sphi 0, %s60
    %s61 = sphi 0, %s58
    %s62 = sphi 0, %s61
    %s78 = sphi 0, %s62
    %s84 = sphi 0, %s86
    %s87 = sphi 0, %s84
    %s88 = sphi 0, %s87
    %s104 = sphi 0, %s88
  $region4: #{discriminator_forward.9} parent=0 // loop_header_branch
    %11 = sbr.rel (%p9) target = $region8
  $region5: #{discriminator_forward.9} parent=0 // loop_body
    %s13 = ssub.s32 %s8, 1
    %s14 = ssub.s32 %s8, 2
    %s21 = sadd.s32 1, %s16
    %p22 = scmp.ge.s32.totalorder %s21, 16
    %s23 = scalar_select %p22, 0, %s21
    %s24 = sadd.s32 1, %s15
    %s25 = scalar_select %p22, %s24, %s15
    %p26 = scmp.ge.s32.totalorder %s25, 1
    %s27 = scalar_select %p26, 0, %s25
    %s28 = ssub.s32 %s15, %s27
    %s29 = ssub.s32 %s16, %s23
    %s30 = sor.u32 %s28, %s29
    %p31 = scmp.eq.s32.totalorder %s30, 0
    %s33 = sadd.s32 %s32, 1
    %s34 = scalar_select %p31, %s32, %s33
    %p37 = pneg %p31
    %p38 = scmp.eq.s32.totalorder %s8, 15
    %p39 = por %p37, %p38
    %p40 = scmp.ne.s32.totalorder %s32, %s35
    %p41 = scmp.eq.s32.totalorder %s8, 0
    %p42 = por %p40, %p41
    %p43 = scmp.ne.s32.totalorder %s32, %s35
    %p44 = scmp.eq.s32.totalorder %s13, 15
    %p45 = por %p43, %p44
    %p46 = scmp.ne.s32.totalorder %s35, %s36
    %p47 = scmp.eq.s32.totalorder %s13, 0
    %p48 = por %p46, %p47
    %p49 = scmp.ne.s32.totalorder %s35, %s36
    %p50 = scmp.eq.s32.totalorder %s14, 15
    %p51 = por %p49, %p50
    %p53 = scmp.ne.s32.totalorder %s36, %s52
    %p54 = scmp.eq.s32.totalorder %s14, 0
    %p55 = por %p53, %p54
    %s56 = ssub.s32 %s16, %s23
    %p57 = scmp.eq.s32.totalorder %s56, 0
    %s59 = sadd.s32 %s58, 1
    %s60 = scalar_select %p57, %s58, %s59
    %p63 = pneg %p57
    %p64 = scmp.eq.s32.totalorder %s8, 15
    %p65 = por %p63, %p64
    %p66 = scmp.ne.s32.totalorder %s58, %s61
    %p67 = scmp.eq.s32.totalorder %s8, 0
    %p68 = por %p66, %p67
    %p69 = scmp.ne.s32.totalorder %s58, %s61
    %p70 = scmp.eq.s32.totalorder %s13, 15
    %p71 = por %p69, %p70
    %p72 = scmp.ne.s32.totalorder %s61, %s62
    %p73 = scmp.eq.s32.totalorder %s13, 0
    %p74 = por %p72, %p73
    %p75 = scmp.ne.s32.totalorder %s61, %s62
    %p76 = scmp.eq.s32.totalorder %s14, 15
    %p77 = por %p75, %p76
    %p79 = scmp.ne.s32.totalorder %s62, %s78
    %p80 = scmp.eq.s32.totalorder %s14, 0
    %p81 = por %p79, %p80
    %s82 = ssub.s32 %s15, %s27
    %p83 = scmp.eq.s32.totalorder %s82, 0
    %s85 = sadd.s32 %s84, 1
    %s86 = scalar_select %p83, %s84, %s85
    %p89 = pneg %p83
    %p90 = scmp.eq.s32.totalorder %s8, 15
    %p91 = por %p89, %p90
    %p92 = scmp.ne.s32.totalorder %s84, %s87
    %p93 = scmp.eq.s32.totalorder %s8, 0
    %p94 = por %p92, %p93
    %p95 = scmp.ne.s32.totalorder %s84, %s87
    %p96 = scmp.eq.s32.totalorder %s13, 15
    %p97 = por %p95, %p96
    %p98 = scmp.ne.s32.totalorder %s87, %s88
    %p99 = scmp.eq.s32.totalorder %s13, 0
    %p100 = por %p98, %p99
    %p101 = scmp.ne.s32.totalorder %s87, %s88
    %p102 = scmp.eq.s32.totalorder %s14, 15
    %p103 = por %p101, %p102
    %p105 = scmp.ne.s32.totalorder %s88, %s104
    %p106 = scmp.eq.s32.totalorder %s14, 0
    %p107 = por %p105, %p106
    %p108 = scmp.le.s32.totalorder 1, %s8
    %p109 = scmp.lt.s32.totalorder %s8, 17
    %p110 = pnand %p108, %p109
    %p111 = pneg %p110
    // Predicated region
    $region9: #{discriminator_forward.9} parent=5 // pred_check
      _
    $region10: #{discriminator_forward.9} parent=5 // pred_check_branch
      %113 = sbr.rel (%p110) target = $region12
    $region11: #{discriminator_forward.9} parent=5 // pred_region
      %s114 = ssub.s32 %s8, 1
    $region12: #{discriminator_forward.9} parent=5 // pred_fallthru
      _
    %p115 = scmp.lt.s32.totalorder %s8, 16
    // Predicated region
    $region13: #{discriminator_forward.9} parent=5 // pred_check
      %p116 = pneg %p115
    $region14: #{discriminator_forward.9} parent=5 // pred_check_branch
      %118 = sbr.rel (%p116) target = $region16
    $region15: #{discriminator_forward.9} parent=5 // pred_region
      // Predicated region
      $region17: #{discriminator_forward.9} parent=15 // pred_check
        %p119 = pneg %p42
      $region18: #{discriminator_forward.9} parent=15 // pred_check_branch
        %121 = sbr.rel (%p119) target = $region20
      $region19: #{discriminator_forward.9} parent=15 // pred_region
        %s122 = smul.u32 4, %s16
        %p123 = scmp.lt.s32.totalorder %s15, 0
        %s124 = scalar_select %p123, %s15, 0
        %p125 = scmp.lt.s32.totalorder %s122, 63
        %s126 = scalar_select %p125, %s122, 63
        %s127 = smul.addr %s124, 64
        %s128 = sadd.s32 %s126, %s127
        %s129 = scalar_lea.vmem %s0, %s128
        %s130 = smul.u32 4, %s16
      $region20: #{discriminator_forward.9} parent=15 // pred_fallthru
        _
      // Predicated region
      $region21: #{discriminator_forward.9} parent=15 // pred_check
        %p131 = pneg %p68
      $region22: #{discriminator_forward.9} parent=15 // pred_check_branch
        %133 = sbr.rel (%p131) target = $region24
      $region23: #{discriminator_forward.9} parent=15 // pred_region
        %s134 = smul.u32 64, %s16
        %p135 = scmp.lt.s32.totalorder %s134, 1023
        %s136 = scalar_select %p135, %s134, 1023
        %s137 = smul.addr %s136, 4
        %s138 = scalar_lea.vmem %s1, %s137
        %s139 = smul.u32 64, %s16
      $region24: #{discriminator_forward.9} parent=15 // pred_fallthru
        _
    $region16: #{discriminator_forward.9} parent=5 // pred_fallthru
      _
    %p140 = scmp.le.s32.totalorder 1, %s8
    %p141 = scmp.lt.s32.totalorder %s8, 17
    %p142 = pnand %p140, %p141
    %p143 = pneg %p142
    // Predicated region
    $region25: #{discriminator_forward.9} parent=5 // pred_check
      _
    $region26: #{discriminator_forward.9} parent=5 // pred_check_branch
      %145 = sbr.rel (%p142) target = $region28
    $region27: #{discriminator_forward.9} parent=5 // pred_region
      %s146 = ssub.s32 %s8, 1
      %s147 = smul.u32 4, %s18
      %p148 = scmp.lt.s32.totalorder %s17, 0
      %s149 = scalar_select %p148, %s17, 0
      %p150 = scmp.lt.s32.totalorder %s147, 63
      %s151 = scalar_select %p150, %s147, 63
      %s152 = smul.addr %s149, 64
      %s153 = sadd.s32 %s151, %s152
      %s154 = scalar_lea.vmem %s0, %s153
      %p155 = pneg %p48
      %p156 = pneg %p45
      %s157 = smul.u32 64, %s18
      %p158 = scmp.lt.s32.totalorder %s157, 1023
      %s159 = scalar_select %p158, %s157, 1023
      %s160 = smul.addr %s159, 4
      %s161 = scalar_lea.vmem %s1, %s160
      %p162 = pneg %p74
      %p163 = pneg %p71
      %p164 = pneg %p100
      %p165 = pneg %p97
      %p166 = scmp.lt.s32.totalorder %s17, 0
      %s167 = scalar_select %p166, %s17, 0
      %s168 = smul.addr %s167, 2
      %s169 = scalar_lea.vmem %s2, %s168
      %s170 = smul.u32 4, %s18
      %p171 = scmp.lt.s32.totalorder %s17, 0
      %s172 = scalar_select %p171, %s17, 0
      %p173 = scmp.lt.s32.totalorder %s170, 63
      %s174 = scalar_select %p173, %s170, 63
      %s175 = smul.addr %s172, 64
      %s176 = sadd.s32 %s174, %s175
      %s177 = scalar_lea.vmem %s0, %s176
      %s178 = smul.u32 4, %s18
      %s179 = smul.u32 64, %s18
      %p180 = scmp.lt.s32.totalorder %s179, 1023
      %s181 = scalar_select %p180, %s179, 1023
      %s182 = smul.addr %s181, 4
      %s183 = scalar_lea.vmem %s1, %s182
      %s184 = smul.u32 64, %s18
      %p185 = scmp.lt.s32.totalorder %s17, 0
      %s186 = scalar_select %p185, %s17, 0
      %s187 = smul.addr %s186, 2
      %s188 = scalar_lea.vmem %s2, %s187
      %p189 = scmp.eq.s32.totalorder %s18, 0
      // Predicated region
      $region29: #{discriminator_forward.9} parent=27 // pred_check
        %p190 = pneg %p189
      $region30: #{discriminator_forward.9} parent=27 // pred_check_branch
        %192 = sbr.rel (%p190) target = $region32
      $region31: #{discriminator_forward.9} parent=27 // pred_region
        %193 = vst [vmem:[#allocation2] sm:$0x3] 0.0
      $region32: #{discriminator_forward.9} parent=27 // pred_fallthru
        _
      %v194 = vld [vmem:[#allocation2] sm:$0x3]
      %v195 = vld [vmem:[%s177] sm:$0xf]
      %v196 = vld [vmem:[%s183] sm:$0xf]
      %v197 = vld [vmem:[%s183 + $0x4] sm:$0xf]
      %v198 = vld [vmem:[%s183 + $0x8] sm:$0xf]
      %v199 = vld [vmem:[%s183 + $0xc] sm:$0xf]
      %v200 = vld [vmem:[%s183 + $0x10] sm:$0xf]
      %v201 = vld [vmem:[%s183 + $0x14] sm:$0xf]
      %v202 = vld [vmem:[%s183 + $0x18] sm:$0xf]
      %v203 = vld [vmem:[%s183 + $0x1c] sm:$0xf]
      %v204 = vld [vmem:[%s183 + $0x20] sm:$0xf]
      %v205 = vld [vmem:[%s183 + $0x24] sm:$0xf]
      %v206 = vld [vmem:[%s183 + $0x28] sm:$0xf]
      %v207 = vld [vmem:[%s183 + $0x2c] sm:$0xf]
      %v208 = vld [vmem:[%s183 + $0x30] sm:$0xf]
      %v209 = vld [vmem:[%s183 + $0x34] sm:$0xf]
      %v210 = vld [vmem:[%s183 + $0x38] sm:$0xf]
      %v211 = vld [vmem:[%s183 + $0x3c] sm:$0xf]
      %v212 = vld [vmem:[%s183 + $0x40] sm:$0xf]
      %v213 = vld [vmem:[%s183 + $0x44] sm:$0xf]
      %v214 = vld [vmem:[%s183 + $0x48] sm:$0xf]
      %v215 = vld [vmem:[%s183 + $0x4c] sm:$0xf]
      %v216 = vld [vmem:[%s183 + $0x50] sm:$0xf]
      %v217 = vld [vmem:[%s183 + $0x54] sm:$0xf]
      %v218 = vld [vmem:[%s183 + $0x58] sm:$0xf]
      %v219 = vld [vmem:[%s183 + $0x5c] sm:$0xf]
      %v220 = vld [vmem:[%s183 + $0x60] sm:$0xf]
      %v221 = vld [vmem:[%s183 + $0x64] sm:$0xf]
      %v222 = vld [vmem:[%s183 + $0x68] sm:$0xf]
      %v223 = vld [vmem:[%s183 + $0x6c] sm:$0xf]
      %v224 = vld [vmem:[%s183 + $0x70] sm:$0xf]
      %v225 = vld [vmem:[%s183 + $0x74] sm:$0xf]
      %v226 = vld [vmem:[%s183 + $0x78] sm:$0xf]
      %v227 = vld [vmem:[%s183 + $0x7c] sm:$0xf]
      %v228 = vld [vmem:[%s183 + $0x80] sm:$0xf]
      %v229 = vld [vmem:[%s183 + $0x84] sm:$0xf]
      %v230 = vld [vmem:[%s183 + $0x88] sm:$0xf]
      %v231 = vld [vmem:[%s183 + $0x8c] sm:$0xf]
      %v232 = vld [vmem:[%s183 + $0x90] sm:$0xf]
      %v233 = vld [vmem:[%s183 + $0x94] sm:$0xf]
      %v234 = vld [vmem:[%s183 + $0x98] sm:$0xf]
      %v235 = vld [vmem:[%s183 + $0x9c] sm:$0xf]
      %v236 = vld [vmem:[%s183 + $0xa0] sm:$0xf]
      %v237 = vld [vmem:[%s183 + $0xa4] sm:$0xf]
      %v238 = vld [vmem:[%s183 + $0xa8] sm:$0xf]
      %v239 = vld [vmem:[%s183 + $0xac] sm:$0xf]
      %v240 = vld [vmem:[%s183 + $0xb0] sm:$0xf]
      %v241 = vld [vmem:[%s183 + $0xb4] sm:$0xf]
      %v242 = vld [vmem:[%s183 + $0xb8] sm:$0xf]
      %v243 = vld [vmem:[%s183 + $0xbc] sm:$0xf]
      %v244 = vld [vmem:[%s183 + $0xc0] sm:$0xf]
      %v245 = vld [vmem:[%s183 + $0xc4] sm:$0xf]
      %v246 = vld [vmem:[%s183 + $0xc8] sm:$0xf]
      %v247 = vld [vmem:[%s183 + $0xcc] sm:$0xf]
      %v248 = vld [vmem:[%s183 + $0xd0] sm:$0xf]
      %v249 = vld [vmem:[%s183 + $0xd4] sm:$0xf]
      %v250 = vld [vmem:[%s183 + $0xd8] sm:$0xf]
      %v251 = vld [vmem:[%s183 + $0xdc] sm:$0xf]
      %v252 = vld [vmem:[%s183 + $0xe0] sm:$0xf]
      %v253 = vld [vmem:[%s183 + $0xe4] sm:$0xf]
      %v254 = vld [vmem:[%s183 + $0xe8] sm:$0xf]
      %v255 = vld [vmem:[%s183 + $0xec] sm:$0xf]
      %v256 = vld [vmem:[%s183 + $0xf0] sm:$0xf]
      %v257 = vld [vmem:[%s183 + $0xf4] sm:$0xf]
      %v258 = vld [vmem:[%s183 + $0xf8] sm:$0xf]
      %v259 = vld [vmem:[%s183 + $0xfc] sm:$0xf]
      %261 = vst [vmem:[#allocation1] ss:$9 sm:$0xff] %v195
      %v262 = vld [vmem:[#allocation1] sm:$0xff]
      %v263 = vld [vmem:[#allocation1 + $0x9] sm:$0xff]
      %v264 = vld [vmem:[#allocation1 + $0x12] sm:$0xff]
      %v265 = vld [vmem:[#allocation1 + $0x1b] sm:$0xff]
      %v334 = vunpack.c.l.b16 %v196
      %v335 = vunpack.c.l.b16 %v197
      %v336 = vunpack.c.l.b16 %v198
      %v337 = vunpack.c.l.b16 %v199
      %v338 = vunpack.c.l.b16 %v200
      %v339 = vunpack.c.l.b16 %v201
      %v340 = vunpack.c.l.b16 %v202
      %v341 = vunpack.c.l.b16 %v203
      %v342 = vunpack.c.l.b16 %v204
      %v343 = vunpack.c.l.b16 %v205
      %v344 = vunpack.c.l.b16 %v206
      %v345 = vunpack.c.l.b16 %v207
      %v346 = vunpack.c.l.b16 %v208
      %v347 = vunpack.c.l.b16 %v209
      %v348 = vunpack.c.l.b16 %v210
      %v349 = vunpack.c.l.b16 %v211
      %v350 = vunpack.c.l.b16 %v212
      %v351 = vunpack.c.l.b16 %v213
      %v352 = vunpack.c.l.b16 %v214
      %v353 = vunpack.c.l.b16 %v215
      %v354 = vunpack.c.l.b16 %v216
      %v355 = vunpack.c.l.b16 %v217
      %v356 = vunpack.c.l.b16 %v218
      %v357 = vunpack.c.l.b16 %v219
      %v358 = vunpack.c.l.b16 %v220
      %v359 = vunpack.c.l.b16 %v221
      %v360 = vunpack.c.l.b16 %v222
      %v361 = vunpack.c.l.b16 %v223
      %v362 = vunpack.c.l.b16 %v224
      %v363 = vunpack.c.l.b16 %v225
      %v364 = vunpack.c.l.b16 %v226
      %v365 = vunpack.c.l.b16 %v227
      %v366 = vunpack.c.l.b16 %v228
      %v367 = vunpack.c.l.b16 %v229
      %v368 = vunpack.c.l.b16 %v230
      %v369 = vunpack.c.l.b16 %v231
      %v370 = vunpack.c.l.b16 %v232
      %v371 = vunpack.c.l.b16 %v233
      %v372 = vunpack.c.l.b16 %v234
      %v373 = vunpack.c.l.b16 %v235
      %v374 = vunpack.c.l.b16 %v236
      %v375 = vunpack.c.l.b16 %v237
      %v376 = vunpack.c.l.b16 %v238
      %v377 = vunpack.c.l.b16 %v239
      %v378 = vunpack.c.l.b16 %v240
      %v379 = vunpack.c.l.b16 %v241
      %v380 = vunpack.c.l.b16 %v242
      %v381 = vunpack.c.l.b16 %v243
      %v382 = vunpack.c.l.b16 %v244
      %v383 = vunpack.c.l.b16 %v245
      %v384 = vunpack.c.l.b16 %v246
      %v385 = vunpack.c.l.b16 %v247
      %v386 = vunpack.c.l.b16 %v248
      %v387 = vunpack.c.l.b16 %v249
      %v388 = vunpack.c.l.b16 %v250
      %v389 = vunpack.c.l.b16 %v251
      %v390 = vunpack.c.l.b16 %v252
      %v391 = vunpack.c.l.b16 %v253
      %v392 = vunpack.c.l.b16 %v254
      %v393 = vunpack.c.l.b16 %v255
      %v394 = vunpack.c.l.b16 %v256
      %v395 = vunpack.c.l.b16 %v257
      %v396 = vunpack.c.l.b16 %v258
      %v397 = vunpack.c.l.b16 %v259
      %v398 = vpack.c.b16 %v335, %v334
      %v399 = vpack.c.b16 %v337, %v336
      %v400 = vpack.c.b16 %v339, %v338
      %v401 = vpack.c.b16 %v341, %v340
      %v402 = vpack.c.b16 %v343, %v342
      %v403 = vpack.c.b16 %v345, %v344
      %v404 = vpack.c.b16 %v347, %v346
      %v405 = vpack.c.b16 %v349, %v348
      %v406 = vpack.c.b16 %v351, %v350
      %v407 = vpack.c.b16 %v353, %v352
      %v408 = vpack.c.b16 %v355, %v354
      %v409 = vpack.c.b16 %v357, %v356
      %v410 = vpack.c.b16 %v359, %v358
      %v411 = vpack.c.b16 %v361, %v360
      %v412 = vpack.c.b16 %v363, %v362
      %v413 = vpack.c.b16 %v365, %v364
      %v414 = vpack.c.b16 %v367, %v366
      %v415 = vpack.c.b16 %v369, %v368
      %v416 = vpack.c.b16 %v371, %v370
      %v417 = vpack.c.b16 %v373, %v372
      %v418 = vpack.c.b16 %v375, %v374
      %v419 = vpack.c.b16 %v377, %v376
      %v420 = vpack.c.b16 %v379, %v378
      %v421 = vpack.c.b16 %v381, %v380
      %v422 = vpack.c.b16 %v383, %v382
      %v423 = vpack.c.b16 %v385, %v384
      %v424 = vpack.c.b16 %v387, %v386
      %v425 = vpack.c.b16 %v389, %v388
      %v426 = vpack.c.b16 %v391, %v390
      %v427 = vpack.c.b16 %v393, %v392
      %v428 = vpack.c.b16 %v395, %v394
      %v429 = vpack.c.b16 %v397, %v396
      %462 = vmatpush.bf16.msra.mxu0 %v405
      %463 = vmatpush.bf16.msra.mxu0 %v404
      %464 = vmatpush.bf16.msra.mxu0 %v403
      %465 = vmatpush.bf16.msra.mxu0 %v402
      %466 = vmatpush.bf16.msra.mxu0 %v401
      %467 = vmatpush.bf16.msra.mxu0 %v400
      %468 = vmatpush.bf16.msra.mxu0 %v399
      %469 = vmatpush.bf16.msra.mxu0 %v398
      %470 = vmatmul.bf16.gmra.mxu0 %v262
      %v471 = vpop.f32.mrf.mxu0
      %v472 = vadd.f32 0.0, %v471
      %v473 = vpop.f32.mrf.mxu0
      %474 = vdwg.mxu0
      %475 = vmatpush.bf16.msra.mxu0 %v413
      %476 = vmatpush.bf16.msra.mxu0 %v412
      %477 = vmatpush.bf16.msra.mxu0 %v411
      %478 = vmatpush.bf16.msra.mxu0 %v410
      %479 = vmatpush.bf16.msra.mxu0 %v409
      %480 = vmatpush.bf16.msra.mxu0 %v408
      %481 = vmatpush.bf16.msra.mxu0 %v407
      %482 = vmatpush.bf16.msra.mxu0 %v406
      %483 = vmatmul.bf16.gmra.mxu0 %v263
      %v484 = vpop.f32.mrf.mxu0
      %v485 = vadd.f32 %v472, %v484
      %v486 = vpop.f32.mrf.mxu0
      %487 = vdwg.mxu0
      %488 = vmatpush.bf16.msra.mxu0 %v421
      %489 = vmatpush.bf16.msra.mxu0 %v420
      %490 = vmatpush.bf16.msra.mxu0 %v419
      %491 = vmatpush.bf16.msra.mxu0 %v418
      %492 = vmatpush.bf16.msra.mxu0 %v417
      %493 = vmatpush.bf16.msra.mxu0 %v416
      %494 = vmatpush.bf16.msra.mxu0 %v415
      %495 = vmatpush.bf16.msra.mxu0 %v414
      %496 = vmatmul.bf16.gmra.mxu0 %v264
      %v497 = vpop.f32.mrf.mxu0
      %v498 = vadd.f32 %v485, %v497
      %v499 = vpop.f32.mrf.mxu0
      %500 = vdwg.mxu0
      %501 = vmatpush.bf16.msra.mxu0 %v429
      %502 = vmatpush.bf16.msra.mxu0 %v428
      %503 = vmatpush.bf16.msra.mxu0 %v427
      %504 = vmatpush.bf16.msra.mxu0 %v426
      %505 = vmatpush.bf16.msra.mxu0 %v425
      %506 = vmatpush.bf16.msra.mxu0 %v424
      %507 = vmatpush.bf16.msra.mxu0 %v423
      %508 = vmatpush.bf16.msra.mxu0 %v422
      %509 = vmatmul.bf16.gmra.mxu0 %v265
      %v510 = vpop.f32.mrf.mxu0
      %v511 = vadd.f32 %v498, %v510
      %v512 = vpop.f32.mrf.mxu0
      %513 = vdwg.mxu0
      %v514 = vadd.f32 %v194, %v511
      %515 = vst [vmem:[#allocation2] sm:$0x3] %v514
      %p516 = scmp.eq.s32.totalorder %s18, 15
      // Predicated region
      $region33: #{discriminator_forward.9} parent=27 // pred_check
        %p517 = pneg %p516
      $region34: #{discriminator_forward.9} parent=27 // pred_check_branch
        %519 = sbr.rel (%p517) target = $region36
      $region35: #{discriminator_forward.9} parent=27 // pred_region
        %v520 = vld [vmem:[#allocation2] sm:$0x3]
        %v521 = vxor.u32 %v520, 2147483648
        %v522 = vmul.f32 %v521, 1.442695
        %v523 = vpow.pop %v522
        %v524 = vadd.f32 %v523, 1.0
        %v525 = vrcp.pop %v524
        %v526 = vmul.f32 %v524, %v525
        %v527 = vsub.f32 1.0, %v526
        %v528 = vmul.f32 %v525, %v527
        %v529 = vadd.f32 %v525, %v528
        %vm530 = vweird.f32 %v524
        %vm531 = vweird.f32 %v525
        %vm532 = vmor %vm530, %vm531
        %v533 = vsel %vm532, %v525, %v529
        %v534 = vand.u32 2147483647, %v524
        %vm535 = vcmp.eq.f32.partialorder %v534, 8.507059e+37
        %v536 = vand.u32 %v524, 2147483648
        %v537 = vor.u32 1.1754944e-38, %v536
        %v538 = vsel %vm535, %v537, %v533
        %v539 = vmul.f32 1.0, %v538
        %540 = vst [vmem:[%s188] sm:$0x3] %v539
      $region36: #{discriminator_forward.9} parent=27 // pred_fallthru
        _
      %p541 = scmp.lt.s32.totalorder %s17, 0
      %s542 = scalar_select %p541, %s17, 0
      %s543 = smul.addr %s542, 2
      %s544 = scalar_lea.vmem %s2, %s543
      // Predicated region
      $region37: #{discriminator_forward.9} parent=27 // pred_check
        %p545 = pneg %p97
      $region38: #{discriminator_forward.9} parent=27 // pred_check_branch
        %547 = sbr.rel (%p545) target = $region40
      $region39: #{discriminator_forward.9} parent=27 // pred_region
        _
      $region40: #{discriminator_forward.9} parent=27 // pred_fallthru
        _
      // Predicated region
      $region41: #{discriminator_forward.9} parent=27 // pred_check
        %p548 = pneg %p97
      $region42: #{discriminator_forward.9} parent=27 // pred_check_branch
        %550 = sbr.rel (%p548) target = $region44
      $region43: #{discriminator_forward.9} parent=27 // pred_region
        %p551 = scmp.lt.s32.totalorder %s17, 0
        %s552 = scalar_select %p551, %s17, 0
        %s553 = smul.addr %s552, 2
        %s554 = scalar_lea.vmem %s2, %s553
      $region44: #{discriminator_forward.9} parent=27 // pred_fallthru
        _
    $region28: #{discriminator_forward.9} parent=5 // pred_fallthru
      _
    %p555 = scmp.le.s32.totalorder 2, %s8
    // Predicated region
    $region45: #{discriminator_forward.9} parent=5 // pred_check
      %p556 = pneg %p555
    $region46: #{discriminator_forward.9} parent=5 // pred_check_branch
      %558 = sbr.rel (%p556) target = $region48
    $region47: #{discriminator_forward.9} parent=5 // pred_region
      %s559 = ssub.s32 %s8, 2
    $region48: #{discriminator_forward.9} parent=5 // pred_fallthru
      _
  $region6: #{discriminator_forward.9} parent=0 // loop_footer
    %s12 = sadd.s32 1, %s8
  $region7: #{discriminator_forward.9} parent=0 // loop_footer_branch
    %7 = sbr.rel target = $region3
  $region8: #{discriminator_forward.9} parent=0 // loop_exit
    _

</llo_original>
